<compile_context>
chip_gen: v5e
topology: v5e:2x2
jax: 0.10.0
libtpu: 0.0.40
codegen_flags: <defaults>
</compile_context>

<pallas_src>
import jax
import jax.numpy as jnp
from jax.experimental import pallas as pl
from jax.experimental.pallas import tpu as pltpu

# ---- model dims (match the PyTorch module) ----
IMAGE_SIZE = 784
H_DIM = 400
Z_DIM = 20

# ---- lane-dense padded dims ----
D_PAD = 896        # 784 -> 7 * 128
H_PAD = 512        # 400 -> 4 * 128
LV_OFF = 128       # log_var column offset inside fused mu|log_var projection
Z2_PAD = 256       # fused projection width: mu at [0:20], log_var at [128:148]

# ---- packed-bias layout (all offsets 128-aligned) ----
B1_OFF = 0
B23_OFF = B1_OFF + H_PAD      # 512
B4_OFF = B23_OFF + Z2_PAD     # 768
B5_OFF = B4_OFF + H_PAD       # 1280
BPACK = B5_OFF + D_PAD        # 2176

TILE_B = 128                  # batch tile (safe for VMEM on all generations)


def vae_kernel(x_ref, eps_ref, w1_ref, w23_ref, w4_ref, w5_ref, b_ref, out_ref):
    bf16 = jnp.bfloat16
    x = x_ref[...].astype(bf16)

    # encode: h = relu(x @ W1 + b1)
    h = jnp.dot(x, w1_ref[...], preferred_element_type=jnp.float32)
    h = jnp.maximum(h + b_ref[:, B1_OFF:B1_OFF + H_PAD], 0.0)

    # fused fc2|fc3 -> (mu | log_var) in one MXU pass
    ml = jnp.dot(h.astype(bf16), w23_ref[...], preferred_element_type=jnp.float32)
    ml = ml + b_ref[:, B23_OFF:B23_OFF + Z2_PAD]
    mu = ml[:, :Z_DIM]
    log_var = ml[:, LV_OFF:LV_OFF + Z_DIM]

    # reparameterize: z = mu + eps * exp(log_var / 2)
    z = mu + eps_ref[...] * jnp.exp(log_var * 0.5)

    # decode: h2 = relu(z @ W4 + b4)
    h2 = jnp.dot(z.astype(bf16), w4_ref[...], preferred_element_type=jnp.float32)
    h2 = jnp.maximum(h2 + b_ref[:, B4_OFF:B4_OFF + H_PAD], 0.0)

    # out = sigmoid(h2 @ W5 + b5)
    logits = jnp.dot(h2.astype(bf16), w5_ref[...], preferred_element_type=jnp.float32)
    logits = logits + b_ref[:, B5_OFF:B5_OFF + D_PAD]
    out_ref[...] = jax.nn.sigmoid(logits)


def init_params(key):
    """PyTorch-style uniform(-1/sqrt(fan_in)) init; weights stored (in, out)."""
    def linear(k, fan_in, fan_out):
        kw, kb = jax.random.split(k)
        bound = 1.0 / (fan_in ** 0.5)
        w = jax.random.uniform(kw, (fan_in, fan_out), jnp.float32, -bound, bound)
        b = jax.random.uniform(kb, (fan_out,), jnp.float32, -bound, bound)
        return w, b

    ks = jax.random.split(key, 5)
    w1, b1 = linear(ks[0], IMAGE_SIZE, H_DIM)
    w2, b2 = linear(ks[1], H_DIM, Z_DIM)
    w3, b3 = linear(ks[2], H_DIM, Z_DIM)
    w4, b4 = linear(ks[3], Z_DIM, H_DIM)
    w5, b5 = linear(ks[4], H_DIM, IMAGE_SIZE)
    return (w1, b1, w2, b2, w3, b3, w4, b4, w5, b5)


def pack_params(params):
    """Zero-pad to lane-dense dims, fuse fc2/fc3, cast weights to bf16, pack biases."""
    w1, b1, w2, b2, w3, b3, w4, b4, w5, b5 = params

    w1p = (jnp.zeros((D_PAD, H_PAD), jnp.float32)
           .at[:IMAGE_SIZE, :H_DIM].set(w1).astype(jnp.bfloat16))
    w23p = (jnp.zeros((H_PAD, Z2_PAD), jnp.float32)
            .at[:H_DIM, :Z_DIM].set(w2)
            .at[:H_DIM, LV_OFF:LV_OFF + Z_DIM].set(w3).astype(jnp.bfloat16))
    w4p = (jnp.zeros((Z_DIM, H_PAD), jnp.float32)
           .at[:, :H_DIM].set(w4).astype(jnp.bfloat16))
    w5p = (jnp.zeros((H_PAD, D_PAD), jnp.float32)
           .at[:H_DIM, :IMAGE_SIZE].set(w5).astype(jnp.bfloat16))

    bpack = jnp.zeros((1, BPACK), jnp.float32)
    bpack = bpack.at[0, B1_OFF:B1_OFF + H_DIM].set(b1)
    bpack = bpack.at[0, B23_OFF:B23_OFF + Z_DIM].set(b2)
    bpack = bpack.at[0, B23_OFF + LV_OFF:B23_OFF + LV_OFF + Z_DIM].set(b3)
    bpack = bpack.at[0, B4_OFF:B4_OFF + H_DIM].set(b4)
    bpack = bpack.at[0, B5_OFF:B5_OFF + IMAGE_SIZE].set(b5)

    return (w1p, w23p, w4p, w5p, bpack)


@jax.jit
def vae_forward(x, eps, packed_params):
    B, D = x.shape
    w1p, w23p, w4p, w5p, bpack = packed_params

    # pad batch to a multiple of the batch tile and features to lane-dense width
    B_pad = pl.cdiv(B, TILE_B) * TILE_B
    x_p = jnp.zeros((B_pad, D_PAD), jnp.float32).at[:B, :D].set(x)
    eps_p = jnp.zeros((B_pad, Z_DIM), jnp.float32).at[:B, :].set(eps)

    grid = (B_pad // TILE_B,)

    def tiled(shape):
        return pl.BlockSpec(shape, lambda i: (i, 0))

    def resident(shape):
        return pl.BlockSpec(shape, lambda i: (0, 0))

    flops = 2 * B_pad * (D_PAD * H_PAD + H_PAD * Z2_PAD + Z_DIM * H_PAD + H_PAD * D_PAD)
    transcendentals = B_pad * (Z_DIM + D_PAD)           # exp (reparam) + sigmoid
    bytes_accessed = (
        x_p.size * 4 + eps_p.size * 4 + B_pad * D_PAD * 4
        + (w1p.size + w23p.size + w4p.size + w5p.size) * 2
        + bpack.size * 4
    )

    out = pl.pallas_call(
        vae_kernel,
        out_shape=jax.ShapeDtypeStruct((B_pad, D_PAD), jnp.float32),
        grid_spec=pltpu.PrefetchScalarGridSpec(
            num_scalar_prefetch=0,
            grid=grid,
            in_specs=[
                tiled((TILE_B, D_PAD)),     # x tile
                tiled((TILE_B, Z_DIM)),     # eps tile
                resident(w1p.shape),        # weights: DMA'd once, stay resident
                resident(w23p.shape),
                resident(w4p.shape),
                resident(w5p.shape),
                resident(bpack.shape),      # packed biases
            ],
            out_specs=tiled((TILE_B, D_PAD)),
        ),
        compiler_params=pltpu.CompilerParams(
            dimension_semantics=("parallel",),
        ),
        cost_estimate=pl.CostEstimate(
            flops=flops,
            transcendentals=transcendentals,
            bytes_accessed=bytes_accessed,
        ),
    )(x_p, eps_p, w1p, w23p, w4p, w5p, bpack)

    return out[:B, :IMAGE_SIZE]


def vae_forward_ref(x, eps, params):
    """Plain-JAX reference mimicking the kernel precision (bf16 matmul, fp32 acc)."""
    w1, b1, w2, b2, w3, b3, w4, b4, w5, b5 = params
    bf = jnp.bfloat16

    def mm(a, w):
        return jnp.dot(a.astype(bf), w.astype(bf), preferred_element_type=jnp.float32)

    h = jnp.maximum(mm(x, w1) + b1, 0.0)
    mu = mm(h, w2) + b2
    log_var = mm(h, w3) + b3
    z = mu + eps * jnp.exp(log_var * 0.5)
    h2 = jnp.maximum(mm(z, w4) + b4, 0.0)
    return jax.nn.sigmoid(mm(h2, w5) + b5)


if __name__ == "__main__":
    key = jax.random.PRNGKey(0)
    k_params, k_x, k_eps = jax.random.split(key, 3)

    B = 200  # non-multiple of TILE_B to exercise batch padding (pads to 256 -> 2 grid steps)
    params = init_params(k_params)
    packed = pack_params(params)

    x = jax.random.uniform(k_x, (B, IMAGE_SIZE), jnp.float32)       # image-like input
    eps = jax.random.normal(k_eps, (B, Z_DIM), jnp.float32)         # torch.randn_like(std)

    out = jax.block_until_ready(vae_forward(x, eps, packed))
    ref = vae_forward_ref(x, eps, params)

    assert out.shape == (B, IMAGE_SIZE), out.shape
    max_err = float(jnp.max(jnp.abs(out - ref)))
    assert jnp.allclose(out, ref, atol=1e-2, rtol=1e-2), f"mismatch vs reference: {max_err}"

    print("KERNEL_OK")
</pallas_src>

<mosaic_0001>
module attributes {stable_mosaic.version = 11 : i64} {
  func.func @vae_kernel(%arg0: i32, %arg1: memref<128x896xf32, #tpu.memory_space<vmem>>, %arg2: memref<128x20xf32, #tpu.memory_space<vmem>>, %arg3: memref<896x512xbf16, #tpu.memory_space<vmem>>, %arg4: memref<512x256xbf16, #tpu.memory_space<vmem>>, %arg5: memref<20x512xbf16, #tpu.memory_space<vmem>>, %arg6: memref<512x896xbf16, #tpu.memory_space<vmem>>, %arg7: memref<1x2176xf32, #tpu.memory_space<vmem>>, %arg8: memref<128x896xf32, #tpu.memory_space<vmem>>) attributes {dimension_semantics = [#tpu.dimension_semantics<parallel>], iteration_bounds = array<i64: 2>, scalar_prefetch = 0 : i64, scratch_operands = 0 : i64, tpu.core_type = #tpu.core_type<tc>, window_params = [{transform_indices = @transform_0, window_bounds = array<i64: 128, 896>}, {transform_indices = @transform_1, window_bounds = array<i64: 128, 20>}, {pipeline_mode = #tpu.pipeline_mode<synchronous>, transform_indices = @transform_2, window_bounds = array<i64: 896, 512>}, {pipeline_mode = #tpu.pipeline_mode<synchronous>, transform_indices = @transform_3, window_bounds = array<i64: 512, 256>}, {pipeline_mode = #tpu.pipeline_mode<synchronous>, transform_indices = @transform_4, window_bounds = array<i64: 20, 512>}, {pipeline_mode = #tpu.pipeline_mode<synchronous>, transform_indices = @transform_5, window_bounds = array<i64: 512, 896>}, {pipeline_mode = #tpu.pipeline_mode<synchronous>, transform_indices = @transform_6, window_bounds = array<i64: 1, 2176>}, {transform_indices = @transform_7, window_bounds = array<i64: 128, 896>}]} {
    %c0 = arith.constant 0 : index
    %c0_0 = arith.constant 0 : index
    %0 = vector.load %arg1[%c0, %c0_0] : memref<128x896xf32, #tpu.memory_space<vmem>>, vector<128x896xf32>
    %1 = arith.truncf %0 : vector<128x896xf32> to vector<128x896xbf16>
    %c0_1 = arith.constant 0 : index
    %c0_2 = arith.constant 0 : index
    %2 = vector.load %arg3[%c0_1, %c0_2] : memref<896x512xbf16, #tpu.memory_space<vmem>>, vector<896x512xbf16>
    %cst = arith.constant dense<0.000000e+00> : vector<128x512xf32>
    %3 = tpu.matmul %1, %2, %cst {dimension_numbers = #tpu.dot_dimension_numbers<[1], [0], [0], [1], [0, 0, 1, 1], [], []>} : vector<128x896xbf16>, vector<896x512xbf16>, vector<128x512xf32> -> vector<128x512xf32>
    %c0_3 = arith.constant 0 : index
    %c0_4 = arith.constant 0 : index
    %4 = vector.load %arg7[%c0_3, %c0_4] : memref<1x2176xf32, #tpu.memory_space<vmem>>, vector<1x512xf32>
    %5 = vector.broadcast %4 : vector<1x512xf32> to vector<128x512xf32>
    %6 = arith.addf %3, %5 : vector<128x512xf32>
    %cst_5 = arith.constant 0.000000e+00 : f32
    %7 = vector.broadcast %cst_5 : f32 to vector<128x512xf32>
    %8 = arith.maximumf %6, %7 : vector<128x512xf32>
    %9 = arith.truncf %8 : vector<128x512xf32> to vector<128x512xbf16>
    %c0_6 = arith.constant 0 : index
    %c0_7 = arith.constant 0 : index
    %10 = vector.load %arg4[%c0_6, %c0_7] : memref<512x256xbf16, #tpu.memory_space<vmem>>, vector<512x256xbf16>
    %cst_8 = arith.constant dense<0.000000e+00> : vector<128x256xf32>
    %11 = tpu.matmul %9, %10, %cst_8 {dimension_numbers = #tpu.dot_dimension_numbers<[1], [0], [0], [1], [0, 0, 1, 1], [], []>} : vector<128x512xbf16>, vector<512x256xbf16>, vector<128x256xf32> -> vector<128x256xf32>
    %c0_9 = arith.constant 0 : index
    %c512 = arith.constant 512 : index
    %12 = vector.load %arg7[%c0_9, %c512] : memref<1x2176xf32, #tpu.memory_space<vmem>>, vector<1x256xf32>
    %13 = vector.broadcast %12 : vector<1x256xf32> to vector<128x256xf32>
    %14 = arith.addf %11, %13 : vector<128x256xf32>
    %15 = vector.extract_strided_slice %14 {offsets = [0, 0], sizes = [128, 20], strides = [1, 1]} : vector<128x256xf32> to vector<128x20xf32>
    %16 = vector.extract_strided_slice %14 {offsets = [0, 128], sizes = [128, 20], strides = [1, 1]} : vector<128x256xf32> to vector<128x20xf32>
    %c0_10 = arith.constant 0 : index
    %c0_11 = arith.constant 0 : index
    %17 = vector.load %arg2[%c0_10, %c0_11] : memref<128x20xf32, #tpu.memory_space<vmem>>, vector<128x20xf32>
    %cst_12 = arith.constant 5.000000e-01 : f32
    %18 = vector.broadcast %cst_12 : f32 to vector<128x20xf32>
    %19 = arith.mulf %16, %18 : vector<128x20xf32>
    %20 = math.exp %19 : vector<128x20xf32>
    %21 = arith.mulf %17, %20 : vector<128x20xf32>
    %22 = arith.addf %15, %21 : vector<128x20xf32>
    %23 = arith.truncf %22 : vector<128x20xf32> to vector<128x20xbf16>
    %c0_13 = arith.constant 0 : index
    %c0_14 = arith.constant 0 : index
    %24 = vector.load %arg5[%c0_13, %c0_14] : memref<20x512xbf16, #tpu.memory_space<vmem>>, vector<20x512xbf16>
    %cst_15 = arith.constant dense<0.000000e+00> : vector<128x512xf32>
    %25 = tpu.matmul %23, %24, %cst_15 {dimension_numbers = #tpu.dot_dimension_numbers<[1], [0], [0], [1], [0, 0, 1, 1], [], []>} : vector<128x20xbf16>, vector<20x512xbf16>, vector<128x512xf32> -> vector<128x512xf32>
    %c0_16 = arith.constant 0 : index
    %c768 = arith.constant 768 : index
    %26 = vector.load %arg7[%c0_16, %c768] : memref<1x2176xf32, #tpu.memory_space<vmem>>, vector<1x512xf32>
    %27 = vector.broadcast %26 : vector<1x512xf32> to vector<128x512xf32>
    %28 = arith.addf %25, %27 : vector<128x512xf32>
    %cst_17 = arith.constant 0.000000e+00 : f32
    %29 = vector.broadcast %cst_17 : f32 to vector<128x512xf32>
    %30 = arith.maximumf %28, %29 : vector<128x512xf32>
    %31 = arith.truncf %30 : vector<128x512xf32> to vector<128x512xbf16>
    %c0_18 = arith.constant 0 : index
    %c0_19 = arith.constant 0 : index
    %32 = vector.load %arg6[%c0_18, %c0_19] : memref<512x896xbf16, #tpu.memory_space<vmem>>, vector<512x896xbf16>
    %cst_20 = arith.constant dense<0.000000e+00> : vector<128x896xf32>
    %33 = tpu.matmul %31, %32, %cst_20 {dimension_numbers = #tpu.dot_dimension_numbers<[1], [0], [0], [1], [0, 0, 1, 1], [], []>} : vector<128x512xbf16>, vector<512x896xbf16>, vector<128x896xf32> -> vector<128x896xf32>
    %c0_21 = arith.constant 0 : index
    %c1280 = arith.constant 1280 : index
    %34 = vector.load %arg7[%c0_21, %c1280] : memref<1x2176xf32, #tpu.memory_space<vmem>>, vector<1x896xf32>
    %35 = vector.broadcast %34 : vector<1x896xf32> to vector<128x896xf32>
    %36 = arith.addf %33, %35 : vector<128x896xf32>
    %37 = arith.negf %36 : vector<128x896xf32>
    %38 = math.exp %37 : vector<128x896xf32>
    %cst_22 = arith.constant 1.000000e+00 : f32
    %39 = vector.broadcast %cst_22 : f32 to vector<128x896xf32>
    %40 = arith.addf %39, %38 : vector<128x896xf32>
    %41 = arith.divf %39, %40 : vector<128x896xf32>
    %c0_23 = arith.constant 0 : index
    %c0_24 = arith.constant 0 : index
    %42 = vector.load %arg8[%c0_23, %c0_24] : memref<128x896xf32, #tpu.memory_space<vmem>>, vector<128x896xf32>
    tpu.vector_store %arg8[%c0_23, %c0_24], %41 {strides = array<i32>} : memref<128x896xf32, #tpu.memory_space<vmem>>, vector<128x896xf32>,
    return
  }
  func.func @transform_0(%arg0: i32) -> (i32, i32) {
    %c0_i32 = arith.constant 0 : i32
    %c0_i32_0 = arith.constant 0 : i32
    return %arg0, %c0_i32 : i32, i32
  }
  func.func @transform_1(%arg0: i32) -> (i32, i32) {
    %c0_i32 = arith.constant 0 : i32
    %c0_i32_0 = arith.constant 0 : i32
    return %arg0, %c0_i32 : i32, i32
  }
  func.func @transform_2(%arg0: i32) -> (i32, i32) {
    %c0_i32 = arith.constant 0 : i32
    %c0_i32_0 = arith.constant 0 : i32
    %c0_i32_1 = arith.constant 0 : i32
    return %c0_i32, %c0_i32_0 : i32, i32
  }
  func.func @transform_3(%arg0: i32) -> (i32, i32) {
    %c0_i32 = arith.constant 0 : i32
    %c0_i32_0 = arith.constant 0 : i32
    %c0_i32_1 = arith.constant 0 : i32
    return %c0_i32, %c0_i32_0 : i32, i32
  }
  func.func @transform_4(%arg0: i32) -> (i32, i32) {
    %c0_i32 = arith.constant 0 : i32
    %c0_i32_0 = arith.constant 0 : i32
    %c0_i32_1 = arith.constant 0 : i32
    return %c0_i32, %c0_i32_0 : i32, i32
  }
  func.func @transform_5(%arg0: i32) -> (i32, i32) {
    %c0_i32 = arith.constant 0 : i32
    %c0_i32_0 = arith.constant 0 : i32
    %c0_i32_1 = arith.constant 0 : i32
    return %c0_i32, %c0_i32_0 : i32, i32
  }
  func.func @transform_6(%arg0: i32) -> (i32, i32) {
    %c0_i32 = arith.constant 0 : i32
    %c0_i32_0 = arith.constant 0 : i32
    %c0_i32_1 = arith.constant 0 : i32
    return %c0_i32, %c0_i32_0 : i32, i32
  }
  func.func @transform_7(%arg0: i32) -> (i32, i32) {
    %c0_i32 = arith.constant 0 : i32
    %c0_i32_0 = arith.constant 0 : i32
    return %arg0, %c0_i32 : i32, i32
  }
}

</mosaic_0001>

<llo_original>
// kernel: vae_forward.1
$region0: #{vae_forward.1}
  #allocation0 [shape = 'u32[]', space=smem, size = 0x4, offset = 0x4, fixed_abs, tag = 'smem constant byte address 0x4 - core index']
  #allocation1 [shape = 'u32[72,128]{1,0:T(1,128)}', space=vmem, size = 0x9000, scoped, tag = 'internal scratch']
  %s0 = inlined_call_operand.vmem [shape: f32[256,896], index: 0, kind: input, shape index: {}]
  %s1 = inlined_call_operand.vmem [shape: f32[256,20], index: 1, kind: input, shape index: {}]
  %s2 = inlined_call_operand.vmem [shape: bf16[896,512], index: 2, kind: input, shape index: {}]
  %s3 = inlined_call_operand.hbm [shape: bf16[512,256], index: 3, kind: input, shape index: {}]
  %s4 = inlined_call_operand.vmem [shape: bf16[20,512], index: 4, kind: input, shape index: {}]
  %s5 = inlined_call_operand.vmem [shape: bf16[512,896], index: 5, kind: input, shape index: {}]
  %s6 = inlined_call_operand.vmem [shape: f32[1,2176], index: 6, kind: input, shape index: {}]
  %s7 = inlined_call_operand.vmem [shape: f32[256,896], index: 7, kind: output, shape index: {}]
  %s8 = sld [smem:[#allocation0]]
  $region65: #{vae_forward.1} parent=0
    _
  %s10 = ssub.s32 1, %s8
  %s11 = scalar_select 0, %s10, %s8
  $region1: #{vae_forward.1} parent=0
    #allocation2 [shape = 'u8[262144]{0}', space=vmem, size = 0x40000, scoped, tag = 'input window, operand 3, single buffered']
    #allocation3 [shape = 's32[2]{0}', space=sflag, size = 0x8, scoped, tag = 'scoped memory for vae_forward.1']
    %12 = vsyncpa [#allocation3], 0
    loop: start=0, step=1, limit=4
    $region2: #{vae_forward.1} parent=1 // loop_pre_header
      _
    $region3: #{vae_forward.1} parent=1 // loop_header
      %s14 = sphi 0, %s18
      %p15 = scmp.ge.s32.totalorder %s14, 4
      %s24 = sphi 0, %s26
      %s27 = sphi 0, %s24
      %s28 = sphi 0, %s27
      %s44 = sphi 0, %s28
      %s50 = sphi 0, %s52
      %s53 = sphi 0, %s50
      %s54 = sphi 0, %s53
      %s70 = sphi 0, %s54
      %s74 = sphi 0, %s74
      %s76 = sphi 0, %s74
      %s77 = sphi 0, %s76
      %s91 = sphi 0, %s77
      %s95 = sphi 0, %s95
      %s97 = sphi 0, %s95
      %s98 = sphi 0, %s97
      %s112 = sphi 0, %s98
      %s116 = sphi 0, %s116
      %s118 = sphi 0, %s116
      %s119 = sphi 0, %s118
      %s133 = sphi 0, %s119
      %s137 = sphi 0, %s137
      %s139 = sphi 0, %s137
      %s140 = sphi 0, %s139
      %s154 = sphi 0, %s140
      %s158 = sphi 0, %s158
      %s160 = sphi 0, %s158
      %s161 = sphi 0, %s160
      %s175 = sphi 0, %s161
      %s181 = sphi 0, %s183
      %s184 = sphi 0, %s181
      %s185 = sphi 0, %s184
      %s201 = sphi 0, %s185
    $region4: #{vae_forward.1} parent=1 // loop_header_branch
      %17 = sbr.rel (%p15) target = $region8
    $region5: #{vae_forward.1} parent=1 // loop_body
      %s19 = ssub.s32 %s14, 1
      %s20 = ssub.s32 %s14, 2
      %s21 = sadd.s32 %s14, 1
      %s22 = ssub.s32 %s14, %s21
      %p23 = scmp.eq.s32.totalorder %s22, 0
      %s25 = sadd.s32 %s24, 1
      %s26 = scalar_select %p23, %s24, %s25
      %p29 = pneg %p23
      %p30 = scmp.eq.s32.totalorder %s14, 1
      %p31 = por %p29, %p30
      %p32 = scmp.ne.s32.totalorder %s24, %s27
      %p33 = scmp.eq.s32.totalorder %s14, 0
      %p34 = por %p32, %p33
      %p35 = scmp.ne.s32.totalorder %s24, %s27
      %p36 = scmp.eq.s32.totalorder %s19, 1
      %p37 = por %p35, %p36
      %p38 = scmp.ne.s32.totalorder %s27, %s28
      %p39 = scmp.eq.s32.totalorder %s19, 0
      %p40 = por %p38, %p39
      %p41 = scmp.ne.s32.totalorder %s27, %s28
      %p42 = scmp.eq.s32.totalorder %s20, 1
      %p43 = por %p41, %p42
      %p45 = scmp.ne.s32.totalorder %s28, %s44
      %p46 = scmp.eq.s32.totalorder %s20, 0
      %p47 = por %p45, %p46
      %s48 = ssub.s32 %s14, %s21
      %p49 = scmp.eq.s32.totalorder %s48, 0
      %s51 = sadd.s32 %s50, 1
      %s52 = scalar_select %p49, %s50, %s51
      %p55 = pneg %p49
      %p56 = scmp.eq.s32.totalorder %s14, 1
      %p57 = por %p55, %p56
      %p58 = scmp.ne.s32.totalorder %s50, %s53
      %p59 = scmp.eq.s32.totalorder %s14, 0
      %p60 = por %p58, %p59
      %p61 = scmp.ne.s32.totalorder %s50, %s53
      %p62 = scmp.eq.s32.totalorder %s19, 1
      %p63 = por %p61, %p62
      %p64 = scmp.ne.s32.totalorder %s53, %s54
      %p65 = scmp.eq.s32.totalorder %s19, 0
      %p66 = por %p64, %p65
      %p67 = scmp.ne.s32.totalorder %s53, %s54
      %p68 = scmp.eq.s32.totalorder %s20, 1
      %p69 = por %p67, %p68
      %p71 = scmp.ne.s32.totalorder %s54, %s70
      %p72 = scmp.eq.s32.totalorder %s20, 0
      %p73 = por %p71, %p72
      %s75 = sadd.s32 %s74, 1
      %p78 = scmp.eq.s32.totalorder %s14, 1
      %p79 = scmp.ne.s32.totalorder %s74, %s76
      %p80 = scmp.eq.s32.totalorder %s14, 0
      %p81 = por %p79, %p80
      %p82 = scmp.ne.s32.totalorder %s74, %s76
      %p83 = scmp.eq.s32.totalorder %s19, 1
      %p84 = por %p82, %p83
      %p85 = scmp.ne.s32.totalorder %s76, %s77
      %p86 = scmp.eq.s32.totalorder %s19, 0
      %p87 = por %p85, %p86
      %p88 = scmp.ne.s32.totalorder %s76, %s77
      %p89 = scmp.eq.s32.totalorder %s20, 1
      %p90 = por %p88, %p89
      %p92 = scmp.ne.s32.totalorder %s77, %s91
      %p93 = scmp.eq.s32.totalorder %s20, 0
      %p94 = por %p92, %p93
      %s96 = sadd.s32 %s95, 1
      %p99 = scmp.eq.s32.totalorder %s14, 1
      %p100 = scmp.ne.s32.totalorder %s95, %s97
      %p101 = scmp.eq.s32.totalorder %s14, 0
      %p102 = por %p100, %p101
      %p103 = scmp.ne.s32.totalorder %s95, %s97
      %p104 = scmp.eq.s32.totalorder %s19, 1
      %p105 = por %p103, %p104
      %p106 = scmp.ne.s32.totalorder %s97, %s98
      %p107 = scmp.eq.s32.totalorder %s19, 0
      %p108 = por %p106, %p107
      %p109 = scmp.ne.s32.totalorder %s97, %s98
      %p110 = scmp.eq.s32.totalorder %s20, 1
      %p111 = por %p109, %p110
      %p113 = scmp.ne.s32.totalorder %s98, %s112
      %p114 = scmp.eq.s32.totalorder %s20, 0
      %p115 = por %p113, %p114
      %s117 = sadd.s32 %s116, 1
      %p120 = scmp.eq.s32.totalorder %s14, 1
      %p121 = scmp.ne.s32.totalorder %s116, %s118
      %p122 = scmp.eq.s32.totalorder %s14, 0
      %p123 = por %p121, %p122
      %p124 = scmp.ne.s32.totalorder %s116, %s118
      %p125 = scmp.eq.s32.totalorder %s19, 1
      %p126 = por %p124, %p125
      %p127 = scmp.ne.s32.totalorder %s118, %s119
      %p128 = scmp.eq.s32.totalorder %s19, 0
      %p129 = por %p127, %p128
      %p130 = scmp.ne.s32.totalorder %s118, %s119
      %p131 = scmp.eq.s32.totalorder %s20, 1
      %p132 = por %p130, %p131
      %p134 = scmp.ne.s32.totalorder %s119, %s133
      %p135 = scmp.eq.s32.totalorder %s20, 0
      %p136 = por %p134, %p135
      %s138 = sadd.s32 %s137, 1
      %p141 = scmp.eq.s32.totalorder %s14, 1
      %p142 = scmp.ne.s32.totalorder %s137, %s139
      %p143 = scmp.eq.s32.totalorder %s14, 0
      %p144 = por %p142, %p143
      %p145 = scmp.ne.s32.totalorder %s137, %s139
      %p146 = scmp.eq.s32.totalorder %s19, 1
      %p147 = por %p145, %p146
      %p148 = scmp.ne.s32.totalorder %s139, %s140
      %p149 = scmp.eq.s32.totalorder %s19, 0
      %p150 = por %p148, %p149
      %p151 = scmp.ne.s32.totalorder %s139, %s140
      %p152 = scmp.eq.s32.totalorder %s20, 1
      %p153 = por %p151, %p152
      %p155 = scmp.ne.s32.totalorder %s140, %s154
      %p156 = scmp.eq.s32.totalorder %s20, 0
      %p157 = por %p155, %p156
      %s159 = sadd.s32 %s158, 1
      %p162 = scmp.eq.s32.totalorder %s14, 1
      %p163 = scmp.ne.s32.totalorder %s158, %s160
      %p164 = scmp.eq.s32.totalorder %s14, 0
      %p165 = por %p163, %p164
      %p166 = scmp.ne.s32.totalorder %s158, %s160
      %p167 = scmp.eq.s32.totalorder %s19, 1
      %p168 = por %p166, %p167
      %p169 = scmp.ne.s32.totalorder %s160, %s161
      %p170 = scmp.eq.s32.totalorder %s19, 0
      %p171 = por %p169, %p170
      %p172 = scmp.ne.s32.totalorder %s160, %s161
      %p173 = scmp.eq.s32.totalorder %s20, 1
      %p174 = por %p172, %p173
      %p176 = scmp.ne.s32.totalorder %s161, %s175
      %p177 = scmp.eq.s32.totalorder %s20, 0
      %p178 = por %p176, %p177
      %s179 = ssub.s32 %s14, %s21
      %p180 = scmp.eq.s32.totalorder %s179, 0
      %s182 = sadd.s32 %s181, 1
      %s183 = scalar_select %p180, %s181, %s182
      %p186 = pneg %p180
      %p187 = scmp.eq.s32.totalorder %s14, 1
      %p188 = por %p186, %p187
      %p189 = scmp.ne.s32.totalorder %s181, %s184
      %p190 = scmp.eq.s32.totalorder %s14, 0
      %p191 = por %p189, %p190
      %p192 = scmp.ne.s32.totalorder %s181, %s184
      %p193 = scmp.eq.s32.totalorder %s19, 1
      %p194 = por %p192, %p193
      %p195 = scmp.ne.s32.totalorder %s184, %s185
      %p196 = scmp.eq.s32.totalorder %s19, 0
      %p197 = por %p195, %p196
      %p198 = scmp.ne.s32.totalorder %s184, %s185
      %p199 = scmp.eq.s32.totalorder %s20, 1
      %p200 = por %p198, %p199
      %p202 = scmp.ne.s32.totalorder %s185, %s201
      %p203 = scmp.eq.s32.totalorder %s20, 0
      %p204 = por %p202, %p203
      %p205 = scmp.le.s32.totalorder 1, %s14
      %p206 = scmp.lt.s32.totalorder %s14, 3
      %p207 = pnand %p205, %p206
      %p208 = pneg %p207
      // Predicated region
      $region9: #{vae_forward.1} parent=5 // pred_check
        _
      $region10: #{vae_forward.1} parent=5 // pred_check_branch
        %210 = sbr.rel (%p207) target = $region12
      $region11: #{vae_forward.1} parent=5 // pred_region
        %s211 = ssub.s32 %s14, 1
        // Predicated region
        $region13: #{vae_forward.1} parent=11 // pred_check
          %p212 = pneg %p87
        $region14: #{vae_forward.1} parent=11 // pred_check_branch
          %214 = sbr.rel (%p212) target = $region16
        $region15: #{vae_forward.1} parent=11 // pred_region
          _
        $region16: #{vae_forward.1} parent=11 // pred_fallthru
          _
        // Predicated region
        $region17: #{vae_forward.1} parent=11 // pred_check
          %p215 = pneg %p108
        $region18: #{vae_forward.1} parent=11 // pred_check_branch
          %217 = sbr.rel (%p215) target = $region20
        $region19: #{vae_forward.1} parent=11 // pred_region
          %219 = vsyncadd [#allocation3], 0
          %s220 = sshll.u32 %s3, 4
          %s221 = int_to_ptr.hbm [resolvable:$true] %s220
          %s222 = sshll.u32 [#allocation2], 4
          %s223 = int_to_ptr.vmem [resolvable:$true] %s222
          %228 = dma.hbm_to_vmem [thread:$0]  %s221, 8192, %s223, [#allocation3], 128, 128, 8
        $region20: #{vae_forward.1} parent=11 // pred_fallthru
          _
        // Predicated region
        $region21: #{vae_forward.1} parent=11 // pred_check
          %p229 = pneg %p129
        $region22: #{vae_forward.1} parent=11 // pred_check_branch
          %231 = sbr.rel (%p229) target = $region24
        $region23: #{vae_forward.1} parent=11 // pred_region
          _
        $region24: #{vae_forward.1} parent=11 // pred_fallthru
          _
        // Predicated region
        $region25: #{vae_forward.1} parent=11 // pred_check
          %p232 = pneg %p150
        $region26: #{vae_forward.1} parent=11 // pred_check_branch
          %234 = sbr.rel (%p232) target = $region28
        $region27: #{vae_forward.1} parent=11 // pred_region
          _
        $region28: #{vae_forward.1} parent=11 // pred_fallthru
          _
        // Predicated region
        $region29: #{vae_forward.1} parent=11 // pred_check
          %p235 = pneg %p171
        $region30: #{vae_forward.1} parent=11 // pred_check_branch
          %237 = sbr.rel (%p235) target = $region32
        $region31: #{vae_forward.1} parent=11 // pred_region
          _
        $region32: #{vae_forward.1} parent=11 // pred_fallthru
          _
      $region12: #{vae_forward.1} parent=5 // pred_fallthru
        _
      %p238 = scmp.lt.s32.totalorder %s14, 2
      // Predicated region
      $region33: #{vae_forward.1} parent=5 // pred_check
        %p239 = pneg %p238
      $region34: #{vae_forward.1} parent=5 // pred_check_branch
        %241 = sbr.rel (%p239) target = $region36
      $region35: #{vae_forward.1} parent=5 // pred_region
        // Predicated region
        $region37: #{vae_forward.1} parent=35 // pred_check
          %p242 = pneg %p34
        $region38: #{vae_forward.1} parent=35 // pred_check_branch
          %244 = sbr.rel (%p242) target = $region40
        $region39: #{vae_forward.1} parent=35 // pred_region
          %s245 = smul.u32 16, %s14
          %p246 = scmp.lt.s32.totalorder %s245, 31
          %s247 = scalar_select %p246, %s245, 31
          %s248 = smul.addr %s247, 7
          %s249 = smul.addr %s248, 8
          %s250 = scalar_lea.vmem %s0, %s249
          %s251 = smul.u32 16, %s14
        $region40: #{vae_forward.1} parent=35 // pred_fallthru
          _
        // Predicated region
        $region41: #{vae_forward.1} parent=35 // pred_check
          %p252 = pneg %p60
        $region42: #{vae_forward.1} parent=35 // pred_check_branch
          %254 = sbr.rel (%p252) target = $region44
        $region43: #{vae_forward.1} parent=35 // pred_region
          %s255 = smul.u32 16, %s14
          %p256 = scmp.lt.s32.totalorder %s255, 31
          %s257 = scalar_select %p256, %s255, 31
          %s258 = smul.addr %s257, 8
          %s259 = scalar_lea.vmem %s1, %s258
          %s260 = smul.u32 16, %s14
        $region44: #{vae_forward.1} parent=35 // pred_fallthru
          _
      $region36: #{vae_forward.1} parent=5 // pred_fallthru
        _
      %p261 = scmp.le.s32.totalorder 1, %s14
      %p262 = scmp.lt.s32.totalorder %s14, 3
      %p263 = pnand %p261, %p262
      %p264 = pneg %p263
      // Predicated region
      $region45: #{vae_forward.1} parent=5 // pred_check
        _
      $region46: #{vae_forward.1} parent=5 // pred_check_branch
        %266 = sbr.rel (%p263) target = $region48
      $region47: #{vae_forward.1} parent=5 // pred_region
        %s267 = ssub.s32 %s14, 1
        // Predicated region
        $region49: #{vae_forward.1} parent=47 // pred_check
          %p268 = pneg %p108
        $region50: #{vae_forward.1} parent=47 // pred_check_branch
          %270 = sbr.rel (%p268) target = $region52
        $region51: #{vae_forward.1} parent=47 // pred_region
          %272 = dma.done [#allocation3], 8192
        $region52: #{vae_forward.1} parent=47 // pred_fallthru
          _
        %s273 = smul.u32 16, %s19
        %p274 = scmp.lt.s32.totalorder %s273, 31
        %s275 = scalar_select %p274, %s273, 31
        %s276 = smul.addr %s275, 7
        %s277 = smul.addr %s276, 8
        %s278 = scalar_lea.vmem %s0, %s277
        %p279 = pneg %p40
        %p280 = pneg %p37
        %s281 = smul.u32 16, %s19
        %p282 = scmp.lt.s32.totalorder %s281, 31
        %s283 = scalar_select %p282, %s281, 31
        %s284 = smul.addr %s283, 8
        %s285 = scalar_lea.vmem %s1, %s284
        %p286 = pneg %p66
        %p287 = pneg %p63
        %p288 = pneg %p87
        %p289 = pneg %p84
        %p290 = pneg %p108
        %p291 = pneg %p105
        %p292 = pneg %p129
        %p293 = pneg %p126
        %p294 = pneg %p150
        %p295 = pneg %p147
        %p296 = pneg %p171
        %p297 = pneg %p168
        %p298 = pneg %p197
        %p299 = pneg %p194
        %s300 = smul.u32 16, %s19
        %p301 = scmp.lt.s32.totalorder %s300, 31
        %s302 = scalar_select %p301, %s300, 31
        %s303 = smul.addr %s302, 7
        %s304 = smul.addr %s303, 8
        %s305 = scalar_lea.vmem %s7, %s304
        %s306 = smul.u32 16, %s19
        %p307 = scmp.lt.s32.totalorder %s306, 31
        %s308 = scalar_select %p307, %s306, 31
        %s309 = smul.addr %s308, 7
        %s310 = smul.addr %s309, 8
        %s311 = scalar_lea.vmem %s0, %s310
        %s312 = smul.u32 16, %s19
        %s313 = smul.u32 16, %s19
        %p314 = scmp.lt.s32.totalorder %s313, 31
        %s315 = scalar_select %p314, %s313, 31
        %s316 = smul.addr %s315, 8
        %s317 = scalar_lea.vmem %s1, %s316
        %s318 = smul.u32 16, %s19
        %s319 = smul.u32 16, %s19
        %p320 = scmp.lt.s32.totalorder %s319, 31
        %s321 = scalar_select %p320, %s319, 31
        %s322 = smul.addr %s321, 7
        %s323 = smul.addr %s322, 8
        %s324 = scalar_lea.vmem %s7, %s323
        %s325 = smul.u32 16, %s19
        %v327 = vld [vmem:[%s311] sm:$0xff]
        %v328 = vld [vmem:[%s311 + $0x8] sm:$0xff]
        %v329 = vld [vmem:[%s311 + $0x10] sm:$0xff]
        %v330 = vld [vmem:[%s311 + $0x18] sm:$0xff]
        %v331 = vld [vmem:[%s311 + $0x20] sm:$0xff]
        %v332 = vld [vmem:[%s311 + $0x28] sm:$0xff]
        %v333 = vld [vmem:[%s311 + $0x30] sm:$0xff]
        %v334 = vld [vmem:[%s311 + $0x38] sm:$0xff]
        %v335 = vld [vmem:[%s311 + $0x40] sm:$0xff]
        %v336 = vld [vmem:[%s311 + $0x48] sm:$0xff]
        %v337 = vld [vmem:[%s311 + $0x50] sm:$0xff]
        %v338 = vld [vmem:[%s311 + $0x58] sm:$0xff]
        %v339 = vld [vmem:[%s311 + $0x60] sm:$0xff]
        %v340 = vld [vmem:[%s311 + $0x68] sm:$0xff]
        %v341 = vld [vmem:[%s311 + $0x70] sm:$0xff]
        %v342 = vld [vmem:[%s311 + $0x78] sm:$0xff]
        %v343 = vld [vmem:[%s311 + $0x80] sm:$0xff]
        %v344 = vld [vmem:[%s311 + $0x88] sm:$0xff]
        %v345 = vld [vmem:[%s311 + $0x90] sm:$0xff]
        %v346 = vld [vmem:[%s311 + $0x98] sm:$0xff]
        %v347 = vld [vmem:[%s311 + $0xa0] sm:$0xff]
        %v348 = vld [vmem:[%s311 + $0xa8] sm:$0xff]
        %v349 = vld [vmem:[%s311 + $0xb0] sm:$0xff]
        %v350 = vld [vmem:[%s311 + $0xb8] sm:$0xff]
        %v351 = vld [vmem:[%s311 + $0xc0] sm:$0xff]
        %v352 = vld [vmem:[%s311 + $0xc8] sm:$0xff]
        %v353 = vld [vmem:[%s311 + $0xd0] sm:$0xff]
        %v354 = vld [vmem:[%s311 + $0xd8] sm:$0xff]
        %v355 = vld [vmem:[%s311 + $0xe0] sm:$0xff]
        %v356 = vld [vmem:[%s311 + $0xe8] sm:$0xff]
        %v357 = vld [vmem:[%s311 + $0xf0] sm:$0xff]
        %v358 = vld [vmem:[%s311 + $0xf8] sm:$0xff]
        %v359 = vld [vmem:[%s311 + $0x100] sm:$0xff]
        %v360 = vld [vmem:[%s311 + $0x108] sm:$0xff]
        %v361 = vld [vmem:[%s311 + $0x110] sm:$0xff]
        %v362 = vld [vmem:[%s311 + $0x118] sm:$0xff]
        %v363 = vld [vmem:[%s311 + $0x120] sm:$0xff]
        %v364 = vld [vmem:[%s311 + $0x128] sm:$0xff]
        %v365 = vld [vmem:[%s311 + $0x130] sm:$0xff]
        %v366 = vld [vmem:[%s311 + $0x138] sm:$0xff]
        %v367 = vld [vmem:[%s311 + $0x140] sm:$0xff]
        %v368 = vld [vmem:[%s311 + $0x148] sm:$0xff]
        %v369 = vld [vmem:[%s311 + $0x150] sm:$0xff]
        %v370 = vld [vmem:[%s311 + $0x158] sm:$0xff]
        %v371 = vld [vmem:[%s311 + $0x160] sm:$0xff]
        %v372 = vld [vmem:[%s311 + $0x168] sm:$0xff]
        %v373 = vld [vmem:[%s311 + $0x170] sm:$0xff]
        %v374 = vld [vmem:[%s311 + $0x178] sm:$0xff]
        %v375 = vld [vmem:[%s311 + $0x180] sm:$0xff]
        %v376 = vld [vmem:[%s311 + $0x188] sm:$0xff]
        %v377 = vld [vmem:[%s311 + $0x190] sm:$0xff]
        %v378 = vld [vmem:[%s311 + $0x198] sm:$0xff]
        %v379 = vld [vmem:[%s311 + $0x1a0] sm:$0xff]
        %v380 = vld [vmem:[%s311 + $0x1a8] sm:$0xff]
        %v381 = vld [vmem:[%s311 + $0x1b0] sm:$0xff]
        %v382 = vld [vmem:[%s311 + $0x1b8] sm:$0xff]
        %v383 = vld [vmem:[%s311 + $0x1c0] sm:$0xff]
        %v384 = vld [vmem:[%s311 + $0x1c8] sm:$0xff]
        %v385 = vld [vmem:[%s311 + $0x1d0] sm:$0xff]
        %v386 = vld [vmem:[%s311 + $0x1d8] sm:$0xff]
        %v387 = vld [vmem:[%s311 + $0x1e0] sm:$0xff]
        %v388 = vld [vmem:[%s311 + $0x1e8] sm:$0xff]
        %v389 = vld [vmem:[%s311 + $0x1f0] sm:$0xff]
        %v390 = vld [vmem:[%s311 + $0x1f8] sm:$0xff]
        %v391 = vld [vmem:[%s311 + $0x200] sm:$0xff]
        %v392 = vld [vmem:[%s311 + $0x208] sm:$0xff]
        %v393 = vld [vmem:[%s311 + $0x210] sm:$0xff]
        %v394 = vld [vmem:[%s311 + $0x218] sm:$0xff]
        %v395 = vld [vmem:[%s311 + $0x220] sm:$0xff]
        %v396 = vld [vmem:[%s311 + $0x228] sm:$0xff]
        %v397 = vld [vmem:[%s311 + $0x230] sm:$0xff]
        %v398 = vld [vmem:[%s311 + $0x238] sm:$0xff]
        %v399 = vld [vmem:[%s311 + $0x240] sm:$0xff]
        %v400 = vld [vmem:[%s311 + $0x248] sm:$0xff]
        %v401 = vld [vmem:[%s311 + $0x250] sm:$0xff]
        %v402 = vld [vmem:[%s311 + $0x258] sm:$0xff]
        %v403 = vld [vmem:[%s311 + $0x260] sm:$0xff]
        %v404 = vld [vmem:[%s311 + $0x268] sm:$0xff]
        %v405 = vld [vmem:[%s311 + $0x270] sm:$0xff]
        %v406 = vld [vmem:[%s311 + $0x278] sm:$0xff]
        %v407 = vld [vmem:[%s311 + $0x280] sm:$0xff]
        %v408 = vld [vmem:[%s311 + $0x288] sm:$0xff]
        %v409 = vld [vmem:[%s311 + $0x290] sm:$0xff]
        %v410 = vld [vmem:[%s311 + $0x298] sm:$0xff]
        %v411 = vld [vmem:[%s311 + $0x2a0] sm:$0xff]
        %v412 = vld [vmem:[%s311 + $0x2a8] sm:$0xff]
        %v413 = vld [vmem:[%s311 + $0x2b0] sm:$0xff]
        %v414 = vld [vmem:[%s311 + $0x2b8] sm:$0xff]
        %v415 = vld [vmem:[%s311 + $0x2c0] sm:$0xff]
        %v416 = vld [vmem:[%s311 + $0x2c8] sm:$0xff]
        %v417 = vld [vmem:[%s311 + $0x2d0] sm:$0xff]
        %v418 = vld [vmem:[%s311 + $0x2d8] sm:$0xff]
        %v419 = vld [vmem:[%s311 + $0x2e0] sm:$0xff]
        %v420 = vld [vmem:[%s311 + $0x2e8] sm:$0xff]
        %v421 = vld [vmem:[%s311 + $0x2f0] sm:$0xff]
        %v422 = vld [vmem:[%s311 + $0x2f8] sm:$0xff]
        %v423 = vld [vmem:[%s311 + $0x300] sm:$0xff]
        %v424 = vld [vmem:[%s311 + $0x308] sm:$0xff]
        %v425 = vld [vmem:[%s311 + $0x310] sm:$0xff]
        %v426 = vld [vmem:[%s311 + $0x318] sm:$0xff]
        %v427 = vld [vmem:[%s311 + $0x320] sm:$0xff]
        %v428 = vld [vmem:[%s311 + $0x328] sm:$0xff]
        %v429 = vld [vmem:[%s311 + $0x330] sm:$0xff]
        %v430 = vld [vmem:[%s311 + $0x338] sm:$0xff]
        %v431 = vld [vmem:[%s311 + $0x340] sm:$0xff]
        %v432 = vld [vmem:[%s311 + $0x348] sm:$0xff]
        %v433 = vld [vmem:[%s311 + $0x350] sm:$0xff]
        %v434 = vld [vmem:[%s311 + $0x358] sm:$0xff]
        %v435 = vld [vmem:[%s311 + $0x360] sm:$0xff]
        %v436 = vld [vmem:[%s311 + $0x368] sm:$0xff]
        %v437 = vld [vmem:[%s311 + $0x370] sm:$0xff]
        %v438 = vld [vmem:[%s311 + $0x378] sm:$0xff]
        %v439 = vpack.c.bf16 %v334, %v327
        %v440 = vpack.c.bf16 %v335, %v328
        %v441 = vpack.c.bf16 %v336, %v329
        %v442 = vpack.c.bf16 %v337, %v330
        %v443 = vpack.c.bf16 %v338, %v331
        %v444 = vpack.c.bf16 %v339, %v332
        %v445 = vpack.c.bf16 %v340, %v333
        %v446 = vpack.c.bf16 %v348, %v341
        %v447 = vpack.c.bf16 %v349, %v342
        %v448 = vpack.c.bf16 %v350, %v343
        %v449 = vpack.c.bf16 %v351, %v344
        %v450 = vpack.c.bf16 %v352, %v345
        %v451 = vpack.c.bf16 %v353, %v346
        %v452 = vpack.c.bf16 %v354, %v347
        %v453 = vpack.c.bf16 %v362, %v355
        %v454 = vpack.c.bf16 %v363, %v356
        %v455 = vpack.c.bf16 %v364, %v357
        %v456 = vpack.c.bf16 %v365, %v358
        %v457 = vpack.c.bf16 %v366, %v359
        %v458 = vpack.c.bf16 %v367, %v360
        %v459 = vpack.c.bf16 %v368, %v361
        %v460 = vpack.c.bf16 %v376, %v369
        %v461 = vpack.c.bf16 %v377, %v370
        %v462 = vpack.c.bf16 %v378, %v371
        %v463 = vpack.c.bf16 %v379, %v372
        %v464 = vpack.c.bf16 %v380, %v373
        %v465 = vpack.c.bf16 %v381, %v374
        %v466 = vpack.c.bf16 %v382, %v375
        %v467 = vpack.c.bf16 %v390, %v383
        %v468 = vpack.c.bf16 %v391, %v384
        %v469 = vpack.c.bf16 %v392, %v385
        %v470 = vpack.c.bf16 %v393, %v386
        %v471 = vpack.c.bf16 %v394, %v387
        %v472 = vpack.c.bf16 %v395, %v388
        %v473 = vpack.c.bf16 %v396, %v389
        %v474 = vpack.c.bf16 %v404, %v397
        %v475 = vpack.c.bf16 %v405, %v398
        %v476 = vpack.c.bf16 %v406, %v399
        %v477 = vpack.c.bf16 %v407, %v400
        %v478 = vpack.c.bf16 %v408, %v401
        %v479 = vpack.c.bf16 %v409, %v402
        %v480 = vpack.c.bf16 %v410, %v403
        %v481 = vpack.c.bf16 %v418, %v411
        %v482 = vpack.c.bf16 %v419, %v412
        %v483 = vpack.c.bf16 %v420, %v413
        %v484 = vpack.c.bf16 %v421, %v414
        %v485 = vpack.c.bf16 %v422, %v415
        %v486 = vpack.c.bf16 %v423, %v416
        %v487 = vpack.c.bf16 %v424, %v417
        %v488 = vpack.c.bf16 %v432, %v425
        %v489 = vpack.c.bf16 %v433, %v426
        %v490 = vpack.c.bf16 %v434, %v427
        %v491 = vpack.c.bf16 %v435, %v428
        %v492 = vpack.c.bf16 %v436, %v429
        %v493 = vpack.c.bf16 %v437, %v430
        %v494 = vpack.c.bf16 %v438, %v431
        %v495 = vld [vmem:[%s2] sm:$0xff]
        %v496 = vld [vmem:[%s2 + $0x8] sm:$0xff]
        %v497 = vld [vmem:[%s2 + $0x10] sm:$0xff]
        %v498 = vld [vmem:[%s2 + $0x18] sm:$0xff]
        %v499 = vld [vmem:[%s2 + $0x20] sm:$0xff]
        %v500 = vld [vmem:[%s2 + $0x28] sm:$0xff]
        %v501 = vld [vmem:[%s2 + $0x30] sm:$0xff]
        %v502 = vld [vmem:[%s2 + $0x38] sm:$0xff]
        %v503 = vld [vmem:[%s2 + $0x40] sm:$0xff]
        %v504 = vld [vmem:[%s2 + $0x48] sm:$0xff]
        %v505 = vld [vmem:[%s2 + $0x50] sm:$0xff]
        %v506 = vld [vmem:[%s2 + $0x58] sm:$0xff]
        %v507 = vld [vmem:[%s2 + $0x60] sm:$0xff]
        %v508 = vld [vmem:[%s2 + $0x68] sm:$0xff]
        %v509 = vld [vmem:[%s2 + $0x70] sm:$0xff]
        %v510 = vld [vmem:[%s2 + $0x78] sm:$0xff]
        %v511 = vld [vmem:[%s2 + $0x80] sm:$0xff]
        %v512 = vld [vmem:[%s2 + $0x88] sm:$0xff]
        %v513 = vld [vmem:[%s2 + $0x90] sm:$0xff]
        %v514 = vld [vmem:[%s2 + $0x98] sm:$0xff]
        %v515 = vld [vmem:[%s2 + $0xa0] sm:$0xff]
        %v516 = vld [vmem:[%s2 + $0xa8] sm:$0xff]
        %v517 = vld [vmem:[%s2 + $0xb0] sm:$0xff]
        %v518 = vld [vmem:[%s2 + $0xb8] sm:$0xff]
        %v519 = vld [vmem:[%s2 + $0xc0] sm:$0xff]
        %v520 = vld [vmem:[%s2 + $0xc8] sm:$0xff]
        %v521 = vld [vmem:[%s2 + $0xd0] sm:$0xff]
        %v522 = vld [vmem:[%s2 + $0xd8] sm:$0xff]
        %v523 = vld [vmem:[%s2 + $0xe0] sm:$0xff]
        %v524 = vld [vmem:[%s2 + $0xe8] sm:$0xff]
        %v525 = vld [vmem:[%s2 + $0xf0] sm:$0xff]
        %v526 = vld [vmem:[%s2 + $0xf8] sm:$0xff]
        %v527 = vld [vmem:[%s2 + $0x100] sm:$0xff]
        %v528 = vld [vmem:[%s2 + $0x108] sm:$0xff]
        %v529 = vld [vmem:[%s2 + $0x110] sm:$0xff]
        %v530 = vld [vmem:[%s2 + $0x118] sm:$0xff]
        %v531 = vld [vmem:[%s2 + $0x120] sm:$0xff]
        %v532 = vld [vmem:[%s2 + $0x128] sm:$0xff]
        %v533 = vld [vmem:[%s2 + $0x130] sm:$0xff]
        %v534 = vld [vmem:[%s2 + $0x138] sm:$0xff]
        %v535 = vld [vmem:[%s2 + $0x140] sm:$0xff]
        %v536 = vld [vmem:[%s2 + $0x148] sm:$0xff]
        %v537 = vld [vmem:[%s2 + $0x150] sm:$0xff]
        %v538 = vld [vmem:[%s2 + $0x158] sm:$0xff]
        %v539 = vld [vmem:[%s2 + $0x160] sm:$0xff]
        %v540 = vld [vmem:[%s2 + $0x168] sm:$0xff]
        %v541 = vld [vmem:[%s2 + $0x170] sm:$0xff]
        %v542 = vld [vmem:[%s2 + $0x178] sm:$0xff]
        %v543 = vld [vmem:[%s2 + $0x180] sm:$0xff]
        %v544 = vld [vmem:[%s2 + $0x188] sm:$0xff]
        %v545 = vld [vmem:[%s2 + $0x190] sm:$0xff]
        %v546 = vld [vmem:[%s2 + $0x198] sm:$0xff]
        %v547 = vld [vmem:[%s2 + $0x1a0] sm:$0xff]
        %v548 = vld [vmem:[%s2 + $0x1a8] sm:$0xff]
        %v549 = vld [vmem:[%s2 + $0x1b0] sm:$0xff]
        %v550 = vld [vmem:[%s2 + $0x1b8] sm:$0xff]
        %v551 = vld [vmem:[%s2 + $0x1c0] sm:$0xff]
        %v552 = vld [vmem:[%s2 + $0x1c8] sm:$0xff]
        %v553 = vld [vmem:[%s2 + $0x1d0] sm:$0xff]
        %v554 = vld [vmem:[%s2 + $0x1d8] sm:$0xff]
        %v555 = vld [vmem:[%s2 + $0x1e0] sm:$0xff]
        %v556 = vld [vmem:[%s2 + $0x1e8] sm:$0xff]
        %v557 = vld [vmem:[%s2 + $0x1f0] sm:$0xff]
        %v558 = vld [vmem:[%s2 + $0x1f8] sm:$0xff]
        %v559 = vld [vmem:[%s2 + $0x200] sm:$0xff]
        %v560 = vld [vmem:[%s2 + $0x208] sm:$0xff]
        %v561 = vld [vmem:[%s2 + $0x210] sm:$0xff]
        %v562 = vld [vmem:[%s2 + $0x218] sm:$0xff]
        %v563 = vld [vmem:[%s2 + $0x220] sm:$0xff]
        %v564 = vld [vmem:[%s2 + $0x228] sm:$0xff]
        %v565 = vld [vmem:[%s2 + $0x230] sm:$0xff]
        %v566 = vld [vmem:[%s2 + $0x238] sm:$0xff]
        %v567 = vld [vmem:[%s2 + $0x240] sm:$0xff]
        %v568 = vld [vmem:[%s2 + $0x248] sm:$0xff]
        %v569 = vld [vmem:[%s2 + $0x250] sm:$0xff]
        %v570 = vld [vmem:[%s2 + $0x258] sm:$0xff]
        %v571 = vld [vmem:[%s2 + $0x260] sm:$0xff]
        %v572 = vld [vmem:[%s2 + $0x268] sm:$0xff]
        %v573 = vld [vmem:[%s2 + $0x270] sm:$0xff]
        %v574 = vld [vmem:[%s2 + $0x278] sm:$0xff]
        %v575 = vld [vmem:[%s2 + $0x280] sm:$0xff]
        %v576 = vld [vmem:[%s2 + $0x288] sm:$0xff]
        %v577 = vld [vmem:[%s2 + $0x290] sm:$0xff]
        %v578 = vld [vmem:[%s2 + $0x298] sm:$0xff]
        %v579 = vld [vmem:[%s2 + $0x2a0] sm:$0xff]
        %v580 = vld [vmem:[%s2 + $0x2a8] sm:$0xff]
        %v581 = vld [vmem:[%s2 + $0x2b0] sm:$0xff]
        %v582 = vld [vmem:[%s2 + $0x2b8] sm:$0xff]
        %v583 = vld [vmem:[%s2 + $0x2c0] sm:$0xff]
        %v584 = vld [vmem:[%s2 + $0x2c8] sm:$0xff]
        %v585 = vld [vmem:[%s2 + $0x2d0] sm:$0xff]
        %v586 = vld [vmem:[%s2 + $0x2d8] sm:$0xff]
        %v587 = vld [vmem:[%s2 + $0x2e0] sm:$0xff]
        %v588 = vld [vmem:[%s2 + $0x2e8] sm:$0xff]
        %v589 = vld [vmem:[%s2 + $0x2f0] sm:$0xff]
        %v590 = vld [vmem:[%s2 + $0x2f8] sm:$0xff]
        %v591 = vld [vmem:[%s2 + $0x300] sm:$0xff]
        %v592 = vld [vmem:[%s2 + $0x308] sm:$0xff]
        %v593 = vld [vmem:[%s2 + $0x310] sm:$0xff]
        %v594 = vld [vmem:[%s2 + $0x318] sm:$0xff]
        %v595 = vld [vmem:[%s2 + $0x320] sm:$0xff]
        %v596 = vld [vmem:[%s2 + $0x328] sm:$0xff]
        %v597 = vld [vmem:[%s2 + $0x330] sm:$0xff]
        %v598 = vld [vmem:[%s2 + $0x338] sm:$0xff]
        %v599 = vld [vmem:[%s2 + $0x340] sm:$0xff]
        %v600 = vld [vmem:[%s2 + $0x348] sm:$0xff]
        %v601 = vld [vmem:[%s2 + $0x350] sm:$0xff]
        %v602 = vld [vmem:[%s2 + $0x358] sm:$0xff]
        %v603 = vld [vmem:[%s2 + $0x360] sm:$0xff]
        %v604 = vld [vmem:[%s2 + $0x368] sm:$0xff]
        %v605 = vld [vmem:[%s2 + $0x370] sm:$0xff]
        %v606 = vld [vmem:[%s2 + $0x378] sm:$0xff]
        %v607 = vld [vmem:[%s2 + $0x380] sm:$0xff]
        %v608 = vld [vmem:[%s2 + $0x388] sm:$0xff]
        %v609 = vld [vmem:[%s2 + $0x390] sm:$0xff]
        %v610 = vld [vmem:[%s2 + $0x398] sm:$0xff]
        %v611 = vld [vmem:[%s2 + $0x3a0] sm:$0xff]
        %v612 = vld [vmem:[%s2 + $0x3a8] sm:$0xff]
        %v613 = vld [vmem:[%s2 + $0x3b0] sm:$0xff]
        %v614 = vld [vmem:[%s2 + $0x3b8] sm:$0xff]
        %v615 = vld [vmem:[%s2 + $0x3c0] sm:$0xff]
        %v616 = vld [vmem:[%s2 + $0x3c8] sm:$0xff]
        %v617 = vld [vmem:[%s2 + $0x3d0] sm:$0xff]
        %v618 = vld [vmem:[%s2 + $0x3d8] sm:$0xff]
        %v619 = vld [vmem:[%s2 + $0x3e0] sm:$0xff]
        %v620 = vld [vmem:[%s2 + $0x3e8] sm:$0xff]
        %v621 = vld [vmem:[%s2 + $0x3f0] sm:$0xff]
        %v622 = vld [vmem:[%s2 + $0x3f8] sm:$0xff]
        %v623 = vld [vmem:[%s2 + $0x400] sm:$0xff]
        %v624 = vld [vmem:[%s2 + $0x408] sm:$0xff]
        %v625 = vld [vmem:[%s2 + $0x410] sm:$0xff]
        %v626 = vld [vmem:[%s2 + $0x418] sm:$0xff]
        %v627 = vld [vmem:[%s2 + $0x420] sm:$0xff]
        %v628 = vld [vmem:[%s2 + $0x428] sm:$0xff]
        %v629 = vld [vmem:[%s2 + $0x430] sm:$0xff]
        %v630 = vld [vmem:[%s2 + $0x438] sm:$0xff]
        %v631 = vld [vmem:[%s2 + $0x440] sm:$0xff]
        %v632 = vld [vmem:[%s2 + $0x448] sm:$0xff]
        %v633 = vld [vmem:[%s2 + $0x450] sm:$0xff]
        %v634 = vld [vmem:[%s2 + $0x458] sm:$0xff]
        %v635 = vld [vmem:[%s2 + $0x460] sm:$0xff]
        %v636 = vld [vmem:[%s2 + $0x468] sm:$0xff]
        %v637 = vld [vmem:[%s2 + $0x470] sm:$0xff]
        %v638 = vld [vmem:[%s2 + $0x478] sm:$0xff]
        %v639 = vld [vmem:[%s2 + $0x480] sm:$0xff]
        %v640 = vld [vmem:[%s2 + $0x488] sm:$0xff]
        %v641 = vld [vmem:[%s2 + $0x490] sm:$0xff]
        %v642 = vld [vmem:[%s2 + $0x498] sm:$0xff]
        %v643 = vld [vmem:[%s2 + $0x4a0] sm:$0xff]
        %v644 = vld [vmem:[%s2 + $0x4a8] sm:$0xff]
        %v645 = vld [vmem:[%s2 + $0x4b0] sm:$0xff]
        %v646 = vld [vmem:[%s2 + $0x4b8] sm:$0xff]
        %v647 = vld [vmem:[%s2 + $0x4c0] sm:$0xff]
        %v648 = vld [vmem:[%s2 + $0x4c8] sm:$0xff]
        %v649 = vld [vmem:[%s2 + $0x4d0] sm:$0xff]
        %v650 = vld [vmem:[%s2 + $0x4d8] sm:$0xff]
        %v651 = vld [vmem:[%s2 + $0x4e0] sm:$0xff]
        %v652 = vld [vmem:[%s2 + $0x4e8] sm:$0xff]
        %v653 = vld [vmem:[%s2 + $0x4f0] sm:$0xff]
        %v654 = vld [vmem:[%s2 + $0x4f8] sm:$0xff]
        %v655 = vld [vmem:[%s2 + $0x500] sm:$0xff]
        %v656 = vld [vmem:[%s2 + $0x508] sm:$0xff]
        %v657 = vld [vmem:[%s2 + $0x510] sm:$0xff]
        %v658 = vld [vmem:[%s2 + $0x518] sm:$0xff]
        %v659 = vld [vmem:[%s2 + $0x520] sm:$0xff]
        %v660 = vld [vmem:[%s2 + $0x528] sm:$0xff]
        %v661 = vld [vmem:[%s2 + $0x530] sm:$0xff]
        %v662 = vld [vmem:[%s2 + $0x538] sm:$0xff]
        %v663 = vld [vmem:[%s2 + $0x540] sm:$0xff]
        %v664 = vld [vmem:[%s2 + $0x548] sm:$0xff]
        %v665 = vld [vmem:[%s2 + $0x550] sm:$0xff]
        %v666 = vld [vmem:[%s2 + $0x558] sm:$0xff]
        %v667 = vld [vmem:[%s2 + $0x560] sm:$0xff]
        %v668 = vld [vmem:[%s2 + $0x568] sm:$0xff]
        %v669 = vld [vmem:[%s2 + $0x570] sm:$0xff]
        %v670 = vld [vmem:[%s2 + $0x578] sm:$0xff]
        %v671 = vld [vmem:[%s2 + $0x580] sm:$0xff]
        %v672 = vld [vmem:[%s2 + $0x588] sm:$0xff]
        %v673 = vld [vmem:[%s2 + $0x590] sm:$0xff]
        %v674 = vld [vmem:[%s2 + $0x598] sm:$0xff]
        %v675 = vld [vmem:[%s2 + $0x5a0] sm:$0xff]
        %v676 = vld [vmem:[%s2 + $0x5a8] sm:$0xff]
        %v677 = vld [vmem:[%s2 + $0x5b0] sm:$0xff]
        %v678 = vld [vmem:[%s2 + $0x5b8] sm:$0xff]
        %v679 = vld [vmem:[%s2 + $0x5c0] sm:$0xff]
        %v680 = vld [vmem:[%s2 + $0x5c8] sm:$0xff]
        %v681 = vld [vmem:[%s2 + $0x5d0] sm:$0xff]
        %v682 = vld [vmem:[%s2 + $0x5d8] sm:$0xff]
        %v683 = vld [vmem:[%s2 + $0x5e0] sm:$0xff]
        %v684 = vld [vmem:[%s2 + $0x5e8] sm:$0xff]
        %v685 = vld [vmem:[%s2 + $0x5f0] sm:$0xff]
        %v686 = vld [vmem:[%s2 + $0x5f8] sm:$0xff]
        %v687 = vld [vmem:[%s2 + $0x600] sm:$0xff]
        %v688 = vld [vmem:[%s2 + $0x608] sm:$0xff]
        %v689 = vld [vmem:[%s2 + $0x610] sm:$0xff]
        %v690 = vld [vmem:[%s2 + $0x618] sm:$0xff]
        %v691 = vld [vmem:[%s2 + $0x620] sm:$0xff]
        %v692 = vld [vmem:[%s2 + $0x628] sm:$0xff]
        %v693 = vld [vmem:[%s2 + $0x630] sm:$0xff]
        %v694 = vld [vmem:[%s2 + $0x638] sm:$0xff]
        %v695 = vld [vmem:[%s2 + $0x640] sm:$0xff]
        %v696 = vld [vmem:[%s2 + $0x648] sm:$0xff]
        %v697 = vld [vmem:[%s2 + $0x650] sm:$0xff]
        %v698 = vld [vmem:[%s2 + $0x658] sm:$0xff]
        %v699 = vld [vmem:[%s2 + $0x660] sm:$0xff]
        %v700 = vld [vmem:[%s2 + $0x668] sm:$0xff]
        %v701 = vld [vmem:[%s2 + $0x670] sm:$0xff]
        %v702 = vld [vmem:[%s2 + $0x678] sm:$0xff]
        %v703 = vld [vmem:[%s2 + $0x680] sm:$0xff]
        %v704 = vld [vmem:[%s2 + $0x688] sm:$0xff]
        %v705 = vld [vmem:[%s2 + $0x690] sm:$0xff]
        %v706 = vld [vmem:[%s2 + $0x698] sm:$0xff]
        %v707 = vld [vmem:[%s2 + $0x6a0] sm:$0xff]
        %v708 = vld [vmem:[%s2 + $0x6a8] sm:$0xff]
        %v709 = vld [vmem:[%s2 + $0x6b0] sm:$0xff]
        %v710 = vld [vmem:[%s2 + $0x6b8] sm:$0xff]
        %v711 = vld [vmem:[%s2 + $0x6c0] sm:$0xff]
        %v712 = vld [vmem:[%s2 + $0x6c8] sm:$0xff]
        %v713 = vld [vmem:[%s2 + $0x6d0] sm:$0xff]
        %v714 = vld [vmem:[%s2 + $0x6d8] sm:$0xff]
        %v715 = vld [vmem:[%s2 + $0x6e0] sm:$0xff]
        %v716 = vld [vmem:[%s2 + $0x6e8] sm:$0xff]
        %v717 = vld [vmem:[%s2 + $0x6f0] sm:$0xff]
        %v718 = vld [vmem:[%s2 + $0x6f8] sm:$0xff]
        %v719 = vld [vmem:[%s6] sm:$0xf]
        %v721 = vperm.slane %v719, 0
        %v722 = vperm.slane %v719, 1
        %v723 = vperm.slane %v719, 2
        %v724 = vperm.slane %v719, 3
        %v953 = vunpack.c.l.b16 %v495
        %v954 = vunpack.c.h.b16 %v495
        %v955 = vunpack.c.l.b16 %v496
        %v956 = vunpack.c.h.b16 %v496
        %v957 = vunpack.c.l.b16 %v497
        %v958 = vunpack.c.h.b16 %v497
        %v959 = vunpack.c.l.b16 %v498
        %v960 = vunpack.c.h.b16 %v498
        %v961 = vunpack.c.l.b16 %v499
        %v962 = vunpack.c.h.b16 %v499
        %v963 = vunpack.c.l.b16 %v500
        %v964 = vunpack.c.h.b16 %v500
        %v965 = vunpack.c.l.b16 %v501
        %v966 = vunpack.c.h.b16 %v501
        %v967 = vunpack.c.l.b16 %v502
        %v968 = vunpack.c.h.b16 %v502
        %v969 = vunpack.c.l.b16 %v503
        %v970 = vunpack.c.h.b16 %v503
        %v971 = vunpack.c.l.b16 %v504
        %v972 = vunpack.c.h.b16 %v504
        %v973 = vunpack.c.l.b16 %v505
        %v974 = vunpack.c.h.b16 %v505
        %v975 = vunpack.c.l.b16 %v506
        %v976 = vunpack.c.h.b16 %v506
        %v977 = vunpack.c.l.b16 %v507
        %v978 = vunpack.c.h.b16 %v507
        %v979 = vunpack.c.l.b16 %v508
        %v980 = vunpack.c.h.b16 %v508
        %v981 = vunpack.c.l.b16 %v509
        %v982 = vunpack.c.h.b16 %v509
        %v983 = vunpack.c.l.b16 %v510
        %v984 = vunpack.c.h.b16 %v510
        %v985 = vunpack.c.l.b16 %v511
        %v986 = vunpack.c.h.b16 %v511
        %v987 = vunpack.c.l.b16 %v512
        %v988 = vunpack.c.h.b16 %v512
        %v989 = vunpack.c.l.b16 %v513
        %v990 = vunpack.c.h.b16 %v513
        %v991 = vunpack.c.l.b16 %v514
        %v992 = vunpack.c.h.b16 %v514
        %v993 = vunpack.c.l.b16 %v515
        %v994 = vunpack.c.h.b16 %v515
        %v995 = vunpack.c.l.b16 %v516
        %v996 = vunpack.c.h.b16 %v516
        %v997 = vunpack.c.l.b16 %v517
        %v998 = vunpack.c.h.b16 %v517
        %v999 = vunpack.c.l.b16 %v518
        %v1000 = vunpack.c.h.b16 %v518
        %v1001 = vunpack.c.l.b16 %v519
        %v1002 = vunpack.c.h.b16 %v519
        %v1003 = vunpack.c.l.b16 %v520
        %v1004 = vunpack.c.h.b16 %v520
        %v1005 = vunpack.c.l.b16 %v521
        %v1006 = vunpack.c.h.b16 %v521
        %v1007 = vunpack.c.l.b16 %v522
        %v1008 = vunpack.c.h.b16 %v522
        %v1009 = vunpack.c.l.b16 %v523
        %v1010 = vunpack.c.h.b16 %v523
        %v1011 = vunpack.c.l.b16 %v524
        %v1012 = vunpack.c.h.b16 %v524
        %v1013 = vunpack.c.l.b16 %v525
        %v1014 = vunpack.c.h.b16 %v525
        %v1015 = vunpack.c.l.b16 %v526
        %v1016 = vunpack.c.h.b16 %v526
        %v1017 = vunpack.c.l.b16 %v527
        %v1018 = vunpack.c.h.b16 %v527
        %v1019 = vunpack.c.l.b16 %v528
        %v1020 = vunpack.c.h.b16 %v528
        %v1021 = vunpack.c.l.b16 %v529
        %v1022 = vunpack.c.h.b16 %v529
        %v1023 = vunpack.c.l.b16 %v530
        %v1024 = vunpack.c.h.b16 %v530
        %v1025 = vunpack.c.l.b16 %v531
        %v1026 = vunpack.c.h.b16 %v531
        %v1027 = vunpack.c.l.b16 %v532
        %v1028 = vunpack.c.h.b16 %v532
        %v1029 = vunpack.c.l.b16 %v533
        %v1030 = vunpack.c.h.b16 %v533
        %v1031 = vunpack.c.l.b16 %v534
        %v1032 = vunpack.c.h.b16 %v534
        %v1033 = vunpack.c.l.b16 %v535
        %v1034 = vunpack.c.h.b16 %v535
        %v1035 = vunpack.c.l.b16 %v536
        %v1036 = vunpack.c.h.b16 %v536
        %v1037 = vunpack.c.l.b16 %v537
        %v1038 = vunpack.c.h.b16 %v537
        %v1039 = vunpack.c.l.b16 %v538
        %v1040 = vunpack.c.h.b16 %v538
        %v1041 = vunpack.c.l.b16 %v539
        %v1042 = vunpack.c.h.b16 %v539
        %v1043 = vunpack.c.l.b16 %v540
        %v1044 = vunpack.c.h.b16 %v540
        %v1045 = vunpack.c.l.b16 %v541
        %v1046 = vunpack.c.h.b16 %v541
        %v1047 = vunpack.c.l.b16 %v542
        %v1048 = vunpack.c.h.b16 %v542
        %v1049 = vunpack.c.l.b16 %v543
        %v1050 = vunpack.c.h.b16 %v543
        %v1051 = vunpack.c.l.b16 %v544
        %v1052 = vunpack.c.h.b16 %v544
        %v1053 = vunpack.c.l.b16 %v545
        %v1054 = vunpack.c.h.b16 %v545
        %v1055 = vunpack.c.l.b16 %v546
        %v1056 = vunpack.c.h.b16 %v546
        %v1057 = vunpack.c.l.b16 %v547
        %v1058 = vunpack.c.h.b16 %v547
        %v1059 = vunpack.c.l.b16 %v548
        %v1060 = vunpack.c.h.b16 %v548
        %v1061 = vunpack.c.l.b16 %v549
        %v1062 = vunpack.c.h.b16 %v549
        %v1063 = vunpack.c.l.b16 %v550
        %v1064 = vunpack.c.h.b16 %v550
        %v1065 = vunpack.c.l.b16 %v551
        %v1066 = vunpack.c.h.b16 %v551
        %v1067 = vunpack.c.l.b16 %v552
        %v1068 = vunpack.c.h.b16 %v552
        %v1069 = vunpack.c.l.b16 %v553
        %v1070 = vunpack.c.h.b16 %v553
        %v1071 = vunpack.c.l.b16 %v554
        %v1072 = vunpack.c.h.b16 %v554
        %v1073 = vunpack.c.l.b16 %v555
        %v1074 = vunpack.c.h.b16 %v555
        %v1075 = vunpack.c.l.b16 %v556
        %v1076 = vunpack.c.h.b16 %v556
        %v1077 = vunpack.c.l.b16 %v557
        %v1078 = vunpack.c.h.b16 %v557
        %v1079 = vunpack.c.l.b16 %v558
        %v1080 = vunpack.c.h.b16 %v558
        %v1081 = vunpack.c.l.b16 %v559
        %v1082 = vunpack.c.h.b16 %v559
        %v1083 = vunpack.c.l.b16 %v560
        %v1084 = vunpack.c.h.b16 %v560
        %v1085 = vunpack.c.l.b16 %v561
        %v1086 = vunpack.c.h.b16 %v561
        %v1087 = vunpack.c.l.b16 %v562
        %v1088 = vunpack.c.h.b16 %v562
        %v1089 = vunpack.c.l.b16 %v563
        %v1090 = vunpack.c.h.b16 %v563
        %v1091 = vunpack.c.l.b16 %v564
        %v1092 = vunpack.c.h.b16 %v564
        %v1093 = vunpack.c.l.b16 %v565
        %v1094 = vunpack.c.h.b16 %v565
        %v1095 = vunpack.c.l.b16 %v566
        %v1096 = vunpack.c.h.b16 %v566
        %v1097 = vunpack.c.l.b16 %v567
        %v1098 = vunpack.c.h.b16 %v567
        %v1099 = vunpack.c.l.b16 %v568
        %v1100 = vunpack.c.h.b16 %v568
        %v1101 = vunpack.c.l.b16 %v569
        %v1102 = vunpack.c.h.b16 %v569
        %v1103 = vunpack.c.l.b16 %v570
        %v1104 = vunpack.c.h.b16 %v570
        %v1105 = vunpack.c.l.b16 %v571
        %v1106 = vunpack.c.h.b16 %v571
        %v1107 = vunpack.c.l.b16 %v572
        %v1108 = vunpack.c.h.b16 %v572
        %v1109 = vunpack.c.l.b16 %v573
        %v1110 = vunpack.c.h.b16 %v573
        %v1111 = vunpack.c.l.b16 %v574
        %v1112 = vunpack.c.h.b16 %v574
        %v1113 = vunpack.c.l.b16 %v575
        %v1114 = vunpack.c.h.b16 %v575
        %v1115 = vunpack.c.l.b16 %v576
        %v1116 = vunpack.c.h.b16 %v576
        %v1117 = vunpack.c.l.b16 %v577
        %v1118 = vunpack.c.h.b16 %v577
        %v1119 = vunpack.c.l.b16 %v578
        %v1120 = vunpack.c.h.b16 %v578
        %v1121 = vunpack.c.l.b16 %v579
        %v1122 = vunpack.c.h.b16 %v579
        %v1123 = vunpack.c.l.b16 %v580
        %v1124 = vunpack.c.h.b16 %v580
        %v1125 = vunpack.c.l.b16 %v581
        %v1126 = vunpack.c.h.b16 %v581
        %v1127 = vunpack.c.l.b16 %v582
        %v1128 = vunpack.c.h.b16 %v582
        %v1129 = vunpack.c.l.b16 %v583
        %v1130 = vunpack.c.h.b16 %v583
        %v1131 = vunpack.c.l.b16 %v584
        %v1132 = vunpack.c.h.b16 %v584
        %v1133 = vunpack.c.l.b16 %v585
        %v1134 = vunpack.c.h.b16 %v585
        %v1135 = vunpack.c.l.b16 %v586
        %v1136 = vunpack.c.h.b16 %v586
        %v1137 = vunpack.c.l.b16 %v587
        %v1138 = vunpack.c.h.b16 %v587
        %v1139 = vunpack.c.l.b16 %v588
        %v1140 = vunpack.c.h.b16 %v588
        %v1141 = vunpack.c.l.b16 %v589
        %v1142 = vunpack.c.h.b16 %v589
        %v1143 = vunpack.c.l.b16 %v590
        %v1144 = vunpack.c.h.b16 %v590
        %v1145 = vunpack.c.l.b16 %v591
        %v1146 = vunpack.c.h.b16 %v591
        %v1147 = vunpack.c.l.b16 %v592
        %v1148 = vunpack.c.h.b16 %v592
        %v1149 = vunpack.c.l.b16 %v593
        %v1150 = vunpack.c.h.b16 %v593
        %v1151 = vunpack.c.l.b16 %v594
        %v1152 = vunpack.c.h.b16 %v594
        %v1153 = vunpack.c.l.b16 %v595
        %v1154 = vunpack.c.h.b16 %v595
        %v1155 = vunpack.c.l.b16 %v596
        %v1156 = vunpack.c.h.b16 %v596
        %v1157 = vunpack.c.l.b16 %v597
        %v1158 = vunpack.c.h.b16 %v597
        %v1159 = vunpack.c.l.b16 %v598
        %v1160 = vunpack.c.h.b16 %v598
        %v1161 = vunpack.c.l.b16 %v599
        %v1162 = vunpack.c.h.b16 %v599
        %v1163 = vunpack.c.l.b16 %v600
        %v1164 = vunpack.c.h.b16 %v600
        %v1165 = vunpack.c.l.b16 %v601
        %v1166 = vunpack.c.h.b16 %v601
        %v1167 = vunpack.c.l.b16 %v602
        %v1168 = vunpack.c.h.b16 %v602
        %v1169 = vunpack.c.l.b16 %v603
        %v1170 = vunpack.c.h.b16 %v603
        %v1171 = vunpack.c.l.b16 %v604
        %v1172 = vunpack.c.h.b16 %v604
        %v1173 = vunpack.c.l.b16 %v605
        %v1174 = vunpack.c.h.b16 %v605
        %v1175 = vunpack.c.l.b16 %v606
        %v1176 = vunpack.c.h.b16 %v606
        %v1177 = vunpack.c.l.b16 %v607
        %v1178 = vunpack.c.h.b16 %v607
        %v1179 = vunpack.c.l.b16 %v608
        %v1180 = vunpack.c.h.b16 %v608
        %v1181 = vunpack.c.l.b16 %v609
        %v1182 = vunpack.c.h.b16 %v609
        %v1183 = vunpack.c.l.b16 %v610
        %v1184 = vunpack.c.h.b16 %v610
        %v1185 = vunpack.c.l.b16 %v611
        %v1186 = vunpack.c.h.b16 %v611
        %v1187 = vunpack.c.l.b16 %v612
        %v1188 = vunpack.c.h.b16 %v612
        %v1189 = vunpack.c.l.b16 %v613
        %v1190 = vunpack.c.h.b16 %v613
        %v1191 = vunpack.c.l.b16 %v614
        %v1192 = vunpack.c.h.b16 %v614
        %v1193 = vunpack.c.l.b16 %v615
        %v1194 = vunpack.c.h.b16 %v615
        %v1195 = vunpack.c.l.b16 %v616
        %v1196 = vunpack.c.h.b16 %v616
        %v1197 = vunpack.c.l.b16 %v617
        %v1198 = vunpack.c.h.b16 %v617
        %v1199 = vunpack.c.l.b16 %v618
        %v1200 = vunpack.c.h.b16 %v618
        %v1201 = vunpack.c.l.b16 %v619
        %v1202 = vunpack.c.h.b16 %v619
        %v1203 = vunpack.c.l.b16 %v620
        %v1204 = vunpack.c.h.b16 %v620
        %v1205 = vunpack.c.l.b16 %v621
        %v1206 = vunpack.c.h.b16 %v621
        %v1207 = vunpack.c.l.b16 %v622
        %v1208 = vunpack.c.h.b16 %v622
        %v1209 = vunpack.c.l.b16 %v623
        %v1210 = vunpack.c.h.b16 %v623
        %v1211 = vunpack.c.l.b16 %v624
        %v1212 = vunpack.c.h.b16 %v624
        %v1213 = vunpack.c.l.b16 %v625
        %v1214 = vunpack.c.h.b16 %v625
        %v1215 = vunpack.c.l.b16 %v626
        %v1216 = vunpack.c.h.b16 %v626
        %v1217 = vunpack.c.l.b16 %v627
        %v1218 = vunpack.c.h.b16 %v627
        %v1219 = vunpack.c.l.b16 %v628
        %v1220 = vunpack.c.h.b16 %v628
        %v1221 = vunpack.c.l.b16 %v629
        %v1222 = vunpack.c.h.b16 %v629
        %v1223 = vunpack.c.l.b16 %v630
        %v1224 = vunpack.c.h.b16 %v630
        %v1225 = vunpack.c.l.b16 %v631
        %v1226 = vunpack.c.h.b16 %v631
        %v1227 = vunpack.c.l.b16 %v632
        %v1228 = vunpack.c.h.b16 %v632
        %v1229 = vunpack.c.l.b16 %v633
        %v1230 = vunpack.c.h.b16 %v633
        %v1231 = vunpack.c.l.b16 %v634
        %v1232 = vunpack.c.h.b16 %v634
        %v1233 = vunpack.c.l.b16 %v635
        %v1234 = vunpack.c.h.b16 %v635
        %v1235 = vunpack.c.l.b16 %v636
        %v1236 = vunpack.c.h.b16 %v636
        %v1237 = vunpack.c.l.b16 %v637
        %v1238 = vunpack.c.h.b16 %v637
        %v1239 = vunpack.c.l.b16 %v638
        %v1240 = vunpack.c.h.b16 %v638
        %v1241 = vunpack.c.l.b16 %v639
        %v1242 = vunpack.c.h.b16 %v639
        %v1243 = vunpack.c.l.b16 %v640
        %v1244 = vunpack.c.h.b16 %v640
        %v1245 = vunpack.c.l.b16 %v641
        %v1246 = vunpack.c.h.b16 %v641
        %v1247 = vunpack.c.l.b16 %v642
        %v1248 = vunpack.c.h.b16 %v642
        %v1249 = vunpack.c.l.b16 %v643
        %v1250 = vunpack.c.h.b16 %v643
        %v1251 = vunpack.c.l.b16 %v644
        %v1252 = vunpack.c.h.b16 %v644
        %v1253 = vunpack.c.l.b16 %v645
        %v1254 = vunpack.c.h.b16 %v645
        %v1255 = vunpack.c.l.b16 %v646
        %v1256 = vunpack.c.h.b16 %v646
        %v1257 = vunpack.c.l.b16 %v647
        %v1258 = vunpack.c.h.b16 %v647
        %v1259 = vunpack.c.l.b16 %v648
        %v1260 = vunpack.c.h.b16 %v648
        %v1261 = vunpack.c.l.b16 %v649
        %v1262 = vunpack.c.h.b16 %v649
        %v1263 = vunpack.c.l.b16 %v650
        %v1264 = vunpack.c.h.b16 %v650
        %v1265 = vunpack.c.l.b16 %v651
        %v1266 = vunpack.c.h.b16 %v651
        %v1267 = vunpack.c.l.b16 %v652
        %v1268 = vunpack.c.h.b16 %v652
        %v1269 = vunpack.c.l.b16 %v653
        %v1270 = vunpack.c.h.b16 %v653
        %v1271 = vunpack.c.l.b16 %v654
        %v1272 = vunpack.c.h.b16 %v654
        %v1273 = vunpack.c.l.b16 %v655
        %v1274 = vunpack.c.h.b16 %v655
        %v1275 = vunpack.c.l.b16 %v656
        %v1276 = vunpack.c.h.b16 %v656
        %v1277 = vunpack.c.l.b16 %v657
        %v1278 = vunpack.c.h.b16 %v657
        %v1279 = vunpack.c.l.b16 %v658
        %v1280 = vunpack.c.h.b16 %v658
        %v1281 = vunpack.c.l.b16 %v659
        %v1282 = vunpack.c.h.b16 %v659
        %v1283 = vunpack.c.l.b16 %v660
        %v1284 = vunpack.c.h.b16 %v660
        %v1285 = vunpack.c.l.b16 %v661
        %v1286 = vunpack.c.h.b16 %v661
        %v1287 = vunpack.c.l.b16 %v662
        %v1288 = vunpack.c.h.b16 %v662
        %v1289 = vunpack.c.l.b16 %v663
        %v1290 = vunpack.c.h.b16 %v663
        %v1291 = vunpack.c.l.b16 %v664
        %v1292 = vunpack.c.h.b16 %v664
        %v1293 = vunpack.c.l.b16 %v665
        %v1294 = vunpack.c.h.b16 %v665
        %v1295 = vunpack.c.l.b16 %v666
        %v1296 = vunpack.c.h.b16 %v666
        %v1297 = vunpack.c.l.b16 %v667
        %v1298 = vunpack.c.h.b16 %v667
        %v1299 = vunpack.c.l.b16 %v668
        %v1300 = vunpack.c.h.b16 %v668
        %v1301 = vunpack.c.l.b16 %v669
        %v1302 = vunpack.c.h.b16 %v669
        %v1303 = vunpack.c.l.b16 %v670
        %v1304 = vunpack.c.h.b16 %v670
        %v1305 = vunpack.c.l.b16 %v671
        %v1306 = vunpack.c.h.b16 %v671
        %v1307 = vunpack.c.l.b16 %v672
        %v1308 = vunpack.c.h.b16 %v672
        %v1309 = vunpack.c.l.b16 %v673
        %v1310 = vunpack.c.h.b16 %v673
        %v1311 = vunpack.c.l.b16 %v674
        %v1312 = vunpack.c.h.b16 %v674
        %v1313 = vunpack.c.l.b16 %v675
        %v1314 = vunpack.c.h.b16 %v675
        %v1315 = vunpack.c.l.b16 %v676
        %v1316 = vunpack.c.h.b16 %v676
        %v1317 = vunpack.c.l.b16 %v677
        %v1318 = vunpack.c.h.b16 %v677
        %v1319 = vunpack.c.l.b16 %v678
        %v1320 = vunpack.c.h.b16 %v678
        %v1321 = vunpack.c.l.b16 %v679
        %v1322 = vunpack.c.h.b16 %v679
        %v1323 = vunpack.c.l.b16 %v680
        %v1324 = vunpack.c.h.b16 %v680
        %v1325 = vunpack.c.l.b16 %v681
        %v1326 = vunpack.c.h.b16 %v681
        %v1327 = vunpack.c.l.b16 %v682
        %v1328 = vunpack.c.h.b16 %v682
        %v1329 = vunpack.c.l.b16 %v683
        %v1330 = vunpack.c.h.b16 %v683
        %v1331 = vunpack.c.l.b16 %v684
        %v1332 = vunpack.c.h.b16 %v684
        %v1333 = vunpack.c.l.b16 %v685
        %v1334 = vunpack.c.h.b16 %v685
        %v1335 = vunpack.c.l.b16 %v686
        %v1336 = vunpack.c.h.b16 %v686
        %v1337 = vunpack.c.l.b16 %v687
        %v1338 = vunpack.c.h.b16 %v687
        %v1339 = vunpack.c.l.b16 %v688
        %v1340 = vunpack.c.h.b16 %v688
        %v1341 = vunpack.c.l.b16 %v689
        %v1342 = vunpack.c.h.b16 %v689
        %v1343 = vunpack.c.l.b16 %v690
        %v1344 = vunpack.c.h.b16 %v690
        %v1345 = vunpack.c.l.b16 %v691
        %v1346 = vunpack.c.h.b16 %v691
        %v1347 = vunpack.c.l.b16 %v692
        %v1348 = vunpack.c.h.b16 %v692
        %v1349 = vunpack.c.l.b16 %v693
        %v1350 = vunpack.c.h.b16 %v693
        %v1351 = vunpack.c.l.b16 %v694
        %v1352 = vunpack.c.h.b16 %v694
        %v1353 = vunpack.c.l.b16 %v695
        %v1354 = vunpack.c.h.b16 %v695
        %v1355 = vunpack.c.l.b16 %v696
        %v1356 = vunpack.c.h.b16 %v696
        %v1357 = vunpack.c.l.b16 %v697
        %v1358 = vunpack.c.h.b16 %v697
        %v1359 = vunpack.c.l.b16 %v698
        %v1360 = vunpack.c.h.b16 %v698
        %v1361 = vunpack.c.l.b16 %v699
        %v1362 = vunpack.c.h.b16 %v699
        %v1363 = vunpack.c.l.b16 %v700
        %v1364 = vunpack.c.h.b16 %v700
        %v1365 = vunpack.c.l.b16 %v701
        %v1366 = vunpack.c.h.b16 %v701
        %v1367 = vunpack.c.l.b16 %v702
        %v1368 = vunpack.c.h.b16 %v702
        %v1369 = vunpack.c.l.b16 %v703
        %v1370 = vunpack.c.h.b16 %v703
        %v1371 = vunpack.c.l.b16 %v704
        %v1372 = vunpack.c.h.b16 %v704
        %v1373 = vunpack.c.l.b16 %v705
        %v1374 = vunpack.c.h.b16 %v705
        %v1375 = vunpack.c.l.b16 %v706
        %v1376 = vunpack.c.h.b16 %v706
        %v1377 = vunpack.c.l.b16 %v707
        %v1378 = vunpack.c.h.b16 %v707
        %v1379 = vunpack.c.l.b16 %v708
        %v1380 = vunpack.c.h.b16 %v708
        %v1381 = vunpack.c.l.b16 %v709
        %v1382 = vunpack.c.h.b16 %v709
        %v1383 = vunpack.c.l.b16 %v710
        %v1384 = vunpack.c.h.b16 %v710
        %v1385 = vunpack.c.l.b16 %v711
        %v1386 = vunpack.c.h.b16 %v711
        %v1387 = vunpack.c.l.b16 %v712
        %v1388 = vunpack.c.h.b16 %v712
        %v1389 = vunpack.c.l.b16 %v713
        %v1390 = vunpack.c.h.b16 %v713
        %v1391 = vunpack.c.l.b16 %v714
        %v1392 = vunpack.c.h.b16 %v714
        %v1393 = vunpack.c.l.b16 %v715
        %v1394 = vunpack.c.h.b16 %v715
        %v1395 = vunpack.c.l.b16 %v716
        %v1396 = vunpack.c.h.b16 %v716
        %v1397 = vunpack.c.l.b16 %v717
        %v1398 = vunpack.c.h.b16 %v717
        %v1399 = vunpack.c.l.b16 %v718
        %v1400 = vunpack.c.h.b16 %v718
        %v1401 = vpack.c.b16 %v957, %v953
        %v1402 = vpack.c.b16 %v958, %v954
        %v1403 = vpack.c.b16 %v959, %v955
        %v1404 = vpack.c.b16 %v960, %v956
        %v1405 = vpack.c.b16 %v965, %v961
        %v1406 = vpack.c.b16 %v966, %v962
        %v1407 = vpack.c.b16 %v967, %v963
        %v1408 = vpack.c.b16 %v968, %v964
        %v1409 = vpack.c.b16 %v973, %v969
        %v1410 = vpack.c.b16 %v974, %v970
        %v1411 = vpack.c.b16 %v975, %v971
        %v1412 = vpack.c.b16 %v976, %v972
        %v1413 = vpack.c.b16 %v981, %v977
        %v1414 = vpack.c.b16 %v982, %v978
        %v1415 = vpack.c.b16 %v983, %v979
        %v1416 = vpack.c.b16 %v984, %v980
        %v1417 = vpack.c.b16 %v989, %v985
        %v1418 = vpack.c.b16 %v990, %v986
        %v1419 = vpack.c.b16 %v991, %v987
        %v1420 = vpack.c.b16 %v992, %v988
        %v1421 = vpack.c.b16 %v997, %v993
        %v1422 = vpack.c.b16 %v998, %v994
        %v1423 = vpack.c.b16 %v999, %v995
        %v1424 = vpack.c.b16 %v1000, %v996
        %v1425 = vpack.c.b16 %v1005, %v1001
        %v1426 = vpack.c.b16 %v1006, %v1002
        %v1427 = vpack.c.b16 %v1007, %v1003
        %v1428 = vpack.c.b16 %v1008, %v1004
        %v1429 = vpack.c.b16 %v1013, %v1009
        %v1430 = vpack.c.b16 %v1014, %v1010
        %v1431 = vpack.c.b16 %v1015, %v1011
        %v1432 = vpack.c.b16 %v1016, %v1012
        %v1433 = vpack.c.b16 %v1021, %v1017
        %v1434 = vpack.c.b16 %v1022, %v1018
        %v1435 = vpack.c.b16 %v1023, %v1019
        %v1436 = vpack.c.b16 %v1024, %v1020
        %v1437 = vpack.c.b16 %v1029, %v1025
        %v1438 = vpack.c.b16 %v1030, %v1026
        %v1439 = vpack.c.b16 %v1031, %v1027
        %v1440 = vpack.c.b16 %v1032, %v1028
        %v1441 = vpack.c.b16 %v1037, %v1033
        %v1442 = vpack.c.b16 %v1038, %v1034
        %v1443 = vpack.c.b16 %v1039, %v1035
        %v1444 = vpack.c.b16 %v1040, %v1036
        %v1445 = vpack.c.b16 %v1045, %v1041
        %v1446 = vpack.c.b16 %v1046, %v1042
        %v1447 = vpack.c.b16 %v1047, %v1043
        %v1448 = vpack.c.b16 %v1048, %v1044
        %v1449 = vpack.c.b16 %v1053, %v1049
        %v1450 = vpack.c.b16 %v1054, %v1050
        %v1451 = vpack.c.b16 %v1055, %v1051
        %v1452 = vpack.c.b16 %v1056, %v1052
        %v1453 = vpack.c.b16 %v1061, %v1057
        %v1454 = vpack.c.b16 %v1062, %v1058
        %v1455 = vpack.c.b16 %v1063, %v1059
        %v1456 = vpack.c.b16 %v1064, %v1060
        %v1457 = vpack.c.b16 %v1069, %v1065
        %v1458 = vpack.c.b16 %v1070, %v1066
        %v1459 = vpack.c.b16 %v1071, %v1067
        %v1460 = vpack.c.b16 %v1072, %v1068
        %v1461 = vpack.c.b16 %v1077, %v1073
        %v1462 = vpack.c.b16 %v1078, %v1074
        %v1463 = vpack.c.b16 %v1079, %v1075
        %v1464 = vpack.c.b16 %v1080, %v1076
        %v1465 = vpack.c.b16 %v1085, %v1081
        %v1466 = vpack.c.b16 %v1086, %v1082
        %v1467 = vpack.c.b16 %v1087, %v1083
        %v1468 = vpack.c.b16 %v1088, %v1084
        %v1469 = vpack.c.b16 %v1093, %v1089
        %v1470 = vpack.c.b16 %v1094, %v1090
        %v1471 = vpack.c.b16 %v1095, %v1091
        %v1472 = vpack.c.b16 %v1096, %v1092
        %v1473 = vpack.c.b16 %v1101, %v1097
        %v1474 = vpack.c.b16 %v1102, %v1098
        %v1475 = vpack.c.b16 %v1103, %v1099
        %v1476 = vpack.c.b16 %v1104, %v1100
        %v1477 = vpack.c.b16 %v1109, %v1105
        %v1478 = vpack.c.b16 %v1110, %v1106
        %v1479 = vpack.c.b16 %v1111, %v1107
        %v1480 = vpack.c.b16 %v1112, %v1108
        %v1481 = vpack.c.b16 %v1117, %v1113
        %v1482 = vpack.c.b16 %v1118, %v1114
        %v1483 = vpack.c.b16 %v1119, %v1115
        %v1484 = vpack.c.b16 %v1120, %v1116
        %v1485 = vpack.c.b16 %v1125, %v1121
        %v1486 = vpack.c.b16 %v1126, %v1122
        %v1487 = vpack.c.b16 %v1127, %v1123
        %v1488 = vpack.c.b16 %v1128, %v1124
        %v1489 = vpack.c.b16 %v1133, %v1129
        %v1490 = vpack.c.b16 %v1134, %v1130
        %v1491 = vpack.c.b16 %v1135, %v1131
        %v1492 = vpack.c.b16 %v1136, %v1132
        %v1493 = vpack.c.b16 %v1141, %v1137
        %v1494 = vpack.c.b16 %v1142, %v1138
        %v1495 = vpack.c.b16 %v1143, %v1139
        %v1496 = vpack.c.b16 %v1144, %v1140
        %v1497 = vpack.c.b16 %v1149, %v1145
        %v1498 = vpack.c.b16 %v1150, %v1146
        %v1499 = vpack.c.b16 %v1151, %v1147
        %v1500 = vpack.c.b16 %v1152, %v1148
        %v1501 = vpack.c.b16 %v1157, %v1153
        %v1502 = vpack.c.b16 %v1158, %v1154
        %v1503 = vpack.c.b16 %v1159, %v1155
        %v1504 = vpack.c.b16 %v1160, %v1156
        %v1505 = vpack.c.b16 %v1165, %v1161
        %v1506 = vpack.c.b16 %v1166, %v1162
        %v1507 = vpack.c.b16 %v1167, %v1163
        %v1508 = vpack.c.b16 %v1168, %v1164
        %v1509 = vpack.c.b16 %v1173, %v1169
        %v1510 = vpack.c.b16 %v1174, %v1170
        %v1511 = vpack.c.b16 %v1175, %v1171
        %v1512 = vpack.c.b16 %v1176, %v1172
        %v1513 = vpack.c.b16 %v1181, %v1177
        %v1514 = vpack.c.b16 %v1182, %v1178
        %v1515 = vpack.c.b16 %v1183, %v1179
        %v1516 = vpack.c.b16 %v1184, %v1180
        %v1517 = vpack.c.b16 %v1189, %v1185
        %v1518 = vpack.c.b16 %v1190, %v1186
        %v1519 = vpack.c.b16 %v1191, %v1187
        %v1520 = vpack.c.b16 %v1192, %v1188
        %v1521 = vpack.c.b16 %v1197, %v1193
        %v1522 = vpack.c.b16 %v1198, %v1194
        %v1523 = vpack.c.b16 %v1199, %v1195
        %v1524 = vpack.c.b16 %v1200, %v1196
        %v1525 = vpack.c.b16 %v1205, %v1201
        %v1526 = vpack.c.b16 %v1206, %v1202
        %v1527 = vpack.c.b16 %v1207, %v1203
        %v1528 = vpack.c.b16 %v1208, %v1204
        %v1529 = vpack.c.b16 %v1213, %v1209
        %v1530 = vpack.c.b16 %v1214, %v1210
        %v1531 = vpack.c.b16 %v1215, %v1211
        %v1532 = vpack.c.b16 %v1216, %v1212
        %v1533 = vpack.c.b16 %v1221, %v1217
        %v1534 = vpack.c.b16 %v1222, %v1218
        %v1535 = vpack.c.b16 %v1223, %v1219
        %v1536 = vpack.c.b16 %v1224, %v1220
        %v1537 = vpack.c.b16 %v1229, %v1225
        %v1538 = vpack.c.b16 %v1230, %v1226
        %v1539 = vpack.c.b16 %v1231, %v1227
        %v1540 = vpack.c.b16 %v1232, %v1228
        %v1541 = vpack.c.b16 %v1237, %v1233
        %v1542 = vpack.c.b16 %v1238, %v1234
        %v1543 = vpack.c.b16 %v1239, %v1235
        %v1544 = vpack.c.b16 %v1240, %v1236
        %v1545 = vpack.c.b16 %v1245, %v1241
        %v1546 = vpack.c.b16 %v1246, %v1242
        %v1547 = vpack.c.b16 %v1247, %v1243
        %v1548 = vpack.c.b16 %v1248, %v1244
        %v1549 = vpack.c.b16 %v1253, %v1249
        %v1550 = vpack.c.b16 %v1254, %v1250
        %v1551 = vpack.c.b16 %v1255, %v1251
        %v1552 = vpack.c.b16 %v1256, %v1252
        %v1553 = vpack.c.b16 %v1261, %v1257
        %v1554 = vpack.c.b16 %v1262, %v1258
        %v1555 = vpack.c.b16 %v1263, %v1259
        %v1556 = vpack.c.b16 %v1264, %v1260
        %v1557 = vpack.c.b16 %v1269, %v1265
        %v1558 = vpack.c.b16 %v1270, %v1266
        %v1559 = vpack.c.b16 %v1271, %v1267
        %v1560 = vpack.c.b16 %v1272, %v1268
        %v1561 = vpack.c.b16 %v1277, %v1273
        %v1562 = vpack.c.b16 %v1278, %v1274
        %v1563 = vpack.c.b16 %v1279, %v1275
        %v1564 = vpack.c.b16 %v1280, %v1276
        %v1565 = vpack.c.b16 %v1285, %v1281
        %v1566 = vpack.c.b16 %v1286, %v1282
        %v1567 = vpack.c.b16 %v1287, %v1283
        %v1568 = vpack.c.b16 %v1288, %v1284
        %v1569 = vpack.c.b16 %v1293, %v1289
        %v1570 = vpack.c.b16 %v1294, %v1290
        %v1571 = vpack.c.b16 %v1295, %v1291
        %v1572 = vpack.c.b16 %v1296, %v1292
        %v1573 = vpack.c.b16 %v1301, %v1297
        %v1574 = vpack.c.b16 %v1302, %v1298
        %v1575 = vpack.c.b16 %v1303, %v1299
        %v1576 = vpack.c.b16 %v1304, %v1300
        %v1577 = vpack.c.b16 %v1309, %v1305
        %v1578 = vpack.c.b16 %v1310, %v1306
        %v1579 = vpack.c.b16 %v1311, %v1307
        %v1580 = vpack.c.b16 %v1312, %v1308
        %v1581 = vpack.c.b16 %v1317, %v1313
        %v1582 = vpack.c.b16 %v1318, %v1314
        %v1583 = vpack.c.b16 %v1319, %v1315
        %v1584 = vpack.c.b16 %v1320, %v1316
        %v1585 = vpack.c.b16 %v1325, %v1321
        %v1586 = vpack.c.b16 %v1326, %v1322
        %v1587 = vpack.c.b16 %v1327, %v1323
        %v1588 = vpack.c.b16 %v1328, %v1324
        %v1589 = vpack.c.b16 %v1333, %v1329
        %v1590 = vpack.c.b16 %v1334, %v1330
        %v1591 = vpack.c.b16 %v1335, %v1331
        %v1592 = vpack.c.b16 %v1336, %v1332
        %v1593 = vpack.c.b16 %v1341, %v1337
        %v1594 = vpack.c.b16 %v1342, %v1338
        %v1595 = vpack.c.b16 %v1343, %v1339
        %v1596 = vpack.c.b16 %v1344, %v1340
        %v1597 = vpack.c.b16 %v1349, %v1345
        %v1598 = vpack.c.b16 %v1350, %v1346
        %v1599 = vpack.c.b16 %v1351, %v1347
        %v1600 = vpack.c.b16 %v1352, %v1348
        %v1601 = vpack.c.b16 %v1357, %v1353
        %v1602 = vpack.c.b16 %v1358, %v1354
        %v1603 = vpack.c.b16 %v1359, %v1355
        %v1604 = vpack.c.b16 %v1360, %v1356
        %v1605 = vpack.c.b16 %v1365, %v1361
        %v1606 = vpack.c.b16 %v1366, %v1362
        %v1607 = vpack.c.b16 %v1367, %v1363
        %v1608 = vpack.c.b16 %v1368, %v1364
        %v1609 = vpack.c.b16 %v1373, %v1369
        %v1610 = vpack.c.b16 %v1374, %v1370
        %v1611 = vpack.c.b16 %v1375, %v1371
        %v1612 = vpack.c.b16 %v1376, %v1372
        %v1613 = vpack.c.b16 %v1381, %v1377
        %v1614 = vpack.c.b16 %v1382, %v1378
        %v1615 = vpack.c.b16 %v1383, %v1379
        %v1616 = vpack.c.b16 %v1384, %v1380
        %v1617 = vpack.c.b16 %v1389, %v1385
        %v1618 = vpack.c.b16 %v1390, %v1386
        %v1619 = vpack.c.b16 %v1391, %v1387
        %v1620 = vpack.c.b16 %v1392, %v1388
        %v1621 = vpack.c.b16 %v1397, %v1393
        %v1622 = vpack.c.b16 %v1398, %v1394
        %v1623 = vpack.c.b16 %v1399, %v1395
        %v1624 = vpack.c.b16 %v1400, %v1396
        %1849 = vmatpush.bf16.msra.mxu0 %v1429
        %1850 = vmatpush.bf16.msra.mxu0 %v1425
        %1851 = vmatpush.bf16.msra.mxu0 %v1421
        %1852 = vmatpush.bf16.msra.mxu0 %v1417
        %1853 = vmatpush.bf16.msra.mxu0 %v1413
        %1854 = vmatpush.bf16.msra.mxu0 %v1409
        %1855 = vmatpush.bf16.msra.mxu0 %v1405
        %1856 = vmatpush.bf16.msra.mxu0 %v1401
        %1857 = vmatmul.bf16.gmra.mxu0 %v439
        %v1858 = vpop.f32.mrf.mxu0
        %v1859 = vadd.f32 %v721, %v1858
        %v1860 = vpop.f32.mrf.mxu0
        %v1861 = vadd.f32 %v721, %v1860
        %1862 = vmatmul.bf16.gmra.mxu0 %v446
        %v1863 = vpop.f32.mrf.mxu0
        %v1864 = vadd.f32 %v721, %v1863
        %v1865 = vpop.f32.mrf.mxu0
        %v1866 = vadd.f32 %v721, %v1865
        %1867 = vmatmul.bf16.gmra.mxu0 %v453
        %v1868 = vpop.f32.mrf.mxu0
        %v1869 = vadd.f32 %v721, %v1868
        %v1870 = vpop.f32.mrf.mxu0
        %v1871 = vadd.f32 %v721, %v1870
        %1872 = vmatmul.bf16.gmra.mxu0 %v460
        %v1873 = vpop.f32.mrf.mxu0
        %v1874 = vadd.f32 %v721, %v1873
        %v1875 = vpop.f32.mrf.mxu0
        %v1876 = vadd.f32 %v721, %v1875
        %1877 = vmatmul.bf16.gmra.mxu0 %v467
        %v1878 = vpop.f32.mrf.mxu0
        %v1879 = vadd.f32 %v721, %v1878
        %v1880 = vpop.f32.mrf.mxu0
        %v1881 = vadd.f32 %v721, %v1880
        %1882 = vmatmul.bf16.gmra.mxu0 %v474
        %v1883 = vpop.f32.mrf.mxu0
        %v1884 = vadd.f32 %v721, %v1883
        %v1885 = vpop.f32.mrf.mxu0
        %v1886 = vadd.f32 %v721, %v1885
        %1887 = vmatmul.bf16.gmra.mxu0 %v481
        %v1888 = vpop.f32.mrf.mxu0
        %v1889 = vadd.f32 %v721, %v1888
        %v1890 = vpop.f32.mrf.mxu0
        %v1891 = vadd.f32 %v721, %v1890
        %1892 = vmatmul.bf16.gmra.mxu0 %v488
        %v1893 = vpop.f32.mrf.mxu0
        %v1894 = vadd.f32 %v721, %v1893
        %v1895 = vpop.f32.mrf.mxu0
        %v1896 = vadd.f32 %v721, %v1895
        %1897 = vdwg.mxu0
        %1898 = vmatpush.bf16.msra.mxu0 %v1461
        %1899 = vmatpush.bf16.msra.mxu0 %v1457
        %1900 = vmatpush.bf16.msra.mxu0 %v1453
        %1901 = vmatpush.bf16.msra.mxu0 %v1449
        %1902 = vmatpush.bf16.msra.mxu0 %v1445
        %1903 = vmatpush.bf16.msra.mxu0 %v1441
        %1904 = vmatpush.bf16.msra.mxu0 %v1437
        %1905 = vmatpush.bf16.msra.mxu0 %v1433
        %1906 = vmatmul.bf16.gmra.mxu0 %v440
        %v1907 = vpop.f32.mrf.mxu0
        %v1908 = vadd.f32 %v1859, %v1907
        %v1909 = vpop.f32.mrf.mxu0
        %v1910 = vadd.f32 %v1861, %v1909
        %1911 = vmatmul.bf16.gmra.mxu0 %v447
        %v1912 = vpop.f32.mrf.mxu0
        %v1913 = vadd.f32 %v1864, %v1912
        %v1914 = vpop.f32.mrf.mxu0
        %v1915 = vadd.f32 %v1866, %v1914
        %1916 = vmatmul.bf16.gmra.mxu0 %v454
        %v1917 = vpop.f32.mrf.mxu0
        %v1918 = vadd.f32 %v1869, %v1917
        %v1919 = vpop.f32.mrf.mxu0
        %v1920 = vadd.f32 %v1871, %v1919
        %1921 = vmatmul.bf16.gmra.mxu0 %v461
        %v1922 = vpop.f32.mrf.mxu0
        %v1923 = vadd.f32 %v1874, %v1922
        %v1924 = vpop.f32.mrf.mxu0
        %v1925 = vadd.f32 %v1876, %v1924
        %1926 = vmatmul.bf16.gmra.mxu0 %v468
        %v1927 = vpop.f32.mrf.mxu0
        %v1928 = vadd.f32 %v1879, %v1927
        %v1929 = vpop.f32.mrf.mxu0
        %v1930 = vadd.f32 %v1881, %v1929
        %1931 = vmatmul.bf16.gmra.mxu0 %v475
        %v1932 = vpop.f32.mrf.mxu0
        %v1933 = vadd.f32 %v1884, %v1932
        %v1934 = vpop.f32.mrf.mxu0
        %v1935 = vadd.f32 %v1886, %v1934
        %1936 = vmatmul.bf16.gmra.mxu0 %v482
        %v1937 = vpop.f32.mrf.mxu0
        %v1938 = vadd.f32 %v1889, %v1937
        %v1939 = vpop.f32.mrf.mxu0
        %v1940 = vadd.f32 %v1891, %v1939
        %1941 = vmatmul.bf16.gmra.mxu0 %v489
        %v1942 = vpop.f32.mrf.mxu0
        %v1943 = vadd.f32 %v1894, %v1942
        %v1944 = vpop.f32.mrf.mxu0
        %v1945 = vadd.f32 %v1896, %v1944
        %1946 = vdwg.mxu0
        %1947 = vmatpush.bf16.msra.mxu0 %v1493
        %1948 = vmatpush.bf16.msra.mxu0 %v1489
        %1949 = vmatpush.bf16.msra.mxu0 %v1485
        %1950 = vmatpush.bf16.msra.mxu0 %v1481
        %1951 = vmatpush.bf16.msra.mxu0 %v1477
        %1952 = vmatpush.bf16.msra.mxu0 %v1473
        %1953 = vmatpush.bf16.msra.mxu0 %v1469
        %1954 = vmatpush.bf16.msra.mxu0 %v1465
        %1955 = vmatmul.bf16.gmra.mxu0 %v441
        %v1956 = vpop.f32.mrf.mxu0
        %v1957 = vadd.f32 %v1908, %v1956
        %v1958 = vpop.f32.mrf.mxu0
        %v1959 = vadd.f32 %v1910, %v1958
        %1960 = vmatmul.bf16.gmra.mxu0 %v448
        %v1961 = vpop.f32.mrf.mxu0
        %v1962 = vadd.f32 %v1913, %v1961
        %v1963 = vpop.f32.mrf.mxu0
        %v1964 = vadd.f32 %v1915, %v1963
        %1965 = vmatmul.bf16.gmra.mxu0 %v455
        %v1966 = vpop.f32.mrf.mxu0
        %v1967 = vadd.f32 %v1918, %v1966
        %v1968 = vpop.f32.mrf.mxu0
        %v1969 = vadd.f32 %v1920, %v1968
        %1970 = vmatmul.bf16.gmra.mxu0 %v462
        %v1971 = vpop.f32.mrf.mxu0
        %v1972 = vadd.f32 %v1923, %v1971
        %v1973 = vpop.f32.mrf.mxu0
        %v1974 = vadd.f32 %v1925, %v1973
        %1975 = vmatmul.bf16.gmra.mxu0 %v469
        %v1976 = vpop.f32.mrf.mxu0
        %v1977 = vadd.f32 %v1928, %v1976
        %v1978 = vpop.f32.mrf.mxu0
        %v1979 = vadd.f32 %v1930, %v1978
        %1980 = vmatmul.bf16.gmra.mxu0 %v476
        %v1981 = vpop.f32.mrf.mxu0
        %v1982 = vadd.f32 %v1933, %v1981
        %v1983 = vpop.f32.mrf.mxu0
        %v1984 = vadd.f32 %v1935, %v1983
        %1985 = vmatmul.bf16.gmra.mxu0 %v483
        %v1986 = vpop.f32.mrf.mxu0
        %v1987 = vadd.f32 %v1938, %v1986
        %v1988 = vpop.f32.mrf.mxu0
        %v1989 = vadd.f32 %v1940, %v1988
        %1990 = vmatmul.bf16.gmra.mxu0 %v490
        %v1991 = vpop.f32.mrf.mxu0
        %v1992 = vadd.f32 %v1943, %v1991
        %v1993 = vpop.f32.mrf.mxu0
        %v1994 = vadd.f32 %v1945, %v1993
        %1995 = vdwg.mxu0
        %1996 = vmatpush.bf16.msra.mxu0 %v1525
        %1997 = vmatpush.bf16.msra.mxu0 %v1521
        %1998 = vmatpush.bf16.msra.mxu0 %v1517
        %1999 = vmatpush.bf16.msra.mxu0 %v1513
        %2000 = vmatpush.bf16.msra.mxu0 %v1509
        %2001 = vmatpush.bf16.msra.mxu0 %v1505
        %2002 = vmatpush.bf16.msra.mxu0 %v1501
        %2003 = vmatpush.bf16.msra.mxu0 %v1497
        %2004 = vmatmul.bf16.gmra.mxu0 %v442
        %v2005 = vpop.f32.mrf.mxu0
        %v2006 = vadd.f32 %v1957, %v2005
        %v2007 = vpop.f32.mrf.mxu0
        %v2008 = vadd.f32 %v1959, %v2007
        %2009 = vmatmul.bf16.gmra.mxu0 %v449
        %v2010 = vpop.f32.mrf.mxu0
        %v2011 = vadd.f32 %v1962, %v2010
        %v2012 = vpop.f32.mrf.mxu0
        %v2013 = vadd.f32 %v1964, %v2012
        %2014 = vmatmul.bf16.gmra.mxu0 %v456
        %v2015 = vpop.f32.mrf.mxu0
        %v2016 = vadd.f32 %v1967, %v2015
        %v2017 = vpop.f32.mrf.mxu0
        %v2018 = vadd.f32 %v1969, %v2017
        %2019 = vmatmul.bf16.gmra.mxu0 %v463
        %v2020 = vpop.f32.mrf.mxu0
        %v2021 = vadd.f32 %v1972, %v2020
        %v2022 = vpop.f32.mrf.mxu0
        %v2023 = vadd.f32 %v1974, %v2022
        %2024 = vmatmul.bf16.gmra.mxu0 %v470
        %v2025 = vpop.f32.mrf.mxu0
        %v2026 = vadd.f32 %v1977, %v2025
        %v2027 = vpop.f32.mrf.mxu0
        %v2028 = vadd.f32 %v1979, %v2027
        %2029 = vmatmul.bf16.gmra.mxu0 %v477
        %v2030 = vpop.f32.mrf.mxu0
        %v2031 = vadd.f32 %v1982, %v2030
        %v2032 = vpop.f32.mrf.mxu0
        %v2033 = vadd.f32 %v1984, %v2032
        %2034 = vmatmul.bf16.gmra.mxu0 %v484
        %v2035 = vpop.f32.mrf.mxu0
        %v2036 = vadd.f32 %v1987, %v2035
        %v2037 = vpop.f32.mrf.mxu0
        %v2038 = vadd.f32 %v1989, %v2037
        %2039 = vmatmul.bf16.gmra.mxu0 %v491
        %v2040 = vpop.f32.mrf.mxu0
        %v2041 = vadd.f32 %v1992, %v2040
        %v2042 = vpop.f32.mrf.mxu0
        %v2043 = vadd.f32 %v1994, %v2042
        %2044 = vdwg.mxu0
        %2045 = vmatpush.bf16.msra.mxu0 %v1557
        %2046 = vmatpush.bf16.msra.mxu0 %v1553
        %2047 = vmatpush.bf16.msra.mxu0 %v1549
        %2048 = vmatpush.bf16.msra.mxu0 %v1545
        %2049 = vmatpush.bf16.msra.mxu0 %v1541
        %2050 = vmatpush.bf16.msra.mxu0 %v1537
        %2051 = vmatpush.bf16.msra.mxu0 %v1533
        %2052 = vmatpush.bf16.msra.mxu0 %v1529
        %2053 = vmatmul.bf16.gmra.mxu0 %v443
        %v2054 = vpop.f32.mrf.mxu0
        %v2055 = vadd.f32 %v2006, %v2054
        %v2056 = vpop.f32.mrf.mxu0
        %v2057 = vadd.f32 %v2008, %v2056
        %2058 = vmatmul.bf16.gmra.mxu0 %v450
        %v2059 = vpop.f32.mrf.mxu0
        %v2060 = vadd.f32 %v2011, %v2059
        %v2061 = vpop.f32.mrf.mxu0
        %v2062 = vadd.f32 %v2013, %v2061
        %2063 = vmatmul.bf16.gmra.mxu0 %v457
        %v2064 = vpop.f32.mrf.mxu0
        %v2065 = vadd.f32 %v2016, %v2064
        %v2066 = vpop.f32.mrf.mxu0
        %v2067 = vadd.f32 %v2018, %v2066
        %2068 = vmatmul.bf16.gmra.mxu0 %v464
        %v2069 = vpop.f32.mrf.mxu0
        %v2070 = vadd.f32 %v2021, %v2069
        %v2071 = vpop.f32.mrf.mxu0
        %v2072 = vadd.f32 %v2023, %v2071
        %2073 = vmatmul.bf16.gmra.mxu0 %v471
        %v2074 = vpop.f32.mrf.mxu0
        %v2075 = vadd.f32 %v2026, %v2074
        %v2076 = vpop.f32.mrf.mxu0
        %v2077 = vadd.f32 %v2028, %v2076
        %2078 = vmatmul.bf16.gmra.mxu0 %v478
        %v2079 = vpop.f32.mrf.mxu0
        %v2080 = vadd.f32 %v2031, %v2079
        %v2081 = vpop.f32.mrf.mxu0
        %v2082 = vadd.f32 %v2033, %v2081
        %2083 = vmatmul.bf16.gmra.mxu0 %v485
        %v2084 = vpop.f32.mrf.mxu0
        %v2085 = vadd.f32 %v2036, %v2084
        %v2086 = vpop.f32.mrf.mxu0
        %v2087 = vadd.f32 %v2038, %v2086
        %2088 = vmatmul.bf16.gmra.mxu0 %v492
        %v2089 = vpop.f32.mrf.mxu0
        %v2090 = vadd.f32 %v2041, %v2089
        %v2091 = vpop.f32.mrf.mxu0
        %v2092 = vadd.f32 %v2043, %v2091
        %2093 = vdwg.mxu0
        %2094 = vmatpush.bf16.msra.mxu0 %v1589
        %2095 = vmatpush.bf16.msra.mxu0 %v1585
        %2096 = vmatpush.bf16.msra.mxu0 %v1581
        %2097 = vmatpush.bf16.msra.mxu0 %v1577
        %2098 = vmatpush.bf16.msra.mxu0 %v1573
        %2099 = vmatpush.bf16.msra.mxu0 %v1569
        %2100 = vmatpush.bf16.msra.mxu0 %v1565
        %2101 = vmatpush.bf16.msra.mxu0 %v1561
        %2102 = vmatmul.bf16.gmra.mxu0 %v444
        %v2103 = vpop.f32.mrf.mxu0
        %v2104 = vadd.f32 %v2055, %v2103
        %v2105 = vpop.f32.mrf.mxu0
        %v2106 = vadd.f32 %v2057, %v2105
        %2107 = vmatmul.bf16.gmra.mxu0 %v451
        %v2108 = vpop.f32.mrf.mxu0
        %v2109 = vadd.f32 %v2060, %v2108
        %v2110 = vpop.f32.mrf.mxu0
        %v2111 = vadd.f32 %v2062, %v2110
        %2112 = vmatmul.bf16.gmra.mxu0 %v458
        %v2113 = vpop.f32.mrf.mxu0
        %v2114 = vadd.f32 %v2065, %v2113
        %v2115 = vpop.f32.mrf.mxu0
        %v2116 = vadd.f32 %v2067, %v2115
        %2117 = vmatmul.bf16.gmra.mxu0 %v465
        %v2118 = vpop.f32.mrf.mxu0
        %v2119 = vadd.f32 %v2070, %v2118
        %v2120 = vpop.f32.mrf.mxu0
        %v2121 = vadd.f32 %v2072, %v2120
        %2122 = vmatmul.bf16.gmra.mxu0 %v472
        %v2123 = vpop.f32.mrf.mxu0
        %v2124 = vadd.f32 %v2075, %v2123
        %v2125 = vpop.f32.mrf.mxu0
        %v2126 = vadd.f32 %v2077, %v2125
        %2127 = vmatmul.bf16.gmra.mxu0 %v479
        %v2128 = vpop.f32.mrf.mxu0
        %v2129 = vadd.f32 %v2080, %v2128
        %v2130 = vpop.f32.mrf.mxu0
        %v2131 = vadd.f32 %v2082, %v2130
        %2132 = vmatmul.bf16.gmra.mxu0 %v486
        %v2133 = vpop.f32.mrf.mxu0
        %v2134 = vadd.f32 %v2085, %v2133
        %v2135 = vpop.f32.mrf.mxu0
        %v2136 = vadd.f32 %v2087, %v2135
        %2137 = vmatmul.bf16.gmra.mxu0 %v493
        %v2138 = vpop.f32.mrf.mxu0
        %v2139 = vadd.f32 %v2090, %v2138
        %v2140 = vpop.f32.mrf.mxu0
        %v2141 = vadd.f32 %v2092, %v2140
        %2142 = vdwg.mxu0
        %2143 = vmatpush.bf16.msra.mxu0 %v1621
        %2144 = vmatpush.bf16.msra.mxu0 %v1617
        %2145 = vmatpush.bf16.msra.mxu0 %v1613
        %2146 = vmatpush.bf16.msra.mxu0 %v1609
        %2147 = vmatpush.bf16.msra.mxu0 %v1605
        %2148 = vmatpush.bf16.msra.mxu0 %v1601
        %2149 = vmatpush.bf16.msra.mxu0 %v1597
        %2150 = vmatpush.bf16.msra.mxu0 %v1593
        %2151 = vmatmul.bf16.gmra.mxu0 %v445
        %v2152 = vpop.f32.mrf.mxu0
        %v2153 = vadd.f32 %v2104, %v2152
        %v2154 = vpop.f32.mrf.mxu0
        %v2155 = vadd.f32 %v2106, %v2154
        %2156 = vmatmul.bf16.gmra.mxu0 %v452
        %v2157 = vpop.f32.mrf.mxu0
        %v2158 = vadd.f32 %v2109, %v2157
        %v2159 = vpop.f32.mrf.mxu0
        %v2160 = vadd.f32 %v2111, %v2159
        %2161 = vmatmul.bf16.gmra.mxu0 %v459
        %v2162 = vpop.f32.mrf.mxu0
        %v2163 = vadd.f32 %v2114, %v2162
        %v2164 = vpop.f32.mrf.mxu0
        %v2165 = vadd.f32 %v2116, %v2164
        %2166 = vmatmul.bf16.gmra.mxu0 %v466
        %v2167 = vpop.f32.mrf.mxu0
        %v2168 = vadd.f32 %v2119, %v2167
        %v2169 = vpop.f32.mrf.mxu0
        %v2170 = vadd.f32 %v2121, %v2169
        %2171 = vmatmul.bf16.gmra.mxu0 %v473
        %v2172 = vpop.f32.mrf.mxu0
        %v2173 = vadd.f32 %v2124, %v2172
        %v2174 = vpop.f32.mrf.mxu0
        %v2175 = vadd.f32 %v2126, %v2174
        %2176 = vmatmul.bf16.gmra.mxu0 %v480
        %v2177 = vpop.f32.mrf.mxu0
        %v2178 = vadd.f32 %v2129, %v2177
        %v2179 = vpop.f32.mrf.mxu0
        %v2180 = vadd.f32 %v2131, %v2179
        %2181 = vmatmul.bf16.gmra.mxu0 %v487
        %v2182 = vpop.f32.mrf.mxu0
        %v2183 = vadd.f32 %v2134, %v2182
        %v2184 = vpop.f32.mrf.mxu0
        %v2185 = vadd.f32 %v2136, %v2184
        %2186 = vmatmul.bf16.gmra.mxu0 %v494
        %v2187 = vpop.f32.mrf.mxu0
        %v2188 = vadd.f32 %v2139, %v2187
        %v2189 = vpop.f32.mrf.mxu0
        %v2190 = vadd.f32 %v2141, %v2189
        %2191 = vdwg.mxu0
        %2192 = vmatpush.bf16.msra.mxu0 %v1430
        %2193 = vmatpush.bf16.msra.mxu0 %v1426
        %2194 = vmatpush.bf16.msra.mxu0 %v1422
        %2195 = vmatpush.bf16.msra.mxu0 %v1418
        %2196 = vmatpush.bf16.msra.mxu0 %v1414
        %2197 = vmatpush.bf16.msra.mxu0 %v1410
        %2198 = vmatpush.bf16.msra.mxu0 %v1406
        %2199 = vmatpush.bf16.msra.mxu0 %v1402
        %2200 = vmatmul.bf16.gmra.mxu0 %v439
        %v2201 = vpop.f32.mrf.mxu0
        %v2202 = vadd.f32 %v722, %v2201
        %v2203 = vpop.f32.mrf.mxu0
        %v2204 = vadd.f32 %v722, %v2203
        %2205 = vmatmul.bf16.gmra.mxu0 %v446
        %v2206 = vpop.f32.mrf.mxu0
        %v2207 = vadd.f32 %v722, %v2206
        %v2208 = vpop.f32.mrf.mxu0
        %v2209 = vadd.f32 %v722, %v2208
        %2210 = vmatmul.bf16.gmra.mxu0 %v453
        %v2211 = vpop.f32.mrf.mxu0
        %v2212 = vadd.f32 %v722, %v2211
        %v2213 = vpop.f32.mrf.mxu0
        %v2214 = vadd.f32 %v722, %v2213
        %2215 = vmatmul.bf16.gmra.mxu0 %v460
        %v2216 = vpop.f32.mrf.mxu0
        %v2217 = vadd.f32 %v722, %v2216
        %v2218 = vpop.f32.mrf.mxu0
        %v2219 = vadd.f32 %v722, %v2218
        %2220 = vmatmul.bf16.gmra.mxu0 %v467
        %v2221 = vpop.f32.mrf.mxu0
        %v2222 = vadd.f32 %v722, %v2221
        %v2223 = vpop.f32.mrf.mxu0
        %v2224 = vadd.f32 %v722, %v2223
        %2225 = vmatmul.bf16.gmra.mxu0 %v474
        %v2226 = vpop.f32.mrf.mxu0
        %v2227 = vadd.f32 %v722, %v2226
        %v2228 = vpop.f32.mrf.mxu0
        %v2229 = vadd.f32 %v722, %v2228
        %2230 = vmatmul.bf16.gmra.mxu0 %v481
        %v2231 = vpop.f32.mrf.mxu0
        %v2232 = vadd.f32 %v722, %v2231
        %v2233 = vpop.f32.mrf.mxu0
        %v2234 = vadd.f32 %v722, %v2233
        %2235 = vmatmul.bf16.gmra.mxu0 %v488
        %v2236 = vpop.f32.mrf.mxu0
        %v2237 = vadd.f32 %v722, %v2236
        %v2238 = vpop.f32.mrf.mxu0
        %v2239 = vadd.f32 %v722, %v2238
        %2240 = vdwg.mxu0
        %2241 = vmatpush.bf16.msra.mxu0 %v1462
        %2242 = vmatpush.bf16.msra.mxu0 %v1458
        %2243 = vmatpush.bf16.msra.mxu0 %v1454
        %2244 = vmatpush.bf16.msra.mxu0 %v1450
        %2245 = vmatpush.bf16.msra.mxu0 %v1446
        %2246 = vmatpush.bf16.msra.mxu0 %v1442
        %2247 = vmatpush.bf16.msra.mxu0 %v1438
        %2248 = vmatpush.bf16.msra.mxu0 %v1434
        %2249 = vmatmul.bf16.gmra.mxu0 %v440
        %v2250 = vpop.f32.mrf.mxu0
        %v2251 = vadd.f32 %v2202, %v2250
        %v2252 = vpop.f32.mrf.mxu0
        %v2253 = vadd.f32 %v2204, %v2252
        %2254 = vmatmul.bf16.gmra.mxu0 %v447
        %v2255 = vpop.f32.mrf.mxu0
        %v2256 = vadd.f32 %v2207, %v2255
        %v2257 = vpop.f32.mrf.mxu0
        %v2258 = vadd.f32 %v2209, %v2257
        %2259 = vmatmul.bf16.gmra.mxu0 %v454
        %v2260 = vpop.f32.mrf.mxu0
        %v2261 = vadd.f32 %v2212, %v2260
        %v2262 = vpop.f32.mrf.mxu0
        %v2263 = vadd.f32 %v2214, %v2262
        %2264 = vmatmul.bf16.gmra.mxu0 %v461
        %v2265 = vpop.f32.mrf.mxu0
        %v2266 = vadd.f32 %v2217, %v2265
        %v2267 = vpop.f32.mrf.mxu0
        %v2268 = vadd.f32 %v2219, %v2267
        %2269 = vmatmul.bf16.gmra.mxu0 %v468
        %v2270 = vpop.f32.mrf.mxu0
        %v2271 = vadd.f32 %v2222, %v2270
        %v2272 = vpop.f32.mrf.mxu0
        %v2273 = vadd.f32 %v2224, %v2272
        %2274 = vmatmul.bf16.gmra.mxu0 %v475
        %v2275 = vpop.f32.mrf.mxu0
        %v2276 = vadd.f32 %v2227, %v2275
        %v2277 = vpop.f32.mrf.mxu0
        %v2278 = vadd.f32 %v2229, %v2277
        %2279 = vmatmul.bf16.gmra.mxu0 %v482
        %v2280 = vpop.f32.mrf.mxu0
        %v2281 = vadd.f32 %v2232, %v2280
        %v2282 = vpop.f32.mrf.mxu0
        %v2283 = vadd.f32 %v2234, %v2282
        %2284 = vmatmul.bf16.gmra.mxu0 %v489
        %v2285 = vpop.f32.mrf.mxu0
        %v2286 = vadd.f32 %v2237, %v2285
        %v2287 = vpop.f32.mrf.mxu0
        %v2288 = vadd.f32 %v2239, %v2287
        %2289 = vdwg.mxu0
        %2290 = vmatpush.bf16.msra.mxu0 %v1494
        %2291 = vmatpush.bf16.msra.mxu0 %v1490
        %2292 = vmatpush.bf16.msra.mxu0 %v1486
        %2293 = vmatpush.bf16.msra.mxu0 %v1482
        %2294 = vmatpush.bf16.msra.mxu0 %v1478
        %2295 = vmatpush.bf16.msra.mxu0 %v1474
        %2296 = vmatpush.bf16.msra.mxu0 %v1470
        %2297 = vmatpush.bf16.msra.mxu0 %v1466
        %2298 = vmatmul.bf16.gmra.mxu0 %v441
        %v2299 = vpop.f32.mrf.mxu0
        %v2300 = vadd.f32 %v2251, %v2299
        %v2301 = vpop.f32.mrf.mxu0
        %v2302 = vadd.f32 %v2253, %v2301
        %2303 = vmatmul.bf16.gmra.mxu0 %v448
        %v2304 = vpop.f32.mrf.mxu0
        %v2305 = vadd.f32 %v2256, %v2304
        %v2306 = vpop.f32.mrf.mxu0
        %v2307 = vadd.f32 %v2258, %v2306
        %2308 = vmatmul.bf16.gmra.mxu0 %v455
        %v2309 = vpop.f32.mrf.mxu0
        %v2310 = vadd.f32 %v2261, %v2309
        %v2311 = vpop.f32.mrf.mxu0
        %v2312 = vadd.f32 %v2263, %v2311
        %2313 = vmatmul.bf16.gmra.mxu0 %v462
        %v2314 = vpop.f32.mrf.mxu0
        %v2315 = vadd.f32 %v2266, %v2314
        %v2316 = vpop.f32.mrf.mxu0
        %v2317 = vadd.f32 %v2268, %v2316
        %2318 = vmatmul.bf16.gmra.mxu0 %v469
        %v2319 = vpop.f32.mrf.mxu0
        %v2320 = vadd.f32 %v2271, %v2319
        %v2321 = vpop.f32.mrf.mxu0
        %v2322 = vadd.f32 %v2273, %v2321
        %2323 = vmatmul.bf16.gmra.mxu0 %v476
        %v2324 = vpop.f32.mrf.mxu0
        %v2325 = vadd.f32 %v2276, %v2324
        %v2326 = vpop.f32.mrf.mxu0
        %v2327 = vadd.f32 %v2278, %v2326
        %2328 = vmatmul.bf16.gmra.mxu0 %v483
        %v2329 = vpop.f32.mrf.mxu0
        %v2330 = vadd.f32 %v2281, %v2329
        %v2331 = vpop.f32.mrf.mxu0
        %v2332 = vadd.f32 %v2283, %v2331
        %2333 = vmatmul.bf16.gmra.mxu0 %v490
        %v2334 = vpop.f32.mrf.mxu0
        %v2335 = vadd.f32 %v2286, %v2334
        %v2336 = vpop.f32.mrf.mxu0
        %v2337 = vadd.f32 %v2288, %v2336
        %2338 = vdwg.mxu0
        %2339 = vmatpush.bf16.msra.mxu0 %v1526
        %2340 = vmatpush.bf16.msra.mxu0 %v1522
        %2341 = vmatpush.bf16.msra.mxu0 %v1518
        %2342 = vmatpush.bf16.msra.mxu0 %v1514
        %2343 = vmatpush.bf16.msra.mxu0 %v1510
        %2344 = vmatpush.bf16.msra.mxu0 %v1506
        %2345 = vmatpush.bf16.msra.mxu0 %v1502
        %2346 = vmatpush.bf16.msra.mxu0 %v1498
        %2347 = vmatmul.bf16.gmra.mxu0 %v442
        %v2348 = vpop.f32.mrf.mxu0
        %v2349 = vadd.f32 %v2300, %v2348
        %v2350 = vpop.f32.mrf.mxu0
        %v2351 = vadd.f32 %v2302, %v2350
        %2352 = vmatmul.bf16.gmra.mxu0 %v449
        %v2353 = vpop.f32.mrf.mxu0
        %v2354 = vadd.f32 %v2305, %v2353
        %v2355 = vpop.f32.mrf.mxu0
        %v2356 = vadd.f32 %v2307, %v2355
        %2357 = vmatmul.bf16.gmra.mxu0 %v456
        %v2358 = vpop.f32.mrf.mxu0
        %v2359 = vadd.f32 %v2310, %v2358
        %v2360 = vpop.f32.mrf.mxu0
        %v2361 = vadd.f32 %v2312, %v2360
        %2362 = vmatmul.bf16.gmra.mxu0 %v463
        %v2363 = vpop.f32.mrf.mxu0
        %v2364 = vadd.f32 %v2315, %v2363
        %v2365 = vpop.f32.mrf.mxu0
        %v2366 = vadd.f32 %v2317, %v2365
        %2367 = vmatmul.bf16.gmra.mxu0 %v470
        %v2368 = vpop.f32.mrf.mxu0
        %v2369 = vadd.f32 %v2320, %v2368
        %v2370 = vpop.f32.mrf.mxu0
        %v2371 = vadd.f32 %v2322, %v2370
        %2372 = vmatmul.bf16.gmra.mxu0 %v477
        %v2373 = vpop.f32.mrf.mxu0
        %v2374 = vadd.f32 %v2325, %v2373
        %v2375 = vpop.f32.mrf.mxu0
        %v2376 = vadd.f32 %v2327, %v2375
        %2377 = vmatmul.bf16.gmra.mxu0 %v484
        %v2378 = vpop.f32.mrf.mxu0
        %v2379 = vadd.f32 %v2330, %v2378
        %v2380 = vpop.f32.mrf.mxu0
        %v2381 = vadd.f32 %v2332, %v2380
        %2382 = vmatmul.bf16.gmra.mxu0 %v491
        %v2383 = vpop.f32.mrf.mxu0
        %v2384 = vadd.f32 %v2335, %v2383
        %v2385 = vpop.f32.mrf.mxu0
        %v2386 = vadd.f32 %v2337, %v2385
        %2387 = vdwg.mxu0
        %2388 = vmatpush.bf16.msra.mxu0 %v1558
        %2389 = vmatpush.bf16.msra.mxu0 %v1554
        %2390 = vmatpush.bf16.msra.mxu0 %v1550
        %2391 = vmatpush.bf16.msra.mxu0 %v1546
        %2392 = vmatpush.bf16.msra.mxu0 %v1542
        %2393 = vmatpush.bf16.msra.mxu0 %v1538
        %2394 = vmatpush.bf16.msra.mxu0 %v1534
        %2395 = vmatpush.bf16.msra.mxu0 %v1530
        %2396 = vmatmul.bf16.gmra.mxu0 %v443
        %v2397 = vpop.f32.mrf.mxu0
        %v2398 = vadd.f32 %v2349, %v2397
        %v2399 = vpop.f32.mrf.mxu0
        %v2400 = vadd.f32 %v2351, %v2399
        %2401 = vmatmul.bf16.gmra.mxu0 %v450
        %v2402 = vpop.f32.mrf.mxu0
        %v2403 = vadd.f32 %v2354, %v2402
        %v2404 = vpop.f32.mrf.mxu0
        %v2405 = vadd.f32 %v2356, %v2404
        %2406 = vmatmul.bf16.gmra.mxu0 %v457
        %v2407 = vpop.f32.mrf.mxu0
        %v2408 = vadd.f32 %v2359, %v2407
        %v2409 = vpop.f32.mrf.mxu0
        %v2410 = vadd.f32 %v2361, %v2409
        %2411 = vmatmul.bf16.gmra.mxu0 %v464
        %v2412 = vpop.f32.mrf.mxu0
        %v2413 = vadd.f32 %v2364, %v2412
        %v2414 = vpop.f32.mrf.mxu0
        %v2415 = vadd.f32 %v2366, %v2414
        %2416 = vmatmul.bf16.gmra.mxu0 %v471
        %v2417 = vpop.f32.mrf.mxu0
        %v2418 = vadd.f32 %v2369, %v2417
        %v2419 = vpop.f32.mrf.mxu0
        %v2420 = vadd.f32 %v2371, %v2419
        %2421 = vmatmul.bf16.gmra.mxu0 %v478
        %v2422 = vpop.f32.mrf.mxu0
        %v2423 = vadd.f32 %v2374, %v2422
        %v2424 = vpop.f32.mrf.mxu0
        %v2425 = vadd.f32 %v2376, %v2424
        %2426 = vmatmul.bf16.gmra.mxu0 %v485
        %v2427 = vpop.f32.mrf.mxu0
        %v2428 = vadd.f32 %v2379, %v2427
        %v2429 = vpop.f32.mrf.mxu0
        %v2430 = vadd.f32 %v2381, %v2429
        %2431 = vmatmul.bf16.gmra.mxu0 %v492
        %v2432 = vpop.f32.mrf.mxu0
        %v2433 = vadd.f32 %v2384, %v2432
        %v2434 = vpop.f32.mrf.mxu0
        %v2435 = vadd.f32 %v2386, %v2434
        %2436 = vdwg.mxu0
        %2437 = vmatpush.bf16.msra.mxu0 %v1590
        %2438 = vmatpush.bf16.msra.mxu0 %v1586
        %2439 = vmatpush.bf16.msra.mxu0 %v1582
        %2440 = vmatpush.bf16.msra.mxu0 %v1578
        %2441 = vmatpush.bf16.msra.mxu0 %v1574
        %2442 = vmatpush.bf16.msra.mxu0 %v1570
        %2443 = vmatpush.bf16.msra.mxu0 %v1566
        %2444 = vmatpush.bf16.msra.mxu0 %v1562
        %2445 = vmatmul.bf16.gmra.mxu0 %v444
        %v2446 = vpop.f32.mrf.mxu0
        %v2447 = vadd.f32 %v2398, %v2446
        %v2448 = vpop.f32.mrf.mxu0
        %v2449 = vadd.f32 %v2400, %v2448
        %2450 = vmatmul.bf16.gmra.mxu0 %v451
        %v2451 = vpop.f32.mrf.mxu0
        %v2452 = vadd.f32 %v2403, %v2451
        %v2453 = vpop.f32.mrf.mxu0
        %v2454 = vadd.f32 %v2405, %v2453
        %2455 = vmatmul.bf16.gmra.mxu0 %v458
        %v2456 = vpop.f32.mrf.mxu0
        %v2457 = vadd.f32 %v2408, %v2456
        %v2458 = vpop.f32.mrf.mxu0
        %v2459 = vadd.f32 %v2410, %v2458
        %2460 = vmatmul.bf16.gmra.mxu0 %v465
        %v2461 = vpop.f32.mrf.mxu0
        %v2462 = vadd.f32 %v2413, %v2461
        %v2463 = vpop.f32.mrf.mxu0
        %v2464 = vadd.f32 %v2415, %v2463
        %2465 = vmatmul.bf16.gmra.mxu0 %v472
        %v2466 = vpop.f32.mrf.mxu0
        %v2467 = vadd.f32 %v2418, %v2466
        %v2468 = vpop.f32.mrf.mxu0
        %v2469 = vadd.f32 %v2420, %v2468
        %2470 = vmatmul.bf16.gmra.mxu0 %v479
        %v2471 = vpop.f32.mrf.mxu0
        %v2472 = vadd.f32 %v2423, %v2471
        %v2473 = vpop.f32.mrf.mxu0
        %v2474 = vadd.f32 %v2425, %v2473
        %2475 = vmatmul.bf16.gmra.mxu0 %v486
        %v2476 = vpop.f32.mrf.mxu0
        %v2477 = vadd.f32 %v2428, %v2476
        %v2478 = vpop.f32.mrf.mxu0
        %v2479 = vadd.f32 %v2430, %v2478
        %2480 = vmatmul.bf16.gmra.mxu0 %v493
        %v2481 = vpop.f32.mrf.mxu0
        %v2482 = vadd.f32 %v2433, %v2481
        %v2483 = vpop.f32.mrf.mxu0
        %v2484 = vadd.f32 %v2435, %v2483
        %2485 = vdwg.mxu0
        %2486 = vmatpush.bf16.msra.mxu0 %v1622
        %2487 = vmatpush.bf16.msra.mxu0 %v1618
        %2488 = vmatpush.bf16.msra.mxu0 %v1614
        %2489 = vmatpush.bf16.msra.mxu0 %v1610
        %2490 = vmatpush.bf16.msra.mxu0 %v1606
        %2491 = vmatpush.bf16.msra.mxu0 %v1602
        %2492 = vmatpush.bf16.msra.mxu0 %v1598
        %2493 = vmatpush.bf16.msra.mxu0 %v1594
        %2494 = vmatmul.bf16.gmra.mxu0 %v445
        %v2495 = vpop.f32.mrf.mxu0
        %v2496 = vadd.f32 %v2447, %v2495
        %v2497 = vpop.f32.mrf.mxu0
        %v2498 = vadd.f32 %v2449, %v2497
        %2499 = vmatmul.bf16.gmra.mxu0 %v452
        %v2500 = vpop.f32.mrf.mxu0
        %v2501 = vadd.f32 %v2452, %v2500
        %v2502 = vpop.f32.mrf.mxu0
        %v2503 = vadd.f32 %v2454, %v2502
        %2504 = vmatmul.bf16.gmra.mxu0 %v459
        %v2505 = vpop.f32.mrf.mxu0
        %v2506 = vadd.f32 %v2457, %v2505
        %v2507 = vpop.f32.mrf.mxu0
        %v2508 = vadd.f32 %v2459, %v2507
        %2509 = vmatmul.bf16.gmra.mxu0 %v466
        %v2510 = vpop.f32.mrf.mxu0
        %v2511 = vadd.f32 %v2462, %v2510
        %v2512 = vpop.f32.mrf.mxu0
        %v2513 = vadd.f32 %v2464, %v2512
        %2514 = vmatmul.bf16.gmra.mxu0 %v473
        %v2515 = vpop.f32.mrf.mxu0
        %v2516 = vadd.f32 %v2467, %v2515
        %v2517 = vpop.f32.mrf.mxu0
        %v2518 = vadd.f32 %v2469, %v2517
        %2519 = vmatmul.bf16.gmra.mxu0 %v480
        %v2520 = vpop.f32.mrf.mxu0
        %v2521 = vadd.f32 %v2472, %v2520
        %v2522 = vpop.f32.mrf.mxu0
        %v2523 = vadd.f32 %v2474, %v2522
        %2524 = vmatmul.bf16.gmra.mxu0 %v487
        %v2525 = vpop.f32.mrf.mxu0
        %v2526 = vadd.f32 %v2477, %v2525
        %v2527 = vpop.f32.mrf.mxu0
        %v2528 = vadd.f32 %v2479, %v2527
        %2529 = vmatmul.bf16.gmra.mxu0 %v494
        %v2530 = vpop.f32.mrf.mxu0
        %v2531 = vadd.f32 %v2482, %v2530
        %v2532 = vpop.f32.mrf.mxu0
        %v2533 = vadd.f32 %v2484, %v2532
        %2534 = vdwg.mxu0
        %2535 = vmatpush.bf16.msra.mxu0 %v1431
        %2536 = vmatpush.bf16.msra.mxu0 %v1427
        %2537 = vmatpush.bf16.msra.mxu0 %v1423
        %2538 = vmatpush.bf16.msra.mxu0 %v1419
        %2539 = vmatpush.bf16.msra.mxu0 %v1415
        %2540 = vmatpush.bf16.msra.mxu0 %v1411
        %2541 = vmatpush.bf16.msra.mxu0 %v1407
        %2542 = vmatpush.bf16.msra.mxu0 %v1403
        %2543 = vmatmul.bf16.gmra.mxu0 %v439
        %v2544 = vpop.f32.mrf.mxu0
        %v2545 = vadd.f32 %v723, %v2544
        %v2546 = vpop.f32.mrf.mxu0
        %v2547 = vadd.f32 %v723, %v2546
        %2548 = vmatmul.bf16.gmra.mxu0 %v446
        %v2549 = vpop.f32.mrf.mxu0
        %v2550 = vadd.f32 %v723, %v2549
        %v2551 = vpop.f32.mrf.mxu0
        %v2552 = vadd.f32 %v723, %v2551
        %2553 = vmatmul.bf16.gmra.mxu0 %v453
        %v2554 = vpop.f32.mrf.mxu0
        %v2555 = vadd.f32 %v723, %v2554
        %v2556 = vpop.f32.mrf.mxu0
        %v2557 = vadd.f32 %v723, %v2556
        %2558 = vmatmul.bf16.gmra.mxu0 %v460
        %v2559 = vpop.f32.mrf.mxu0
        %v2560 = vadd.f32 %v723, %v2559
        %v2561 = vpop.f32.mrf.mxu0
        %v2562 = vadd.f32 %v723, %v2561
        %2563 = vmatmul.bf16.gmra.mxu0 %v467
        %v2564 = vpop.f32.mrf.mxu0
        %v2565 = vadd.f32 %v723, %v2564
        %v2566 = vpop.f32.mrf.mxu0
        %v2567 = vadd.f32 %v723, %v2566
        %2568 = vmatmul.bf16.gmra.mxu0 %v474
        %v2569 = vpop.f32.mrf.mxu0
        %v2570 = vadd.f32 %v723, %v2569
        %v2571 = vpop.f32.mrf.mxu0
        %v2572 = vadd.f32 %v723, %v2571
        %2573 = vmatmul.bf16.gmra.mxu0 %v481
        %v2574 = vpop.f32.mrf.mxu0
        %v2575 = vadd.f32 %v723, %v2574
        %v2576 = vpop.f32.mrf.mxu0
        %v2577 = vadd.f32 %v723, %v2576
        %2578 = vmatmul.bf16.gmra.mxu0 %v488
        %v2579 = vpop.f32.mrf.mxu0
        %v2580 = vadd.f32 %v723, %v2579
        %v2581 = vpop.f32.mrf.mxu0
        %v2582 = vadd.f32 %v723, %v2581
        %2583 = vdwg.mxu0
        %2584 = vmatpush.bf16.msra.mxu0 %v1463
        %2585 = vmatpush.bf16.msra.mxu0 %v1459
        %2586 = vmatpush.bf16.msra.mxu0 %v1455
        %2587 = vmatpush.bf16.msra.mxu0 %v1451
        %2588 = vmatpush.bf16.msra.mxu0 %v1447
        %2589 = vmatpush.bf16.msra.mxu0 %v1443
        %2590 = vmatpush.bf16.msra.mxu0 %v1439
        %2591 = vmatpush.bf16.msra.mxu0 %v1435
        %2592 = vmatmul.bf16.gmra.mxu0 %v440
        %v2593 = vpop.f32.mrf.mxu0
        %v2594 = vadd.f32 %v2545, %v2593
        %v2595 = vpop.f32.mrf.mxu0
        %v2596 = vadd.f32 %v2547, %v2595
        %2597 = vmatmul.bf16.gmra.mxu0 %v447
        %v2598 = vpop.f32.mrf.mxu0
        %v2599 = vadd.f32 %v2550, %v2598
        %v2600 = vpop.f32.mrf.mxu0
        %v2601 = vadd.f32 %v2552, %v2600
        %2602 = vmatmul.bf16.gmra.mxu0 %v454
        %v2603 = vpop.f32.mrf.mxu0
        %v2604 = vadd.f32 %v2555, %v2603
        %v2605 = vpop.f32.mrf.mxu0
        %v2606 = vadd.f32 %v2557, %v2605
        %2607 = vmatmul.bf16.gmra.mxu0 %v461
        %v2608 = vpop.f32.mrf.mxu0
        %v2609 = vadd.f32 %v2560, %v2608
        %v2610 = vpop.f32.mrf.mxu0
        %v2611 = vadd.f32 %v2562, %v2610
        %2612 = vmatmul.bf16.gmra.mxu0 %v468
        %v2613 = vpop.f32.mrf.mxu0
        %v2614 = vadd.f32 %v2565, %v2613
        %v2615 = vpop.f32.mrf.mxu0
        %v2616 = vadd.f32 %v2567, %v2615
        %2617 = vmatmul.bf16.gmra.mxu0 %v475
        %v2618 = vpop.f32.mrf.mxu0
        %v2619 = vadd.f32 %v2570, %v2618
        %v2620 = vpop.f32.mrf.mxu0
        %v2621 = vadd.f32 %v2572, %v2620
        %2622 = vmatmul.bf16.gmra.mxu0 %v482
        %v2623 = vpop.f32.mrf.mxu0
        %v2624 = vadd.f32 %v2575, %v2623
        %v2625 = vpop.f32.mrf.mxu0
        %v2626 = vadd.f32 %v2577, %v2625
        %2627 = vmatmul.bf16.gmra.mxu0 %v489
        %v2628 = vpop.f32.mrf.mxu0
        %v2629 = vadd.f32 %v2580, %v2628
        %v2630 = vpop.f32.mrf.mxu0
        %v2631 = vadd.f32 %v2582, %v2630
        %2632 = vdwg.mxu0
        %2633 = vmatpush.bf16.msra.mxu0 %v1495
        %2634 = vmatpush.bf16.msra.mxu0 %v1491
        %2635 = vmatpush.bf16.msra.mxu0 %v1487
        %2636 = vmatpush.bf16.msra.mxu0 %v1483
        %2637 = vmatpush.bf16.msra.mxu0 %v1479
        %2638 = vmatpush.bf16.msra.mxu0 %v1475
        %2639 = vmatpush.bf16.msra.mxu0 %v1471
        %2640 = vmatpush.bf16.msra.mxu0 %v1467
        %2641 = vmatmul.bf16.gmra.mxu0 %v441
        %v2642 = vpop.f32.mrf.mxu0
        %v2643 = vadd.f32 %v2594, %v2642
        %v2644 = vpop.f32.mrf.mxu0
        %v2645 = vadd.f32 %v2596, %v2644
        %2646 = vmatmul.bf16.gmra.mxu0 %v448
        %v2647 = vpop.f32.mrf.mxu0
        %v2648 = vadd.f32 %v2599, %v2647
        %v2649 = vpop.f32.mrf.mxu0
        %v2650 = vadd.f32 %v2601, %v2649
        %2651 = vmatmul.bf16.gmra.mxu0 %v455
        %v2652 = vpop.f32.mrf.mxu0
        %v2653 = vadd.f32 %v2604, %v2652
        %v2654 = vpop.f32.mrf.mxu0
        %v2655 = vadd.f32 %v2606, %v2654
        %2656 = vmatmul.bf16.gmra.mxu0 %v462
        %v2657 = vpop.f32.mrf.mxu0
        %v2658 = vadd.f32 %v2609, %v2657
        %v2659 = vpop.f32.mrf.mxu0
        %v2660 = vadd.f32 %v2611, %v2659
        %2661 = vmatmul.bf16.gmra.mxu0 %v469
        %v2662 = vpop.f32.mrf.mxu0
        %v2663 = vadd.f32 %v2614, %v2662
        %v2664 = vpop.f32.mrf.mxu0
        %v2665 = vadd.f32 %v2616, %v2664
        %2666 = vmatmul.bf16.gmra.mxu0 %v476
        %v2667 = vpop.f32.mrf.mxu0
        %v2668 = vadd.f32 %v2619, %v2667
        %v2669 = vpop.f32.mrf.mxu0
        %v2670 = vadd.f32 %v2621, %v2669
        %2671 = vmatmul.bf16.gmra.mxu0 %v483
        %v2672 = vpop.f32.mrf.mxu0
        %v2673 = vadd.f32 %v2624, %v2672
        %v2674 = vpop.f32.mrf.mxu0
        %v2675 = vadd.f32 %v2626, %v2674
        %2676 = vmatmul.bf16.gmra.mxu0 %v490
        %v2677 = vpop.f32.mrf.mxu0
        %v2678 = vadd.f32 %v2629, %v2677
        %v2679 = vpop.f32.mrf.mxu0
        %v2680 = vadd.f32 %v2631, %v2679
        %2681 = vdwg.mxu0
        %2682 = vmatpush.bf16.msra.mxu0 %v1527
        %2683 = vmatpush.bf16.msra.mxu0 %v1523
        %2684 = vmatpush.bf16.msra.mxu0 %v1519
        %2685 = vmatpush.bf16.msra.mxu0 %v1515
        %2686 = vmatpush.bf16.msra.mxu0 %v1511
        %2687 = vmatpush.bf16.msra.mxu0 %v1507
        %2688 = vmatpush.bf16.msra.mxu0 %v1503
        %2689 = vmatpush.bf16.msra.mxu0 %v1499
        %2690 = vmatmul.bf16.gmra.mxu0 %v442
        %v2691 = vpop.f32.mrf.mxu0
        %v2692 = vadd.f32 %v2643, %v2691
        %v2693 = vpop.f32.mrf.mxu0
        %v2694 = vadd.f32 %v2645, %v2693
        %2695 = vmatmul.bf16.gmra.mxu0 %v449
        %v2696 = vpop.f32.mrf.mxu0
        %v2697 = vadd.f32 %v2648, %v2696
        %v2698 = vpop.f32.mrf.mxu0
        %v2699 = vadd.f32 %v2650, %v2698
        %2700 = vmatmul.bf16.gmra.mxu0 %v456
        %v2701 = vpop.f32.mrf.mxu0
        %v2702 = vadd.f32 %v2653, %v2701
        %v2703 = vpop.f32.mrf.mxu0
        %v2704 = vadd.f32 %v2655, %v2703
        %2705 = vmatmul.bf16.gmra.mxu0 %v463
        %v2706 = vpop.f32.mrf.mxu0
        %v2707 = vadd.f32 %v2658, %v2706
        %v2708 = vpop.f32.mrf.mxu0
        %v2709 = vadd.f32 %v2660, %v2708
        %2710 = vmatmul.bf16.gmra.mxu0 %v470
        %v2711 = vpop.f32.mrf.mxu0
        %v2712 = vadd.f32 %v2663, %v2711
        %v2713 = vpop.f32.mrf.mxu0
        %v2714 = vadd.f32 %v2665, %v2713
        %2715 = vmatmul.bf16.gmra.mxu0 %v477
        %v2716 = vpop.f32.mrf.mxu0
        %v2717 = vadd.f32 %v2668, %v2716
        %v2718 = vpop.f32.mrf.mxu0
        %v2719 = vadd.f32 %v2670, %v2718
        %2720 = vmatmul.bf16.gmra.mxu0 %v484
        %v2721 = vpop.f32.mrf.mxu0
        %v2722 = vadd.f32 %v2673, %v2721
        %v2723 = vpop.f32.mrf.mxu0
        %v2724 = vadd.f32 %v2675, %v2723
        %2725 = vmatmul.bf16.gmra.mxu0 %v491
        %v2726 = vpop.f32.mrf.mxu0
        %v2727 = vadd.f32 %v2678, %v2726
        %v2728 = vpop.f32.mrf.mxu0
        %v2729 = vadd.f32 %v2680, %v2728
        %2730 = vdwg.mxu0
        %2731 = vmatpush.bf16.msra.mxu0 %v1559
        %2732 = vmatpush.bf16.msra.mxu0 %v1555
        %2733 = vmatpush.bf16.msra.mxu0 %v1551
        %2734 = vmatpush.bf16.msra.mxu0 %v1547
        %2735 = vmatpush.bf16.msra.mxu0 %v1543
        %2736 = vmatpush.bf16.msra.mxu0 %v1539
        %2737 = vmatpush.bf16.msra.mxu0 %v1535
        %2738 = vmatpush.bf16.msra.mxu0 %v1531
        %2739 = vmatmul.bf16.gmra.mxu0 %v443
        %v2740 = vpop.f32.mrf.mxu0
        %v2741 = vadd.f32 %v2692, %v2740
        %v2742 = vpop.f32.mrf.mxu0
        %v2743 = vadd.f32 %v2694, %v2742
        %2744 = vmatmul.bf16.gmra.mxu0 %v450
        %v2745 = vpop.f32.mrf.mxu0
        %v2746 = vadd.f32 %v2697, %v2745
        %v2747 = vpop.f32.mrf.mxu0
        %v2748 = vadd.f32 %v2699, %v2747
        %2749 = vmatmul.bf16.gmra.mxu0 %v457
        %v2750 = vpop.f32.mrf.mxu0
        %v2751 = vadd.f32 %v2702, %v2750
        %v2752 = vpop.f32.mrf.mxu0
        %v2753 = vadd.f32 %v2704, %v2752
        %2754 = vmatmul.bf16.gmra.mxu0 %v464
        %v2755 = vpop.f32.mrf.mxu0
        %v2756 = vadd.f32 %v2707, %v2755
        %v2757 = vpop.f32.mrf.mxu0
        %v2758 = vadd.f32 %v2709, %v2757
        %2759 = vmatmul.bf16.gmra.mxu0 %v471
        %v2760 = vpop.f32.mrf.mxu0
        %v2761 = vadd.f32 %v2712, %v2760
        %v2762 = vpop.f32.mrf.mxu0
        %v2763 = vadd.f32 %v2714, %v2762
        %2764 = vmatmul.bf16.gmra.mxu0 %v478
        %v2765 = vpop.f32.mrf.mxu0
        %v2766 = vadd.f32 %v2717, %v2765
        %v2767 = vpop.f32.mrf.mxu0
        %v2768 = vadd.f32 %v2719, %v2767
        %2769 = vmatmul.bf16.gmra.mxu0 %v485
        %v2770 = vpop.f32.mrf.mxu0
        %v2771 = vadd.f32 %v2722, %v2770
        %v2772 = vpop.f32.mrf.mxu0
        %v2773 = vadd.f32 %v2724, %v2772
        %2774 = vmatmul.bf16.gmra.mxu0 %v492
        %v2775 = vpop.f32.mrf.mxu0
        %v2776 = vadd.f32 %v2727, %v2775
        %v2777 = vpop.f32.mrf.mxu0
        %v2778 = vadd.f32 %v2729, %v2777
        %2779 = vdwg.mxu0
        %2780 = vmatpush.bf16.msra.mxu0 %v1591
        %2781 = vmatpush.bf16.msra.mxu0 %v1587
        %2782 = vmatpush.bf16.msra.mxu0 %v1583
        %2783 = vmatpush.bf16.msra.mxu0 %v1579
        %2784 = vmatpush.bf16.msra.mxu0 %v1575
        %2785 = vmatpush.bf16.msra.mxu0 %v1571
        %2786 = vmatpush.bf16.msra.mxu0 %v1567
        %2787 = vmatpush.bf16.msra.mxu0 %v1563
        %2788 = vmatmul.bf16.gmra.mxu0 %v444
        %v2789 = vpop.f32.mrf.mxu0
        %v2790 = vadd.f32 %v2741, %v2789
        %v2791 = vpop.f32.mrf.mxu0
        %v2792 = vadd.f32 %v2743, %v2791
        %2793 = vmatmul.bf16.gmra.mxu0 %v451
        %v2794 = vpop.f32.mrf.mxu0
        %v2795 = vadd.f32 %v2746, %v2794
        %v2796 = vpop.f32.mrf.mxu0
        %v2797 = vadd.f32 %v2748, %v2796
        %2798 = vmatmul.bf16.gmra.mxu0 %v458
        %v2799 = vpop.f32.mrf.mxu0
        %v2800 = vadd.f32 %v2751, %v2799
        %v2801 = vpop.f32.mrf.mxu0
        %v2802 = vadd.f32 %v2753, %v2801
        %2803 = vmatmul.bf16.gmra.mxu0 %v465
        %v2804 = vpop.f32.mrf.mxu0
        %v2805 = vadd.f32 %v2756, %v2804
        %v2806 = vpop.f32.mrf.mxu0
        %v2807 = vadd.f32 %v2758, %v2806
        %2808 = vmatmul.bf16.gmra.mxu0 %v472
        %v2809 = vpop.f32.mrf.mxu0
        %v2810 = vadd.f32 %v2761, %v2809
        %v2811 = vpop.f32.mrf.mxu0
        %v2812 = vadd.f32 %v2763, %v2811
        %2813 = vmatmul.bf16.gmra.mxu0 %v479
        %v2814 = vpop.f32.mrf.mxu0
        %v2815 = vadd.f32 %v2766, %v2814
        %v2816 = vpop.f32.mrf.mxu0
        %v2817 = vadd.f32 %v2768, %v2816
        %2818 = vmatmul.bf16.gmra.mxu0 %v486
        %v2819 = vpop.f32.mrf.mxu0
        %v2820 = vadd.f32 %v2771, %v2819
        %v2821 = vpop.f32.mrf.mxu0
        %v2822 = vadd.f32 %v2773, %v2821
        %2823 = vmatmul.bf16.gmra.mxu0 %v493
        %v2824 = vpop.f32.mrf.mxu0
        %v2825 = vadd.f32 %v2776, %v2824
        %v2826 = vpop.f32.mrf.mxu0
        %v2827 = vadd.f32 %v2778, %v2826
        %2828 = vdwg.mxu0
        %2829 = vmatpush.bf16.msra.mxu0 %v1623
        %2830 = vmatpush.bf16.msra.mxu0 %v1619
        %2831 = vmatpush.bf16.msra.mxu0 %v1615
        %2832 = vmatpush.bf16.msra.mxu0 %v1611
        %2833 = vmatpush.bf16.msra.mxu0 %v1607
        %2834 = vmatpush.bf16.msra.mxu0 %v1603
        %2835 = vmatpush.bf16.msra.mxu0 %v1599
        %2836 = vmatpush.bf16.msra.mxu0 %v1595
        %2837 = vmatmul.bf16.gmra.mxu0 %v445
        %v2838 = vpop.f32.mrf.mxu0
        %v2839 = vadd.f32 %v2790, %v2838
        %v2840 = vpop.f32.mrf.mxu0
        %v2841 = vadd.f32 %v2792, %v2840
        %2842 = vmatmul.bf16.gmra.mxu0 %v452
        %v2843 = vpop.f32.mrf.mxu0
        %v2844 = vadd.f32 %v2795, %v2843
        %v2845 = vpop.f32.mrf.mxu0
        %v2846 = vadd.f32 %v2797, %v2845
        %2847 = vmatmul.bf16.gmra.mxu0 %v459
        %v2848 = vpop.f32.mrf.mxu0
        %v2849 = vadd.f32 %v2800, %v2848
        %v2850 = vpop.f32.mrf.mxu0
        %v2851 = vadd.f32 %v2802, %v2850
        %2852 = vmatmul.bf16.gmra.mxu0 %v466
        %v2853 = vpop.f32.mrf.mxu0
        %v2854 = vadd.f32 %v2805, %v2853
        %v2855 = vpop.f32.mrf.mxu0
        %v2856 = vadd.f32 %v2807, %v2855
        %2857 = vmatmul.bf16.gmra.mxu0 %v473
        %v2858 = vpop.f32.mrf.mxu0
        %v2859 = vadd.f32 %v2810, %v2858
        %v2860 = vpop.f32.mrf.mxu0
        %v2861 = vadd.f32 %v2812, %v2860
        %2862 = vmatmul.bf16.gmra.mxu0 %v480
        %v2863 = vpop.f32.mrf.mxu0
        %v2864 = vadd.f32 %v2815, %v2863
        %v2865 = vpop.f32.mrf.mxu0
        %v2866 = vadd.f32 %v2817, %v2865
        %2867 = vmatmul.bf16.gmra.mxu0 %v487
        %v2868 = vpop.f32.mrf.mxu0
        %v2869 = vadd.f32 %v2820, %v2868
        %v2870 = vpop.f32.mrf.mxu0
        %v2871 = vadd.f32 %v2822, %v2870
        %2872 = vmatmul.bf16.gmra.mxu0 %v494
        %v2873 = vpop.f32.mrf.mxu0
        %v2874 = vadd.f32 %v2825, %v2873
        %v2875 = vpop.f32.mrf.mxu0
        %v2876 = vadd.f32 %v2827, %v2875
        %2877 = vdwg.mxu0
        %2878 = vmatpush.bf16.msra.mxu0 %v1432
        %2879 = vmatpush.bf16.msra.mxu0 %v1428
        %2880 = vmatpush.bf16.msra.mxu0 %v1424
        %2881 = vmatpush.bf16.msra.mxu0 %v1420
        %2882 = vmatpush.bf16.msra.mxu0 %v1416
        %2883 = vmatpush.bf16.msra.mxu0 %v1412
        %2884 = vmatpush.bf16.msra.mxu0 %v1408
        %2885 = vmatpush.bf16.msra.mxu0 %v1404
        %2886 = vmatmul.bf16.gmra.mxu0 %v439
        %v2887 = vpop.f32.mrf.mxu0
        %v2888 = vadd.f32 %v724, %v2887
        %v2889 = vpop.f32.mrf.mxu0
        %v2890 = vadd.f32 %v724, %v2889
        %2891 = vmatmul.bf16.gmra.mxu0 %v446
        %v2892 = vpop.f32.mrf.mxu0
        %v2893 = vadd.f32 %v724, %v2892
        %v2894 = vpop.f32.mrf.mxu0
        %v2895 = vadd.f32 %v724, %v2894
        %2896 = vmatmul.bf16.gmra.mxu0 %v453
        %v2897 = vpop.f32.mrf.mxu0
        %v2898 = vadd.f32 %v724, %v2897
        %v2899 = vpop.f32.mrf.mxu0
        %v2900 = vadd.f32 %v724, %v2899
        %2901 = vmatmul.bf16.gmra.mxu0 %v460
        %v2902 = vpop.f32.mrf.mxu0
        %v2903 = vadd.f32 %v724, %v2902
        %v2904 = vpop.f32.mrf.mxu0
        %v2905 = vadd.f32 %v724, %v2904
        %2906 = vmatmul.bf16.gmra.mxu0 %v467
        %v2907 = vpop.f32.mrf.mxu0
        %v2908 = vadd.f32 %v724, %v2907
        %v2909 = vpop.f32.mrf.mxu0
        %v2910 = vadd.f32 %v724, %v2909
        %2911 = vmatmul.bf16.gmra.mxu0 %v474
        %v2912 = vpop.f32.mrf.mxu0
        %v2913 = vadd.f32 %v724, %v2912
        %v2914 = vpop.f32.mrf.mxu0
        %v2915 = vadd.f32 %v724, %v2914
        %2916 = vmatmul.bf16.gmra.mxu0 %v481
        %v2917 = vpop.f32.mrf.mxu0
        %v2918 = vadd.f32 %v724, %v2917
        %v2919 = vpop.f32.mrf.mxu0
        %v2920 = vadd.f32 %v724, %v2919
        %2921 = vmatmul.bf16.gmra.mxu0 %v488
        %v2922 = vpop.f32.mrf.mxu0
        %v2923 = vadd.f32 %v724, %v2922
        %v2924 = vpop.f32.mrf.mxu0
        %v2925 = vadd.f32 %v724, %v2924
        %2926 = vdwg.mxu0
        %2927 = vmatpush.bf16.msra.mxu0 %v1464
        %2928 = vmatpush.bf16.msra.mxu0 %v1460
        %2929 = vmatpush.bf16.msra.mxu0 %v1456
        %2930 = vmatpush.bf16.msra.mxu0 %v1452
        %2931 = vmatpush.bf16.msra.mxu0 %v1448
        %2932 = vmatpush.bf16.msra.mxu0 %v1444
        %2933 = vmatpush.bf16.msra.mxu0 %v1440
        %2934 = vmatpush.bf16.msra.mxu0 %v1436
        %2935 = vmatmul.bf16.gmra.mxu0 %v440
        %v2936 = vpop.f32.mrf.mxu0
        %v2937 = vadd.f32 %v2888, %v2936
        %v2938 = vpop.f32.mrf.mxu0
        %v2939 = vadd.f32 %v2890, %v2938
        %2940 = vmatmul.bf16.gmra.mxu0 %v447
        %v2941 = vpop.f32.mrf.mxu0
        %v2942 = vadd.f32 %v2893, %v2941
        %v2943 = vpop.f32.mrf.mxu0
        %v2944 = vadd.f32 %v2895, %v2943
        %2945 = vmatmul.bf16.gmra.mxu0 %v454
        %v2946 = vpop.f32.mrf.mxu0
        %v2947 = vadd.f32 %v2898, %v2946
        %v2948 = vpop.f32.mrf.mxu0
        %v2949 = vadd.f32 %v2900, %v2948
        %2950 = vmatmul.bf16.gmra.mxu0 %v461
        %v2951 = vpop.f32.mrf.mxu0
        %v2952 = vadd.f32 %v2903, %v2951
        %v2953 = vpop.f32.mrf.mxu0
        %v2954 = vadd.f32 %v2905, %v2953
        %2955 = vmatmul.bf16.gmra.mxu0 %v468
        %v2956 = vpop.f32.mrf.mxu0
        %v2957 = vadd.f32 %v2908, %v2956
        %v2958 = vpop.f32.mrf.mxu0
        %v2959 = vadd.f32 %v2910, %v2958
        %2960 = vmatmul.bf16.gmra.mxu0 %v475
        %v2961 = vpop.f32.mrf.mxu0
        %v2962 = vadd.f32 %v2913, %v2961
        %v2963 = vpop.f32.mrf.mxu0
        %v2964 = vadd.f32 %v2915, %v2963
        %2965 = vmatmul.bf16.gmra.mxu0 %v482
        %v2966 = vpop.f32.mrf.mxu0
        %v2967 = vadd.f32 %v2918, %v2966
        %v2968 = vpop.f32.mrf.mxu0
        %v2969 = vadd.f32 %v2920, %v2968
        %2970 = vmatmul.bf16.gmra.mxu0 %v489
        %v2971 = vpop.f32.mrf.mxu0
        %v2972 = vadd.f32 %v2923, %v2971
        %v2973 = vpop.f32.mrf.mxu0
        %v2974 = vadd.f32 %v2925, %v2973
        %2975 = vdwg.mxu0
        %2976 = vmatpush.bf16.msra.mxu0 %v1496
        %2977 = vmatpush.bf16.msra.mxu0 %v1492
        %2978 = vmatpush.bf16.msra.mxu0 %v1488
        %2979 = vmatpush.bf16.msra.mxu0 %v1484
        %2980 = vmatpush.bf16.msra.mxu0 %v1480
        %2981 = vmatpush.bf16.msra.mxu0 %v1476
        %2982 = vmatpush.bf16.msra.mxu0 %v1472
        %2983 = vmatpush.bf16.msra.mxu0 %v1468
        %2984 = vmatmul.bf16.gmra.mxu0 %v441
        %v2985 = vpop.f32.mrf.mxu0
        %v2986 = vadd.f32 %v2937, %v2985
        %v2987 = vpop.f32.mrf.mxu0
        %v2988 = vadd.f32 %v2939, %v2987
        %2989 = vmatmul.bf16.gmra.mxu0 %v448
        %v2990 = vpop.f32.mrf.mxu0
        %v2991 = vadd.f32 %v2942, %v2990
        %v2992 = vpop.f32.mrf.mxu0
        %v2993 = vadd.f32 %v2944, %v2992
        %2994 = vmatmul.bf16.gmra.mxu0 %v455
        %v2995 = vpop.f32.mrf.mxu0
        %v2996 = vadd.f32 %v2947, %v2995
        %v2997 = vpop.f32.mrf.mxu0
        %v2998 = vadd.f32 %v2949, %v2997
        %2999 = vmatmul.bf16.gmra.mxu0 %v462
        %v3000 = vpop.f32.mrf.mxu0
        %v3001 = vadd.f32 %v2952, %v3000
        %v3002 = vpop.f32.mrf.mxu0
        %v3003 = vadd.f32 %v2954, %v3002
        %3004 = vmatmul.bf16.gmra.mxu0 %v469
        %v3005 = vpop.f32.mrf.mxu0
        %v3006 = vadd.f32 %v2957, %v3005
        %v3007 = vpop.f32.mrf.mxu0
        %v3008 = vadd.f32 %v2959, %v3007
        %3009 = vmatmul.bf16.gmra.mxu0 %v476
        %v3010 = vpop.f32.mrf.mxu0
        %v3011 = vadd.f32 %v2962, %v3010
        %v3012 = vpop.f32.mrf.mxu0
        %v3013 = vadd.f32 %v2964, %v3012
        %3014 = vmatmul.bf16.gmra.mxu0 %v483
        %v3015 = vpop.f32.mrf.mxu0
        %v3016 = vadd.f32 %v2967, %v3015
        %v3017 = vpop.f32.mrf.mxu0
        %v3018 = vadd.f32 %v2969, %v3017
        %3019 = vmatmul.bf16.gmra.mxu0 %v490
        %v3020 = vpop.f32.mrf.mxu0
        %v3021 = vadd.f32 %v2972, %v3020
        %v3022 = vpop.f32.mrf.mxu0
        %v3023 = vadd.f32 %v2974, %v3022
        %3024 = vdwg.mxu0
        %3025 = vmatpush.bf16.msra.mxu0 %v1528
        %3026 = vmatpush.bf16.msra.mxu0 %v1524
        %3027 = vmatpush.bf16.msra.mxu0 %v1520
        %3028 = vmatpush.bf16.msra.mxu0 %v1516
        %3029 = vmatpush.bf16.msra.mxu0 %v1512
        %3030 = vmatpush.bf16.msra.mxu0 %v1508
        %3031 = vmatpush.bf16.msra.mxu0 %v1504
        %3032 = vmatpush.bf16.msra.mxu0 %v1500
        %3033 = vmatmul.bf16.gmra.mxu0 %v442
        %v3034 = vpop.f32.mrf.mxu0
        %v3035 = vadd.f32 %v2986, %v3034
        %v3036 = vpop.f32.mrf.mxu0
        %v3037 = vadd.f32 %v2988, %v3036
        %3038 = vmatmul.bf16.gmra.mxu0 %v449
        %v3039 = vpop.f32.mrf.mxu0
        %v3040 = vadd.f32 %v2991, %v3039
        %v3041 = vpop.f32.mrf.mxu0
        %v3042 = vadd.f32 %v2993, %v3041
        %3043 = vmatmul.bf16.gmra.mxu0 %v456
        %v3044 = vpop.f32.mrf.mxu0
        %v3045 = vadd.f32 %v2996, %v3044
        %v3046 = vpop.f32.mrf.mxu0
        %v3047 = vadd.f32 %v2998, %v3046
        %3048 = vmatmul.bf16.gmra.mxu0 %v463
        %v3049 = vpop.f32.mrf.mxu0
        %v3050 = vadd.f32 %v3001, %v3049
        %v3051 = vpop.f32.mrf.mxu0
        %v3052 = vadd.f32 %v3003, %v3051
        %3053 = vmatmul.bf16.gmra.mxu0 %v470
        %v3054 = vpop.f32.mrf.mxu0
        %v3055 = vadd.f32 %v3006, %v3054
        %v3056 = vpop.f32.mrf.mxu0
        %v3057 = vadd.f32 %v3008, %v3056
        %3058 = vmatmul.bf16.gmra.mxu0 %v477
        %v3059 = vpop.f32.mrf.mxu0
        %v3060 = vadd.f32 %v3011, %v3059
        %v3061 = vpop.f32.mrf.mxu0
        %v3062 = vadd.f32 %v3013, %v3061
        %3063 = vmatmul.bf16.gmra.mxu0 %v484
        %v3064 = vpop.f32.mrf.mxu0
        %v3065 = vadd.f32 %v3016, %v3064
        %v3066 = vpop.f32.mrf.mxu0
        %v3067 = vadd.f32 %v3018, %v3066
        %3068 = vmatmul.bf16.gmra.mxu0 %v491
        %v3069 = vpop.f32.mrf.mxu0
        %v3070 = vadd.f32 %v3021, %v3069
        %v3071 = vpop.f32.mrf.mxu0
        %v3072 = vadd.f32 %v3023, %v3071
        %3073 = vdwg.mxu0
        %3074 = vmatpush.bf16.msra.mxu0 %v1560
        %3075 = vmatpush.bf16.msra.mxu0 %v1556
        %3076 = vmatpush.bf16.msra.mxu0 %v1552
        %3077 = vmatpush.bf16.msra.mxu0 %v1548
        %3078 = vmatpush.bf16.msra.mxu0 %v1544
        %3079 = vmatpush.bf16.msra.mxu0 %v1540
        %3080 = vmatpush.bf16.msra.mxu0 %v1536
        %3081 = vmatpush.bf16.msra.mxu0 %v1532
        %3082 = vmatmul.bf16.gmra.mxu0 %v443
        %v3083 = vpop.f32.mrf.mxu0
        %v3084 = vadd.f32 %v3035, %v3083
        %v3085 = vpop.f32.mrf.mxu0
        %v3086 = vadd.f32 %v3037, %v3085
        %3087 = vmatmul.bf16.gmra.mxu0 %v450
        %v3088 = vpop.f32.mrf.mxu0
        %v3089 = vadd.f32 %v3040, %v3088
        %v3090 = vpop.f32.mrf.mxu0
        %v3091 = vadd.f32 %v3042, %v3090
        %3092 = vmatmul.bf16.gmra.mxu0 %v457
        %v3093 = vpop.f32.mrf.mxu0
        %v3094 = vadd.f32 %v3045, %v3093
        %v3095 = vpop.f32.mrf.mxu0
        %v3096 = vadd.f32 %v3047, %v3095
        %3097 = vmatmul.bf16.gmra.mxu0 %v464
        %v3098 = vpop.f32.mrf.mxu0
        %v3099 = vadd.f32 %v3050, %v3098
        %v3100 = vpop.f32.mrf.mxu0
        %v3101 = vadd.f32 %v3052, %v3100
        %3102 = vmatmul.bf16.gmra.mxu0 %v471
        %v3103 = vpop.f32.mrf.mxu0
        %v3104 = vadd.f32 %v3055, %v3103
        %v3105 = vpop.f32.mrf.mxu0
        %v3106 = vadd.f32 %v3057, %v3105
        %3107 = vmatmul.bf16.gmra.mxu0 %v478
        %v3108 = vpop.f32.mrf.mxu0
        %v3109 = vadd.f32 %v3060, %v3108
        %v3110 = vpop.f32.mrf.mxu0
        %v3111 = vadd.f32 %v3062, %v3110
        %3112 = vmatmul.bf16.gmra.mxu0 %v485
        %v3113 = vpop.f32.mrf.mxu0
        %v3114 = vadd.f32 %v3065, %v3113
        %v3115 = vpop.f32.mrf.mxu0
        %v3116 = vadd.f32 %v3067, %v3115
        %3117 = vmatmul.bf16.gmra.mxu0 %v492
        %v3118 = vpop.f32.mrf.mxu0
        %v3119 = vadd.f32 %v3070, %v3118
        %v3120 = vpop.f32.mrf.mxu0
        %v3121 = vadd.f32 %v3072, %v3120
        %3122 = vdwg.mxu0
        %3123 = vmatpush.bf16.msra.mxu0 %v1592
        %3124 = vmatpush.bf16.msra.mxu0 %v1588
        %3125 = vmatpush.bf16.msra.mxu0 %v1584
        %3126 = vmatpush.bf16.msra.mxu0 %v1580
        %3127 = vmatpush.bf16.msra.mxu0 %v1576
        %3128 = vmatpush.bf16.msra.mxu0 %v1572
        %3129 = vmatpush.bf16.msra.mxu0 %v1568
        %3130 = vmatpush.bf16.msra.mxu0 %v1564
        %3131 = vmatmul.bf16.gmra.mxu0 %v444
        %v3132 = vpop.f32.mrf.mxu0
        %v3133 = vadd.f32 %v3084, %v3132
        %v3134 = vpop.f32.mrf.mxu0
        %v3135 = vadd.f32 %v3086, %v3134
        %3136 = vmatmul.bf16.gmra.mxu0 %v451
        %v3137 = vpop.f32.mrf.mxu0
        %v3138 = vadd.f32 %v3089, %v3137
        %v3139 = vpop.f32.mrf.mxu0
        %v3140 = vadd.f32 %v3091, %v3139
        %3141 = vmatmul.bf16.gmra.mxu0 %v458
        %v3142 = vpop.f32.mrf.mxu0
        %v3143 = vadd.f32 %v3094, %v3142
        %v3144 = vpop.f32.mrf.mxu0
        %v3145 = vadd.f32 %v3096, %v3144
        %3146 = vmatmul.bf16.gmra.mxu0 %v465
        %v3147 = vpop.f32.mrf.mxu0
        %v3148 = vadd.f32 %v3099, %v3147
        %v3149 = vpop.f32.mrf.mxu0
        %v3150 = vadd.f32 %v3101, %v3149
        %3151 = vmatmul.bf16.gmra.mxu0 %v472
        %v3152 = vpop.f32.mrf.mxu0
        %v3153 = vadd.f32 %v3104, %v3152
        %v3154 = vpop.f32.mrf.mxu0
        %v3155 = vadd.f32 %v3106, %v3154
        %3156 = vmatmul.bf16.gmra.mxu0 %v479
        %v3157 = vpop.f32.mrf.mxu0
        %v3158 = vadd.f32 %v3109, %v3157
        %v3159 = vpop.f32.mrf.mxu0
        %v3160 = vadd.f32 %v3111, %v3159
        %3161 = vmatmul.bf16.gmra.mxu0 %v486
        %v3162 = vpop.f32.mrf.mxu0
        %v3163 = vadd.f32 %v3114, %v3162
        %v3164 = vpop.f32.mrf.mxu0
        %v3165 = vadd.f32 %v3116, %v3164
        %3166 = vmatmul.bf16.gmra.mxu0 %v493
        %v3167 = vpop.f32.mrf.mxu0
        %v3168 = vadd.f32 %v3119, %v3167
        %v3169 = vpop.f32.mrf.mxu0
        %v3170 = vadd.f32 %v3121, %v3169
        %3171 = vdwg.mxu0
        %3172 = vmatpush.bf16.msra.mxu0 %v1624
        %3173 = vmatpush.bf16.msra.mxu0 %v1620
        %3174 = vmatpush.bf16.msra.mxu0 %v1616
        %3175 = vmatpush.bf16.msra.mxu0 %v1612
        %3176 = vmatpush.bf16.msra.mxu0 %v1608
        %3177 = vmatpush.bf16.msra.mxu0 %v1604
        %3178 = vmatpush.bf16.msra.mxu0 %v1600
        %3179 = vmatpush.bf16.msra.mxu0 %v1596
        %3180 = vmatmul.bf16.gmra.mxu0 %v445
        %v3181 = vpop.f32.mrf.mxu0
        %v3182 = vadd.f32 %v3133, %v3181
        %v3183 = vpop.f32.mrf.mxu0
        %v3184 = vadd.f32 %v3135, %v3183
        %3185 = vmatmul.bf16.gmra.mxu0 %v452
        %v3186 = vpop.f32.mrf.mxu0
        %v3187 = vadd.f32 %v3138, %v3186
        %v3188 = vpop.f32.mrf.mxu0
        %v3189 = vadd.f32 %v3140, %v3188
        %3190 = vmatmul.bf16.gmra.mxu0 %v459
        %v3191 = vpop.f32.mrf.mxu0
        %v3192 = vadd.f32 %v3143, %v3191
        %v3193 = vpop.f32.mrf.mxu0
        %v3194 = vadd.f32 %v3145, %v3193
        %3195 = vmatmul.bf16.gmra.mxu0 %v466
        %v3196 = vpop.f32.mrf.mxu0
        %v3197 = vadd.f32 %v3148, %v3196
        %v3198 = vpop.f32.mrf.mxu0
        %v3199 = vadd.f32 %v3150, %v3198
        %3200 = vmatmul.bf16.gmra.mxu0 %v473
        %v3201 = vpop.f32.mrf.mxu0
        %v3202 = vadd.f32 %v3153, %v3201
        %v3203 = vpop.f32.mrf.mxu0
        %v3204 = vadd.f32 %v3155, %v3203
        %3205 = vmatmul.bf16.gmra.mxu0 %v480
        %v3206 = vpop.f32.mrf.mxu0
        %v3207 = vadd.f32 %v3158, %v3206
        %v3208 = vpop.f32.mrf.mxu0
        %v3209 = vadd.f32 %v3160, %v3208
        %3210 = vmatmul.bf16.gmra.mxu0 %v487
        %v3211 = vpop.f32.mrf.mxu0
        %v3212 = vadd.f32 %v3163, %v3211
        %v3213 = vpop.f32.mrf.mxu0
        %v3214 = vadd.f32 %v3165, %v3213
        %3215 = vmatmul.bf16.gmra.mxu0 %v494
        %v3216 = vpop.f32.mrf.mxu0
        %v3217 = vadd.f32 %v3168, %v3216
        %v3218 = vpop.f32.mrf.mxu0
        %v3219 = vadd.f32 %v3170, %v3218
        %3220 = vdwg.mxu0
        %v3221 = vmax.f32 %v2153, 0.0
        %v3222 = vmax.f32 %v2496, 0.0
        %v3223 = vmax.f32 %v2839, 0.0
        %v3224 = vmax.f32 %v3182, 0.0
        %v3225 = vmax.f32 %v2155, 0.0
        %v3226 = vmax.f32 %v2498, 0.0
        %v3227 = vmax.f32 %v2841, 0.0
        %v3228 = vmax.f32 %v3184, 0.0
        %v3229 = vmax.f32 %v2158, 0.0
        %v3230 = vmax.f32 %v2501, 0.0
        %v3231 = vmax.f32 %v2844, 0.0
        %v3232 = vmax.f32 %v3187, 0.0
        %v3233 = vmax.f32 %v2160, 0.0
        %v3234 = vmax.f32 %v2503, 0.0
        %v3235 = vmax.f32 %v2846, 0.0
        %v3236 = vmax.f32 %v3189, 0.0
        %v3237 = vmax.f32 %v2163, 0.0
        %v3238 = vmax.f32 %v2506, 0.0
        %v3239 = vmax.f32 %v2849, 0.0
        %v3240 = vmax.f32 %v3192, 0.0
        %v3241 = vmax.f32 %v2165, 0.0
        %v3242 = vmax.f32 %v2508, 0.0
        %v3243 = vmax.f32 %v2851, 0.0
        %v3244 = vmax.f32 %v3194, 0.0
        %v3245 = vmax.f32 %v2168, 0.0
        %v3246 = vmax.f32 %v2511, 0.0
        %v3247 = vmax.f32 %v2854, 0.0
        %v3248 = vmax.f32 %v3197, 0.0
        %v3249 = vmax.f32 %v2170, 0.0
        %v3250 = vmax.f32 %v2513, 0.0
        %v3251 = vmax.f32 %v2856, 0.0
        %v3252 = vmax.f32 %v3199, 0.0
        %v3253 = vmax.f32 %v2173, 0.0
        %v3254 = vmax.f32 %v2516, 0.0
        %v3255 = vmax.f32 %v2859, 0.0
        %v3256 = vmax.f32 %v3202, 0.0
        %v3257 = vmax.f32 %v2175, 0.0
        %v3258 = vmax.f32 %v2518, 0.0
        %v3259 = vmax.f32 %v2861, 0.0
        %v3260 = vmax.f32 %v3204, 0.0
        %v3261 = vmax.f32 %v2178, 0.0
        %v3262 = vmax.f32 %v2521, 0.0
        %v3263 = vmax.f32 %v2864, 0.0
        %v3264 = vmax.f32 %v3207, 0.0
        %v3265 = vmax.f32 %v2180, 0.0
        %v3266 = vmax.f32 %v2523, 0.0
        %v3267 = vmax.f32 %v2866, 0.0
        %v3268 = vmax.f32 %v3209, 0.0
        %v3269 = vmax.f32 %v2183, 0.0
        %v3270 = vmax.f32 %v2526, 0.0
        %v3271 = vmax.f32 %v2869, 0.0
        %v3272 = vmax.f32 %v3212, 0.0
        %v3273 = vmax.f32 %v2185, 0.0
        %v3274 = vmax.f32 %v2528, 0.0
        %v3275 = vmax.f32 %v2871, 0.0
        %v3276 = vmax.f32 %v3214, 0.0
        %v3277 = vmax.f32 %v2188, 0.0
        %v3278 = vmax.f32 %v2531, 0.0
        %v3279 = vmax.f32 %v2874, 0.0
        %v3280 = vmax.f32 %v3217, 0.0
        %v3281 = vmax.f32 %v2190, 0.0
        %v3282 = vmax.f32 %v2533, 0.0
        %v3283 = vmax.f32 %v2876, 0.0
        %v3284 = vmax.f32 %v3219, 0.0
        %v3285 = vpack.c.bf16 %v3225, %v3221
        %v3286 = vpack.c.bf16 %v3226, %v3222
        %v3287 = vpack.c.bf16 %v3227, %v3223
        %v3288 = vpack.c.bf16 %v3228, %v3224
        %v3289 = vpack.c.bf16 %v3233, %v3229
        %v3290 = vpack.c.bf16 %v3234, %v3230
        %v3291 = vpack.c.bf16 %v3235, %v3231
        %v3292 = vpack.c.bf16 %v3236, %v3232
        %v3293 = vpack.c.bf16 %v3241, %v3237
        %v3294 = vpack.c.bf16 %v3242, %v3238
        %v3295 = vpack.c.bf16 %v3243, %v3239
        %v3296 = vpack.c.bf16 %v3244, %v3240
        %v3297 = vpack.c.bf16 %v3249, %v3245
        %v3298 = vpack.c.bf16 %v3250, %v3246
        %v3299 = vpack.c.bf16 %v3251, %v3247
        %v3300 = vpack.c.bf16 %v3252, %v3248
        %v3301 = vpack.c.bf16 %v3257, %v3253
        %v3302 = vpack.c.bf16 %v3258, %v3254
        %v3303 = vpack.c.bf16 %v3259, %v3255
        %v3304 = vpack.c.bf16 %v3260, %v3256
        %v3305 = vpack.c.bf16 %v3265, %v3261
        %v3306 = vpack.c.bf16 %v3266, %v3262
        %v3307 = vpack.c.bf16 %v3267, %v3263
        %v3308 = vpack.c.bf16 %v3268, %v3264
        %v3309 = vpack.c.bf16 %v3273, %v3269
        %v3310 = vpack.c.bf16 %v3274, %v3270
        %v3311 = vpack.c.bf16 %v3275, %v3271
        %v3312 = vpack.c.bf16 %v3276, %v3272
        %v3313 = vpack.c.bf16 %v3281, %v3277
        %v3314 = vpack.c.bf16 %v3282, %v3278
        %v3315 = vpack.c.bf16 %v3283, %v3279
        %v3316 = vpack.c.bf16 %v3284, %v3280
        %v3317 = vld [vmem:[#allocation2] sm:$0xff]
        %v3318 = vld [vmem:[#allocation2 + $0x8] sm:$0xff]
        %v3319 = vld [vmem:[#allocation2 + $0x10] sm:$0xff]
        %v3320 = vld [vmem:[#allocation2 + $0x18] sm:$0xff]
        %v3321 = vld [vmem:[#allocation2 + $0x20] sm:$0xff]
        %v3322 = vld [vmem:[#allocation2 + $0x28] sm:$0xff]
        %v3323 = vld [vmem:[#allocation2 + $0x30] sm:$0xff]
        %v3324 = vld [vmem:[#allocation2 + $0x38] sm:$0xff]
        %v3325 = vld [vmem:[#allocation2 + $0x40] sm:$0xff]
        %v3326 = vld [vmem:[#allocation2 + $0x48] sm:$0xff]
        %v3327 = vld [vmem:[#allocation2 + $0x50] sm:$0xff]
        %v3328 = vld [vmem:[#allocation2 + $0x58] sm:$0xff]
        %v3329 = vld [vmem:[#allocation2 + $0x60] sm:$0xff]
        %v3330 = vld [vmem:[#allocation2 + $0x68] sm:$0xff]
        %v3331 = vld [vmem:[#allocation2 + $0x70] sm:$0xff]
        %v3332 = vld [vmem:[#allocation2 + $0x78] sm:$0xff]
        %v3333 = vld [vmem:[#allocation2 + $0x80] sm:$0xff]
        %v3334 = vld [vmem:[#allocation2 + $0x88] sm:$0xff]
        %v3335 = vld [vmem:[#allocation2 + $0x90] sm:$0xff]
        %v3336 = vld [vmem:[#allocation2 + $0x98] sm:$0xff]
        %v3337 = vld [vmem:[#allocation2 + $0xa0] sm:$0xff]
        %v3338 = vld [vmem:[#allocation2 + $0xa8] sm:$0xff]
        %v3339 = vld [vmem:[#allocation2 + $0xb0] sm:$0xff]
        %v3340 = vld [vmem:[#allocation2 + $0xb8] sm:$0xff]
        %v3341 = vld [vmem:[#allocation2 + $0xc0] sm:$0xff]
        %v3342 = vld [vmem:[#allocation2 + $0xc8] sm:$0xff]
        %v3343 = vld [vmem:[#allocation2 + $0xd0] sm:$0xff]
        %v3344 = vld [vmem:[#allocation2 + $0xd8] sm:$0xff]
        %v3345 = vld [vmem:[#allocation2 + $0xe0] sm:$0xff]
        %v3346 = vld [vmem:[#allocation2 + $0xe8] sm:$0xff]
        %v3347 = vld [vmem:[#allocation2 + $0xf0] sm:$0xff]
        %v3348 = vld [vmem:[#allocation2 + $0xf8] sm:$0xff]
        %v3349 = vld [vmem:[#allocation2 + $0x100] sm:$0xff]
        %v3350 = vld [vmem:[#allocation2 + $0x108] sm:$0xff]
        %v3351 = vld [vmem:[#allocation2 + $0x110] sm:$0xff]
        %v3352 = vld [vmem:[#allocation2 + $0x118] sm:$0xff]
        %v3353 = vld [vmem:[#allocation2 + $0x120] sm:$0xff]
        %v3354 = vld [vmem:[#allocation2 + $0x128] sm:$0xff]
        %v3355 = vld [vmem:[#allocation2 + $0x130] sm:$0xff]
        %v3356 = vld [vmem:[#allocation2 + $0x138] sm:$0xff]
        %v3357 = vld [vmem:[#allocation2 + $0x140] sm:$0xff]
        %v3358 = vld [vmem:[#allocation2 + $0x148] sm:$0xff]
        %v3359 = vld [vmem:[#allocation2 + $0x150] sm:$0xff]
        %v3360 = vld [vmem:[#allocation2 + $0x158] sm:$0xff]
        %v3361 = vld [vmem:[#allocation2 + $0x160] sm:$0xff]
        %v3362 = vld [vmem:[#allocation2 + $0x168] sm:$0xff]
        %v3363 = vld [vmem:[#allocation2 + $0x170] sm:$0xff]
        %v3364 = vld [vmem:[#allocation2 + $0x178] sm:$0xff]
        %v3365 = vld [vmem:[#allocation2 + $0x180] sm:$0xff]
        %v3366 = vld [vmem:[#allocation2 + $0x188] sm:$0xff]
        %v3367 = vld [vmem:[#allocation2 + $0x190] sm:$0xff]
        %v3368 = vld [vmem:[#allocation2 + $0x198] sm:$0xff]
        %v3369 = vld [vmem:[#allocation2 + $0x1a0] sm:$0xff]
        %v3370 = vld [vmem:[#allocation2 + $0x1a8] sm:$0xff]
        %v3371 = vld [vmem:[#allocation2 + $0x1b0] sm:$0xff]
        %v3372 = vld [vmem:[#allocation2 + $0x1b8] sm:$0xff]
        %v3373 = vld [vmem:[#allocation2 + $0x1c0] sm:$0xff]
        %v3374 = vld [vmem:[#allocation2 + $0x1c8] sm:$0xff]
        %v3375 = vld [vmem:[#allocation2 + $0x1d0] sm:$0xff]
        %v3376 = vld [vmem:[#allocation2 + $0x1d8] sm:$0xff]
        %v3377 = vld [vmem:[#allocation2 + $0x1e0] sm:$0xff]
        %v3378 = vld [vmem:[#allocation2 + $0x1e8] sm:$0xff]
        %v3379 = vld [vmem:[#allocation2 + $0x1f0] sm:$0xff]
        %v3380 = vld [vmem:[#allocation2 + $0x1f8] sm:$0xff]
        %v3381 = vld [vmem:[%s6 + $0x4] sm:$0x3]
        %v3383 = vperm.slane %v3381, 0
        %v3384 = vperm.slane %v3381, 1
        %v3451 = vunpack.c.l.b16 %v3317
        %v3452 = vunpack.c.h.b16 %v3317
        %v3453 = vunpack.c.l.b16 %v3318
        %v3454 = vunpack.c.h.b16 %v3318
        %v3455 = vunpack.c.l.b16 %v3319
        %v3456 = vunpack.c.h.b16 %v3319
        %v3457 = vunpack.c.l.b16 %v3320
        %v3458 = vunpack.c.h.b16 %v3320
        %v3459 = vunpack.c.l.b16 %v3321
        %v3460 = vunpack.c.h.b16 %v3321
        %v3461 = vunpack.c.l.b16 %v3322
        %v3462 = vunpack.c.h.b16 %v3322
        %v3463 = vunpack.c.l.b16 %v3323
        %v3464 = vunpack.c.h.b16 %v3323
        %v3465 = vunpack.c.l.b16 %v3324
        %v3466 = vunpack.c.h.b16 %v3324
        %v3467 = vunpack.c.l.b16 %v3325
        %v3468 = vunpack.c.h.b16 %v3325
        %v3469 = vunpack.c.l.b16 %v3326
        %v3470 = vunpack.c.h.b16 %v3326
        %v3471 = vunpack.c.l.b16 %v3327
        %v3472 = vunpack.c.h.b16 %v3327
        %v3473 = vunpack.c.l.b16 %v3328
        %v3474 = vunpack.c.h.b16 %v3328
        %v3475 = vunpack.c.l.b16 %v3329
        %v3476 = vunpack.c.h.b16 %v3329
        %v3477 = vunpack.c.l.b16 %v3330
        %v3478 = vunpack.c.h.b16 %v3330
        %v3479 = vunpack.c.l.b16 %v3331
        %v3480 = vunpack.c.h.b16 %v3331
        %v3481 = vunpack.c.l.b16 %v3332
        %v3482 = vunpack.c.h.b16 %v3332
        %v3483 = vunpack.c.l.b16 %v3333
        %v3484 = vunpack.c.h.b16 %v3333
        %v3485 = vunpack.c.l.b16 %v3334
        %v3486 = vunpack.c.h.b16 %v3334
        %v3487 = vunpack.c.l.b16 %v3335
        %v3488 = vunpack.c.h.b16 %v3335
        %v3489 = vunpack.c.l.b16 %v3336
        %v3490 = vunpack.c.h.b16 %v3336
        %v3491 = vunpack.c.l.b16 %v3337
        %v3492 = vunpack.c.h.b16 %v3337
        %v3493 = vunpack.c.l.b16 %v3338
        %v3494 = vunpack.c.h.b16 %v3338
        %v3495 = vunpack.c.l.b16 %v3339
        %v3496 = vunpack.c.h.b16 %v3339
        %v3497 = vunpack.c.l.b16 %v3340
        %v3498 = vunpack.c.h.b16 %v3340
        %v3499 = vunpack.c.l.b16 %v3341
        %v3500 = vunpack.c.h.b16 %v3341
        %v3501 = vunpack.c.l.b16 %v3342
        %v3502 = vunpack.c.h.b16 %v3342
        %v3503 = vunpack.c.l.b16 %v3343
        %v3504 = vunpack.c.h.b16 %v3343
        %v3505 = vunpack.c.l.b16 %v3344
        %v3506 = vunpack.c.h.b16 %v3344
        %v3507 = vunpack.c.l.b16 %v3345
        %v3508 = vunpack.c.h.b16 %v3345
        %v3509 = vunpack.c.l.b16 %v3346
        %v3510 = vunpack.c.h.b16 %v3346
        %v3511 = vunpack.c.l.b16 %v3347
        %v3512 = vunpack.c.h.b16 %v3347
        %v3513 = vunpack.c.l.b16 %v3348
        %v3514 = vunpack.c.h.b16 %v3348
        %v3515 = vunpack.c.l.b16 %v3349
        %v3516 = vunpack.c.h.b16 %v3349
        %v3517 = vunpack.c.l.b16 %v3350
        %v3518 = vunpack.c.h.b16 %v3350
        %v3519 = vunpack.c.l.b16 %v3351
        %v3520 = vunpack.c.h.b16 %v3351
        %v3521 = vunpack.c.l.b16 %v3352
        %v3522 = vunpack.c.h.b16 %v3352
        %v3523 = vunpack.c.l.b16 %v3353
        %v3524 = vunpack.c.h.b16 %v3353
        %v3525 = vunpack.c.l.b16 %v3354
        %v3526 = vunpack.c.h.b16 %v3354
        %v3527 = vunpack.c.l.b16 %v3355
        %v3528 = vunpack.c.h.b16 %v3355
        %v3529 = vunpack.c.l.b16 %v3356
        %v3530 = vunpack.c.h.b16 %v3356
        %v3531 = vunpack.c.l.b16 %v3357
        %v3532 = vunpack.c.h.b16 %v3357
        %v3533 = vunpack.c.l.b16 %v3358
        %v3534 = vunpack.c.h.b16 %v3358
        %v3535 = vunpack.c.l.b16 %v3359
        %v3536 = vunpack.c.h.b16 %v3359
        %v3537 = vunpack.c.l.b16 %v3360
        %v3538 = vunpack.c.h.b16 %v3360
        %v3539 = vunpack.c.l.b16 %v3361
        %v3540 = vunpack.c.h.b16 %v3361
        %v3541 = vunpack.c.l.b16 %v3362
        %v3542 = vunpack.c.h.b16 %v3362
        %v3543 = vunpack.c.l.b16 %v3363
        %v3544 = vunpack.c.h.b16 %v3363
        %v3545 = vunpack.c.l.b16 %v3364
        %v3546 = vunpack.c.h.b16 %v3364
        %v3547 = vunpack.c.l.b16 %v3365
        %v3548 = vunpack.c.h.b16 %v3365
        %v3549 = vunpack.c.l.b16 %v3366
        %v3550 = vunpack.c.h.b16 %v3366
        %v3551 = vunpack.c.l.b16 %v3367
        %v3552 = vunpack.c.h.b16 %v3367
        %v3553 = vunpack.c.l.b16 %v3368
        %v3554 = vunpack.c.h.b16 %v3368
        %v3555 = vunpack.c.l.b16 %v3369
        %v3556 = vunpack.c.h.b16 %v3369
        %v3557 = vunpack.c.l.b16 %v3370
        %v3558 = vunpack.c.h.b16 %v3370
        %v3559 = vunpack.c.l.b16 %v3371
        %v3560 = vunpack.c.h.b16 %v3371
        %v3561 = vunpack.c.l.b16 %v3372
        %v3562 = vunpack.c.h.b16 %v3372
        %v3563 = vunpack.c.l.b16 %v3373
        %v3564 = vunpack.c.h.b16 %v3373
        %v3565 = vunpack.c.l.b16 %v3374
        %v3566 = vunpack.c.h.b16 %v3374
        %v3567 = vunpack.c.l.b16 %v3375
        %v3568 = vunpack.c.h.b16 %v3375
        %v3569 = vunpack.c.l.b16 %v3376
        %v3570 = vunpack.c.h.b16 %v3376
        %v3571 = vunpack.c.l.b16 %v3377
        %v3572 = vunpack.c.h.b16 %v3377
        %v3573 = vunpack.c.l.b16 %v3378
        %v3574 = vunpack.c.h.b16 %v3378
        %v3575 = vunpack.c.l.b16 %v3379
        %v3576 = vunpack.c.h.b16 %v3379
        %v3577 = vunpack.c.l.b16 %v3380
        %v3578 = vunpack.c.h.b16 %v3380
        %v3579 = vpack.c.b16 %v3453, %v3451
        %v3580 = vpack.c.b16 %v3454, %v3452
        %v3581 = vpack.c.b16 %v3457, %v3455
        %v3582 = vpack.c.b16 %v3458, %v3456
        %v3583 = vpack.c.b16 %v3461, %v3459
        %v3584 = vpack.c.b16 %v3462, %v3460
        %v3585 = vpack.c.b16 %v3465, %v3463
        %v3586 = vpack.c.b16 %v3466, %v3464
        %v3587 = vpack.c.b16 %v3469, %v3467
        %v3588 = vpack.c.b16 %v3470, %v3468
        %v3589 = vpack.c.b16 %v3473, %v3471
        %v3590 = vpack.c.b16 %v3474, %v3472
        %v3591 = vpack.c.b16 %v3477, %v3475
        %v3592 = vpack.c.b16 %v3478, %v3476
        %v3593 = vpack.c.b16 %v3481, %v3479
        %v3594 = vpack.c.b16 %v3482, %v3480
        %v3595 = vpack.c.b16 %v3485, %v3483
        %v3596 = vpack.c.b16 %v3486, %v3484
        %v3597 = vpack.c.b16 %v3489, %v3487
        %v3598 = vpack.c.b16 %v3490, %v3488
        %v3599 = vpack.c.b16 %v3493, %v3491
        %v3600 = vpack.c.b16 %v3494, %v3492
        %v3601 = vpack.c.b16 %v3497, %v3495
        %v3602 = vpack.c.b16 %v3498, %v3496
        %v3603 = vpack.c.b16 %v3501, %v3499
        %v3604 = vpack.c.b16 %v3502, %v3500
        %v3605 = vpack.c.b16 %v3505, %v3503
        %v3606 = vpack.c.b16 %v3506, %v3504
        %v3607 = vpack.c.b16 %v3509, %v3507
        %v3608 = vpack.c.b16 %v3510, %v3508
        %v3609 = vpack.c.b16 %v3513, %v3511
        %v3610 = vpack.c.b16 %v3514, %v3512
        %v3611 = vpack.c.b16 %v3517, %v3515
        %v3612 = vpack.c.b16 %v3518, %v3516
        %v3613 = vpack.c.b16 %v3521, %v3519
        %v3614 = vpack.c.b16 %v3522, %v3520
        %v3615 = vpack.c.b16 %v3525, %v3523
        %v3616 = vpack.c.b16 %v3526, %v3524
        %v3617 = vpack.c.b16 %v3529, %v3527
        %v3618 = vpack.c.b16 %v3530, %v3528
        %v3619 = vpack.c.b16 %v3533, %v3531
        %v3620 = vpack.c.b16 %v3534, %v3532
        %v3621 = vpack.c.b16 %v3537, %v3535
        %v3622 = vpack.c.b16 %v3538, %v3536
        %v3623 = vpack.c.b16 %v3541, %v3539
        %v3624 = vpack.c.b16 %v3542, %v3540
        %v3625 = vpack.c.b16 %v3545, %v3543
        %v3626 = vpack.c.b16 %v3546, %v3544
        %v3627 = vpack.c.b16 %v3549, %v3547
        %v3628 = vpack.c.b16 %v3550, %v3548
        %v3629 = vpack.c.b16 %v3553, %v3551
        %v3630 = vpack.c.b16 %v3554, %v3552
        %v3631 = vpack.c.b16 %v3557, %v3555
        %v3632 = vpack.c.b16 %v3558, %v3556
        %v3633 = vpack.c.b16 %v3561, %v3559
        %v3634 = vpack.c.b16 %v3562, %v3560
        %v3635 = vpack.c.b16 %v3565, %v3563
        %v3636 = vpack.c.b16 %v3566, %v3564
        %v3637 = vpack.c.b16 %v3569, %v3567
        %v3638 = vpack.c.b16 %v3570, %v3568
        %v3639 = vpack.c.b16 %v3573, %v3571
        %v3640 = vpack.c.b16 %v3574, %v3572
        %v3641 = vpack.c.b16 %v3577, %v3575
        %v3642 = vpack.c.b16 %v3578, %v3576
        %3707 = vmatpush.bf16.msra.mxu0 %v3593
        %3708 = vmatpush.bf16.msra.mxu0 %v3591
        %3709 = vmatpush.bf16.msra.mxu0 %v3589
        %3710 = vmatpush.bf16.msra.mxu0 %v3587
        %3711 = vmatpush.bf16.msra.mxu0 %v3585
        %3712 = vmatpush.bf16.msra.mxu0 %v3583
        %3713 = vmatpush.bf16.msra.mxu0 %v3581
        %3714 = vmatpush.bf16.msra.mxu0 %v3579
        %3715 = vmatmul.bf16.gmra.mxu0 %v3285
        %v3716 = vpop.f32.mrf.mxu0
        %v3717 = vadd.f32 %v3383, %v3716
        %v3718 = vpop.f32.mrf.mxu0
        %v3719 = vadd.f32 %v3383, %v3718
        %3720 = vmatmul.bf16.gmra.mxu0 %v3289
        %v3721 = vpop.f32.mrf.mxu0
        %v3722 = vadd.f32 %v3383, %v3721
        %v3723 = vpop.f32.mrf.mxu0
        %v3724 = vadd.f32 %v3383, %v3723
        %3725 = vmatmul.bf16.gmra.mxu0 %v3293
        %v3726 = vpop.f32.mrf.mxu0
        %v3727 = vadd.f32 %v3383, %v3726
        %v3728 = vpop.f32.mrf.mxu0
        %v3729 = vadd.f32 %v3383, %v3728
        %3730 = vmatmul.bf16.gmra.mxu0 %v3297
        %v3731 = vpop.f32.mrf.mxu0
        %v3732 = vadd.f32 %v3383, %v3731
        %v3733 = vpop.f32.mrf.mxu0
        %v3734 = vadd.f32 %v3383, %v3733
        %3735 = vmatmul.bf16.gmra.mxu0 %v3301
        %v3736 = vpop.f32.mrf.mxu0
        %v3737 = vadd.f32 %v3383, %v3736
        %v3738 = vpop.f32.mrf.mxu0
        %v3739 = vadd.f32 %v3383, %v3738
        %3740 = vmatmul.bf16.gmra.mxu0 %v3305
        %v3741 = vpop.f32.mrf.mxu0
        %v3742 = vadd.f32 %v3383, %v3741
        %v3743 = vpop.f32.mrf.mxu0
        %v3744 = vadd.f32 %v3383, %v3743
        %3745 = vmatmul.bf16.gmra.mxu0 %v3309
        %v3746 = vpop.f32.mrf.mxu0
        %v3747 = vadd.f32 %v3383, %v3746
        %v3748 = vpop.f32.mrf.mxu0
        %v3749 = vadd.f32 %v3383, %v3748
        %3750 = vmatmul.bf16.gmra.mxu0 %v3313
        %v3751 = vpop.f32.mrf.mxu0
        %v3752 = vadd.f32 %v3383, %v3751
        %v3753 = vpop.f32.mrf.mxu0
        %v3754 = vadd.f32 %v3383, %v3753
        %3755 = vdwg.mxu0
        %3756 = vmatpush.bf16.msra.mxu0 %v3609
        %3757 = vmatpush.bf16.msra.mxu0 %v3607
        %3758 = vmatpush.bf16.msra.mxu0 %v3605
        %3759 = vmatpush.bf16.msra.mxu0 %v3603
        %3760 = vmatpush.bf16.msra.mxu0 %v3601
        %3761 = vmatpush.bf16.msra.mxu0 %v3599
        %3762 = vmatpush.bf16.msra.mxu0 %v3597
        %3763 = vmatpush.bf16.msra.mxu0 %v3595
        %3764 = vmatmul.bf16.gmra.mxu0 %v3286
        %v3765 = vpop.f32.mrf.mxu0
        %v3766 = vadd.f32 %v3717, %v3765
        %v3767 = vpop.f32.mrf.mxu0
        %v3768 = vadd.f32 %v3719, %v3767
        %3769 = vmatmul.bf16.gmra.mxu0 %v3290
        %v3770 = vpop.f32.mrf.mxu0
        %v3771 = vadd.f32 %v3722, %v3770
        %v3772 = vpop.f32.mrf.mxu0
        %v3773 = vadd.f32 %v3724, %v3772
        %3774 = vmatmul.bf16.gmra.mxu0 %v3294
        %v3775 = vpop.f32.mrf.mxu0
        %v3776 = vadd.f32 %v3727, %v3775
        %v3777 = vpop.f32.mrf.mxu0
        %v3778 = vadd.f32 %v3729, %v3777
        %3779 = vmatmul.bf16.gmra.mxu0 %v3298
        %v3780 = vpop.f32.mrf.mxu0
        %v3781 = vadd.f32 %v3732, %v3780
        %v3782 = vpop.f32.mrf.mxu0
        %v3783 = vadd.f32 %v3734, %v3782
        %3784 = vmatmul.bf16.gmra.mxu0 %v3302
        %v3785 = vpop.f32.mrf.mxu0
        %v3786 = vadd.f32 %v3737, %v3785
        %v3787 = vpop.f32.mrf.mxu0
        %v3788 = vadd.f32 %v3739, %v3787
        %3789 = vmatmul.bf16.gmra.mxu0 %v3306
        %v3790 = vpop.f32.mrf.mxu0
        %v3791 = vadd.f32 %v3742, %v3790
        %v3792 = vpop.f32.mrf.mxu0
        %v3793 = vadd.f32 %v3744, %v3792
        %3794 = vmatmul.bf16.gmra.mxu0 %v3310
        %v3795 = vpop.f32.mrf.mxu0
        %v3796 = vadd.f32 %v3747, %v3795
        %v3797 = vpop.f32.mrf.mxu0
        %v3798 = vadd.f32 %v3749, %v3797
        %3799 = vmatmul.bf16.gmra.mxu0 %v3314
        %v3800 = vpop.f32.mrf.mxu0
        %v3801 = vadd.f32 %v3752, %v3800
        %v3802 = vpop.f32.mrf.mxu0
        %v3803 = vadd.f32 %v3754, %v3802
        %3804 = vdwg.mxu0
        %3805 = vmatpush.bf16.msra.mxu0 %v3625
        %3806 = vmatpush.bf16.msra.mxu0 %v3623
        %3807 = vmatpush.bf16.msra.mxu0 %v3621
        %3808 = vmatpush.bf16.msra.mxu0 %v3619
        %3809 = vmatpush.bf16.msra.mxu0 %v3617
        %3810 = vmatpush.bf16.msra.mxu0 %v3615
        %3811 = vmatpush.bf16.msra.mxu0 %v3613
        %3812 = vmatpush.bf16.msra.mxu0 %v3611
        %3813 = vmatmul.bf16.gmra.mxu0 %v3287
        %v3814 = vpop.f32.mrf.mxu0
        %v3815 = vadd.f32 %v3766, %v3814
        %v3816 = vpop.f32.mrf.mxu0
        %v3817 = vadd.f32 %v3768, %v3816
        %3818 = vmatmul.bf16.gmra.mxu0 %v3291
        %v3819 = vpop.f32.mrf.mxu0
        %v3820 = vadd.f32 %v3771, %v3819
        %v3821 = vpop.f32.mrf.mxu0
        %v3822 = vadd.f32 %v3773, %v3821
        %3823 = vmatmul.bf16.gmra.mxu0 %v3295
        %v3824 = vpop.f32.mrf.mxu0
        %v3825 = vadd.f32 %v3776, %v3824
        %v3826 = vpop.f32.mrf.mxu0
        %v3827 = vadd.f32 %v3778, %v3826
        %3828 = vmatmul.bf16.gmra.mxu0 %v3299
        %v3829 = vpop.f32.mrf.mxu0
        %v3830 = vadd.f32 %v3781, %v3829
        %v3831 = vpop.f32.mrf.mxu0
        %v3832 = vadd.f32 %v3783, %v3831
        %3833 = vmatmul.bf16.gmra.mxu0 %v3303
        %v3834 = vpop.f32.mrf.mxu0
        %v3835 = vadd.f32 %v3786, %v3834
        %v3836 = vpop.f32.mrf.mxu0
        %v3837 = vadd.f32 %v3788, %v3836
        %3838 = vmatmul.bf16.gmra.mxu0 %v3307
        %v3839 = vpop.f32.mrf.mxu0
        %v3840 = vadd.f32 %v3791, %v3839
        %v3841 = vpop.f32.mrf.mxu0
        %v3842 = vadd.f32 %v3793, %v3841
        %3843 = vmatmul.bf16.gmra.mxu0 %v3311
        %v3844 = vpop.f32.mrf.mxu0
        %v3845 = vadd.f32 %v3796, %v3844
        %v3846 = vpop.f32.mrf.mxu0
        %v3847 = vadd.f32 %v3798, %v3846
        %3848 = vmatmul.bf16.gmra.mxu0 %v3315
        %v3849 = vpop.f32.mrf.mxu0
        %v3850 = vadd.f32 %v3801, %v3849
        %v3851 = vpop.f32.mrf.mxu0
        %v3852 = vadd.f32 %v3803, %v3851
        %3853 = vdwg.mxu0
        %3854 = vmatpush.bf16.msra.mxu0 %v3641
        %3855 = vmatpush.bf16.msra.mxu0 %v3639
        %3856 = vmatpush.bf16.msra.mxu0 %v3637
        %3857 = vmatpush.bf16.msra.mxu0 %v3635
        %3858 = vmatpush.bf16.msra.mxu0 %v3633
        %3859 = vmatpush.bf16.msra.mxu0 %v3631
        %3860 = vmatpush.bf16.msra.mxu0 %v3629
        %3861 = vmatpush.bf16.msra.mxu0 %v3627
        %3862 = vmatmul.bf16.gmra.mxu0 %v3288
        %v3863 = vpop.f32.mrf.mxu0
        %v3864 = vadd.f32 %v3815, %v3863
        %v3865 = vpop.f32.mrf.mxu0
        %v3866 = vadd.f32 %v3817, %v3865
        %3867 = vmatmul.bf16.gmra.mxu0 %v3292
        %v3868 = vpop.f32.mrf.mxu0
        %v3869 = vadd.f32 %v3820, %v3868
        %v3870 = vpop.f32.mrf.mxu0
        %v3871 = vadd.f32 %v3822, %v3870
        %3872 = vmatmul.bf16.gmra.mxu0 %v3296
        %v3873 = vpop.f32.mrf.mxu0
        %v3874 = vadd.f32 %v3825, %v3873
        %v3875 = vpop.f32.mrf.mxu0
        %v3876 = vadd.f32 %v3827, %v3875
        %3877 = vmatmul.bf16.gmra.mxu0 %v3300
        %v3878 = vpop.f32.mrf.mxu0
        %v3879 = vadd.f32 %v3830, %v3878
        %v3880 = vpop.f32.mrf.mxu0
        %v3881 = vadd.f32 %v3832, %v3880
        %3882 = vmatmul.bf16.gmra.mxu0 %v3304
        %v3883 = vpop.f32.mrf.mxu0
        %v3884 = vadd.f32 %v3835, %v3883
        %v3885 = vpop.f32.mrf.mxu0
        %v3886 = vadd.f32 %v3837, %v3885
        %3887 = vmatmul.bf16.gmra.mxu0 %v3308
        %v3888 = vpop.f32.mrf.mxu0
        %v3889 = vadd.f32 %v3840, %v3888
        %v3890 = vpop.f32.mrf.mxu0
        %v3891 = vadd.f32 %v3842, %v3890
        %3892 = vmatmul.bf16.gmra.mxu0 %v3312
        %v3893 = vpop.f32.mrf.mxu0
        %v3894 = vadd.f32 %v3845, %v3893
        %v3895 = vpop.f32.mrf.mxu0
        %v3896 = vadd.f32 %v3847, %v3895
        %3897 = vmatmul.bf16.gmra.mxu0 %v3316
        %v3898 = vpop.f32.mrf.mxu0
        %v3899 = vadd.f32 %v3850, %v3898
        %v3900 = vpop.f32.mrf.mxu0
        %v3901 = vadd.f32 %v3852, %v3900
        %3902 = vdwg.mxu0
        %3903 = vmatpush.bf16.msra.mxu0 %v3594
        %3904 = vmatpush.bf16.msra.mxu0 %v3592
        %3905 = vmatpush.bf16.msra.mxu0 %v3590
        %3906 = vmatpush.bf16.msra.mxu0 %v3588
        %3907 = vmatpush.bf16.msra.mxu0 %v3586
        %3908 = vmatpush.bf16.msra.mxu0 %v3584
        %3909 = vmatpush.bf16.msra.mxu0 %v3582
        %3910 = vmatpush.bf16.msra.mxu0 %v3580
        %3911 = vmatmul.bf16.gmra.mxu0 %v3285
        %v3912 = vpop.f32.mrf.mxu0
        %v3913 = vadd.f32 %v3384, %v3912
        %v3914 = vpop.f32.mrf.mxu0
        %v3915 = vadd.f32 %v3384, %v3914
        %3916 = vmatmul.bf16.gmra.mxu0 %v3289
        %v3917 = vpop.f32.mrf.mxu0
        %v3918 = vadd.f32 %v3384, %v3917
        %v3919 = vpop.f32.mrf.mxu0
        %v3920 = vadd.f32 %v3384, %v3919
        %3921 = vmatmul.bf16.gmra.mxu0 %v3293
        %v3922 = vpop.f32.mrf.mxu0
        %v3923 = vadd.f32 %v3384, %v3922
        %v3924 = vpop.f32.mrf.mxu0
        %v3925 = vadd.f32 %v3384, %v3924
        %3926 = vmatmul.bf16.gmra.mxu0 %v3297
        %v3927 = vpop.f32.mrf.mxu0
        %v3928 = vadd.f32 %v3384, %v3927
        %v3929 = vpop.f32.mrf.mxu0
        %v3930 = vadd.f32 %v3384, %v3929
        %3931 = vmatmul.bf16.gmra.mxu0 %v3301
        %v3932 = vpop.f32.mrf.mxu0
        %v3933 = vadd.f32 %v3384, %v3932
        %v3934 = vpop.f32.mrf.mxu0
        %v3935 = vadd.f32 %v3384, %v3934
        %3936 = vmatmul.bf16.gmra.mxu0 %v3305
        %v3937 = vpop.f32.mrf.mxu0
        %v3938 = vadd.f32 %v3384, %v3937
        %v3939 = vpop.f32.mrf.mxu0
        %v3940 = vadd.f32 %v3384, %v3939
        %3941 = vmatmul.bf16.gmra.mxu0 %v3309
        %v3942 = vpop.f32.mrf.mxu0
        %v3943 = vadd.f32 %v3384, %v3942
        %v3944 = vpop.f32.mrf.mxu0
        %v3945 = vadd.f32 %v3384, %v3944
        %3946 = vmatmul.bf16.gmra.mxu0 %v3313
        %v3947 = vpop.f32.mrf.mxu0
        %v3948 = vadd.f32 %v3384, %v3947
        %v3949 = vpop.f32.mrf.mxu0
        %v3950 = vadd.f32 %v3384, %v3949
        %3951 = vdwg.mxu0
        %3952 = vmatpush.bf16.msra.mxu0 %v3610
        %3953 = vmatpush.bf16.msra.mxu0 %v3608
        %3954 = vmatpush.bf16.msra.mxu0 %v3606
        %3955 = vmatpush.bf16.msra.mxu0 %v3604
        %3956 = vmatpush.bf16.msra.mxu0 %v3602
        %3957 = vmatpush.bf16.msra.mxu0 %v3600
        %3958 = vmatpush.bf16.msra.mxu0 %v3598
        %3959 = vmatpush.bf16.msra.mxu0 %v3596
        %3960 = vmatmul.bf16.gmra.mxu0 %v3286
        %v3961 = vpop.f32.mrf.mxu0
        %v3962 = vadd.f32 %v3913, %v3961
        %v3963 = vpop.f32.mrf.mxu0
        %v3964 = vadd.f32 %v3915, %v3963
        %3965 = vmatmul.bf16.gmra.mxu0 %v3290
        %v3966 = vpop.f32.mrf.mxu0
        %v3967 = vadd.f32 %v3918, %v3966
        %v3968 = vpop.f32.mrf.mxu0
        %v3969 = vadd.f32 %v3920, %v3968
        %3970 = vmatmul.bf16.gmra.mxu0 %v3294
        %v3971 = vpop.f32.mrf.mxu0
        %v3972 = vadd.f32 %v3923, %v3971
        %v3973 = vpop.f32.mrf.mxu0
        %v3974 = vadd.f32 %v3925, %v3973
        %3975 = vmatmul.bf16.gmra.mxu0 %v3298
        %v3976 = vpop.f32.mrf.mxu0
        %v3977 = vadd.f32 %v3928, %v3976
        %v3978 = vpop.f32.mrf.mxu0
        %v3979 = vadd.f32 %v3930, %v3978
        %3980 = vmatmul.bf16.gmra.mxu0 %v3302
        %v3981 = vpop.f32.mrf.mxu0
        %v3982 = vadd.f32 %v3933, %v3981
        %v3983 = vpop.f32.mrf.mxu0
        %v3984 = vadd.f32 %v3935, %v3983
        %3985 = vmatmul.bf16.gmra.mxu0 %v3306
        %v3986 = vpop.f32.mrf.mxu0
        %v3987 = vadd.f32 %v3938, %v3986
        %v3988 = vpop.f32.mrf.mxu0
        %v3989 = vadd.f32 %v3940, %v3988
        %3990 = vmatmul.bf16.gmra.mxu0 %v3310
        %v3991 = vpop.f32.mrf.mxu0
        %v3992 = vadd.f32 %v3943, %v3991
        %v3993 = vpop.f32.mrf.mxu0
        %v3994 = vadd.f32 %v3945, %v3993
        %3995 = vmatmul.bf16.gmra.mxu0 %v3314
        %v3996 = vpop.f32.mrf.mxu0
        %v3997 = vadd.f32 %v3948, %v3996
        %v3998 = vpop.f32.mrf.mxu0
        %v3999 = vadd.f32 %v3950, %v3998
        %4000 = vdwg.mxu0
        %4001 = vmatpush.bf16.msra.mxu0 %v3626
        %4002 = vmatpush.bf16.msra.mxu0 %v3624
        %4003 = vmatpush.bf16.msra.mxu0 %v3622
        %4004 = vmatpush.bf16.msra.mxu0 %v3620
        %4005 = vmatpush.bf16.msra.mxu0 %v3618
        %4006 = vmatpush.bf16.msra.mxu0 %v3616
        %4007 = vmatpush.bf16.msra.mxu0 %v3614
        %4008 = vmatpush.bf16.msra.mxu0 %v3612
        %4009 = vmatmul.bf16.gmra.mxu0 %v3287
        %v4010 = vpop.f32.mrf.mxu0
        %v4011 = vadd.f32 %v3962, %v4010
        %v4012 = vpop.f32.mrf.mxu0
        %v4013 = vadd.f32 %v3964, %v4012
        %4014 = vmatmul.bf16.gmra.mxu0 %v3291
        %v4015 = vpop.f32.mrf.mxu0
        %v4016 = vadd.f32 %v3967, %v4015
        %v4017 = vpop.f32.mrf.mxu0
        %v4018 = vadd.f32 %v3969, %v4017
        %4019 = vmatmul.bf16.gmra.mxu0 %v3295
        %v4020 = vpop.f32.mrf.mxu0
        %v4021 = vadd.f32 %v3972, %v4020
        %v4022 = vpop.f32.mrf.mxu0
        %v4023 = vadd.f32 %v3974, %v4022
        %4024 = vmatmul.bf16.gmra.mxu0 %v3299
        %v4025 = vpop.f32.mrf.mxu0
        %v4026 = vadd.f32 %v3977, %v4025
        %v4027 = vpop.f32.mrf.mxu0
        %v4028 = vadd.f32 %v3979, %v4027
        %4029 = vmatmul.bf16.gmra.mxu0 %v3303
        %v4030 = vpop.f32.mrf.mxu0
        %v4031 = vadd.f32 %v3982, %v4030
        %v4032 = vpop.f32.mrf.mxu0
        %v4033 = vadd.f32 %v3984, %v4032
        %4034 = vmatmul.bf16.gmra.mxu0 %v3307
        %v4035 = vpop.f32.mrf.mxu0
        %v4036 = vadd.f32 %v3987, %v4035
        %v4037 = vpop.f32.mrf.mxu0
        %v4038 = vadd.f32 %v3989, %v4037
        %4039 = vmatmul.bf16.gmra.mxu0 %v3311
        %v4040 = vpop.f32.mrf.mxu0
        %v4041 = vadd.f32 %v3992, %v4040
        %v4042 = vpop.f32.mrf.mxu0
        %v4043 = vadd.f32 %v3994, %v4042
        %4044 = vmatmul.bf16.gmra.mxu0 %v3315
        %v4045 = vpop.f32.mrf.mxu0
        %v4046 = vadd.f32 %v3997, %v4045
        %v4047 = vpop.f32.mrf.mxu0
        %v4048 = vadd.f32 %v3999, %v4047
        %4049 = vdwg.mxu0
        %4050 = vmatpush.bf16.msra.mxu0 %v3642
        %4051 = vmatpush.bf16.msra.mxu0 %v3640
        %4052 = vmatpush.bf16.msra.mxu0 %v3638
        %4053 = vmatpush.bf16.msra.mxu0 %v3636
        %4054 = vmatpush.bf16.msra.mxu0 %v3634
        %4055 = vmatpush.bf16.msra.mxu0 %v3632
        %4056 = vmatpush.bf16.msra.mxu0 %v3630
        %4057 = vmatpush.bf16.msra.mxu0 %v3628
        %4058 = vmatmul.bf16.gmra.mxu0 %v3288
        %v4059 = vpop.f32.mrf.mxu0
        %v4060 = vadd.f32 %v4011, %v4059
        %v4061 = vpop.f32.mrf.mxu0
        %v4062 = vadd.f32 %v4013, %v4061
        %4063 = vmatmul.bf16.gmra.mxu0 %v3292
        %v4064 = vpop.f32.mrf.mxu0
        %v4065 = vadd.f32 %v4016, %v4064
        %v4066 = vpop.f32.mrf.mxu0
        %v4067 = vadd.f32 %v4018, %v4066
        %4068 = vmatmul.bf16.gmra.mxu0 %v3296
        %v4069 = vpop.f32.mrf.mxu0
        %v4070 = vadd.f32 %v4021, %v4069
        %v4071 = vpop.f32.mrf.mxu0
        %v4072 = vadd.f32 %v4023, %v4071
        %4073 = vmatmul.bf16.gmra.mxu0 %v3300
        %v4074 = vpop.f32.mrf.mxu0
        %v4075 = vadd.f32 %v4026, %v4074
        %v4076 = vpop.f32.mrf.mxu0
        %v4077 = vadd.f32 %v4028, %v4076
        %4078 = vmatmul.bf16.gmra.mxu0 %v3304
        %v4079 = vpop.f32.mrf.mxu0
        %v4080 = vadd.f32 %v4031, %v4079
        %v4081 = vpop.f32.mrf.mxu0
        %v4082 = vadd.f32 %v4033, %v4081
        %4083 = vmatmul.bf16.gmra.mxu0 %v3308
        %v4084 = vpop.f32.mrf.mxu0
        %v4085 = vadd.f32 %v4036, %v4084
        %v4086 = vpop.f32.mrf.mxu0
        %v4087 = vadd.f32 %v4038, %v4086
        %4088 = vmatmul.bf16.gmra.mxu0 %v3312
        %v4089 = vpop.f32.mrf.mxu0
        %v4090 = vadd.f32 %v4041, %v4089
        %v4091 = vpop.f32.mrf.mxu0
        %v4092 = vadd.f32 %v4043, %v4091
        %4093 = vmatmul.bf16.gmra.mxu0 %v3316
        %v4094 = vpop.f32.mrf.mxu0
        %v4095 = vadd.f32 %v4046, %v4094
        %v4096 = vpop.f32.mrf.mxu0
        %v4097 = vadd.f32 %v4048, %v4096
        %4098 = vdwg.mxu0
        %v4099 = vld [vmem:[%s317] sm:$0xff]
        %v4100 = vld [vmem:[%s317 + $0x8] sm:$0xff]
        %v4101 = vld [vmem:[%s317 + $0x10] sm:$0xff]
        %v4102 = vld [vmem:[%s317 + $0x18] sm:$0xff]
        %v4103 = vld [vmem:[%s317 + $0x20] sm:$0xff]
        %v4104 = vld [vmem:[%s317 + $0x28] sm:$0xff]
        %v4105 = vld [vmem:[%s317 + $0x30] sm:$0xff]
        %v4106 = vld [vmem:[%s317 + $0x38] sm:$0xff]
        %v4107 = vld [vmem:[%s317 + $0x40] sm:$0xff]
        %v4108 = vld [vmem:[%s317 + $0x48] sm:$0xff]
        %v4109 = vld [vmem:[%s317 + $0x50] sm:$0xff]
        %v4110 = vld [vmem:[%s317 + $0x58] sm:$0xff]
        %v4111 = vld [vmem:[%s317 + $0x60] sm:$0xff]
        %v4112 = vld [vmem:[%s317 + $0x68] sm:$0xff]
        %v4113 = vld [vmem:[%s317 + $0x70] sm:$0xff]
        %v4114 = vld [vmem:[%s317 + $0x78] sm:$0xff]
        %v4115 = vmul.f32 %v4060, 0.5
        %v4116 = vmul.f32 %v4062, 0.5
        %v4117 = vmul.f32 %v4065, 0.5
        %v4118 = vmul.f32 %v4067, 0.5
        %v4119 = vmul.f32 %v4070, 0.5
        %v4120 = vmul.f32 %v4072, 0.5
        %v4121 = vmul.f32 %v4075, 0.5
        %v4122 = vmul.f32 %v4077, 0.5
        %v4123 = vmul.f32 %v4080, 0.5
        %v4124 = vmul.f32 %v4082, 0.5
        %v4125 = vmul.f32 %v4085, 0.5
        %v4126 = vmul.f32 %v4087, 0.5
        %v4127 = vmul.f32 %v4090, 0.5
        %v4128 = vmul.f32 %v4092, 0.5
        %v4129 = vmul.f32 %v4095, 0.5
        %v4130 = vmul.f32 %v4097, 0.5
        %v4131 = vmul.f32 %v4115, 1.442695
        %v4132 = vpow.pop %v4131
        %v4133 = vmul.f32 %v4116, 1.442695
        %v4134 = vpow.pop %v4133
        %v4135 = vmul.f32 %v4117, 1.442695
        %v4136 = vpow.pop %v4135
        %v4137 = vmul.f32 %v4118, 1.442695
        %v4138 = vpow.pop %v4137
        %v4139 = vmul.f32 %v4119, 1.442695
        %v4140 = vpow.pop %v4139
        %v4141 = vmul.f32 %v4120, 1.442695
        %v4142 = vpow.pop %v4141
        %v4143 = vmul.f32 %v4121, 1.442695
        %v4144 = vpow.pop %v4143
        %v4145 = vmul.f32 %v4122, 1.442695
        %v4146 = vpow.pop %v4145
        %v4147 = vmul.f32 %v4123, 1.442695
        %v4148 = vpow.pop %v4147
        %v4149 = vmul.f32 %v4124, 1.442695
        %v4150 = vpow.pop %v4149
        %v4151 = vmul.f32 %v4125, 1.442695
        %v4152 = vpow.pop %v4151
        %v4153 = vmul.f32 %v4126, 1.442695
        %v4154 = vpow.pop %v4153
        %v4155 = vmul.f32 %v4127, 1.442695
        %v4156 = vpow.pop %v4155
        %v4157 = vmul.f32 %v4128, 1.442695
        %v4158 = vpow.pop %v4157
        %v4159 = vmul.f32 %v4129, 1.442695
        %v4160 = vpow.pop %v4159
        %v4161 = vmul.f32 %v4130, 1.442695
        %v4162 = vpow.pop %v4161
        %v4163 = vmul.f32 %v4099, %v4132
        %v4164 = vmul.f32 %v4100, %v4134
        %v4165 = vmul.f32 %v4101, %v4136
        %v4166 = vmul.f32 %v4102, %v4138
        %v4167 = vmul.f32 %v4103, %v4140
        %v4168 = vmul.f32 %v4104, %v4142
        %v4169 = vmul.f32 %v4105, %v4144
        %v4170 = vmul.f32 %v4106, %v4146
        %v4171 = vmul.f32 %v4107, %v4148
        %v4172 = vmul.f32 %v4108, %v4150
        %v4173 = vmul.f32 %v4109, %v4152
        %v4174 = vmul.f32 %v4110, %v4154
        %v4175 = vmul.f32 %v4111, %v4156
        %v4176 = vmul.f32 %v4112, %v4158
        %v4177 = vmul.f32 %v4113, %v4160
        %v4178 = vmul.f32 %v4114, %v4162
        %v4179 = vadd.f32 %v3864, %v4163
        %v4180 = vadd.f32 %v3866, %v4164
        %v4181 = vadd.f32 %v3869, %v4165
        %v4182 = vadd.f32 %v3871, %v4166
        %v4183 = vadd.f32 %v3874, %v4167
        %v4184 = vadd.f32 %v3876, %v4168
        %v4185 = vadd.f32 %v3879, %v4169
        %v4186 = vadd.f32 %v3881, %v4170
        %v4187 = vadd.f32 %v3884, %v4171
        %v4188 = vadd.f32 %v3886, %v4172
        %v4189 = vadd.f32 %v3889, %v4173
        %v4190 = vadd.f32 %v3891, %v4174
        %v4191 = vadd.f32 %v3894, %v4175
        %v4192 = vadd.f32 %v3896, %v4176
        %v4193 = vadd.f32 %v3899, %v4177
        %v4194 = vadd.f32 %v3901, %v4178
        %v4195 = vpack.c.bf16 %v4180, %v4179
        %v4196 = vpack.c.bf16 %v4182, %v4181
        %v4197 = vpack.c.bf16 %v4184, %v4183
        %v4198 = vpack.c.bf16 %v4186, %v4185
        %v4199 = vpack.c.bf16 %v4188, %v4187
        %v4200 = vpack.c.bf16 %v4190, %v4189
        %v4201 = vpack.c.bf16 %v4192, %v4191
        %v4202 = vpack.c.bf16 %v4194, %v4193
        %v4203 = vld [vmem:[%s4] sm:$0xff]
        %v4204 = vld [vmem:[%s4 + $0x8] sm:$0xff]
        %v4205 = vld [vmem:[%s4 + $0x10] sm:$0xff]
        %v4206 = vld [vmem:[%s4 + $0x18] sm:$0xff]
        %v4207 = vld [vmem:[%s4 + $0x20] sm:$0x33]
        %v4208 = vld [vmem:[%s4 + $0x28] sm:$0x33]
        %v4209 = vld [vmem:[%s6 + $0x6] sm:$0xf]
        %v4211 = vperm.slane %v4209, 0
        %v4212 = vperm.slane %v4209, 1
        %v4213 = vperm.slane %v4209, 2
        %v4214 = vperm.slane %v4209, 3
        %v4225 = vunpack.c.l.b16 %v4203
        %v4226 = vunpack.c.h.b16 %v4203
        %v4227 = vunpack.c.l.b16 %v4204
        %v4228 = vunpack.c.h.b16 %v4204
        %v4229 = vunpack.c.l.b16 %v4205
        %v4230 = vunpack.c.h.b16 %v4205
        %v4231 = vunpack.c.l.b16 %v4206
        %v4232 = vunpack.c.h.b16 %v4206
        %v4233 = vunpack.c.l.b16 %v4207
        %v4234 = vunpack.c.h.b16 %v4207
        %v4235 = vunpack.c.l.b16 %v4208
        %v4236 = vunpack.c.h.b16 %v4208
        %v4237 = vpack.c.b16 %v4229, %v4225
        %v4238 = vpack.c.b16 %v4230, %v4226
        %v4239 = vpack.c.b16 %v4231, %v4227
        %v4240 = vpack.c.b16 %v4232, %v4228
        %v4241 = vpack.c.b16 %v4233, %v4233
        %v4242 = vpack.c.b16 %v4234, %v4234
        %v4243 = vpack.c.b16 %v4235, %v4235
        %v4244 = vpack.c.b16 %v4236, %v4236
        %vm4249 = vcmask 162816
        %v4251 = vsel %vm4249, %v4195, 0
        %v4254 = vsel %vm4249, %v4196, 0
        %v4257 = vsel %vm4249, %v4197, 0
        %v4260 = vsel %vm4249, %v4198, 0
        %v4263 = vsel %vm4249, %v4199, 0
        %v4266 = vsel %vm4249, %v4200, 0
        %v4269 = vsel %vm4249, %v4201, 0
        %v4272 = vsel %vm4249, %v4202, 0
        %vm4274 = vcmask 1041408
        %v4276 = vsel %vm4274, %v4241, 0
        %v4279 = vsel %vm4274, %v4242, 0
        %v4282 = vsel %vm4274, %v4243, 0
        %v4285 = vsel %vm4274, %v4244, 0
        %4287 = vmatpush.bf16.msra.mxu0 0
        %4288 = vmatpush.bf16.msra.mxu0 0
        %4289 = vmatpush.bf16.msra.mxu0 0
        %4290 = vmatpush.bf16.msra.mxu0 0
        %4291 = vmatpush.bf16.msra.mxu0 0
        %4292 = vmatpush.bf16.msra.mxu0 0
        %4293 = vmatpush.bf16.msra.mxu0 %v4276
        %4294 = vmatpush.bf16.msra.mxu0 %v4237
        %4295 = vmatmul.bf16.gmra.mxu0 %v4251
        %v4296 = vpop.f32.mrf.mxu0
        %v4297 = vadd.f32 %v4211, %v4296
        %v4298 = vpop.f32.mrf.mxu0
        %v4299 = vadd.f32 %v4211, %v4298
        %4300 = vmatmul.bf16.gmra.mxu0 %v4254
        %v4301 = vpop.f32.mrf.mxu0
        %v4302 = vadd.f32 %v4211, %v4301
        %v4303 = vpop.f32.mrf.mxu0
        %v4304 = vadd.f32 %v4211, %v4303
        %4305 = vmatmul.bf16.gmra.mxu0 %v4257
        %v4306 = vpop.f32.mrf.mxu0
        %v4307 = vadd.f32 %v4211, %v4306
        %v4308 = vpop.f32.mrf.mxu0
        %v4309 = vadd.f32 %v4211, %v4308
        %4310 = vmatmul.bf16.gmra.mxu0 %v4260
        %v4311 = vpop.f32.mrf.mxu0
        %v4312 = vadd.f32 %v4211, %v4311
        %v4313 = vpop.f32.mrf.mxu0
        %v4314 = vadd.f32 %v4211, %v4313
        %4315 = vmatmul.bf16.gmra.mxu0 %v4263
        %v4316 = vpop.f32.mrf.mxu0
        %v4317 = vadd.f32 %v4211, %v4316
        %v4318 = vpop.f32.mrf.mxu0
        %v4319 = vadd.f32 %v4211, %v4318
        %4320 = vmatmul.bf16.gmra.mxu0 %v4266
        %v4321 = vpop.f32.mrf.mxu0
        %v4322 = vadd.f32 %v4211, %v4321
        %v4323 = vpop.f32.mrf.mxu0
        %v4324 = vadd.f32 %v4211, %v4323
        %4325 = vmatmul.bf16.gmra.mxu0 %v4269
        %v4326 = vpop.f32.mrf.mxu0
        %v4327 = vadd.f32 %v4211, %v4326
        %v4328 = vpop.f32.mrf.mxu0
        %v4329 = vadd.f32 %v4211, %v4328
        %4330 = vmatmul.bf16.gmra.mxu0 %v4272
        %v4331 = vpop.f32.mrf.mxu0
        %v4332 = vadd.f32 %v4211, %v4331
        %v4333 = vpop.f32.mrf.mxu0
        %v4334 = vadd.f32 %v4211, %v4333
        %4335 = vdwg.mxu0
        %4336 = vmatpush.bf16.msra.mxu0 0
        %4337 = vmatpush.bf16.msra.mxu0 0
        %4338 = vmatpush.bf16.msra.mxu0 0
        %4339 = vmatpush.bf16.msra.mxu0 0
        %4340 = vmatpush.bf16.msra.mxu0 0
        %4341 = vmatpush.bf16.msra.mxu0 0
        %4342 = vmatpush.bf16.msra.mxu0 %v4279
        %4343 = vmatpush.bf16.msra.mxu0 %v4238
        %4344 = vmatmul.bf16.gmra.mxu0 %v4251
        %v4345 = vpop.f32.mrf.mxu0
        %v4346 = vadd.f32 %v4212, %v4345
        %v4347 = vpop.f32.mrf.mxu0
        %v4348 = vadd.f32 %v4212, %v4347
        %4349 = vmatmul.bf16.gmra.mxu0 %v4254
        %v4350 = vpop.f32.mrf.mxu0
        %v4351 = vadd.f32 %v4212, %v4350
        %v4352 = vpop.f32.mrf.mxu0
        %v4353 = vadd.f32 %v4212, %v4352
        %4354 = vmatmul.bf16.gmra.mxu0 %v4257
        %v4355 = vpop.f32.mrf.mxu0
        %v4356 = vadd.f32 %v4212, %v4355
        %v4357 = vpop.f32.mrf.mxu0
        %v4358 = vadd.f32 %v4212, %v4357
        %4359 = vmatmul.bf16.gmra.mxu0 %v4260
        %v4360 = vpop.f32.mrf.mxu0
        %v4361 = vadd.f32 %v4212, %v4360
        %v4362 = vpop.f32.mrf.mxu0
        %v4363 = vadd.f32 %v4212, %v4362
        %4364 = vmatmul.bf16.gmra.mxu0 %v4263
        %v4365 = vpop.f32.mrf.mxu0
        %v4366 = vadd.f32 %v4212, %v4365
        %v4367 = vpop.f32.mrf.mxu0
        %v4368 = vadd.f32 %v4212, %v4367
        %4369 = vmatmul.bf16.gmra.mxu0 %v4266
        %v4370 = vpop.f32.mrf.mxu0
        %v4371 = vadd.f32 %v4212, %v4370
        %v4372 = vpop.f32.mrf.mxu0
        %v4373 = vadd.f32 %v4212, %v4372
        %4374 = vmatmul.bf16.gmra.mxu0 %v4269
        %v4375 = vpop.f32.mrf.mxu0
        %v4376 = vadd.f32 %v4212, %v4375
        %v4377 = vpop.f32.mrf.mxu0
        %v4378 = vadd.f32 %v4212, %v4377
        %4379 = vmatmul.bf16.gmra.mxu0 %v4272
        %v4380 = vpop.f32.mrf.mxu0
        %v4381 = vadd.f32 %v4212, %v4380
        %v4382 = vpop.f32.mrf.mxu0
        %v4383 = vadd.f32 %v4212, %v4382
        %4384 = vdwg.mxu0
        %4385 = vmatpush.bf16.msra.mxu0 0
        %4386 = vmatpush.bf16.msra.mxu0 0
        %4387 = vmatpush.bf16.msra.mxu0 0
        %4388 = vmatpush.bf16.msra.mxu0 0
        %4389 = vmatpush.bf16.msra.mxu0 0
        %4390 = vmatpush.bf16.msra.mxu0 0
        %4391 = vmatpush.bf16.msra.mxu0 %v4282
        %4392 = vmatpush.bf16.msra.mxu0 %v4239
        %4393 = vmatmul.bf16.gmra.mxu0 %v4251
        %v4394 = vpop.f32.mrf.mxu0
        %v4395 = vadd.f32 %v4213, %v4394
        %v4396 = vpop.f32.mrf.mxu0
        %v4397 = vadd.f32 %v4213, %v4396
        %4398 = vmatmul.bf16.gmra.mxu0 %v4254
        %v4399 = vpop.f32.mrf.mxu0
        %v4400 = vadd.f32 %v4213, %v4399
        %v4401 = vpop.f32.mrf.mxu0
        %v4402 = vadd.f32 %v4213, %v4401
        %4403 = vmatmul.bf16.gmra.mxu0 %v4257
        %v4404 = vpop.f32.mrf.mxu0
        %v4405 = vadd.f32 %v4213, %v4404
        %v4406 = vpop.f32.mrf.mxu0
        %v4407 = vadd.f32 %v4213, %v4406
        %4408 = vmatmul.bf16.gmra.mxu0 %v4260
        %v4409 = vpop.f32.mrf.mxu0
        %v4410 = vadd.f32 %v4213, %v4409
        %v4411 = vpop.f32.mrf.mxu0
        %v4412 = vadd.f32 %v4213, %v4411
        %4413 = vmatmul.bf16.gmra.mxu0 %v4263
        %v4414 = vpop.f32.mrf.mxu0
        %v4415 = vadd.f32 %v4213, %v4414
        %v4416 = vpop.f32.mrf.mxu0
        %v4417 = vadd.f32 %v4213, %v4416
        %4418 = vmatmul.bf16.gmra.mxu0 %v4266
        %v4419 = vpop.f32.mrf.mxu0
        %v4420 = vadd.f32 %v4213, %v4419
        %v4421 = vpop.f32.mrf.mxu0
        %v4422 = vadd.f32 %v4213, %v4421
        %4423 = vmatmul.bf16.gmra.mxu0 %v4269
        %v4424 = vpop.f32.mrf.mxu0
        %v4425 = vadd.f32 %v4213, %v4424
        %v4426 = vpop.f32.mrf.mxu0
        %v4427 = vadd.f32 %v4213, %v4426
        %4428 = vmatmul.bf16.gmra.mxu0 %v4272
        %v4429 = vpop.f32.mrf.mxu0
        %v4430 = vadd.f32 %v4213, %v4429
        %v4431 = vpop.f32.mrf.mxu0
        %v4432 = vadd.f32 %v4213, %v4431
        %4433 = vdwg.mxu0
        %4434 = vmatpush.bf16.msra.mxu0 0
        %4435 = vmatpush.bf16.msra.mxu0 0
        %4436 = vmatpush.bf16.msra.mxu0 0
        %4437 = vmatpush.bf16.msra.mxu0 0
        %4438 = vmatpush.bf16.msra.mxu0 0
        %4439 = vmatpush.bf16.msra.mxu0 0
        %4440 = vmatpush.bf16.msra.mxu0 %v4285
        %4441 = vmatpush.bf16.msra.mxu0 %v4240
        %4442 = vmatmul.bf16.gmra.mxu0 %v4251
        %v4443 = vpop.f32.mrf.mxu0
        %v4444 = vadd.f32 %v4214, %v4443
        %v4445 = vpop.f32.mrf.mxu0
        %v4446 = vadd.f32 %v4214, %v4445
        %4447 = vmatmul.bf16.gmra.mxu0 %v4254
        %v4448 = vpop.f32.mrf.mxu0
        %v4449 = vadd.f32 %v4214, %v4448
        %v4450 = vpop.f32.mrf.mxu0
        %v4451 = vadd.f32 %v4214, %v4450
        %4452 = vmatmul.bf16.gmra.mxu0 %v4257
        %v4453 = vpop.f32.mrf.mxu0
        %v4454 = vadd.f32 %v4214, %v4453
        %v4455 = vpop.f32.mrf.mxu0
        %v4456 = vadd.f32 %v4214, %v4455
        %4457 = vmatmul.bf16.gmra.mxu0 %v4260
        %v4458 = vpop.f32.mrf.mxu0
        %v4459 = vadd.f32 %v4214, %v4458
        %v4460 = vpop.f32.mrf.mxu0
        %v4461 = vadd.f32 %v4214, %v4460
        %4462 = vmatmul.bf16.gmra.mxu0 %v4263
        %v4463 = vpop.f32.mrf.mxu0
        %v4464 = vadd.f32 %v4214, %v4463
        %v4465 = vpop.f32.mrf.mxu0
        %v4466 = vadd.f32 %v4214, %v4465
        %4467 = vmatmul.bf16.gmra.mxu0 %v4266
        %v4468 = vpop.f32.mrf.mxu0
        %v4469 = vadd.f32 %v4214, %v4468
        %v4470 = vpop.f32.mrf.mxu0
        %v4471 = vadd.f32 %v4214, %v4470
        %4472 = vmatmul.bf16.gmra.mxu0 %v4269
        %v4473 = vpop.f32.mrf.mxu0
        %v4474 = vadd.f32 %v4214, %v4473
        %v4475 = vpop.f32.mrf.mxu0
        %v4476 = vadd.f32 %v4214, %v4475
        %4477 = vmatmul.bf16.gmra.mxu0 %v4272
        %v4478 = vpop.f32.mrf.mxu0
        %v4479 = vadd.f32 %v4214, %v4478
        %v4480 = vpop.f32.mrf.mxu0
        %v4481 = vadd.f32 %v4214, %v4480
        %4482 = vdwg.mxu0
        %v4483 = vmax.f32 %v4297, 0.0
        %v4484 = vmax.f32 %v4346, 0.0
        %v4485 = vmax.f32 %v4395, 0.0
        %v4486 = vmax.f32 %v4444, 0.0
        %v4487 = vmax.f32 %v4299, 0.0
        %v4488 = vmax.f32 %v4348, 0.0
        %v4489 = vmax.f32 %v4397, 0.0
        %v4490 = vmax.f32 %v4446, 0.0
        %v4491 = vmax.f32 %v4302, 0.0
        %v4492 = vmax.f32 %v4351, 0.0
        %v4493 = vmax.f32 %v4400, 0.0
        %v4494 = vmax.f32 %v4449, 0.0
        %v4495 = vmax.f32 %v4304, 0.0
        %v4496 = vmax.f32 %v4353, 0.0
        %v4497 = vmax.f32 %v4402, 0.0
        %v4498 = vmax.f32 %v4451, 0.0
        %v4499 = vmax.f32 %v4307, 0.0
        %v4500 = vmax.f32 %v4356, 0.0
        %v4501 = vmax.f32 %v4405, 0.0
        %v4502 = vmax.f32 %v4454, 0.0
        %v4503 = vmax.f32 %v4309, 0.0
        %v4504 = vmax.f32 %v4358, 0.0
        %v4505 = vmax.f32 %v4407, 0.0
        %v4506 = vmax.f32 %v4456, 0.0
        %v4507 = vmax.f32 %v4312, 0.0
        %v4508 = vmax.f32 %v4361, 0.0
        %v4509 = vmax.f32 %v4410, 0.0
        %v4510 = vmax.f32 %v4459, 0.0
        %v4511 = vmax.f32 %v4314, 0.0
        %v4512 = vmax.f32 %v4363, 0.0
        %v4513 = vmax.f32 %v4412, 0.0
        %v4514 = vmax.f32 %v4461, 0.0
        %v4515 = vmax.f32 %v4317, 0.0
        %v4516 = vmax.f32 %v4366, 0.0
        %v4517 = vmax.f32 %v4415, 0.0
        %v4518 = vmax.f32 %v4464, 0.0
        %v4519 = vmax.f32 %v4319, 0.0
        %v4520 = vmax.f32 %v4368, 0.0
        %v4521 = vmax.f32 %v4417, 0.0
        %v4522 = vmax.f32 %v4466, 0.0
        %v4523 = vmax.f32 %v4322, 0.0
        %v4524 = vmax.f32 %v4371, 0.0
        %v4525 = vmax.f32 %v4420, 0.0
        %v4526 = vmax.f32 %v4469, 0.0
        %v4527 = vmax.f32 %v4324, 0.0
        %v4528 = vmax.f32 %v4373, 0.0
        %v4529 = vmax.f32 %v4422, 0.0
        %v4530 = vmax.f32 %v4471, 0.0
        %v4531 = vmax.f32 %v4327, 0.0
        %v4532 = vmax.f32 %v4376, 0.0
        %v4533 = vmax.f32 %v4425, 0.0
        %v4534 = vmax.f32 %v4474, 0.0
        %v4535 = vmax.f32 %v4329, 0.0
        %v4536 = vmax.f32 %v4378, 0.0
        %v4537 = vmax.f32 %v4427, 0.0
        %v4538 = vmax.f32 %v4476, 0.0
        %v4539 = vmax.f32 %v4332, 0.0
        %v4540 = vmax.f32 %v4381, 0.0
        %v4541 = vmax.f32 %v4430, 0.0
        %v4542 = vmax.f32 %v4479, 0.0
        %v4543 = vmax.f32 %v4334, 0.0
        %v4544 = vmax.f32 %v4383, 0.0
        %v4545 = vmax.f32 %v4432, 0.0
        %v4546 = vmax.f32 %v4481, 0.0
        %v4547 = vpack.c.bf16 %v4487, %v4483
        %v4548 = vpack.c.bf16 %v4488, %v4484
        %v4549 = vpack.c.bf16 %v4489, %v4485
        %v4550 = vpack.c.bf16 %v4490, %v4486
        %v4551 = vpack.c.bf16 %v4495, %v4491
        %v4552 = vpack.c.bf16 %v4496, %v4492
        %v4553 = vpack.c.bf16 %v4497, %v4493
        %v4554 = vpack.c.bf16 %v4498, %v4494
        %v4555 = vpack.c.bf16 %v4503, %v4499
        %v4556 = vpack.c.bf16 %v4504, %v4500
        %v4557 = vpack.c.bf16 %v4505, %v4501
        %v4558 = vpack.c.bf16 %v4506, %v4502
        %v4559 = vpack.c.bf16 %v4511, %v4507
        %v4560 = vpack.c.bf16 %v4512, %v4508
        %v4561 = vpack.c.bf16 %v4513, %v4509
        %v4562 = vpack.c.bf16 %v4514, %v4510
        %v4563 = vpack.c.bf16 %v4519, %v4515
        %v4564 = vpack.c.bf16 %v4520, %v4516
        %v4565 = vpack.c.bf16 %v4521, %v4517
        %v4566 = vpack.c.bf16 %v4522, %v4518
        %v4567 = vpack.c.bf16 %v4527, %v4523
        %v4568 = vpack.c.bf16 %v4528, %v4524
        %v4569 = vpack.c.bf16 %v4529, %v4525
        %v4570 = vpack.c.bf16 %v4530, %v4526
        %v4571 = vpack.c.bf16 %v4535, %v4531
        %v4572 = vpack.c.bf16 %v4536, %v4532
        %v4573 = vpack.c.bf16 %v4537, %v4533
        %v4574 = vpack.c.bf16 %v4538, %v4534
        %v4575 = vpack.c.bf16 %v4543, %v4539
        %v4576 = vpack.c.bf16 %v4544, %v4540
        %v4577 = vpack.c.bf16 %v4545, %v4541
        %v4578 = vpack.c.bf16 %v4546, %v4542
        %v4579 = vld [vmem:[%s5] sm:$0xff]
        %v4580 = vld [vmem:[%s5 + $0x8] sm:$0xff]
        %v4581 = vld [vmem:[%s5 + $0x10] sm:$0xff]
        %v4582 = vld [vmem:[%s5 + $0x18] sm:$0xf]
        %v4583 = vld [vmem:[%s5 + $0x1c] sm:$0xff]
        %v4584 = vld [vmem:[%s5 + $0x24] sm:$0xff]
        %v4585 = vld [vmem:[%s5 + $0x2c] sm:$0xff]
        %v4586 = vld [vmem:[%s5 + $0x34] sm:$0xf]
        %v4587 = vld [vmem:[%s5 + $0x38] sm:$0xff]
        %v4588 = vld [vmem:[%s5 + $0x40] sm:$0xff]
        %v4589 = vld [vmem:[%s5 + $0x48] sm:$0xff]
        %v4590 = vld [vmem:[%s5 + $0x50] sm:$0xf]
        %v4591 = vld [vmem:[%s5 + $0x54] sm:$0xff]
        %v4592 = vld [vmem:[%s5 + $0x5c] sm:$0xff]
        %v4593 = vld [vmem:[%s5 + $0x64] sm:$0xff]
        %v4594 = vld [vmem:[%s5 + $0x6c] sm:$0xf]
        %v4595 = vld [vmem:[%s5 + $0x70] sm:$0xff]
        %v4596 = vld [vmem:[%s5 + $0x78] sm:$0xff]
        %v4597 = vld [vmem:[%s5 + $0x80] sm:$0xff]
        %v4598 = vld [vmem:[%s5 + $0x88] sm:$0xf]
        %v4599 = vld [vmem:[%s5 + $0x8c] sm:$0xff]
        %v4600 = vld [vmem:[%s5 + $0x94] sm:$0xff]
        %v4601 = vld [vmem:[%s5 + $0x9c] sm:$0xff]
        %v4602 = vld [vmem:[%s5 + $0xa4] sm:$0xf]
        %v4603 = vld [vmem:[%s5 + $0xa8] sm:$0xff]
        %v4604 = vld [vmem:[%s5 + $0xb0] sm:$0xff]
        %v4605 = vld [vmem:[%s5 + $0xb8] sm:$0xff]
        %v4606 = vld [vmem:[%s5 + $0xc0] sm:$0xf]
        %v4607 = vld [vmem:[%s5 + $0xc4] sm:$0xff]
        %v4608 = vld [vmem:[%s5 + $0xcc] sm:$0xff]
        %v4609 = vld [vmem:[%s5 + $0xd4] sm:$0xff]
        %v4610 = vld [vmem:[%s5 + $0xdc] sm:$0xf]
        %v4611 = vld [vmem:[%s5 + $0xe0] sm:$0xff]
        %v4612 = vld [vmem:[%s5 + $0xe8] sm:$0xff]
        %v4613 = vld [vmem:[%s5 + $0xf0] sm:$0xff]
        %v4614 = vld [vmem:[%s5 + $0xf8] sm:$0xf]
        %v4615 = vld [vmem:[%s5 + $0xfc] sm:$0xff]
        %v4616 = vld [vmem:[%s5 + $0x104] sm:$0xff]
        %v4617 = vld [vmem:[%s5 + $0x10c] sm:$0xff]
        %v4618 = vld [vmem:[%s5 + $0x114] sm:$0xf]
        %v4619 = vld [vmem:[%s5 + $0x118] sm:$0xff]
        %v4620 = vld [vmem:[%s5 + $0x120] sm:$0xff]
        %v4621 = vld [vmem:[%s5 + $0x128] sm:$0xff]
        %v4622 = vld [vmem:[%s5 + $0x130] sm:$0xf]
        %v4623 = vld [vmem:[%s5 + $0x134] sm:$0xff]
        %v4624 = vld [vmem:[%s5 + $0x13c] sm:$0xff]
        %v4625 = vld [vmem:[%s5 + $0x144] sm:$0xff]
        %v4626 = vld [vmem:[%s5 + $0x14c] sm:$0xf]
        %v4627 = vld [vmem:[%s5 + $0x150] sm:$0xff]
        %v4628 = vld [vmem:[%s5 + $0x158] sm:$0xff]
        %v4629 = vld [vmem:[%s5 + $0x160] sm:$0xff]
        %v4630 = vld [vmem:[%s5 + $0x168] sm:$0xf]
        %v4631 = vld [vmem:[%s5 + $0x16c] sm:$0xff]
        %v4632 = vld [vmem:[%s5 + $0x174] sm:$0xff]
        %v4633 = vld [vmem:[%s5 + $0x17c] sm:$0xff]
        %v4634 = vld [vmem:[%s5 + $0x184] sm:$0xf]
        %v4635 = vld [vmem:[%s5 + $0x188] sm:$0xff]
        %v4636 = vld [vmem:[%s5 + $0x190] sm:$0xff]
        %v4637 = vld [vmem:[%s5 + $0x198] sm:$0xff]
        %v4638 = vld [vmem:[%s5 + $0x1a0] sm:$0xf]
        %v4639 = vld [vmem:[%s5 + $0x1a4] sm:$0xff]
        %v4640 = vld [vmem:[%s5 + $0x1ac] sm:$0xff]
        %v4641 = vld [vmem:[%s5 + $0x1b4] sm:$0xff]
        %v4642 = vld [vmem:[%s5 + $0x1bc] sm:$0xf]
        %v4643 = vld [vmem:[%s5 + $0x1c0] sm:$0xff]
        %v4644 = vld [vmem:[%s5 + $0x1c8] sm:$0xff]
        %v4645 = vld [vmem:[%s5 + $0x1d0] sm:$0xff]
        %v4646 = vld [vmem:[%s5 + $0x1d8] sm:$0xf]
        %v4647 = vld [vmem:[%s5 + $0x1dc] sm:$0xff]
        %v4648 = vld [vmem:[%s5 + $0x1e4] sm:$0xff]
        %v4649 = vld [vmem:[%s5 + $0x1ec] sm:$0xff]
        %v4650 = vld [vmem:[%s5 + $0x1f4] sm:$0xf]
        %v4651 = vld [vmem:[%s5 + $0x1f8] sm:$0xff]
        %v4652 = vld [vmem:[%s5 + $0x200] sm:$0xff]
        %v4653 = vld [vmem:[%s5 + $0x208] sm:$0xff]
        %v4654 = vld [vmem:[%s5 + $0x210] sm:$0xf]
        %v4655 = vld [vmem:[%s5 + $0x214] sm:$0xff]
        %v4656 = vld [vmem:[%s5 + $0x21c] sm:$0xff]
        %v4657 = vld [vmem:[%s5 + $0x224] sm:$0xff]
        %v4658 = vld [vmem:[%s5 + $0x22c] sm:$0xf]
        %v4659 = vld [vmem:[%s5 + $0x230] sm:$0xff]
        %v4660 = vld [vmem:[%s5 + $0x238] sm:$0xff]
        %v4661 = vld [vmem:[%s5 + $0x240] sm:$0xff]
        %v4662 = vld [vmem:[%s5 + $0x248] sm:$0xf]
        %v4663 = vld [vmem:[%s5 + $0x24c] sm:$0xff]
        %v4664 = vld [vmem:[%s5 + $0x254] sm:$0xff]
        %v4665 = vld [vmem:[%s5 + $0x25c] sm:$0xff]
        %v4666 = vld [vmem:[%s5 + $0x264] sm:$0xf]
        %v4667 = vld [vmem:[%s5 + $0x268] sm:$0xff]
        %v4668 = vld [vmem:[%s5 + $0x270] sm:$0xff]
        %v4669 = vld [vmem:[%s5 + $0x278] sm:$0xff]
        %v4670 = vld [vmem:[%s5 + $0x280] sm:$0xf]
        %v4671 = vld [vmem:[%s5 + $0x284] sm:$0xff]
        %v4672 = vld [vmem:[%s5 + $0x28c] sm:$0xff]
        %v4673 = vld [vmem:[%s5 + $0x294] sm:$0xff]
        %v4674 = vld [vmem:[%s5 + $0x29c] sm:$0xf]
        %v4675 = vld [vmem:[%s5 + $0x2a0] sm:$0xff]
        %v4676 = vld [vmem:[%s5 + $0x2a8] sm:$0xff]
        %v4677 = vld [vmem:[%s5 + $0x2b0] sm:$0xff]
        %v4678 = vld [vmem:[%s5 + $0x2b8] sm:$0xf]
        %v4679 = vld [vmem:[%s5 + $0x2bc] sm:$0xff]
        %v4680 = vld [vmem:[%s5 + $0x2c4] sm:$0xff]
        %v4681 = vld [vmem:[%s5 + $0x2cc] sm:$0xff]
        %v4682 = vld [vmem:[%s5 + $0x2d4] sm:$0xf]
        %v4683 = vld [vmem:[%s5 + $0x2d8] sm:$0xff]
        %v4684 = vld [vmem:[%s5 + $0x2e0] sm:$0xff]
        %v4685 = vld [vmem:[%s5 + $0x2e8] sm:$0xff]
        %v4686 = vld [vmem:[%s5 + $0x2f0] sm:$0xf]
        %v4687 = vld [vmem:[%s5 + $0x2f4] sm:$0xff]
        %v4688 = vld [vmem:[%s5 + $0x2fc] sm:$0xff]
        %v4689 = vld [vmem:[%s5 + $0x304] sm:$0xff]
        %v4690 = vld [vmem:[%s5 + $0x30c] sm:$0xf]
        %v4691 = vld [vmem:[%s5 + $0x310] sm:$0xff]
        %v4692 = vld [vmem:[%s5 + $0x318] sm:$0xff]
        %v4693 = vld [vmem:[%s5 + $0x320] sm:$0xff]
        %v4694 = vld [vmem:[%s5 + $0x328] sm:$0xf]
        %v4695 = vld [vmem:[%s5 + $0x32c] sm:$0xff]
        %v4696 = vld [vmem:[%s5 + $0x334] sm:$0xff]
        %v4697 = vld [vmem:[%s5 + $0x33c] sm:$0xff]
        %v4698 = vld [vmem:[%s5 + $0x344] sm:$0xf]
        %v4699 = vld [vmem:[%s5 + $0x348] sm:$0xff]
        %v4700 = vld [vmem:[%s5 + $0x350] sm:$0xff]
        %v4701 = vld [vmem:[%s5 + $0x358] sm:$0xff]
        %v4702 = vld [vmem:[%s5 + $0x360] sm:$0xf]
        %v4703 = vld [vmem:[%s5 + $0x364] sm:$0xff]
        %v4704 = vld [vmem:[%s5 + $0x36c] sm:$0xff]
        %v4705 = vld [vmem:[%s5 + $0x374] sm:$0xff]
        %v4706 = vld [vmem:[%s5 + $0x37c] sm:$0xf]
        %v4707 = vld [vmem:[%s5 + $0x380] sm:$0xff]
        %v4708 = vld [vmem:[%s5 + $0x388] sm:$0xff]
        %v4709 = vld [vmem:[%s5 + $0x390] sm:$0xff]
        %v4710 = vld [vmem:[%s5 + $0x398] sm:$0xf]
        %v4711 = vld [vmem:[%s5 + $0x39c] sm:$0xff]
        %v4712 = vld [vmem:[%s5 + $0x3a4] sm:$0xff]
        %v4713 = vld [vmem:[%s5 + $0x3ac] sm:$0xff]
        %v4714 = vld [vmem:[%s5 + $0x3b4] sm:$0xf]
        %v4715 = vld [vmem:[%s5 + $0x3b8] sm:$0xff]
        %v4716 = vld [vmem:[%s5 + $0x3c0] sm:$0xff]
        %v4717 = vld [vmem:[%s5 + $0x3c8] sm:$0xff]
        %v4718 = vld [vmem:[%s5 + $0x3d0] sm:$0xf]
        %v4719 = vld [vmem:[%s5 + $0x3d4] sm:$0xff]
        %v4720 = vld [vmem:[%s5 + $0x3dc] sm:$0xff]
        %v4721 = vld [vmem:[%s5 + $0x3e4] sm:$0xff]
        %v4722 = vld [vmem:[%s5 + $0x3ec] sm:$0xf]
        %v4723 = vld [vmem:[%s5 + $0x3f0] sm:$0xff]
        %v4724 = vld [vmem:[%s5 + $0x3f8] sm:$0xff]
        %v4725 = vld [vmem:[%s5 + $0x400] sm:$0xff]
        %v4726 = vld [vmem:[%s5 + $0x408] sm:$0xf]
        %v4727 = vld [vmem:[%s5 + $0x40c] sm:$0xff]
        %v4728 = vld [vmem:[%s5 + $0x414] sm:$0xff]
        %v4729 = vld [vmem:[%s5 + $0x41c] sm:$0xff]
        %v4730 = vld [vmem:[%s5 + $0x424] sm:$0xf]
        %v4731 = vld [vmem:[%s5 + $0x428] sm:$0xff]
        %v4732 = vld [vmem:[%s5 + $0x430] sm:$0xff]
        %v4733 = vld [vmem:[%s5 + $0x438] sm:$0xff]
        %v4734 = vld [vmem:[%s5 + $0x440] sm:$0xf]
        %v4735 = vld [vmem:[%s5 + $0x444] sm:$0xff]
        %v4736 = vld [vmem:[%s5 + $0x44c] sm:$0xff]
        %v4737 = vld [vmem:[%s5 + $0x454] sm:$0xff]
        %v4738 = vld [vmem:[%s5 + $0x45c] sm:$0xf]
        %v4739 = vld [vmem:[%s5 + $0x460] sm:$0xff]
        %v4740 = vld [vmem:[%s5 + $0x468] sm:$0xff]
        %v4741 = vld [vmem:[%s5 + $0x470] sm:$0xff]
        %v4742 = vld [vmem:[%s5 + $0x478] sm:$0xf]
        %v4743 = vld [vmem:[%s5 + $0x47c] sm:$0xff]
        %v4744 = vld [vmem:[%s5 + $0x484] sm:$0xff]
        %v4745 = vld [vmem:[%s5 + $0x48c] sm:$0xff]
        %v4746 = vld [vmem:[%s5 + $0x494] sm:$0xf]
        %v4747 = vld [vmem:[%s5 + $0x498] sm:$0xff]
        %v4748 = vld [vmem:[%s5 + $0x4a0] sm:$0xff]
        %v4749 = vld [vmem:[%s5 + $0x4a8] sm:$0xff]
        %v4750 = vld [vmem:[%s5 + $0x4b0] sm:$0xf]
        %v4751 = vld [vmem:[%s5 + $0x4b4] sm:$0xff]
        %v4752 = vld [vmem:[%s5 + $0x4bc] sm:$0xff]
        %v4753 = vld [vmem:[%s5 + $0x4c4] sm:$0xff]
        %v4754 = vld [vmem:[%s5 + $0x4cc] sm:$0xf]
        %v4755 = vld [vmem:[%s5 + $0x4d0] sm:$0xff]
        %v4756 = vld [vmem:[%s5 + $0x4d8] sm:$0xff]
        %v4757 = vld [vmem:[%s5 + $0x4e0] sm:$0xff]
        %v4758 = vld [vmem:[%s5 + $0x4e8] sm:$0xf]
        %v4759 = vld [vmem:[%s5 + $0x4ec] sm:$0xff]
        %v4760 = vld [vmem:[%s5 + $0x4f4] sm:$0xff]
        %v4761 = vld [vmem:[%s5 + $0x4fc] sm:$0xff]
        %v4762 = vld [vmem:[%s5 + $0x504] sm:$0xf]
        %v4763 = vld [vmem:[%s5 + $0x508] sm:$0xff]
        %v4764 = vld [vmem:[%s5 + $0x510] sm:$0xff]
        %v4765 = vld [vmem:[%s5 + $0x518] sm:$0xff]
        %v4766 = vld [vmem:[%s5 + $0x520] sm:$0xf]
        %v4767 = vld [vmem:[%s5 + $0x524] sm:$0xff]
        %v4768 = vld [vmem:[%s5 + $0x52c] sm:$0xff]
        %v4769 = vld [vmem:[%s5 + $0x534] sm:$0xff]
        %v4770 = vld [vmem:[%s5 + $0x53c] sm:$0xf]
        %v4771 = vld [vmem:[%s5 + $0x540] sm:$0xff]
        %v4772 = vld [vmem:[%s5 + $0x548] sm:$0xff]
        %v4773 = vld [vmem:[%s5 + $0x550] sm:$0xff]
        %v4774 = vld [vmem:[%s5 + $0x558] sm:$0xf]
        %v4775 = vld [vmem:[%s5 + $0x55c] sm:$0xff]
        %v4776 = vld [vmem:[%s5 + $0x564] sm:$0xff]
        %v4777 = vld [vmem:[%s5 + $0x56c] sm:$0xff]
        %v4778 = vld [vmem:[%s5 + $0x574] sm:$0xf]
        %v4779 = vld [vmem:[%s5 + $0x578] sm:$0xff]
        %v4780 = vld [vmem:[%s5 + $0x580] sm:$0xff]
        %v4781 = vld [vmem:[%s5 + $0x588] sm:$0xff]
        %v4782 = vld [vmem:[%s5 + $0x590] sm:$0xf]
        %v4783 = vld [vmem:[%s5 + $0x594] sm:$0xff]
        %v4784 = vld [vmem:[%s5 + $0x59c] sm:$0xff]
        %v4785 = vld [vmem:[%s5 + $0x5a4] sm:$0xff]
        %v4786 = vld [vmem:[%s5 + $0x5ac] sm:$0xf]
        %v4787 = vld [vmem:[%s5 + $0x5b0] sm:$0xff]
        %v4788 = vld [vmem:[%s5 + $0x5b8] sm:$0xff]
        %v4789 = vld [vmem:[%s5 + $0x5c0] sm:$0xff]
        %v4790 = vld [vmem:[%s5 + $0x5c8] sm:$0xf]
        %v4791 = vld [vmem:[%s5 + $0x5cc] sm:$0xff]
        %v4792 = vld [vmem:[%s5 + $0x5d4] sm:$0xff]
        %v4793 = vld [vmem:[%s5 + $0x5dc] sm:$0xff]
        %v4794 = vld [vmem:[%s5 + $0x5e4] sm:$0xf]
        %v4795 = vld [vmem:[%s5 + $0x5e8] sm:$0xff]
        %v4796 = vld [vmem:[%s5 + $0x5f0] sm:$0xff]
        %v4797 = vld [vmem:[%s5 + $0x5f8] sm:$0xff]
        %v4798 = vld [vmem:[%s5 + $0x600] sm:$0xf]
        %v4799 = vld [vmem:[%s5 + $0x604] sm:$0xff]
        %v4800 = vld [vmem:[%s5 + $0x60c] sm:$0xff]
        %v4801 = vld [vmem:[%s5 + $0x614] sm:$0xff]
        %v4802 = vld [vmem:[%s5 + $0x61c] sm:$0xf]
        %v4803 = vld [vmem:[%s5 + $0x620] sm:$0xff]
        %v4804 = vld [vmem:[%s5 + $0x628] sm:$0xff]
        %v4805 = vld [vmem:[%s5 + $0x630] sm:$0xff]
        %v4806 = vld [vmem:[%s5 + $0x638] sm:$0xf]
        %v4807 = vld [vmem:[%s5 + $0x63c] sm:$0xff]
        %v4808 = vld [vmem:[%s5 + $0x644] sm:$0xff]
        %v4809 = vld [vmem:[%s5 + $0x64c] sm:$0xff]
        %v4810 = vld [vmem:[%s5 + $0x654] sm:$0xf]
        %v4811 = vld [vmem:[%s5 + $0x658] sm:$0xff]
        %v4812 = vld [vmem:[%s5 + $0x660] sm:$0xff]
        %v4813 = vld [vmem:[%s5 + $0x668] sm:$0xff]
        %v4814 = vld [vmem:[%s5 + $0x670] sm:$0xf]
        %v4815 = vld [vmem:[%s5 + $0x674] sm:$0xff]
        %v4816 = vld [vmem:[%s5 + $0x67c] sm:$0xff]
        %v4817 = vld [vmem:[%s5 + $0x684] sm:$0xff]
        %v4818 = vld [vmem:[%s5 + $0x68c] sm:$0xf]
        %v4819 = vld [vmem:[%s5 + $0x690] sm:$0xff]
        %v4820 = vld [vmem:[%s5 + $0x698] sm:$0xff]
        %v4821 = vld [vmem:[%s5 + $0x6a0] sm:$0xff]
        %v4822 = vld [vmem:[%s5 + $0x6a8] sm:$0xf]
        %v4823 = vld [vmem:[%s5 + $0x6ac] sm:$0xff]
        %v4824 = vld [vmem:[%s5 + $0x6b4] sm:$0xff]
        %v4825 = vld [vmem:[%s5 + $0x6bc] sm:$0xff]
        %v4826 = vld [vmem:[%s5 + $0x6c4] sm:$0xf]
        %v4827 = vld [vmem:[%s5 + $0x6c8] sm:$0xff]
        %v4828 = vld [vmem:[%s5 + $0x6d0] sm:$0xff]
        %v4829 = vld [vmem:[%s5 + $0x6d8] sm:$0xff]
        %v4830 = vld [vmem:[%s5 + $0x6e0] sm:$0xf]
        %v4831 = vld [vmem:[%s5 + $0x6e4] sm:$0xff]
        %v4832 = vld [vmem:[%s5 + $0x6ec] sm:$0xff]
        %v4833 = vld [vmem:[%s5 + $0x6f4] sm:$0xff]
        %v4834 = vld [vmem:[%s5 + $0x6fc] sm:$0xf]
        %v4835 = vld [vmem:[%s6 + $0xa] sm:$0xff]
        %v4837 = vperm.slane %v4835, 0
        %v4838 = vperm.slane %v4835, 1
        %v4839 = vperm.slane %v4835, 2
        %v4840 = vperm.slane %v4835, 3
        %v4841 = vperm.slane %v4835, 4
        %v4842 = vperm.slane %v4835, 5
        %v4843 = vperm.slane %v4835, 6
        %v5107 = vunpack.c.l.b16 %v4579
        %v5108 = vunpack.c.h.b16 %v4579
        %v5109 = vunpack.c.l.b16 %v4580
        %v5110 = vunpack.c.h.b16 %v4580
        %v5111 = vunpack.c.l.b16 %v4581
        %v5112 = vunpack.c.h.b16 %v4581
        %v5113 = vunpack.c.l.b16 %v4582
        %v5114 = vunpack.c.l.b16 %v4583
        %v5115 = vunpack.c.h.b16 %v4583
        %v5116 = vunpack.c.l.b16 %v4584
        %v5117 = vunpack.c.h.b16 %v4584
        %v5118 = vunpack.c.l.b16 %v4585
        %v5119 = vunpack.c.h.b16 %v4585
        %v5120 = vunpack.c.l.b16 %v4586
        %v5121 = vunpack.c.l.b16 %v4587
        %v5122 = vunpack.c.h.b16 %v4587
        %v5123 = vunpack.c.l.b16 %v4588
        %v5124 = vunpack.c.h.b16 %v4588
        %v5125 = vunpack.c.l.b16 %v4589
        %v5126 = vunpack.c.h.b16 %v4589
        %v5127 = vunpack.c.l.b16 %v4590
        %v5128 = vunpack.c.l.b16 %v4591
        %v5129 = vunpack.c.h.b16 %v4591
        %v5130 = vunpack.c.l.b16 %v4592
        %v5131 = vunpack.c.h.b16 %v4592
        %v5132 = vunpack.c.l.b16 %v4593
        %v5133 = vunpack.c.h.b16 %v4593
        %v5134 = vunpack.c.l.b16 %v4594
        %v5135 = vunpack.c.l.b16 %v4595
        %v5136 = vunpack.c.h.b16 %v4595
        %v5137 = vunpack.c.l.b16 %v4596
        %v5138 = vunpack.c.h.b16 %v4596
        %v5139 = vunpack.c.l.b16 %v4597
        %v5140 = vunpack.c.h.b16 %v4597
        %v5141 = vunpack.c.l.b16 %v4598
        %v5142 = vunpack.c.l.b16 %v4599
        %v5143 = vunpack.c.h.b16 %v4599
        %v5144 = vunpack.c.l.b16 %v4600
        %v5145 = vunpack.c.h.b16 %v4600
        %v5146 = vunpack.c.l.b16 %v4601
        %v5147 = vunpack.c.h.b16 %v4601
        %v5148 = vunpack.c.l.b16 %v4602
        %v5149 = vunpack.c.l.b16 %v4603
        %v5150 = vunpack.c.h.b16 %v4603
        %v5151 = vunpack.c.l.b16 %v4604
        %v5152 = vunpack.c.h.b16 %v4604
        %v5153 = vunpack.c.l.b16 %v4605
        %v5154 = vunpack.c.h.b16 %v4605
        %v5155 = vunpack.c.l.b16 %v4606
        %v5156 = vunpack.c.l.b16 %v4607
        %v5157 = vunpack.c.h.b16 %v4607
        %v5158 = vunpack.c.l.b16 %v4608
        %v5159 = vunpack.c.h.b16 %v4608
        %v5160 = vunpack.c.l.b16 %v4609
        %v5161 = vunpack.c.h.b16 %v4609
        %v5162 = vunpack.c.l.b16 %v4610
        %v5163 = vunpack.c.l.b16 %v4611
        %v5164 = vunpack.c.h.b16 %v4611
        %v5165 = vunpack.c.l.b16 %v4612
        %v5166 = vunpack.c.h.b16 %v4612
        %v5167 = vunpack.c.l.b16 %v4613
        %v5168 = vunpack.c.h.b16 %v4613
        %v5169 = vunpack.c.l.b16 %v4614
        %v5170 = vunpack.c.l.b16 %v4615
        %v5171 = vunpack.c.h.b16 %v4615
        %v5172 = vunpack.c.l.b16 %v4616
        %v5173 = vunpack.c.h.b16 %v4616
        %v5174 = vunpack.c.l.b16 %v4617
        %v5175 = vunpack.c.h.b16 %v4617
        %v5176 = vunpack.c.l.b16 %v4618
        %v5177 = vunpack.c.l.b16 %v4619
        %v5178 = vunpack.c.h.b16 %v4619
        %v5179 = vunpack.c.l.b16 %v4620
        %v5180 = vunpack.c.h.b16 %v4620
        %v5181 = vunpack.c.l.b16 %v4621
        %v5182 = vunpack.c.h.b16 %v4621
        %v5183 = vunpack.c.l.b16 %v4622
        %v5184 = vunpack.c.l.b16 %v4623
        %v5185 = vunpack.c.h.b16 %v4623
        %v5186 = vunpack.c.l.b16 %v4624
        %v5187 = vunpack.c.h.b16 %v4624
        %v5188 = vunpack.c.l.b16 %v4625
        %v5189 = vunpack.c.h.b16 %v4625
        %v5190 = vunpack.c.l.b16 %v4626
        %v5191 = vunpack.c.l.b16 %v4627
        %v5192 = vunpack.c.h.b16 %v4627
        %v5193 = vunpack.c.l.b16 %v4628
        %v5194 = vunpack.c.h.b16 %v4628
        %v5195 = vunpack.c.l.b16 %v4629
        %v5196 = vunpack.c.h.b16 %v4629
        %v5197 = vunpack.c.l.b16 %v4630
        %v5198 = vunpack.c.l.b16 %v4631
        %v5199 = vunpack.c.h.b16 %v4631
        %v5200 = vunpack.c.l.b16 %v4632
        %v5201 = vunpack.c.h.b16 %v4632
        %v5202 = vunpack.c.l.b16 %v4633
        %v5203 = vunpack.c.h.b16 %v4633
        %v5204 = vunpack.c.l.b16 %v4634
        %v5205 = vunpack.c.l.b16 %v4635
        %v5206 = vunpack.c.h.b16 %v4635
        %v5207 = vunpack.c.l.b16 %v4636
        %v5208 = vunpack.c.h.b16 %v4636
        %v5209 = vunpack.c.l.b16 %v4637
        %v5210 = vunpack.c.h.b16 %v4637
        %v5211 = vunpack.c.l.b16 %v4638
        %v5212 = vunpack.c.l.b16 %v4639
        %v5213 = vunpack.c.h.b16 %v4639
        %v5214 = vunpack.c.l.b16 %v4640
        %v5215 = vunpack.c.h.b16 %v4640
        %v5216 = vunpack.c.l.b16 %v4641
        %v5217 = vunpack.c.h.b16 %v4641
        %v5218 = vunpack.c.l.b16 %v4642
        %v5219 = vunpack.c.l.b16 %v4643
        %v5220 = vunpack.c.h.b16 %v4643
        %v5221 = vunpack.c.l.b16 %v4644
        %v5222 = vunpack.c.h.b16 %v4644
        %v5223 = vunpack.c.l.b16 %v4645
        %v5224 = vunpack.c.h.b16 %v4645
        %v5225 = vunpack.c.l.b16 %v4646
        %v5226 = vunpack.c.l.b16 %v4647
        %v5227 = vunpack.c.h.b16 %v4647
        %v5228 = vunpack.c.l.b16 %v4648
        %v5229 = vunpack.c.h.b16 %v4648
        %v5230 = vunpack.c.l.b16 %v4649
        %v5231 = vunpack.c.h.b16 %v4649
        %v5232 = vunpack.c.l.b16 %v4650
        %v5233 = vunpack.c.l.b16 %v4651
        %v5234 = vunpack.c.h.b16 %v4651
        %v5235 = vunpack.c.l.b16 %v4652
        %v5236 = vunpack.c.h.b16 %v4652
        %v5237 = vunpack.c.l.b16 %v4653
        %v5238 = vunpack.c.h.b16 %v4653
        %v5239 = vunpack.c.l.b16 %v4654
        %v5240 = vunpack.c.l.b16 %v4655
        %v5241 = vunpack.c.h.b16 %v4655
        %v5242 = vunpack.c.l.b16 %v4656
        %v5243 = vunpack.c.h.b16 %v4656
        %v5244 = vunpack.c.l.b16 %v4657
        %v5245 = vunpack.c.h.b16 %v4657
        %v5246 = vunpack.c.l.b16 %v4658
        %v5247 = vunpack.c.l.b16 %v4659
        %v5248 = vunpack.c.h.b16 %v4659
        %v5249 = vunpack.c.l.b16 %v4660
        %v5250 = vunpack.c.h.b16 %v4660
        %v5251 = vunpack.c.l.b16 %v4661
        %v5252 = vunpack.c.h.b16 %v4661
        %v5253 = vunpack.c.l.b16 %v4662
        %v5254 = vunpack.c.l.b16 %v4663
        %v5255 = vunpack.c.h.b16 %v4663
        %v5256 = vunpack.c.l.b16 %v4664
        %v5257 = vunpack.c.h.b16 %v4664
        %v5258 = vunpack.c.l.b16 %v4665
        %v5259 = vunpack.c.h.b16 %v4665
        %v5260 = vunpack.c.l.b16 %v4666
        %v5261 = vunpack.c.l.b16 %v4667
        %v5262 = vunpack.c.h.b16 %v4667
        %v5263 = vunpack.c.l.b16 %v4668
        %v5264 = vunpack.c.h.b16 %v4668
        %v5265 = vunpack.c.l.b16 %v4669
        %v5266 = vunpack.c.h.b16 %v4669
        %v5267 = vunpack.c.l.b16 %v4670
        %v5268 = vunpack.c.l.b16 %v4671
        %v5269 = vunpack.c.h.b16 %v4671
        %v5270 = vunpack.c.l.b16 %v4672
        %v5271 = vunpack.c.h.b16 %v4672
        %v5272 = vunpack.c.l.b16 %v4673
        %v5273 = vunpack.c.h.b16 %v4673
        %v5274 = vunpack.c.l.b16 %v4674
        %v5275 = vunpack.c.l.b16 %v4675
        %v5276 = vunpack.c.h.b16 %v4675
        %v5277 = vunpack.c.l.b16 %v4676
        %v5278 = vunpack.c.h.b16 %v4676
        %v5279 = vunpack.c.l.b16 %v4677
        %v5280 = vunpack.c.h.b16 %v4677
        %v5281 = vunpack.c.l.b16 %v4678
        %v5282 = vunpack.c.l.b16 %v4679
        %v5283 = vunpack.c.h.b16 %v4679
        %v5284 = vunpack.c.l.b16 %v4680
        %v5285 = vunpack.c.h.b16 %v4680
        %v5286 = vunpack.c.l.b16 %v4681
        %v5287 = vunpack.c.h.b16 %v4681
        %v5288 = vunpack.c.l.b16 %v4682
        %v5289 = vunpack.c.l.b16 %v4683
        %v5290 = vunpack.c.h.b16 %v4683
        %v5291 = vunpack.c.l.b16 %v4684
        %v5292 = vunpack.c.h.b16 %v4684
        %v5293 = vunpack.c.l.b16 %v4685
        %v5294 = vunpack.c.h.b16 %v4685
        %v5295 = vunpack.c.l.b16 %v4686
        %v5296 = vunpack.c.l.b16 %v4687
        %v5297 = vunpack.c.h.b16 %v4687
        %v5298 = vunpack.c.l.b16 %v4688
        %v5299 = vunpack.c.h.b16 %v4688
        %v5300 = vunpack.c.l.b16 %v4689
        %v5301 = vunpack.c.h.b16 %v4689
        %v5302 = vunpack.c.l.b16 %v4690
        %v5303 = vunpack.c.l.b16 %v4691
        %v5304 = vunpack.c.h.b16 %v4691
        %v5305 = vunpack.c.l.b16 %v4692
        %v5306 = vunpack.c.h.b16 %v4692
        %v5307 = vunpack.c.l.b16 %v4693
        %v5308 = vunpack.c.h.b16 %v4693
        %v5309 = vunpack.c.l.b16 %v4694
        %v5310 = vunpack.c.l.b16 %v4695
        %v5311 = vunpack.c.h.b16 %v4695
        %v5312 = vunpack.c.l.b16 %v4696
        %v5313 = vunpack.c.h.b16 %v4696
        %v5314 = vunpack.c.l.b16 %v4697
        %v5315 = vunpack.c.h.b16 %v4697
        %v5316 = vunpack.c.l.b16 %v4698
        %v5317 = vunpack.c.l.b16 %v4699
        %v5318 = vunpack.c.h.b16 %v4699
        %v5319 = vunpack.c.l.b16 %v4700
        %v5320 = vunpack.c.h.b16 %v4700
        %v5321 = vunpack.c.l.b16 %v4701
        %v5322 = vunpack.c.h.b16 %v4701
        %v5323 = vunpack.c.l.b16 %v4702
        %v5324 = vunpack.c.l.b16 %v4703
        %v5325 = vunpack.c.h.b16 %v4703
        %v5326 = vunpack.c.l.b16 %v4704
        %v5327 = vunpack.c.h.b16 %v4704
        %v5328 = vunpack.c.l.b16 %v4705
        %v5329 = vunpack.c.h.b16 %v4705
        %v5330 = vunpack.c.l.b16 %v4706
        %v5331 = vunpack.c.l.b16 %v4707
        %v5332 = vunpack.c.h.b16 %v4707
        %v5333 = vunpack.c.l.b16 %v4708
        %v5334 = vunpack.c.h.b16 %v4708
        %v5335 = vunpack.c.l.b16 %v4709
        %v5336 = vunpack.c.h.b16 %v4709
        %v5337 = vunpack.c.l.b16 %v4710
        %v5338 = vunpack.c.l.b16 %v4711
        %v5339 = vunpack.c.h.b16 %v4711
        %v5340 = vunpack.c.l.b16 %v4712
        %v5341 = vunpack.c.h.b16 %v4712
        %v5342 = vunpack.c.l.b16 %v4713
        %v5343 = vunpack.c.h.b16 %v4713
        %v5344 = vunpack.c.l.b16 %v4714
        %v5345 = vunpack.c.l.b16 %v4715
        %v5346 = vunpack.c.h.b16 %v4715
        %v5347 = vunpack.c.l.b16 %v4716
        %v5348 = vunpack.c.h.b16 %v4716
        %v5349 = vunpack.c.l.b16 %v4717
        %v5350 = vunpack.c.h.b16 %v4717
        %v5351 = vunpack.c.l.b16 %v4718
        %v5352 = vunpack.c.l.b16 %v4719
        %v5353 = vunpack.c.h.b16 %v4719
        %v5354 = vunpack.c.l.b16 %v4720
        %v5355 = vunpack.c.h.b16 %v4720
        %v5356 = vunpack.c.l.b16 %v4721
        %v5357 = vunpack.c.h.b16 %v4721
        %v5358 = vunpack.c.l.b16 %v4722
        %v5359 = vunpack.c.l.b16 %v4723
        %v5360 = vunpack.c.h.b16 %v4723
        %v5361 = vunpack.c.l.b16 %v4724
        %v5362 = vunpack.c.h.b16 %v4724
        %v5363 = vunpack.c.l.b16 %v4725
        %v5364 = vunpack.c.h.b16 %v4725
        %v5365 = vunpack.c.l.b16 %v4726
        %v5366 = vunpack.c.l.b16 %v4727
        %v5367 = vunpack.c.h.b16 %v4727
        %v5368 = vunpack.c.l.b16 %v4728
        %v5369 = vunpack.c.h.b16 %v4728
        %v5370 = vunpack.c.l.b16 %v4729
        %v5371 = vunpack.c.h.b16 %v4729
        %v5372 = vunpack.c.l.b16 %v4730
        %v5373 = vunpack.c.l.b16 %v4731
        %v5374 = vunpack.c.h.b16 %v4731
        %v5375 = vunpack.c.l.b16 %v4732
        %v5376 = vunpack.c.h.b16 %v4732
        %v5377 = vunpack.c.l.b16 %v4733
        %v5378 = vunpack.c.h.b16 %v4733
        %v5379 = vunpack.c.l.b16 %v4734
        %v5380 = vunpack.c.l.b16 %v4735
        %v5381 = vunpack.c.h.b16 %v4735
        %v5382 = vunpack.c.l.b16 %v4736
        %v5383 = vunpack.c.h.b16 %v4736
        %v5384 = vunpack.c.l.b16 %v4737
        %v5385 = vunpack.c.h.b16 %v4737
        %v5386 = vunpack.c.l.b16 %v4738
        %v5387 = vunpack.c.l.b16 %v4739
        %v5388 = vunpack.c.h.b16 %v4739
        %v5389 = vunpack.c.l.b16 %v4740
        %v5390 = vunpack.c.h.b16 %v4740
        %v5391 = vunpack.c.l.b16 %v4741
        %v5392 = vunpack.c.h.b16 %v4741
        %v5393 = vunpack.c.l.b16 %v4742
        %v5394 = vunpack.c.l.b16 %v4743
        %v5395 = vunpack.c.h.b16 %v4743
        %v5396 = vunpack.c.l.b16 %v4744
        %v5397 = vunpack.c.h.b16 %v4744
        %v5398 = vunpack.c.l.b16 %v4745
        %v5399 = vunpack.c.h.b16 %v4745
        %v5400 = vunpack.c.l.b16 %v4746
        %v5401 = vunpack.c.l.b16 %v4747
        %v5402 = vunpack.c.h.b16 %v4747
        %v5403 = vunpack.c.l.b16 %v4748
        %v5404 = vunpack.c.h.b16 %v4748
        %v5405 = vunpack.c.l.b16 %v4749
        %v5406 = vunpack.c.h.b16 %v4749
        %v5407 = vunpack.c.l.b16 %v4750
        %v5408 = vunpack.c.l.b16 %v4751
        %v5409 = vunpack.c.h.b16 %v4751
        %v5410 = vunpack.c.l.b16 %v4752
        %v5411 = vunpack.c.h.b16 %v4752
        %v5412 = vunpack.c.l.b16 %v4753
        %v5413 = vunpack.c.h.b16 %v4753
        %v5414 = vunpack.c.l.b16 %v4754
        %v5415 = vunpack.c.l.b16 %v4755
        %v5416 = vunpack.c.h.b16 %v4755
        %v5417 = vunpack.c.l.b16 %v4756
        %v5418 = vunpack.c.h.b16 %v4756
        %v5419 = vunpack.c.l.b16 %v4757
        %v5420 = vunpack.c.h.b16 %v4757
        %v5421 = vunpack.c.l.b16 %v4758
        %v5422 = vunpack.c.l.b16 %v4759
        %v5423 = vunpack.c.h.b16 %v4759
        %v5424 = vunpack.c.l.b16 %v4760
        %v5425 = vunpack.c.h.b16 %v4760
        %v5426 = vunpack.c.l.b16 %v4761
        %v5427 = vunpack.c.h.b16 %v4761
        %v5428 = vunpack.c.l.b16 %v4762
        %v5429 = vunpack.c.l.b16 %v4763
        %v5430 = vunpack.c.h.b16 %v4763
        %v5431 = vunpack.c.l.b16 %v4764
        %v5432 = vunpack.c.h.b16 %v4764
        %v5433 = vunpack.c.l.b16 %v4765
        %v5434 = vunpack.c.h.b16 %v4765
        %v5435 = vunpack.c.l.b16 %v4766
        %v5436 = vunpack.c.l.b16 %v4767
        %v5437 = vunpack.c.h.b16 %v4767
        %v5438 = vunpack.c.l.b16 %v4768
        %v5439 = vunpack.c.h.b16 %v4768
        %v5440 = vunpack.c.l.b16 %v4769
        %v5441 = vunpack.c.h.b16 %v4769
        %v5442 = vunpack.c.l.b16 %v4770
        %v5443 = vunpack.c.l.b16 %v4771
        %v5444 = vunpack.c.h.b16 %v4771
        %v5445 = vunpack.c.l.b16 %v4772
        %v5446 = vunpack.c.h.b16 %v4772
        %v5447 = vunpack.c.l.b16 %v4773
        %v5448 = vunpack.c.h.b16 %v4773
        %v5449 = vunpack.c.l.b16 %v4774
        %v5450 = vunpack.c.l.b16 %v4775
        %v5451 = vunpack.c.h.b16 %v4775
        %v5452 = vunpack.c.l.b16 %v4776
        %v5453 = vunpack.c.h.b16 %v4776
        %v5454 = vunpack.c.l.b16 %v4777
        %v5455 = vunpack.c.h.b16 %v4777
        %v5456 = vunpack.c.l.b16 %v4778
        %v5457 = vunpack.c.l.b16 %v4779
        %v5458 = vunpack.c.h.b16 %v4779
        %v5459 = vunpack.c.l.b16 %v4780
        %v5460 = vunpack.c.h.b16 %v4780
        %v5461 = vunpack.c.l.b16 %v4781
        %v5462 = vunpack.c.h.b16 %v4781
        %v5463 = vunpack.c.l.b16 %v4782
        %v5464 = vunpack.c.l.b16 %v4783
        %v5465 = vunpack.c.h.b16 %v4783
        %v5466 = vunpack.c.l.b16 %v4784
        %v5467 = vunpack.c.h.b16 %v4784
        %v5468 = vunpack.c.l.b16 %v4785
        %v5469 = vunpack.c.h.b16 %v4785
        %v5470 = vunpack.c.l.b16 %v4786
        %v5471 = vunpack.c.l.b16 %v4787
        %v5472 = vunpack.c.h.b16 %v4787
        %v5473 = vunpack.c.l.b16 %v4788
        %v5474 = vunpack.c.h.b16 %v4788
        %v5475 = vunpack.c.l.b16 %v4789
        %v5476 = vunpack.c.h.b16 %v4789
        %v5477 = vunpack.c.l.b16 %v4790
        %v5478 = vunpack.c.l.b16 %v4791
        %v5479 = vunpack.c.h.b16 %v4791
        %v5480 = vunpack.c.l.b16 %v4792
        %v5481 = vunpack.c.h.b16 %v4792
        %v5482 = vunpack.c.l.b16 %v4793
        %v5483 = vunpack.c.h.b16 %v4793
        %v5484 = vunpack.c.l.b16 %v4794
        %v5485 = vunpack.c.l.b16 %v4795
        %v5486 = vunpack.c.h.b16 %v4795
        %v5487 = vunpack.c.l.b16 %v4796
        %v5488 = vunpack.c.h.b16 %v4796
        %v5489 = vunpack.c.l.b16 %v4797
        %v5490 = vunpack.c.h.b16 %v4797
        %v5491 = vunpack.c.l.b16 %v4798
        %v5492 = vunpack.c.l.b16 %v4799
        %v5493 = vunpack.c.h.b16 %v4799
        %v5494 = vunpack.c.l.b16 %v4800
        %v5495 = vunpack.c.h.b16 %v4800
        %v5496 = vunpack.c.l.b16 %v4801
        %v5497 = vunpack.c.h.b16 %v4801
        %v5498 = vunpack.c.l.b16 %v4802
        %v5499 = vunpack.c.l.b16 %v4803
        %v5500 = vunpack.c.h.b16 %v4803
        %v5501 = vunpack.c.l.b16 %v4804
        %v5502 = vunpack.c.h.b16 %v4804
        %v5503 = vunpack.c.l.b16 %v4805
        %v5504 = vunpack.c.h.b16 %v4805
        %v5505 = vunpack.c.l.b16 %v4806
        %v5506 = vunpack.c.l.b16 %v4807
        %v5507 = vunpack.c.h.b16 %v4807
        %v5508 = vunpack.c.l.b16 %v4808
        %v5509 = vunpack.c.h.b16 %v4808
        %v5510 = vunpack.c.l.b16 %v4809
        %v5511 = vunpack.c.h.b16 %v4809
        %v5512 = vunpack.c.l.b16 %v4810
        %v5513 = vunpack.c.l.b16 %v4811
        %v5514 = vunpack.c.h.b16 %v4811
        %v5515 = vunpack.c.l.b16 %v4812
        %v5516 = vunpack.c.h.b16 %v4812
        %v5517 = vunpack.c.l.b16 %v4813
        %v5518 = vunpack.c.h.b16 %v4813
        %v5519 = vunpack.c.l.b16 %v4814
        %v5520 = vunpack.c.l.b16 %v4815
        %v5521 = vunpack.c.h.b16 %v4815
        %v5522 = vunpack.c.l.b16 %v4816
        %v5523 = vunpack.c.h.b16 %v4816
        %v5524 = vunpack.c.l.b16 %v4817
        %v5525 = vunpack.c.h.b16 %v4817
        %v5526 = vunpack.c.l.b16 %v4818
        %v5527 = vunpack.c.l.b16 %v4819
        %v5528 = vunpack.c.h.b16 %v4819
        %v5529 = vunpack.c.l.b16 %v4820
        %v5530 = vunpack.c.h.b16 %v4820
        %v5531 = vunpack.c.l.b16 %v4821
        %v5532 = vunpack.c.h.b16 %v4821
        %v5533 = vunpack.c.l.b16 %v4822
        %v5534 = vunpack.c.l.b16 %v4823
        %v5535 = vunpack.c.h.b16 %v4823
        %v5536 = vunpack.c.l.b16 %v4824
        %v5537 = vunpack.c.h.b16 %v4824
        %v5538 = vunpack.c.l.b16 %v4825
        %v5539 = vunpack.c.h.b16 %v4825
        %v5540 = vunpack.c.l.b16 %v4826
        %v5541 = vunpack.c.l.b16 %v4827
        %v5542 = vunpack.c.h.b16 %v4827
        %v5543 = vunpack.c.l.b16 %v4828
        %v5544 = vunpack.c.h.b16 %v4828
        %v5545 = vunpack.c.l.b16 %v4829
        %v5546 = vunpack.c.h.b16 %v4829
        %v5547 = vunpack.c.l.b16 %v4830
        %v5548 = vunpack.c.l.b16 %v4831
        %v5549 = vunpack.c.h.b16 %v4831
        %v5550 = vunpack.c.l.b16 %v4832
        %v5551 = vunpack.c.h.b16 %v4832
        %v5552 = vunpack.c.l.b16 %v4833
        %v5553 = vunpack.c.h.b16 %v4833
        %v5554 = vunpack.c.l.b16 %v4834
        %v5555 = vpack.c.b16 %v5114, %v5107
        %v5556 = vpack.c.b16 %v5115, %v5108
        %v5557 = vpack.c.b16 %v5116, %v5109
        %v5558 = vpack.c.b16 %v5117, %v5110
        %v5559 = vpack.c.b16 %v5118, %v5111
        %v5560 = vpack.c.b16 %v5119, %v5112
        %v5561 = vpack.c.b16 %v5120, %v5113
        %v5562 = vpack.c.b16 %v5128, %v5121
        %v5563 = vpack.c.b16 %v5129, %v5122
        %v5564 = vpack.c.b16 %v5130, %v5123
        %v5565 = vpack.c.b16 %v5131, %v5124
        %v5566 = vpack.c.b16 %v5132, %v5125
        %v5567 = vpack.c.b16 %v5133, %v5126
        %v5568 = vpack.c.b16 %v5134, %v5127
        %v5569 = vpack.c.b16 %v5142, %v5135
        %v5570 = vpack.c.b16 %v5143, %v5136
        %v5571 = vpack.c.b16 %v5144, %v5137
        %v5572 = vpack.c.b16 %v5145, %v5138
        %v5573 = vpack.c.b16 %v5146, %v5139
        %v5574 = vpack.c.b16 %v5147, %v5140
        %v5575 = vpack.c.b16 %v5148, %v5141
        %v5576 = vpack.c.b16 %v5156, %v5149
        %v5577 = vpack.c.b16 %v5157, %v5150
        %v5578 = vpack.c.b16 %v5158, %v5151
        %v5579 = vpack.c.b16 %v5159, %v5152
        %v5580 = vpack.c.b16 %v5160, %v5153
        %v5581 = vpack.c.b16 %v5161, %v5154
        %v5582 = vpack.c.b16 %v5162, %v5155
        %v5583 = vpack.c.b16 %v5170, %v5163
        %v5584 = vpack.c.b16 %v5171, %v5164
        %v5585 = vpack.c.b16 %v5172, %v5165
        %v5586 = vpack.c.b16 %v5173, %v5166
        %v5587 = vpack.c.b16 %v5174, %v5167
        %v5588 = vpack.c.b16 %v5175, %v5168
        %v5589 = vpack.c.b16 %v5176, %v5169
        %v5590 = vpack.c.b16 %v5184, %v5177
        %v5591 = vpack.c.b16 %v5185, %v5178
        %v5592 = vpack.c.b16 %v5186, %v5179
        %v5593 = vpack.c.b16 %v5187, %v5180
        %v5594 = vpack.c.b16 %v5188, %v5181
        %v5595 = vpack.c.b16 %v5189, %v5182
        %v5596 = vpack.c.b16 %v5190, %v5183
        %v5597 = vpack.c.b16 %v5198, %v5191
        %v5598 = vpack.c.b16 %v5199, %v5192
        %v5599 = vpack.c.b16 %v5200, %v5193
        %v5600 = vpack.c.b16 %v5201, %v5194
        %v5601 = vpack.c.b16 %v5202, %v5195
        %v5602 = vpack.c.b16 %v5203, %v5196
        %v5603 = vpack.c.b16 %v5204, %v5197
        %v5604 = vpack.c.b16 %v5212, %v5205
        %v5605 = vpack.c.b16 %v5213, %v5206
        %v5606 = vpack.c.b16 %v5214, %v5207
        %v5607 = vpack.c.b16 %v5215, %v5208
        %v5608 = vpack.c.b16 %v5216, %v5209
        %v5609 = vpack.c.b16 %v5217, %v5210
        %v5610 = vpack.c.b16 %v5218, %v5211
        %v5611 = vpack.c.b16 %v5226, %v5219
        %v5612 = vpack.c.b16 %v5227, %v5220
        %v5613 = vpack.c.b16 %v5228, %v5221
        %v5614 = vpack.c.b16 %v5229, %v5222
        %v5615 = vpack.c.b16 %v5230, %v5223
        %v5616 = vpack.c.b16 %v5231, %v5224
        %v5617 = vpack.c.b16 %v5232, %v5225
        %v5618 = vpack.c.b16 %v5240, %v5233
        %v5619 = vpack.c.b16 %v5241, %v5234
        %v5620 = vpack.c.b16 %v5242, %v5235
        %v5621 = vpack.c.b16 %v5243, %v5236
        %v5622 = vpack.c.b16 %v5244, %v5237
        %v5623 = vpack.c.b16 %v5245, %v5238
        %v5624 = vpack.c.b16 %v5246, %v5239
        %v5625 = vpack.c.b16 %v5254, %v5247
        %v5626 = vpack.c.b16 %v5255, %v5248
        %v5627 = vpack.c.b16 %v5256, %v5249
        %v5628 = vpack.c.b16 %v5257, %v5250
        %v5629 = vpack.c.b16 %v5258, %v5251
        %v5630 = vpack.c.b16 %v5259, %v5252
        %v5631 = vpack.c.b16 %v5260, %v5253
        %v5632 = vpack.c.b16 %v5268, %v5261
        %v5633 = vpack.c.b16 %v5269, %v5262
        %v5634 = vpack.c.b16 %v5270, %v5263
        %v5635 = vpack.c.b16 %v5271, %v5264
        %v5636 = vpack.c.b16 %v5272, %v5265
        %v5637 = vpack.c.b16 %v5273, %v5266
        %v5638 = vpack.c.b16 %v5274, %v5267
        %v5639 = vpack.c.b16 %v5282, %v5275
        %v5640 = vpack.c.b16 %v5283, %v5276
        %v5641 = vpack.c.b16 %v5284, %v5277
        %v5642 = vpack.c.b16 %v5285, %v5278
        %v5643 = vpack.c.b16 %v5286, %v5279
        %v5644 = vpack.c.b16 %v5287, %v5280
        %v5645 = vpack.c.b16 %v5288, %v5281
        %v5646 = vpack.c.b16 %v5296, %v5289
        %v5647 = vpack.c.b16 %v5297, %v5290
        %v5648 = vpack.c.b16 %v5298, %v5291
        %v5649 = vpack.c.b16 %v5299, %v5292
        %v5650 = vpack.c.b16 %v5300, %v5293
        %v5651 = vpack.c.b16 %v5301, %v5294
        %v5652 = vpack.c.b16 %v5302, %v5295
        %v5653 = vpack.c.b16 %v5310, %v5303
        %v5654 = vpack.c.b16 %v5311, %v5304
        %v5655 = vpack.c.b16 %v5312, %v5305
        %v5656 = vpack.c.b16 %v5313, %v5306
        %v5657 = vpack.c.b16 %v5314, %v5307
        %v5658 = vpack.c.b16 %v5315, %v5308
        %v5659 = vpack.c.b16 %v5316, %v5309
        %v5660 = vpack.c.b16 %v5324, %v5317
        %v5661 = vpack.c.b16 %v5325, %v5318
        %v5662 = vpack.c.b16 %v5326, %v5319
        %v5663 = vpack.c.b16 %v5327, %v5320
        %v5664 = vpack.c.b16 %v5328, %v5321
        %v5665 = vpack.c.b16 %v5329, %v5322
        %v5666 = vpack.c.b16 %v5330, %v5323
        %v5667 = vpack.c.b16 %v5338, %v5331
        %v5668 = vpack.c.b16 %v5339, %v5332
        %v5669 = vpack.c.b16 %v5340, %v5333
        %v5670 = vpack.c.b16 %v5341, %v5334
        %v5671 = vpack.c.b16 %v5342, %v5335
        %v5672 = vpack.c.b16 %v5343, %v5336
        %v5673 = vpack.c.b16 %v5344, %v5337
        %v5674 = vpack.c.b16 %v5352, %v5345
        %v5675 = vpack.c.b16 %v5353, %v5346
        %v5676 = vpack.c.b16 %v5354, %v5347
        %v5677 = vpack.c.b16 %v5355, %v5348
        %v5678 = vpack.c.b16 %v5356, %v5349
        %v5679 = vpack.c.b16 %v5357, %v5350
        %v5680 = vpack.c.b16 %v5358, %v5351
        %v5681 = vpack.c.b16 %v5366, %v5359
        %v5682 = vpack.c.b16 %v5367, %v5360
        %v5683 = vpack.c.b16 %v5368, %v5361
        %v5684 = vpack.c.b16 %v5369, %v5362
        %v5685 = vpack.c.b16 %v5370, %v5363
        %v5686 = vpack.c.b16 %v5371, %v5364
        %v5687 = vpack.c.b16 %v5372, %v5365
        %v5688 = vpack.c.b16 %v5380, %v5373
        %v5689 = vpack.c.b16 %v5381, %v5374
        %v5690 = vpack.c.b16 %v5382, %v5375
        %v5691 = vpack.c.b16 %v5383, %v5376
        %v5692 = vpack.c.b16 %v5384, %v5377
        %v5693 = vpack.c.b16 %v5385, %v5378
        %v5694 = vpack.c.b16 %v5386, %v5379
        %v5695 = vpack.c.b16 %v5394, %v5387
        %v5696 = vpack.c.b16 %v5395, %v5388
        %v5697 = vpack.c.b16 %v5396, %v5389
        %v5698 = vpack.c.b16 %v5397, %v5390
        %v5699 = vpack.c.b16 %v5398, %v5391
        %v5700 = vpack.c.b16 %v5399, %v5392
        %v5701 = vpack.c.b16 %v5400, %v5393
        %v5702 = vpack.c.b16 %v5408, %v5401
        %v5703 = vpack.c.b16 %v5409, %v5402
        %v5704 = vpack.c.b16 %v5410, %v5403
        %v5705 = vpack.c.b16 %v5411, %v5404
        %v5706 = vpack.c.b16 %v5412, %v5405
        %v5707 = vpack.c.b16 %v5413, %v5406
        %v5708 = vpack.c.b16 %v5414, %v5407
        %v5709 = vpack.c.b16 %v5422, %v5415
        %v5710 = vpack.c.b16 %v5423, %v5416
        %v5711 = vpack.c.b16 %v5424, %v5417
        %v5712 = vpack.c.b16 %v5425, %v5418
        %v5713 = vpack.c.b16 %v5426, %v5419
        %v5714 = vpack.c.b16 %v5427, %v5420
        %v5715 = vpack.c.b16 %v5428, %v5421
        %v5716 = vpack.c.b16 %v5436, %v5429
        %v5717 = vpack.c.b16 %v5437, %v5430
        %v5718 = vpack.c.b16 %v5438, %v5431
        %v5719 = vpack.c.b16 %v5439, %v5432
        %v5720 = vpack.c.b16 %v5440, %v5433
        %v5721 = vpack.c.b16 %v5441, %v5434
        %v5722 = vpack.c.b16 %v5442, %v5435
        %v5723 = vpack.c.b16 %v5450, %v5443
        %v5724 = vpack.c.b16 %v5451, %v5444
        %v5725 = vpack.c.b16 %v5452, %v5445
        %v5726 = vpack.c.b16 %v5453, %v5446
        %v5727 = vpack.c.b16 %v5454, %v5447
        %v5728 = vpack.c.b16 %v5455, %v5448
        %v5729 = vpack.c.b16 %v5456, %v5449
        %v5730 = vpack.c.b16 %v5464, %v5457
        %v5731 = vpack.c.b16 %v5465, %v5458
        %v5732 = vpack.c.b16 %v5466, %v5459
        %v5733 = vpack.c.b16 %v5467, %v5460
        %v5734 = vpack.c.b16 %v5468, %v5461
        %v5735 = vpack.c.b16 %v5469, %v5462
        %v5736 = vpack.c.b16 %v5470, %v5463
        %v5737 = vpack.c.b16 %v5478, %v5471
        %v5738 = vpack.c.b16 %v5479, %v5472
        %v5739 = vpack.c.b16 %v5480, %v5473
        %v5740 = vpack.c.b16 %v5481, %v5474
        %v5741 = vpack.c.b16 %v5482, %v5475
        %v5742 = vpack.c.b16 %v5483, %v5476
        %v5743 = vpack.c.b16 %v5484, %v5477
        %v5744 = vpack.c.b16 %v5492, %v5485
        %v5745 = vpack.c.b16 %v5493, %v5486
        %v5746 = vpack.c.b16 %v5494, %v5487
        %v5747 = vpack.c.b16 %v5495, %v5488
        %v5748 = vpack.c.b16 %v5496, %v5489
        %v5749 = vpack.c.b16 %v5497, %v5490
        %v5750 = vpack.c.b16 %v5498, %v5491
        %v5751 = vpack.c.b16 %v5506, %v5499
        %v5752 = vpack.c.b16 %v5507, %v5500
        %v5753 = vpack.c.b16 %v5508, %v5501
        %v5754 = vpack.c.b16 %v5509, %v5502
        %v5755 = vpack.c.b16 %v5510, %v5503
        %v5756 = vpack.c.b16 %v5511, %v5504
        %v5757 = vpack.c.b16 %v5512, %v5505
        %v5758 = vpack.c.b16 %v5520, %v5513
        %v5759 = vpack.c.b16 %v5521, %v5514
        %v5760 = vpack.c.b16 %v5522, %v5515
        %v5761 = vpack.c.b16 %v5523, %v5516
        %v5762 = vpack.c.b16 %v5524, %v5517
        %v5763 = vpack.c.b16 %v5525, %v5518
        %v5764 = vpack.c.b16 %v5526, %v5519
        %v5765 = vpack.c.b16 %v5534, %v5527
        %v5766 = vpack.c.b16 %v5535, %v5528
        %v5767 = vpack.c.b16 %v5536, %v5529
        %v5768 = vpack.c.b16 %v5537, %v5530
        %v5769 = vpack.c.b16 %v5538, %v5531
        %v5770 = vpack.c.b16 %v5539, %v5532
        %v5771 = vpack.c.b16 %v5540, %v5533
        %v5772 = vpack.c.b16 %v5548, %v5541
        %v5773 = vpack.c.b16 %v5549, %v5542
        %v5774 = vpack.c.b16 %v5550, %v5543
        %v5775 = vpack.c.b16 %v5551, %v5544
        %v5776 = vpack.c.b16 %v5552, %v5545
        %v5777 = vpack.c.b16 %v5553, %v5546
        %v5778 = vpack.c.b16 %v5554, %v5547
        %6003 = vmatpush.bf16.msra.mxu0 %v5604
        %6004 = vmatpush.bf16.msra.mxu0 %v5597
        %6005 = vmatpush.bf16.msra.mxu0 %v5590
        %6006 = vmatpush.bf16.msra.mxu0 %v5583
        %6007 = vmatpush.bf16.msra.mxu0 %v5576
        %6008 = vmatpush.bf16.msra.mxu0 %v5569
        %6009 = vmatpush.bf16.msra.mxu0 %v5562
        %6010 = vmatpush.bf16.msra.mxu0 %v5555
        %6011 = vmatmul.bf16.gmra.mxu0 %v4547
        %v6012 = vpop.f32.mrf.mxu0
        %v6013 = vadd.f32 %v4837, %v6012
        %v6014 = vpop.f32.mrf.mxu0
        %v6015 = vadd.f32 %v4837, %v6014
        %6016 = vmatmul.bf16.gmra.mxu0 %v4551
        %v6017 = vpop.f32.mrf.mxu0
        %v6018 = vadd.f32 %v4837, %v6017
        %v6019 = vpop.f32.mrf.mxu0
        %v6020 = vadd.f32 %v4837, %v6019
        %6021 = vmatmul.bf16.gmra.mxu0 %v4555
        %v6022 = vpop.f32.mrf.mxu0
        %v6023 = vadd.f32 %v4837, %v6022
        %v6024 = vpop.f32.mrf.mxu0
        %v6025 = vadd.f32 %v4837, %v6024
        %6026 = vmatmul.bf16.gmra.mxu0 %v4559
        %v6027 = vpop.f32.mrf.mxu0
        %v6028 = vadd.f32 %v4837, %v6027
        %v6029 = vpop.f32.mrf.mxu0
        %v6030 = vadd.f32 %v4837, %v6029
        %6031 = vmatmul.bf16.gmra.mxu0 %v4563
        %v6032 = vpop.f32.mrf.mxu0
        %v6033 = vadd.f32 %v4837, %v6032
        %v6034 = vpop.f32.mrf.mxu0
        %v6035 = vadd.f32 %v4837, %v6034
        %6036 = vmatmul.bf16.gmra.mxu0 %v4567
        %v6037 = vpop.f32.mrf.mxu0
        %v6038 = vadd.f32 %v4837, %v6037
        %v6039 = vpop.f32.mrf.mxu0
        %v6040 = vadd.f32 %v4837, %v6039
        %6041 = vmatmul.bf16.gmra.mxu0 %v4571
        %v6042 = vpop.f32.mrf.mxu0
        %v6043 = vadd.f32 %v4837, %v6042
        %v6044 = vpop.f32.mrf.mxu0
        %v6045 = vadd.f32 %v4837, %v6044
        %6046 = vmatmul.bf16.gmra.mxu0 %v4575
        %v6047 = vpop.f32.mrf.mxu0
        %v6048 = vadd.f32 %v4837, %v6047
        %v6049 = vpop.f32.mrf.mxu0
        %v6050 = vadd.f32 %v4837, %v6049
        %6051 = vdwg.mxu0
        %6052 = vmatpush.bf16.msra.mxu0 %v5660
        %6053 = vmatpush.bf16.msra.mxu0 %v5653
        %6054 = vmatpush.bf16.msra.mxu0 %v5646
        %6055 = vmatpush.bf16.msra.mxu0 %v5639
        %6056 = vmatpush.bf16.msra.mxu0 %v5632
        %6057 = vmatpush.bf16.msra.mxu0 %v5625
        %6058 = vmatpush.bf16.msra.mxu0 %v5618
        %6059 = vmatpush.bf16.msra.mxu0 %v5611
        %6060 = vmatmul.bf16.gmra.mxu0 %v4548
        %v6061 = vpop.f32.mrf.mxu0
        %v6062 = vadd.f32 %v6013, %v6061
        %v6063 = vpop.f32.mrf.mxu0
        %v6064 = vadd.f32 %v6015, %v6063
        %6065 = vmatmul.bf16.gmra.mxu0 %v4552
        %v6066 = vpop.f32.mrf.mxu0
        %v6067 = vadd.f32 %v6018, %v6066
        %v6068 = vpop.f32.mrf.mxu0
        %v6069 = vadd.f32 %v6020, %v6068
        %6070 = vmatmul.bf16.gmra.mxu0 %v4556
        %v6071 = vpop.f32.mrf.mxu0
        %v6072 = vadd.f32 %v6023, %v6071
        %v6073 = vpop.f32.mrf.mxu0
        %v6074 = vadd.f32 %v6025, %v6073
        %6075 = vmatmul.bf16.gmra.mxu0 %v4560
        %v6076 = vpop.f32.mrf.mxu0
        %v6077 = vadd.f32 %v6028, %v6076
        %v6078 = vpop.f32.mrf.mxu0
        %v6079 = vadd.f32 %v6030, %v6078
        %6080 = vmatmul.bf16.gmra.mxu0 %v4564
        %v6081 = vpop.f32.mrf.mxu0
        %v6082 = vadd.f32 %v6033, %v6081
        %v6083 = vpop.f32.mrf.mxu0
        %v6084 = vadd.f32 %v6035, %v6083
        %6085 = vmatmul.bf16.gmra.mxu0 %v4568
        %v6086 = vpop.f32.mrf.mxu0
        %v6087 = vadd.f32 %v6038, %v6086
        %v6088 = vpop.f32.mrf.mxu0
        %v6089 = vadd.f32 %v6040, %v6088
        %6090 = vmatmul.bf16.gmra.mxu0 %v4572
        %v6091 = vpop.f32.mrf.mxu0
        %v6092 = vadd.f32 %v6043, %v6091
        %v6093 = vpop.f32.mrf.mxu0
        %v6094 = vadd.f32 %v6045, %v6093
        %6095 = vmatmul.bf16.gmra.mxu0 %v4576
        %v6096 = vpop.f32.mrf.mxu0
        %v6097 = vadd.f32 %v6048, %v6096
        %v6098 = vpop.f32.mrf.mxu0
        %v6099 = vadd.f32 %v6050, %v6098
        %6100 = vdwg.mxu0
        %6101 = vmatpush.bf16.msra.mxu0 %v5716
        %6102 = vmatpush.bf16.msra.mxu0 %v5709
        %6103 = vmatpush.bf16.msra.mxu0 %v5702
        %6104 = vmatpush.bf16.msra.mxu0 %v5695
        %6105 = vmatpush.bf16.msra.mxu0 %v5688
        %6106 = vmatpush.bf16.msra.mxu0 %v5681
        %6107 = vmatpush.bf16.msra.mxu0 %v5674
        %6108 = vmatpush.bf16.msra.mxu0 %v5667
        %6109 = vmatmul.bf16.gmra.mxu0 %v4549
        %v6110 = vpop.f32.mrf.mxu0
        %v6111 = vadd.f32 %v6062, %v6110
        %v6112 = vpop.f32.mrf.mxu0
        %v6113 = vadd.f32 %v6064, %v6112
        %6114 = vmatmul.bf16.gmra.mxu0 %v4553
        %v6115 = vpop.f32.mrf.mxu0
        %v6116 = vadd.f32 %v6067, %v6115
        %v6117 = vpop.f32.mrf.mxu0
        %v6118 = vadd.f32 %v6069, %v6117
        %6119 = vmatmul.bf16.gmra.mxu0 %v4557
        %v6120 = vpop.f32.mrf.mxu0
        %v6121 = vadd.f32 %v6072, %v6120
        %v6122 = vpop.f32.mrf.mxu0
        %v6123 = vadd.f32 %v6074, %v6122
        %6124 = vmatmul.bf16.gmra.mxu0 %v4561
        %v6125 = vpop.f32.mrf.mxu0
        %v6126 = vadd.f32 %v6077, %v6125
        %v6127 = vpop.f32.mrf.mxu0
        %v6128 = vadd.f32 %v6079, %v6127
        %6129 = vmatmul.bf16.gmra.mxu0 %v4565
        %v6130 = vpop.f32.mrf.mxu0
        %v6131 = vadd.f32 %v6082, %v6130
        %v6132 = vpop.f32.mrf.mxu0
        %v6133 = vadd.f32 %v6084, %v6132
        %6134 = vmatmul.bf16.gmra.mxu0 %v4569
        %v6135 = vpop.f32.mrf.mxu0
        %v6136 = vadd.f32 %v6087, %v6135
        %v6137 = vpop.f32.mrf.mxu0
        %v6138 = vadd.f32 %v6089, %v6137
        %6139 = vmatmul.bf16.gmra.mxu0 %v4573
        %v6140 = vpop.f32.mrf.mxu0
        %v6141 = vadd.f32 %v6092, %v6140
        %v6142 = vpop.f32.mrf.mxu0
        %v6143 = vadd.f32 %v6094, %v6142
        %6144 = vmatmul.bf16.gmra.mxu0 %v4577
        %v6145 = vpop.f32.mrf.mxu0
        %v6146 = vadd.f32 %v6097, %v6145
        %v6147 = vpop.f32.mrf.mxu0
        %v6148 = vadd.f32 %v6099, %v6147
        %6149 = vdwg.mxu0
        %6150 = vmatpush.bf16.msra.mxu0 %v5772
        %6151 = vmatpush.bf16.msra.mxu0 %v5765
        %6152 = vmatpush.bf16.msra.mxu0 %v5758
        %6153 = vmatpush.bf16.msra.mxu0 %v5751
        %6154 = vmatpush.bf16.msra.mxu0 %v5744
        %6155 = vmatpush.bf16.msra.mxu0 %v5737
        %6156 = vmatpush.bf16.msra.mxu0 %v5730
        %6157 = vmatpush.bf16.msra.mxu0 %v5723
        %6158 = vmatmul.bf16.gmra.mxu0 %v4550
        %v6159 = vpop.f32.mrf.mxu0
        %v6160 = vadd.f32 %v6111, %v6159
        %v6161 = vpop.f32.mrf.mxu0
        %v6162 = vadd.f32 %v6113, %v6161
        %6163 = vmatmul.bf16.gmra.mxu0 %v4554
        %v6164 = vpop.f32.mrf.mxu0
        %v6165 = vadd.f32 %v6116, %v6164
        %v6166 = vpop.f32.mrf.mxu0
        %v6167 = vadd.f32 %v6118, %v6166
        %6168 = vmatmul.bf16.gmra.mxu0 %v4558
        %v6169 = vpop.f32.mrf.mxu0
        %v6170 = vadd.f32 %v6121, %v6169
        %v6171 = vpop.f32.mrf.mxu0
        %v6172 = vadd.f32 %v6123, %v6171
        %6173 = vmatmul.bf16.gmra.mxu0 %v4562
        %v6174 = vpop.f32.mrf.mxu0
        %v6175 = vadd.f32 %v6126, %v6174
        %v6176 = vpop.f32.mrf.mxu0
        %v6177 = vadd.f32 %v6128, %v6176
        %6178 = vmatmul.bf16.gmra.mxu0 %v4566
        %v6179 = vpop.f32.mrf.mxu0
        %v6180 = vadd.f32 %v6131, %v6179
        %v6181 = vpop.f32.mrf.mxu0
        %v6182 = vadd.f32 %v6133, %v6181
        %6183 = vmatmul.bf16.gmra.mxu0 %v4570
        %v6184 = vpop.f32.mrf.mxu0
        %v6185 = vadd.f32 %v6136, %v6184
        %v6186 = vpop.f32.mrf.mxu0
        %v6187 = vadd.f32 %v6138, %v6186
        %6188 = vmatmul.bf16.gmra.mxu0 %v4574
        %v6189 = vpop.f32.mrf.mxu0
        %v6190 = vadd.f32 %v6141, %v6189
        %v6191 = vpop.f32.mrf.mxu0
        %v6192 = vadd.f32 %v6143, %v6191
        %6193 = vmatmul.bf16.gmra.mxu0 %v4578
        %v6194 = vpop.f32.mrf.mxu0
        %v6195 = vadd.f32 %v6146, %v6194
        %v6196 = vpop.f32.mrf.mxu0
        %v6197 = vadd.f32 %v6148, %v6196
        %6198 = vdwg.mxu0
        %6199 = vmatpush.bf16.msra.mxu0 %v5605
        %6200 = vmatpush.bf16.msra.mxu0 %v5598
        %6201 = vmatpush.bf16.msra.mxu0 %v5591
        %6202 = vmatpush.bf16.msra.mxu0 %v5584
        %6203 = vmatpush.bf16.msra.mxu0 %v5577
        %6204 = vmatpush.bf16.msra.mxu0 %v5570
        %6205 = vmatpush.bf16.msra.mxu0 %v5563
        %6206 = vmatpush.bf16.msra.mxu0 %v5556
        %6207 = vmatmul.bf16.gmra.mxu0 %v4547
        %v6208 = vpop.f32.mrf.mxu0
        %v6209 = vadd.f32 %v4838, %v6208
        %v6210 = vpop.f32.mrf.mxu0
        %v6211 = vadd.f32 %v4838, %v6210
        %6212 = vmatmul.bf16.gmra.mxu0 %v4551
        %v6213 = vpop.f32.mrf.mxu0
        %v6214 = vadd.f32 %v4838, %v6213
        %v6215 = vpop.f32.mrf.mxu0
        %v6216 = vadd.f32 %v4838, %v6215
        %6217 = vmatmul.bf16.gmra.mxu0 %v4555
        %v6218 = vpop.f32.mrf.mxu0
        %v6219 = vadd.f32 %v4838, %v6218
        %v6220 = vpop.f32.mrf.mxu0
        %v6221 = vadd.f32 %v4838, %v6220
        %6222 = vmatmul.bf16.gmra.mxu0 %v4559
        %v6223 = vpop.f32.mrf.mxu0
        %v6224 = vadd.f32 %v4838, %v6223
        %v6225 = vpop.f32.mrf.mxu0
        %v6226 = vadd.f32 %v4838, %v6225
        %6227 = vmatmul.bf16.gmra.mxu0 %v4563
        %v6228 = vpop.f32.mrf.mxu0
        %v6229 = vadd.f32 %v4838, %v6228
        %v6230 = vpop.f32.mrf.mxu0
        %v6231 = vadd.f32 %v4838, %v6230
        %6232 = vmatmul.bf16.gmra.mxu0 %v4567
        %v6233 = vpop.f32.mrf.mxu0
        %v6234 = vadd.f32 %v4838, %v6233
        %v6235 = vpop.f32.mrf.mxu0
        %v6236 = vadd.f32 %v4838, %v6235
        %6237 = vmatmul.bf16.gmra.mxu0 %v4571
        %v6238 = vpop.f32.mrf.mxu0
        %v6239 = vadd.f32 %v4838, %v6238
        %v6240 = vpop.f32.mrf.mxu0
        %v6241 = vadd.f32 %v4838, %v6240
        %6242 = vmatmul.bf16.gmra.mxu0 %v4575
        %v6243 = vpop.f32.mrf.mxu0
        %v6244 = vadd.f32 %v4838, %v6243
        %v6245 = vpop.f32.mrf.mxu0
        %v6246 = vadd.f32 %v4838, %v6245
        %6247 = vdwg.mxu0
        %6248 = vmatpush.bf16.msra.mxu0 %v5661
        %6249 = vmatpush.bf16.msra.mxu0 %v5654
        %6250 = vmatpush.bf16.msra.mxu0 %v5647
        %6251 = vmatpush.bf16.msra.mxu0 %v5640
        %6252 = vmatpush.bf16.msra.mxu0 %v5633
        %6253 = vmatpush.bf16.msra.mxu0 %v5626
        %6254 = vmatpush.bf16.msra.mxu0 %v5619
        %6255 = vmatpush.bf16.msra.mxu0 %v5612
        %6256 = vmatmul.bf16.gmra.mxu0 %v4548
        %v6257 = vpop.f32.mrf.mxu0
        %v6258 = vadd.f32 %v6209, %v6257
        %v6259 = vpop.f32.mrf.mxu0
        %v6260 = vadd.f32 %v6211, %v6259
        %6261 = vmatmul.bf16.gmra.mxu0 %v4552
        %v6262 = vpop.f32.mrf.mxu0
        %v6263 = vadd.f32 %v6214, %v6262
        %v6264 = vpop.f32.mrf.mxu0
        %v6265 = vadd.f32 %v6216, %v6264
        %6266 = vmatmul.bf16.gmra.mxu0 %v4556
        %v6267 = vpop.f32.mrf.mxu0
        %v6268 = vadd.f32 %v6219, %v6267
        %v6269 = vpop.f32.mrf.mxu0
        %v6270 = vadd.f32 %v6221, %v6269
        %6271 = vmatmul.bf16.gmra.mxu0 %v4560
        %v6272 = vpop.f32.mrf.mxu0
        %v6273 = vadd.f32 %v6224, %v6272
        %v6274 = vpop.f32.mrf.mxu0
        %v6275 = vadd.f32 %v6226, %v6274
        %6276 = vmatmul.bf16.gmra.mxu0 %v4564
        %v6277 = vpop.f32.mrf.mxu0
        %v6278 = vadd.f32 %v6229, %v6277
        %v6279 = vpop.f32.mrf.mxu0
        %v6280 = vadd.f32 %v6231, %v6279
        %6281 = vmatmul.bf16.gmra.mxu0 %v4568
        %v6282 = vpop.f32.mrf.mxu0
        %v6283 = vadd.f32 %v6234, %v6282
        %v6284 = vpop.f32.mrf.mxu0
        %v6285 = vadd.f32 %v6236, %v6284
        %6286 = vmatmul.bf16.gmra.mxu0 %v4572
        %v6287 = vpop.f32.mrf.mxu0
        %v6288 = vadd.f32 %v6239, %v6287
        %v6289 = vpop.f32.mrf.mxu0
        %v6290 = vadd.f32 %v6241, %v6289
        %6291 = vmatmul.bf16.gmra.mxu0 %v4576
        %v6292 = vpop.f32.mrf.mxu0
        %v6293 = vadd.f32 %v6244, %v6292
        %v6294 = vpop.f32.mrf.mxu0
        %v6295 = vadd.f32 %v6246, %v6294
        %6296 = vdwg.mxu0
        %6297 = vmatpush.bf16.msra.mxu0 %v5717
        %6298 = vmatpush.bf16.msra.mxu0 %v5710
        %6299 = vmatpush.bf16.msra.mxu0 %v5703
        %6300 = vmatpush.bf16.msra.mxu0 %v5696
        %6301 = vmatpush.bf16.msra.mxu0 %v5689
        %6302 = vmatpush.bf16.msra.mxu0 %v5682
        %6303 = vmatpush.bf16.msra.mxu0 %v5675
        %6304 = vmatpush.bf16.msra.mxu0 %v5668
        %6305 = vmatmul.bf16.gmra.mxu0 %v4549
        %v6306 = vpop.f32.mrf.mxu0
        %v6307 = vadd.f32 %v6258, %v6306
        %v6308 = vpop.f32.mrf.mxu0
        %v6309 = vadd.f32 %v6260, %v6308
        %6310 = vmatmul.bf16.gmra.mxu0 %v4553
        %v6311 = vpop.f32.mrf.mxu0
        %v6312 = vadd.f32 %v6263, %v6311
        %v6313 = vpop.f32.mrf.mxu0
        %v6314 = vadd.f32 %v6265, %v6313
        %6315 = vmatmul.bf16.gmra.mxu0 %v4557
        %v6316 = vpop.f32.mrf.mxu0
        %v6317 = vadd.f32 %v6268, %v6316
        %v6318 = vpop.f32.mrf.mxu0
        %v6319 = vadd.f32 %v6270, %v6318
        %6320 = vmatmul.bf16.gmra.mxu0 %v4561
        %v6321 = vpop.f32.mrf.mxu0
        %v6322 = vadd.f32 %v6273, %v6321
        %v6323 = vpop.f32.mrf.mxu0
        %v6324 = vadd.f32 %v6275, %v6323
        %6325 = vmatmul.bf16.gmra.mxu0 %v4565
        %v6326 = vpop.f32.mrf.mxu0
        %v6327 = vadd.f32 %v6278, %v6326
        %v6328 = vpop.f32.mrf.mxu0
        %v6329 = vadd.f32 %v6280, %v6328
        %6330 = vmatmul.bf16.gmra.mxu0 %v4569
        %v6331 = vpop.f32.mrf.mxu0
        %v6332 = vadd.f32 %v6283, %v6331
        %v6333 = vpop.f32.mrf.mxu0
        %v6334 = vadd.f32 %v6285, %v6333
        %6335 = vmatmul.bf16.gmra.mxu0 %v4573
        %v6336 = vpop.f32.mrf.mxu0
        %v6337 = vadd.f32 %v6288, %v6336
        %v6338 = vpop.f32.mrf.mxu0
        %v6339 = vadd.f32 %v6290, %v6338
        %6340 = vmatmul.bf16.gmra.mxu0 %v4577
        %v6341 = vpop.f32.mrf.mxu0
        %v6342 = vadd.f32 %v6293, %v6341
        %v6343 = vpop.f32.mrf.mxu0
        %v6344 = vadd.f32 %v6295, %v6343
        %6345 = vdwg.mxu0
        %6346 = vmatpush.bf16.msra.mxu0 %v5773
        %6347 = vmatpush.bf16.msra.mxu0 %v5766
        %6348 = vmatpush.bf16.msra.mxu0 %v5759
        %6349 = vmatpush.bf16.msra.mxu0 %v5752
        %6350 = vmatpush.bf16.msra.mxu0 %v5745
        %6351 = vmatpush.bf16.msra.mxu0 %v5738
        %6352 = vmatpush.bf16.msra.mxu0 %v5731
        %6353 = vmatpush.bf16.msra.mxu0 %v5724
        %6354 = vmatmul.bf16.gmra.mxu0 %v4550
        %v6355 = vpop.f32.mrf.mxu0
        %v6356 = vadd.f32 %v6307, %v6355
        %v6357 = vpop.f32.mrf.mxu0
        %v6358 = vadd.f32 %v6309, %v6357
        %6359 = vmatmul.bf16.gmra.mxu0 %v4554
        %v6360 = vpop.f32.mrf.mxu0
        %v6361 = vadd.f32 %v6312, %v6360
        %v6362 = vpop.f32.mrf.mxu0
        %v6363 = vadd.f32 %v6314, %v6362
        %6364 = vmatmul.bf16.gmra.mxu0 %v4558
        %v6365 = vpop.f32.mrf.mxu0
        %v6366 = vadd.f32 %v6317, %v6365
        %v6367 = vpop.f32.mrf.mxu0
        %v6368 = vadd.f32 %v6319, %v6367
        %6369 = vmatmul.bf16.gmra.mxu0 %v4562
        %v6370 = vpop.f32.mrf.mxu0
        %v6371 = vadd.f32 %v6322, %v6370
        %v6372 = vpop.f32.mrf.mxu0
        %v6373 = vadd.f32 %v6324, %v6372
        %6374 = vmatmul.bf16.gmra.mxu0 %v4566
        %v6375 = vpop.f32.mrf.mxu0
        %v6376 = vadd.f32 %v6327, %v6375
        %v6377 = vpop.f32.mrf.mxu0
        %v6378 = vadd.f32 %v6329, %v6377
        %6379 = vmatmul.bf16.gmra.mxu0 %v4570
        %v6380 = vpop.f32.mrf.mxu0
        %v6381 = vadd.f32 %v6332, %v6380
        %v6382 = vpop.f32.mrf.mxu0
        %v6383 = vadd.f32 %v6334, %v6382
        %6384 = vmatmul.bf16.gmra.mxu0 %v4574
        %v6385 = vpop.f32.mrf.mxu0
        %v6386 = vadd.f32 %v6337, %v6385
        %v6387 = vpop.f32.mrf.mxu0
        %v6388 = vadd.f32 %v6339, %v6387
        %6389 = vmatmul.bf16.gmra.mxu0 %v4578
        %v6390 = vpop.f32.mrf.mxu0
        %v6391 = vadd.f32 %v6342, %v6390
        %v6392 = vpop.f32.mrf.mxu0
        %v6393 = vadd.f32 %v6344, %v6392
        %6394 = vdwg.mxu0
        %6395 = vmatpush.bf16.msra.mxu0 %v5606
        %6396 = vmatpush.bf16.msra.mxu0 %v5599
        %6397 = vmatpush.bf16.msra.mxu0 %v5592
        %6398 = vmatpush.bf16.msra.mxu0 %v5585
        %6399 = vmatpush.bf16.msra.mxu0 %v5578
        %6400 = vmatpush.bf16.msra.mxu0 %v5571
        %6401 = vmatpush.bf16.msra.mxu0 %v5564
        %6402 = vmatpush.bf16.msra.mxu0 %v5557
        %6403 = vmatmul.bf16.gmra.mxu0 %v4547
        %v6404 = vpop.f32.mrf.mxu0
        %v6405 = vadd.f32 %v4839, %v6404
        %v6406 = vpop.f32.mrf.mxu0
        %v6407 = vadd.f32 %v4839, %v6406
        %6408 = vmatmul.bf16.gmra.mxu0 %v4551
        %v6409 = vpop.f32.mrf.mxu0
        %v6410 = vadd.f32 %v4839, %v6409
        %v6411 = vpop.f32.mrf.mxu0
        %v6412 = vadd.f32 %v4839, %v6411
        %6413 = vmatmul.bf16.gmra.mxu0 %v4555
        %v6414 = vpop.f32.mrf.mxu0
        %v6415 = vadd.f32 %v4839, %v6414
        %v6416 = vpop.f32.mrf.mxu0
        %v6417 = vadd.f32 %v4839, %v6416
        %6418 = vmatmul.bf16.gmra.mxu0 %v4559
        %v6419 = vpop.f32.mrf.mxu0
        %v6420 = vadd.f32 %v4839, %v6419
        %v6421 = vpop.f32.mrf.mxu0
        %v6422 = vadd.f32 %v4839, %v6421
        %6423 = vmatmul.bf16.gmra.mxu0 %v4563
        %v6424 = vpop.f32.mrf.mxu0
        %v6425 = vadd.f32 %v4839, %v6424
        %v6426 = vpop.f32.mrf.mxu0
        %v6427 = vadd.f32 %v4839, %v6426
        %6428 = vmatmul.bf16.gmra.mxu0 %v4567
        %v6429 = vpop.f32.mrf.mxu0
        %v6430 = vadd.f32 %v4839, %v6429
        %v6431 = vpop.f32.mrf.mxu0
        %v6432 = vadd.f32 %v4839, %v6431
        %6433 = vmatmul.bf16.gmra.mxu0 %v4571
        %v6434 = vpop.f32.mrf.mxu0
        %v6435 = vadd.f32 %v4839, %v6434
        %v6436 = vpop.f32.mrf.mxu0
        %v6437 = vadd.f32 %v4839, %v6436
        %6438 = vmatmul.bf16.gmra.mxu0 %v4575
        %v6439 = vpop.f32.mrf.mxu0
        %v6440 = vadd.f32 %v4839, %v6439
        %v6441 = vpop.f32.mrf.mxu0
        %v6442 = vadd.f32 %v4839, %v6441
        %6443 = vdwg.mxu0
        %6444 = vmatpush.bf16.msra.mxu0 %v5662
        %6445 = vmatpush.bf16.msra.mxu0 %v5655
        %6446 = vmatpush.bf16.msra.mxu0 %v5648
        %6447 = vmatpush.bf16.msra.mxu0 %v5641
        %6448 = vmatpush.bf16.msra.mxu0 %v5634
        %6449 = vmatpush.bf16.msra.mxu0 %v5627
        %6450 = vmatpush.bf16.msra.mxu0 %v5620
        %6451 = vmatpush.bf16.msra.mxu0 %v5613
        %6452 = vmatmul.bf16.gmra.mxu0 %v4548
        %v6453 = vpop.f32.mrf.mxu0
        %v6454 = vadd.f32 %v6405, %v6453
        %v6455 = vpop.f32.mrf.mxu0
        %v6456 = vadd.f32 %v6407, %v6455
        %6457 = vmatmul.bf16.gmra.mxu0 %v4552
        %v6458 = vpop.f32.mrf.mxu0
        %v6459 = vadd.f32 %v6410, %v6458
        %v6460 = vpop.f32.mrf.mxu0
        %v6461 = vadd.f32 %v6412, %v6460
        %6462 = vmatmul.bf16.gmra.mxu0 %v4556
        %v6463 = vpop.f32.mrf.mxu0
        %v6464 = vadd.f32 %v6415, %v6463
        %v6465 = vpop.f32.mrf.mxu0
        %v6466 = vadd.f32 %v6417, %v6465
        %6467 = vmatmul.bf16.gmra.mxu0 %v4560
        %v6468 = vpop.f32.mrf.mxu0
        %v6469 = vadd.f32 %v6420, %v6468
        %v6470 = vpop.f32.mrf.mxu0
        %v6471 = vadd.f32 %v6422, %v6470
        %6472 = vmatmul.bf16.gmra.mxu0 %v4564
        %v6473 = vpop.f32.mrf.mxu0
        %v6474 = vadd.f32 %v6425, %v6473
        %v6475 = vpop.f32.mrf.mxu0
        %v6476 = vadd.f32 %v6427, %v6475
        %6477 = vmatmul.bf16.gmra.mxu0 %v4568
        %v6478 = vpop.f32.mrf.mxu0
        %v6479 = vadd.f32 %v6430, %v6478
        %v6480 = vpop.f32.mrf.mxu0
        %v6481 = vadd.f32 %v6432, %v6480
        %6482 = vmatmul.bf16.gmra.mxu0 %v4572
        %v6483 = vpop.f32.mrf.mxu0
        %v6484 = vadd.f32 %v6435, %v6483
        %v6485 = vpop.f32.mrf.mxu0
        %v6486 = vadd.f32 %v6437, %v6485
        %6487 = vmatmul.bf16.gmra.mxu0 %v4576
        %v6488 = vpop.f32.mrf.mxu0
        %v6489 = vadd.f32 %v6440, %v6488
        %v6490 = vpop.f32.mrf.mxu0
        %v6491 = vadd.f32 %v6442, %v6490
        %6492 = vdwg.mxu0
        %6493 = vmatpush.bf16.msra.mxu0 %v5718
        %6494 = vmatpush.bf16.msra.mxu0 %v5711
        %6495 = vmatpush.bf16.msra.mxu0 %v5704
        %6496 = vmatpush.bf16.msra.mxu0 %v5697
        %6497 = vmatpush.bf16.msra.mxu0 %v5690
        %6498 = vmatpush.bf16.msra.mxu0 %v5683
        %6499 = vmatpush.bf16.msra.mxu0 %v5676
        %6500 = vmatpush.bf16.msra.mxu0 %v5669
        %6501 = vmatmul.bf16.gmra.mxu0 %v4549
        %v6502 = vpop.f32.mrf.mxu0
        %v6503 = vadd.f32 %v6454, %v6502
        %v6504 = vpop.f32.mrf.mxu0
        %v6505 = vadd.f32 %v6456, %v6504
        %6506 = vmatmul.bf16.gmra.mxu0 %v4553
        %v6507 = vpop.f32.mrf.mxu0
        %v6508 = vadd.f32 %v6459, %v6507
        %v6509 = vpop.f32.mrf.mxu0
        %v6510 = vadd.f32 %v6461, %v6509
        %6511 = vmatmul.bf16.gmra.mxu0 %v4557
        %v6512 = vpop.f32.mrf.mxu0
        %v6513 = vadd.f32 %v6464, %v6512
        %v6514 = vpop.f32.mrf.mxu0
        %v6515 = vadd.f32 %v6466, %v6514
        %6516 = vmatmul.bf16.gmra.mxu0 %v4561
        %v6517 = vpop.f32.mrf.mxu0
        %v6518 = vadd.f32 %v6469, %v6517
        %v6519 = vpop.f32.mrf.mxu0
        %v6520 = vadd.f32 %v6471, %v6519
        %6521 = vmatmul.bf16.gmra.mxu0 %v4565
        %v6522 = vpop.f32.mrf.mxu0
        %v6523 = vadd.f32 %v6474, %v6522
        %v6524 = vpop.f32.mrf.mxu0
        %v6525 = vadd.f32 %v6476, %v6524
        %6526 = vmatmul.bf16.gmra.mxu0 %v4569
        %v6527 = vpop.f32.mrf.mxu0
        %v6528 = vadd.f32 %v6479, %v6527
        %v6529 = vpop.f32.mrf.mxu0
        %v6530 = vadd.f32 %v6481, %v6529
        %6531 = vmatmul.bf16.gmra.mxu0 %v4573
        %v6532 = vpop.f32.mrf.mxu0
        %v6533 = vadd.f32 %v6484, %v6532
        %v6534 = vpop.f32.mrf.mxu0
        %v6535 = vadd.f32 %v6486, %v6534
        %6536 = vmatmul.bf16.gmra.mxu0 %v4577
        %v6537 = vpop.f32.mrf.mxu0
        %v6538 = vadd.f32 %v6489, %v6537
        %v6539 = vpop.f32.mrf.mxu0
        %v6540 = vadd.f32 %v6491, %v6539
        %6541 = vdwg.mxu0
        %6542 = vmatpush.bf16.msra.mxu0 %v5774
        %6543 = vmatpush.bf16.msra.mxu0 %v5767
        %6544 = vmatpush.bf16.msra.mxu0 %v5760
        %6545 = vmatpush.bf16.msra.mxu0 %v5753
        %6546 = vmatpush.bf16.msra.mxu0 %v5746
        %6547 = vmatpush.bf16.msra.mxu0 %v5739
        %6548 = vmatpush.bf16.msra.mxu0 %v5732
        %6549 = vmatpush.bf16.msra.mxu0 %v5725
        %6550 = vmatmul.bf16.gmra.mxu0 %v4550
        %v6551 = vpop.f32.mrf.mxu0
        %v6552 = vadd.f32 %v6503, %v6551
        %v6553 = vpop.f32.mrf.mxu0
        %v6554 = vadd.f32 %v6505, %v6553
        %6555 = vmatmul.bf16.gmra.mxu0 %v4554
        %v6556 = vpop.f32.mrf.mxu0
        %v6557 = vadd.f32 %v6508, %v6556
        %v6558 = vpop.f32.mrf.mxu0
        %v6559 = vadd.f32 %v6510, %v6558
        %6560 = vmatmul.bf16.gmra.mxu0 %v4558
        %v6561 = vpop.f32.mrf.mxu0
        %v6562 = vadd.f32 %v6513, %v6561
        %v6563 = vpop.f32.mrf.mxu0
        %v6564 = vadd.f32 %v6515, %v6563
        %6565 = vmatmul.bf16.gmra.mxu0 %v4562
        %v6566 = vpop.f32.mrf.mxu0
        %v6567 = vadd.f32 %v6518, %v6566
        %v6568 = vpop.f32.mrf.mxu0
        %v6569 = vadd.f32 %v6520, %v6568
        %6570 = vmatmul.bf16.gmra.mxu0 %v4566
        %v6571 = vpop.f32.mrf.mxu0
        %v6572 = vadd.f32 %v6523, %v6571
        %v6573 = vpop.f32.mrf.mxu0
        %v6574 = vadd.f32 %v6525, %v6573
        %6575 = vmatmul.bf16.gmra.mxu0 %v4570
        %v6576 = vpop.f32.mrf.mxu0
        %v6577 = vadd.f32 %v6528, %v6576
        %v6578 = vpop.f32.mrf.mxu0
        %v6579 = vadd.f32 %v6530, %v6578
        %6580 = vmatmul.bf16.gmra.mxu0 %v4574
        %v6581 = vpop.f32.mrf.mxu0
        %v6582 = vadd.f32 %v6533, %v6581
        %v6583 = vpop.f32.mrf.mxu0
        %v6584 = vadd.f32 %v6535, %v6583
        %6585 = vmatmul.bf16.gmra.mxu0 %v4578
        %v6586 = vpop.f32.mrf.mxu0
        %v6587 = vadd.f32 %v6538, %v6586
        %v6588 = vpop.f32.mrf.mxu0
        %v6589 = vadd.f32 %v6540, %v6588
        %6590 = vdwg.mxu0
        %6591 = vmatpush.bf16.msra.mxu0 %v5607
        %6592 = vmatpush.bf16.msra.mxu0 %v5600
        %6593 = vmatpush.bf16.msra.mxu0 %v5593
        %6594 = vmatpush.bf16.msra.mxu0 %v5586
        %6595 = vmatpush.bf16.msra.mxu0 %v5579
        %6596 = vmatpush.bf16.msra.mxu0 %v5572
        %6597 = vmatpush.bf16.msra.mxu0 %v5565
        %6598 = vmatpush.bf16.msra.mxu0 %v5558
        %6599 = vmatmul.bf16.gmra.mxu0 %v4547
        %v6600 = vpop.f32.mrf.mxu0
        %v6601 = vadd.f32 %v4840, %v6600
        %v6602 = vpop.f32.mrf.mxu0
        %v6603 = vadd.f32 %v4840, %v6602
        %6604 = vmatmul.bf16.gmra.mxu0 %v4551
        %v6605 = vpop.f32.mrf.mxu0
        %v6606 = vadd.f32 %v4840, %v6605
        %v6607 = vpop.f32.mrf.mxu0
        %v6608 = vadd.f32 %v4840, %v6607
        %6609 = vmatmul.bf16.gmra.mxu0 %v4555
        %v6610 = vpop.f32.mrf.mxu0
        %v6611 = vadd.f32 %v4840, %v6610
        %v6612 = vpop.f32.mrf.mxu0
        %v6613 = vadd.f32 %v4840, %v6612
        %6614 = vmatmul.bf16.gmra.mxu0 %v4559
        %v6615 = vpop.f32.mrf.mxu0
        %v6616 = vadd.f32 %v4840, %v6615
        %v6617 = vpop.f32.mrf.mxu0
        %v6618 = vadd.f32 %v4840, %v6617
        %6619 = vmatmul.bf16.gmra.mxu0 %v4563
        %v6620 = vpop.f32.mrf.mxu0
        %v6621 = vadd.f32 %v4840, %v6620
        %v6622 = vpop.f32.mrf.mxu0
        %v6623 = vadd.f32 %v4840, %v6622
        %6624 = vmatmul.bf16.gmra.mxu0 %v4567
        %v6625 = vpop.f32.mrf.mxu0
        %v6626 = vadd.f32 %v4840, %v6625
        %v6627 = vpop.f32.mrf.mxu0
        %v6628 = vadd.f32 %v4840, %v6627
        %6629 = vmatmul.bf16.gmra.mxu0 %v4571
        %v6630 = vpop.f32.mrf.mxu0
        %v6631 = vadd.f32 %v4840, %v6630
        %v6632 = vpop.f32.mrf.mxu0
        %v6633 = vadd.f32 %v4840, %v6632
        %6634 = vmatmul.bf16.gmra.mxu0 %v4575
        %v6635 = vpop.f32.mrf.mxu0
        %v6636 = vadd.f32 %v4840, %v6635
        %v6637 = vpop.f32.mrf.mxu0
        %v6638 = vadd.f32 %v4840, %v6637
        %6639 = vdwg.mxu0
        %6640 = vmatpush.bf16.msra.mxu0 %v5663
        %6641 = vmatpush.bf16.msra.mxu0 %v5656
        %6642 = vmatpush.bf16.msra.mxu0 %v5649
        %6643 = vmatpush.bf16.msra.mxu0 %v5642
        %6644 = vmatpush.bf16.msra.mxu0 %v5635
        %6645 = vmatpush.bf16.msra.mxu0 %v5628
        %6646 = vmatpush.bf16.msra.mxu0 %v5621
        %6647 = vmatpush.bf16.msra.mxu0 %v5614
        %6648 = vmatmul.bf16.gmra.mxu0 %v4548
        %v6649 = vpop.f32.mrf.mxu0
        %v6650 = vadd.f32 %v6601, %v6649
        %v6651 = vpop.f32.mrf.mxu0
        %v6652 = vadd.f32 %v6603, %v6651
        %6653 = vmatmul.bf16.gmra.mxu0 %v4552
        %v6654 = vpop.f32.mrf.mxu0
        %v6655 = vadd.f32 %v6606, %v6654
        %v6656 = vpop.f32.mrf.mxu0
        %v6657 = vadd.f32 %v6608, %v6656
        %6658 = vmatmul.bf16.gmra.mxu0 %v4556
        %v6659 = vpop.f32.mrf.mxu0
        %v6660 = vadd.f32 %v6611, %v6659
        %v6661 = vpop.f32.mrf.mxu0
        %v6662 = vadd.f32 %v6613, %v6661
        %6663 = vmatmul.bf16.gmra.mxu0 %v4560
        %v6664 = vpop.f32.mrf.mxu0
        %v6665 = vadd.f32 %v6616, %v6664
        %v6666 = vpop.f32.mrf.mxu0
        %v6667 = vadd.f32 %v6618, %v6666
        %6668 = vmatmul.bf16.gmra.mxu0 %v4564
        %v6669 = vpop.f32.mrf.mxu0
        %v6670 = vadd.f32 %v6621, %v6669
        %v6671 = vpop.f32.mrf.mxu0
        %v6672 = vadd.f32 %v6623, %v6671
        %6673 = vmatmul.bf16.gmra.mxu0 %v4568
        %v6674 = vpop.f32.mrf.mxu0
        %v6675 = vadd.f32 %v6626, %v6674
        %v6676 = vpop.f32.mrf.mxu0
        %v6677 = vadd.f32 %v6628, %v6676
        %6678 = vmatmul.bf16.gmra.mxu0 %v4572
        %v6679 = vpop.f32.mrf.mxu0
        %v6680 = vadd.f32 %v6631, %v6679
        %v6681 = vpop.f32.mrf.mxu0
        %v6682 = vadd.f32 %v6633, %v6681
        %6683 = vmatmul.bf16.gmra.mxu0 %v4576
        %v6684 = vpop.f32.mrf.mxu0
        %v6685 = vadd.f32 %v6636, %v6684
        %v6686 = vpop.f32.mrf.mxu0
        %v6687 = vadd.f32 %v6638, %v6686
        %6688 = vdwg.mxu0
        %6689 = vmatpush.bf16.msra.mxu0 %v5719
        %6690 = vmatpush.bf16.msra.mxu0 %v5712
        %6691 = vmatpush.bf16.msra.mxu0 %v5705
        %6692 = vmatpush.bf16.msra.mxu0 %v5698
        %6693 = vmatpush.bf16.msra.mxu0 %v5691
        %6694 = vmatpush.bf16.msra.mxu0 %v5684
        %6695 = vmatpush.bf16.msra.mxu0 %v5677
        %6696 = vmatpush.bf16.msra.mxu0 %v5670
        %6697 = vmatmul.bf16.gmra.mxu0 %v4549
        %v6698 = vpop.f32.mrf.mxu0
        %v6699 = vadd.f32 %v6650, %v6698
        %v6700 = vpop.f32.mrf.mxu0
        %v6701 = vadd.f32 %v6652, %v6700
        %6702 = vmatmul.bf16.gmra.mxu0 %v4553
        %v6703 = vpop.f32.mrf.mxu0
        %v6704 = vadd.f32 %v6655, %v6703
        %v6705 = vpop.f32.mrf.mxu0
        %v6706 = vadd.f32 %v6657, %v6705
        %6707 = vmatmul.bf16.gmra.mxu0 %v4557
        %v6708 = vpop.f32.mrf.mxu0
        %v6709 = vadd.f32 %v6660, %v6708
        %v6710 = vpop.f32.mrf.mxu0
        %v6711 = vadd.f32 %v6662, %v6710
        %6712 = vmatmul.bf16.gmra.mxu0 %v4561
        %v6713 = vpop.f32.mrf.mxu0
        %v6714 = vadd.f32 %v6665, %v6713
        %v6715 = vpop.f32.mrf.mxu0
        %v6716 = vadd.f32 %v6667, %v6715
        %6717 = vmatmul.bf16.gmra.mxu0 %v4565
        %v6718 = vpop.f32.mrf.mxu0
        %v6719 = vadd.f32 %v6670, %v6718
        %v6720 = vpop.f32.mrf.mxu0
        %v6721 = vadd.f32 %v6672, %v6720
        %6722 = vmatmul.bf16.gmra.mxu0 %v4569
        %v6723 = vpop.f32.mrf.mxu0
        %v6724 = vadd.f32 %v6675, %v6723
        %v6725 = vpop.f32.mrf.mxu0
        %v6726 = vadd.f32 %v6677, %v6725
        %6727 = vmatmul.bf16.gmra.mxu0 %v4573
        %v6728 = vpop.f32.mrf.mxu0
        %v6729 = vadd.f32 %v6680, %v6728
        %v6730 = vpop.f32.mrf.mxu0
        %v6731 = vadd.f32 %v6682, %v6730
        %6732 = vmatmul.bf16.gmra.mxu0 %v4577
        %v6733 = vpop.f32.mrf.mxu0
        %v6734 = vadd.f32 %v6685, %v6733
        %v6735 = vpop.f32.mrf.mxu0
        %v6736 = vadd.f32 %v6687, %v6735
        %6737 = vdwg.mxu0
        %6738 = vmatpush.bf16.msra.mxu0 %v5775
        %6739 = vmatpush.bf16.msra.mxu0 %v5768
        %6740 = vmatpush.bf16.msra.mxu0 %v5761
        %6741 = vmatpush.bf16.msra.mxu0 %v5754
        %6742 = vmatpush.bf16.msra.mxu0 %v5747
        %6743 = vmatpush.bf16.msra.mxu0 %v5740
        %6744 = vmatpush.bf16.msra.mxu0 %v5733
        %6745 = vmatpush.bf16.msra.mxu0 %v5726
        %6746 = vmatmul.bf16.gmra.mxu0 %v4550
        %v6747 = vpop.f32.mrf.mxu0
        %v6748 = vadd.f32 %v6699, %v6747
        %v6749 = vpop.f32.mrf.mxu0
        %v6750 = vadd.f32 %v6701, %v6749
        %6751 = vmatmul.bf16.gmra.mxu0 %v4554
        %v6752 = vpop.f32.mrf.mxu0
        %v6753 = vadd.f32 %v6704, %v6752
        %v6754 = vpop.f32.mrf.mxu0
        %v6755 = vadd.f32 %v6706, %v6754
        %6756 = vmatmul.bf16.gmra.mxu0 %v4558
        %v6757 = vpop.f32.mrf.mxu0
        %v6758 = vadd.f32 %v6709, %v6757
        %v6759 = vpop.f32.mrf.mxu0
        %v6760 = vadd.f32 %v6711, %v6759
        %6761 = vmatmul.bf16.gmra.mxu0 %v4562
        %v6762 = vpop.f32.mrf.mxu0
        %v6763 = vadd.f32 %v6714, %v6762
        %v6764 = vpop.f32.mrf.mxu0
        %v6765 = vadd.f32 %v6716, %v6764
        %6766 = vmatmul.bf16.gmra.mxu0 %v4566
        %v6767 = vpop.f32.mrf.mxu0
        %v6768 = vadd.f32 %v6719, %v6767
        %v6769 = vpop.f32.mrf.mxu0
        %v6770 = vadd.f32 %v6721, %v6769
        %6771 = vmatmul.bf16.gmra.mxu0 %v4570
        %v6772 = vpop.f32.mrf.mxu0
        %v6773 = vadd.f32 %v6724, %v6772
        %v6774 = vpop.f32.mrf.mxu0
        %v6775 = vadd.f32 %v6726, %v6774
        %6776 = vmatmul.bf16.gmra.mxu0 %v4574
        %v6777 = vpop.f32.mrf.mxu0
        %v6778 = vadd.f32 %v6729, %v6777
        %v6779 = vpop.f32.mrf.mxu0
        %v6780 = vadd.f32 %v6731, %v6779
        %6781 = vmatmul.bf16.gmra.mxu0 %v4578
        %v6782 = vpop.f32.mrf.mxu0
        %v6783 = vadd.f32 %v6734, %v6782
        %v6784 = vpop.f32.mrf.mxu0
        %v6785 = vadd.f32 %v6736, %v6784
        %6786 = vdwg.mxu0
        %6787 = vmatpush.bf16.msra.mxu0 %v5608
        %6788 = vmatpush.bf16.msra.mxu0 %v5601
        %6789 = vmatpush.bf16.msra.mxu0 %v5594
        %6790 = vmatpush.bf16.msra.mxu0 %v5587
        %6791 = vmatpush.bf16.msra.mxu0 %v5580
        %6792 = vmatpush.bf16.msra.mxu0 %v5573
        %6793 = vmatpush.bf16.msra.mxu0 %v5566
        %6794 = vmatpush.bf16.msra.mxu0 %v5559
        %6795 = vmatmul.bf16.gmra.mxu0 %v4547
        %v6796 = vpop.f32.mrf.mxu0
        %v6797 = vadd.f32 %v4841, %v6796
        %v6798 = vpop.f32.mrf.mxu0
        %v6799 = vadd.f32 %v4841, %v6798
        %6800 = vmatmul.bf16.gmra.mxu0 %v4551
        %v6801 = vpop.f32.mrf.mxu0
        %v6802 = vadd.f32 %v4841, %v6801
        %v6803 = vpop.f32.mrf.mxu0
        %v6804 = vadd.f32 %v4841, %v6803
        %6805 = vmatmul.bf16.gmra.mxu0 %v4555
        %v6806 = vpop.f32.mrf.mxu0
        %v6807 = vadd.f32 %v4841, %v6806
        %v6808 = vpop.f32.mrf.mxu0
        %v6809 = vadd.f32 %v4841, %v6808
        %6810 = vmatmul.bf16.gmra.mxu0 %v4559
        %v6811 = vpop.f32.mrf.mxu0
        %v6812 = vadd.f32 %v4841, %v6811
        %v6813 = vpop.f32.mrf.mxu0
        %v6814 = vadd.f32 %v4841, %v6813
        %6815 = vmatmul.bf16.gmra.mxu0 %v4563
        %v6816 = vpop.f32.mrf.mxu0
        %v6817 = vadd.f32 %v4841, %v6816
        %v6818 = vpop.f32.mrf.mxu0
        %v6819 = vadd.f32 %v4841, %v6818
        %6820 = vmatmul.bf16.gmra.mxu0 %v4567
        %v6821 = vpop.f32.mrf.mxu0
        %v6822 = vadd.f32 %v4841, %v6821
        %v6823 = vpop.f32.mrf.mxu0
        %v6824 = vadd.f32 %v4841, %v6823
        %6825 = vmatmul.bf16.gmra.mxu0 %v4571
        %v6826 = vpop.f32.mrf.mxu0
        %v6827 = vadd.f32 %v4841, %v6826
        %v6828 = vpop.f32.mrf.mxu0
        %v6829 = vadd.f32 %v4841, %v6828
        %6830 = vmatmul.bf16.gmra.mxu0 %v4575
        %v6831 = vpop.f32.mrf.mxu0
        %v6832 = vadd.f32 %v4841, %v6831
        %v6833 = vpop.f32.mrf.mxu0
        %v6834 = vadd.f32 %v4841, %v6833
        %6835 = vdwg.mxu0
        %6836 = vmatpush.bf16.msra.mxu0 %v5664
        %6837 = vmatpush.bf16.msra.mxu0 %v5657
        %6838 = vmatpush.bf16.msra.mxu0 %v5650
        %6839 = vmatpush.bf16.msra.mxu0 %v5643
        %6840 = vmatpush.bf16.msra.mxu0 %v5636
        %6841 = vmatpush.bf16.msra.mxu0 %v5629
        %6842 = vmatpush.bf16.msra.mxu0 %v5622
        %6843 = vmatpush.bf16.msra.mxu0 %v5615
        %6844 = vmatmul.bf16.gmra.mxu0 %v4548
        %v6845 = vpop.f32.mrf.mxu0
        %v6846 = vadd.f32 %v6797, %v6845
        %v6847 = vpop.f32.mrf.mxu0
        %v6848 = vadd.f32 %v6799, %v6847
        %6849 = vmatmul.bf16.gmra.mxu0 %v4552
        %v6850 = vpop.f32.mrf.mxu0
        %v6851 = vadd.f32 %v6802, %v6850
        %v6852 = vpop.f32.mrf.mxu0
        %v6853 = vadd.f32 %v6804, %v6852
        %6854 = vmatmul.bf16.gmra.mxu0 %v4556
        %v6855 = vpop.f32.mrf.mxu0
        %v6856 = vadd.f32 %v6807, %v6855
        %v6857 = vpop.f32.mrf.mxu0
        %v6858 = vadd.f32 %v6809, %v6857
        %6859 = vmatmul.bf16.gmra.mxu0 %v4560
        %v6860 = vpop.f32.mrf.mxu0
        %v6861 = vadd.f32 %v6812, %v6860
        %v6862 = vpop.f32.mrf.mxu0
        %v6863 = vadd.f32 %v6814, %v6862
        %6864 = vmatmul.bf16.gmra.mxu0 %v4564
        %v6865 = vpop.f32.mrf.mxu0
        %v6866 = vadd.f32 %v6817, %v6865
        %v6867 = vpop.f32.mrf.mxu0
        %v6868 = vadd.f32 %v6819, %v6867
        %6869 = vmatmul.bf16.gmra.mxu0 %v4568
        %v6870 = vpop.f32.mrf.mxu0
        %v6871 = vadd.f32 %v6822, %v6870
        %v6872 = vpop.f32.mrf.mxu0
        %v6873 = vadd.f32 %v6824, %v6872
        %6874 = vmatmul.bf16.gmra.mxu0 %v4572
        %v6875 = vpop.f32.mrf.mxu0
        %v6876 = vadd.f32 %v6827, %v6875
        %v6877 = vpop.f32.mrf.mxu0
        %v6878 = vadd.f32 %v6829, %v6877
        %6879 = vmatmul.bf16.gmra.mxu0 %v4576
        %v6880 = vpop.f32.mrf.mxu0
        %v6881 = vadd.f32 %v6832, %v6880
        %v6882 = vpop.f32.mrf.mxu0
        %v6883 = vadd.f32 %v6834, %v6882
        %6884 = vdwg.mxu0
        %6885 = vmatpush.bf16.msra.mxu0 %v5720
        %6886 = vmatpush.bf16.msra.mxu0 %v5713
        %6887 = vmatpush.bf16.msra.mxu0 %v5706
        %6888 = vmatpush.bf16.msra.mxu0 %v5699
        %6889 = vmatpush.bf16.msra.mxu0 %v5692
        %6890 = vmatpush.bf16.msra.mxu0 %v5685
        %6891 = vmatpush.bf16.msra.mxu0 %v5678
        %6892 = vmatpush.bf16.msra.mxu0 %v5671
        %6893 = vmatmul.bf16.gmra.mxu0 %v4549
        %v6894 = vpop.f32.mrf.mxu0
        %v6895 = vadd.f32 %v6846, %v6894
        %v6896 = vpop.f32.mrf.mxu0
        %v6897 = vadd.f32 %v6848, %v6896
        %6898 = vmatmul.bf16.gmra.mxu0 %v4553
        %v6899 = vpop.f32.mrf.mxu0
        %v6900 = vadd.f32 %v6851, %v6899
        %v6901 = vpop.f32.mrf.mxu0
        %v6902 = vadd.f32 %v6853, %v6901
        %6903 = vmatmul.bf16.gmra.mxu0 %v4557
        %v6904 = vpop.f32.mrf.mxu0
        %v6905 = vadd.f32 %v6856, %v6904
        %v6906 = vpop.f32.mrf.mxu0
        %v6907 = vadd.f32 %v6858, %v6906
        %6908 = vmatmul.bf16.gmra.mxu0 %v4561
        %v6909 = vpop.f32.mrf.mxu0
        %v6910 = vadd.f32 %v6861, %v6909
        %v6911 = vpop.f32.mrf.mxu0
        %v6912 = vadd.f32 %v6863, %v6911
        %6913 = vmatmul.bf16.gmra.mxu0 %v4565
        %v6914 = vpop.f32.mrf.mxu0
        %v6915 = vadd.f32 %v6866, %v6914
        %v6916 = vpop.f32.mrf.mxu0
        %v6917 = vadd.f32 %v6868, %v6916
        %6918 = vmatmul.bf16.gmra.mxu0 %v4569
        %v6919 = vpop.f32.mrf.mxu0
        %v6920 = vadd.f32 %v6871, %v6919
        %v6921 = vpop.f32.mrf.mxu0
        %v6922 = vadd.f32 %v6873, %v6921
        %6923 = vmatmul.bf16.gmra.mxu0 %v4573
        %v6924 = vpop.f32.mrf.mxu0
        %v6925 = vadd.f32 %v6876, %v6924
        %v6926 = vpop.f32.mrf.mxu0
        %v6927 = vadd.f32 %v6878, %v6926
        %6928 = vmatmul.bf16.gmra.mxu0 %v4577
        %v6929 = vpop.f32.mrf.mxu0
        %v6930 = vadd.f32 %v6881, %v6929
        %v6931 = vpop.f32.mrf.mxu0
        %v6932 = vadd.f32 %v6883, %v6931
        %6933 = vdwg.mxu0
        %6934 = vmatpush.bf16.msra.mxu0 %v5776
        %6935 = vmatpush.bf16.msra.mxu0 %v5769
        %6936 = vmatpush.bf16.msra.mxu0 %v5762
        %6937 = vmatpush.bf16.msra.mxu0 %v5755
        %6938 = vmatpush.bf16.msra.mxu0 %v5748
        %6939 = vmatpush.bf16.msra.mxu0 %v5741
        %6940 = vmatpush.bf16.msra.mxu0 %v5734
        %6941 = vmatpush.bf16.msra.mxu0 %v5727
        %6942 = vmatmul.bf16.gmra.mxu0 %v4550
        %v6943 = vpop.f32.mrf.mxu0
        %v6944 = vadd.f32 %v6895, %v6943
        %v6945 = vpop.f32.mrf.mxu0
        %v6946 = vadd.f32 %v6897, %v6945
        %6947 = vmatmul.bf16.gmra.mxu0 %v4554
        %v6948 = vpop.f32.mrf.mxu0
        %v6949 = vadd.f32 %v6900, %v6948
        %v6950 = vpop.f32.mrf.mxu0
        %v6951 = vadd.f32 %v6902, %v6950
        %6952 = vmatmul.bf16.gmra.mxu0 %v4558
        %v6953 = vpop.f32.mrf.mxu0
        %v6954 = vadd.f32 %v6905, %v6953
        %v6955 = vpop.f32.mrf.mxu0
        %v6956 = vadd.f32 %v6907, %v6955
        %6957 = vmatmul.bf16.gmra.mxu0 %v4562
        %v6958 = vpop.f32.mrf.mxu0
        %v6959 = vadd.f32 %v6910, %v6958
        %v6960 = vpop.f32.mrf.mxu0
        %v6961 = vadd.f32 %v6912, %v6960
        %6962 = vmatmul.bf16.gmra.mxu0 %v4566
        %v6963 = vpop.f32.mrf.mxu0
        %v6964 = vadd.f32 %v6915, %v6963
        %v6965 = vpop.f32.mrf.mxu0
        %v6966 = vadd.f32 %v6917, %v6965
        %6967 = vmatmul.bf16.gmra.mxu0 %v4570
        %v6968 = vpop.f32.mrf.mxu0
        %v6969 = vadd.f32 %v6920, %v6968
        %v6970 = vpop.f32.mrf.mxu0
        %v6971 = vadd.f32 %v6922, %v6970
        %6972 = vmatmul.bf16.gmra.mxu0 %v4574
        %v6973 = vpop.f32.mrf.mxu0
        %v6974 = vadd.f32 %v6925, %v6973
        %v6975 = vpop.f32.mrf.mxu0
        %v6976 = vadd.f32 %v6927, %v6975
        %6977 = vmatmul.bf16.gmra.mxu0 %v4578
        %v6978 = vpop.f32.mrf.mxu0
        %v6979 = vadd.f32 %v6930, %v6978
        %v6980 = vpop.f32.mrf.mxu0
        %v6981 = vadd.f32 %v6932, %v6980
        %6982 = vdwg.mxu0
        %6983 = vmatpush.bf16.msra.mxu0 %v5609
        %6984 = vmatpush.bf16.msra.mxu0 %v5602
        %6985 = vmatpush.bf16.msra.mxu0 %v5595
        %6986 = vmatpush.bf16.msra.mxu0 %v5588
        %6987 = vmatpush.bf16.msra.mxu0 %v5581
        %6988 = vmatpush.bf16.msra.mxu0 %v5574
        %6989 = vmatpush.bf16.msra.mxu0 %v5567
        %6990 = vmatpush.bf16.msra.mxu0 %v5560
        %6991 = vmatmul.bf16.gmra.mxu0 %v4547
        %v6992 = vpop.f32.mrf.mxu0
        %v6993 = vadd.f32 %v4842, %v6992
        %v6994 = vpop.f32.mrf.mxu0
        %v6995 = vadd.f32 %v4842, %v6994
        %6996 = vmatmul.bf16.gmra.mxu0 %v4551
        %v6997 = vpop.f32.mrf.mxu0
        %v6998 = vadd.f32 %v4842, %v6997
        %v6999 = vpop.f32.mrf.mxu0
        %v7000 = vadd.f32 %v4842, %v6999
        %7001 = vmatmul.bf16.gmra.mxu0 %v4555
        %v7002 = vpop.f32.mrf.mxu0
        %v7003 = vadd.f32 %v4842, %v7002
        %v7004 = vpop.f32.mrf.mxu0
        %v7005 = vadd.f32 %v4842, %v7004
        %7006 = vmatmul.bf16.gmra.mxu0 %v4559
        %v7007 = vpop.f32.mrf.mxu0
        %v7008 = vadd.f32 %v4842, %v7007
        %v7009 = vpop.f32.mrf.mxu0
        %v7010 = vadd.f32 %v4842, %v7009
        %7011 = vmatmul.bf16.gmra.mxu0 %v4563
        %v7012 = vpop.f32.mrf.mxu0
        %v7013 = vadd.f32 %v4842, %v7012
        %v7014 = vpop.f32.mrf.mxu0
        %v7015 = vadd.f32 %v4842, %v7014
        %7016 = vmatmul.bf16.gmra.mxu0 %v4567
        %v7017 = vpop.f32.mrf.mxu0
        %v7018 = vadd.f32 %v4842, %v7017
        %v7019 = vpop.f32.mrf.mxu0
        %v7020 = vadd.f32 %v4842, %v7019
        %7021 = vmatmul.bf16.gmra.mxu0 %v4571
        %v7022 = vpop.f32.mrf.mxu0
        %v7023 = vadd.f32 %v4842, %v7022
        %v7024 = vpop.f32.mrf.mxu0
        %v7025 = vadd.f32 %v4842, %v7024
        %7026 = vmatmul.bf16.gmra.mxu0 %v4575
        %v7027 = vpop.f32.mrf.mxu0
        %v7028 = vadd.f32 %v4842, %v7027
        %v7029 = vpop.f32.mrf.mxu0
        %v7030 = vadd.f32 %v4842, %v7029
        %7031 = vdwg.mxu0
        %7032 = vmatpush.bf16.msra.mxu0 %v5665
        %7033 = vmatpush.bf16.msra.mxu0 %v5658
        %7034 = vmatpush.bf16.msra.mxu0 %v5651
        %7035 = vmatpush.bf16.msra.mxu0 %v5644
        %7036 = vmatpush.bf16.msra.mxu0 %v5637
        %7037 = vmatpush.bf16.msra.mxu0 %v5630
        %7038 = vmatpush.bf16.msra.mxu0 %v5623
        %7039 = vmatpush.bf16.msra.mxu0 %v5616
        %7040 = vmatmul.bf16.gmra.mxu0 %v4548
        %v7041 = vpop.f32.mrf.mxu0
        %v7042 = vadd.f32 %v6993, %v7041
        %v7043 = vpop.f32.mrf.mxu0
        %v7044 = vadd.f32 %v6995, %v7043
        %7045 = vmatmul.bf16.gmra.mxu0 %v4552
        %v7046 = vpop.f32.mrf.mxu0
        %v7047 = vadd.f32 %v6998, %v7046
        %v7048 = vpop.f32.mrf.mxu0
        %v7049 = vadd.f32 %v7000, %v7048
        %7050 = vmatmul.bf16.gmra.mxu0 %v4556
        %v7051 = vpop.f32.mrf.mxu0
        %v7052 = vadd.f32 %v7003, %v7051
        %v7053 = vpop.f32.mrf.mxu0
        %v7054 = vadd.f32 %v7005, %v7053
        %7055 = vmatmul.bf16.gmra.mxu0 %v4560
        %v7056 = vpop.f32.mrf.mxu0
        %v7057 = vadd.f32 %v7008, %v7056
        %v7058 = vpop.f32.mrf.mxu0
        %v7059 = vadd.f32 %v7010, %v7058
        %7060 = vmatmul.bf16.gmra.mxu0 %v4564
        %v7061 = vpop.f32.mrf.mxu0
        %v7062 = vadd.f32 %v7013, %v7061
        %v7063 = vpop.f32.mrf.mxu0
        %v7064 = vadd.f32 %v7015, %v7063
        %7065 = vmatmul.bf16.gmra.mxu0 %v4568
        %v7066 = vpop.f32.mrf.mxu0
        %v7067 = vadd.f32 %v7018, %v7066
        %v7068 = vpop.f32.mrf.mxu0
        %v7069 = vadd.f32 %v7020, %v7068
        %7070 = vmatmul.bf16.gmra.mxu0 %v4572
        %v7071 = vpop.f32.mrf.mxu0
        %v7072 = vadd.f32 %v7023, %v7071
        %v7073 = vpop.f32.mrf.mxu0
        %v7074 = vadd.f32 %v7025, %v7073
        %7075 = vmatmul.bf16.gmra.mxu0 %v4576
        %v7076 = vpop.f32.mrf.mxu0
        %v7077 = vadd.f32 %v7028, %v7076
        %v7078 = vpop.f32.mrf.mxu0
        %v7079 = vadd.f32 %v7030, %v7078
        %7080 = vdwg.mxu0
        %7081 = vmatpush.bf16.msra.mxu0 %v5721
        %7082 = vmatpush.bf16.msra.mxu0 %v5714
        %7083 = vmatpush.bf16.msra.mxu0 %v5707
        %7084 = vmatpush.bf16.msra.mxu0 %v5700
        %7085 = vmatpush.bf16.msra.mxu0 %v5693
        %7086 = vmatpush.bf16.msra.mxu0 %v5686
        %7087 = vmatpush.bf16.msra.mxu0 %v5679
        %7088 = vmatpush.bf16.msra.mxu0 %v5672
        %7089 = vmatmul.bf16.gmra.mxu0 %v4549
        %v7090 = vpop.f32.mrf.mxu0
        %v7091 = vadd.f32 %v7042, %v7090
        %v7092 = vpop.f32.mrf.mxu0
        %v7093 = vadd.f32 %v7044, %v7092
        %7094 = vmatmul.bf16.gmra.mxu0 %v4553
        %v7095 = vpop.f32.mrf.mxu0
        %v7096 = vadd.f32 %v7047, %v7095
        %v7097 = vpop.f32.mrf.mxu0
        %v7098 = vadd.f32 %v7049, %v7097
        %7099 = vmatmul.bf16.gmra.mxu0 %v4557
        %v7100 = vpop.f32.mrf.mxu0
        %v7101 = vadd.f32 %v7052, %v7100
        %v7102 = vpop.f32.mrf.mxu0
        %v7103 = vadd.f32 %v7054, %v7102
        %7104 = vmatmul.bf16.gmra.mxu0 %v4561
        %v7105 = vpop.f32.mrf.mxu0
        %v7106 = vadd.f32 %v7057, %v7105
        %v7107 = vpop.f32.mrf.mxu0
        %v7108 = vadd.f32 %v7059, %v7107
        %7109 = vmatmul.bf16.gmra.mxu0 %v4565
        %v7110 = vpop.f32.mrf.mxu0
        %v7111 = vadd.f32 %v7062, %v7110
        %v7112 = vpop.f32.mrf.mxu0
        %v7113 = vadd.f32 %v7064, %v7112
        %7114 = vmatmul.bf16.gmra.mxu0 %v4569
        %v7115 = vpop.f32.mrf.mxu0
        %v7116 = vadd.f32 %v7067, %v7115
        %v7117 = vpop.f32.mrf.mxu0
        %v7118 = vadd.f32 %v7069, %v7117
        %7119 = vmatmul.bf16.gmra.mxu0 %v4573
        %v7120 = vpop.f32.mrf.mxu0
        %v7121 = vadd.f32 %v7072, %v7120
        %v7122 = vpop.f32.mrf.mxu0
        %v7123 = vadd.f32 %v7074, %v7122
        %7124 = vmatmul.bf16.gmra.mxu0 %v4577
        %v7125 = vpop.f32.mrf.mxu0
        %v7126 = vadd.f32 %v7077, %v7125
        %v7127 = vpop.f32.mrf.mxu0
        %v7128 = vadd.f32 %v7079, %v7127
        %7129 = vdwg.mxu0
        %7130 = vmatpush.bf16.msra.mxu0 %v5777
        %7131 = vmatpush.bf16.msra.mxu0 %v5770
        %7132 = vmatpush.bf16.msra.mxu0 %v5763
        %7133 = vmatpush.bf16.msra.mxu0 %v5756
        %7134 = vmatpush.bf16.msra.mxu0 %v5749
        %7135 = vmatpush.bf16.msra.mxu0 %v5742
        %7136 = vmatpush.bf16.msra.mxu0 %v5735
        %7137 = vmatpush.bf16.msra.mxu0 %v5728
        %7138 = vmatmul.bf16.gmra.mxu0 %v4550
        %v7139 = vpop.f32.mrf.mxu0
        %v7140 = vadd.f32 %v7091, %v7139
        %v7141 = vpop.f32.mrf.mxu0
        %v7142 = vadd.f32 %v7093, %v7141
        %7143 = vmatmul.bf16.gmra.mxu0 %v4554
        %v7144 = vpop.f32.mrf.mxu0
        %v7145 = vadd.f32 %v7096, %v7144
        %v7146 = vpop.f32.mrf.mxu0
        %v7147 = vadd.f32 %v7098, %v7146
        %7148 = vmatmul.bf16.gmra.mxu0 %v4558
        %v7149 = vpop.f32.mrf.mxu0
        %v7150 = vadd.f32 %v7101, %v7149
        %v7151 = vpop.f32.mrf.mxu0
        %v7152 = vadd.f32 %v7103, %v7151
        %7153 = vmatmul.bf16.gmra.mxu0 %v4562
        %v7154 = vpop.f32.mrf.mxu0
        %v7155 = vadd.f32 %v7106, %v7154
        %v7156 = vpop.f32.mrf.mxu0
        %v7157 = vadd.f32 %v7108, %v7156
        %7158 = vmatmul.bf16.gmra.mxu0 %v4566
        %v7159 = vpop.f32.mrf.mxu0
        %v7160 = vadd.f32 %v7111, %v7159
        %v7161 = vpop.f32.mrf.mxu0
        %v7162 = vadd.f32 %v7113, %v7161
        %7163 = vmatmul.bf16.gmra.mxu0 %v4570
        %v7164 = vpop.f32.mrf.mxu0
        %v7165 = vadd.f32 %v7116, %v7164
        %v7166 = vpop.f32.mrf.mxu0
        %v7167 = vadd.f32 %v7118, %v7166
        %7168 = vmatmul.bf16.gmra.mxu0 %v4574
        %v7169 = vpop.f32.mrf.mxu0
        %v7170 = vadd.f32 %v7121, %v7169
        %v7171 = vpop.f32.mrf.mxu0
        %v7172 = vadd.f32 %v7123, %v7171
        %7173 = vmatmul.bf16.gmra.mxu0 %v4578
        %v7174 = vpop.f32.mrf.mxu0
        %v7175 = vadd.f32 %v7126, %v7174
        %v7176 = vpop.f32.mrf.mxu0
        %v7177 = vadd.f32 %v7128, %v7176
        %7178 = vdwg.mxu0
        %7179 = vmatpush.bf16.msra.mxu0 %v5610
        %7180 = vmatpush.bf16.msra.mxu0 %v5603
        %7181 = vmatpush.bf16.msra.mxu0 %v5596
        %7182 = vmatpush.bf16.msra.mxu0 %v5589
        %7183 = vmatpush.bf16.msra.mxu0 %v5582
        %7184 = vmatpush.bf16.msra.mxu0 %v5575
        %7185 = vmatpush.bf16.msra.mxu0 %v5568
        %7186 = vmatpush.bf16.msra.mxu0 %v5561
        %7187 = vmatmul.bf16.gmra.mxu0 %v4547
        %v7188 = vpop.f32.mrf.mxu0
        %v7189 = vadd.f32 %v4843, %v7188
        %v7190 = vpop.f32.mrf.mxu0
        %v7191 = vadd.f32 %v4843, %v7190
        %7192 = vmatmul.bf16.gmra.mxu0 %v4551
        %v7193 = vpop.f32.mrf.mxu0
        %v7194 = vadd.f32 %v4843, %v7193
        %v7195 = vpop.f32.mrf.mxu0
        %v7196 = vadd.f32 %v4843, %v7195
        %7197 = vmatmul.bf16.gmra.mxu0 %v4555
        %v7198 = vpop.f32.mrf.mxu0
        %v7199 = vadd.f32 %v4843, %v7198
        %v7200 = vpop.f32.mrf.mxu0
        %v7201 = vadd.f32 %v4843, %v7200
        %7202 = vmatmul.bf16.gmra.mxu0 %v4559
        %v7203 = vpop.f32.mrf.mxu0
        %v7204 = vadd.f32 %v4843, %v7203
        %v7205 = vpop.f32.mrf.mxu0
        %v7206 = vadd.f32 %v4843, %v7205
        %7207 = vmatmul.bf16.gmra.mxu0 %v4563
        %v7208 = vpop.f32.mrf.mxu0
        %v7209 = vadd.f32 %v4843, %v7208
        %v7210 = vpop.f32.mrf.mxu0
        %v7211 = vadd.f32 %v4843, %v7210
        %7212 = vmatmul.bf16.gmra.mxu0 %v4567
        %v7213 = vpop.f32.mrf.mxu0
        %v7214 = vadd.f32 %v4843, %v7213
        %v7215 = vpop.f32.mrf.mxu0
        %v7216 = vadd.f32 %v4843, %v7215
        %7217 = vmatmul.bf16.gmra.mxu0 %v4571
        %v7218 = vpop.f32.mrf.mxu0
        %v7219 = vadd.f32 %v4843, %v7218
        %v7220 = vpop.f32.mrf.mxu0
        %v7221 = vadd.f32 %v4843, %v7220
        %7222 = vmatmul.bf16.gmra.mxu0 %v4575
        %v7223 = vpop.f32.mrf.mxu0
        %v7224 = vadd.f32 %v4843, %v7223
        %v7225 = vpop.f32.mrf.mxu0
        %v7226 = vadd.f32 %v4843, %v7225
        %7227 = vdwg.mxu0
        %7228 = vmatpush.bf16.msra.mxu0 %v5666
        %7229 = vmatpush.bf16.msra.mxu0 %v5659
        %7230 = vmatpush.bf16.msra.mxu0 %v5652
        %7231 = vmatpush.bf16.msra.mxu0 %v5645
        %7232 = vmatpush.bf16.msra.mxu0 %v5638
        %7233 = vmatpush.bf16.msra.mxu0 %v5631
        %7234 = vmatpush.bf16.msra.mxu0 %v5624
        %7235 = vmatpush.bf16.msra.mxu0 %v5617
        %7236 = vmatmul.bf16.gmra.mxu0 %v4548
        %v7237 = vpop.f32.mrf.mxu0
        %v7238 = vadd.f32 %v7189, %v7237
        %v7239 = vpop.f32.mrf.mxu0
        %v7240 = vadd.f32 %v7191, %v7239
        %7241 = vmatmul.bf16.gmra.mxu0 %v4552
        %v7242 = vpop.f32.mrf.mxu0
        %v7243 = vadd.f32 %v7194, %v7242
        %v7244 = vpop.f32.mrf.mxu0
        %v7245 = vadd.f32 %v7196, %v7244
        %7246 = vmatmul.bf16.gmra.mxu0 %v4556
        %v7247 = vpop.f32.mrf.mxu0
        %v7248 = vadd.f32 %v7199, %v7247
        %v7249 = vpop.f32.mrf.mxu0
        %v7250 = vadd.f32 %v7201, %v7249
        %7251 = vmatmul.bf16.gmra.mxu0 %v4560
        %v7252 = vpop.f32.mrf.mxu0
        %v7253 = vadd.f32 %v7204, %v7252
        %v7254 = vpop.f32.mrf.mxu0
        %v7255 = vadd.f32 %v7206, %v7254
        %7256 = vmatmul.bf16.gmra.mxu0 %v4564
        %v7257 = vpop.f32.mrf.mxu0
        %v7258 = vadd.f32 %v7209, %v7257
        %v7259 = vpop.f32.mrf.mxu0
        %v7260 = vadd.f32 %v7211, %v7259
        %7261 = vmatmul.bf16.gmra.mxu0 %v4568
        %v7262 = vpop.f32.mrf.mxu0
        %v7263 = vadd.f32 %v7214, %v7262
        %v7264 = vpop.f32.mrf.mxu0
        %v7265 = vadd.f32 %v7216, %v7264
        %7266 = vmatmul.bf16.gmra.mxu0 %v4572
        %v7267 = vpop.f32.mrf.mxu0
        %v7268 = vadd.f32 %v7219, %v7267
        %v7269 = vpop.f32.mrf.mxu0
        %v7270 = vadd.f32 %v7221, %v7269
        %7271 = vmatmul.bf16.gmra.mxu0 %v4576
        %v7272 = vpop.f32.mrf.mxu0
        %v7273 = vadd.f32 %v7224, %v7272
        %v7274 = vpop.f32.mrf.mxu0
        %v7275 = vadd.f32 %v7226, %v7274
        %7276 = vdwg.mxu0
        %7277 = vmatpush.bf16.msra.mxu0 %v5722
        %7278 = vmatpush.bf16.msra.mxu0 %v5715
        %7279 = vmatpush.bf16.msra.mxu0 %v5708
        %7280 = vmatpush.bf16.msra.mxu0 %v5701
        %7281 = vmatpush.bf16.msra.mxu0 %v5694
        %7282 = vmatpush.bf16.msra.mxu0 %v5687
        %7283 = vmatpush.bf16.msra.mxu0 %v5680
        %7284 = vmatpush.bf16.msra.mxu0 %v5673
        %7285 = vmatmul.bf16.gmra.mxu0 %v4549
        %v7286 = vpop.f32.mrf.mxu0
        %v7287 = vadd.f32 %v7238, %v7286
        %v7288 = vpop.f32.mrf.mxu0
        %v7289 = vadd.f32 %v7240, %v7288
        %7290 = vmatmul.bf16.gmra.mxu0 %v4553
        %v7291 = vpop.f32.mrf.mxu0
        %v7292 = vadd.f32 %v7243, %v7291
        %v7293 = vpop.f32.mrf.mxu0
        %v7294 = vadd.f32 %v7245, %v7293
        %7295 = vmatmul.bf16.gmra.mxu0 %v4557
        %v7296 = vpop.f32.mrf.mxu0
        %v7297 = vadd.f32 %v7248, %v7296
        %v7298 = vpop.f32.mrf.mxu0
        %v7299 = vadd.f32 %v7250, %v7298
        %7300 = vmatmul.bf16.gmra.mxu0 %v4561
        %v7301 = vpop.f32.mrf.mxu0
        %v7302 = vadd.f32 %v7253, %v7301
        %v7303 = vpop.f32.mrf.mxu0
        %v7304 = vadd.f32 %v7255, %v7303
        %7305 = vmatmul.bf16.gmra.mxu0 %v4565
        %v7306 = vpop.f32.mrf.mxu0
        %v7307 = vadd.f32 %v7258, %v7306
        %v7308 = vpop.f32.mrf.mxu0
        %v7309 = vadd.f32 %v7260, %v7308
        %7310 = vmatmul.bf16.gmra.mxu0 %v4569
        %v7311 = vpop.f32.mrf.mxu0
        %v7312 = vadd.f32 %v7263, %v7311
        %v7313 = vpop.f32.mrf.mxu0
        %v7314 = vadd.f32 %v7265, %v7313
        %7315 = vmatmul.bf16.gmra.mxu0 %v4573
        %v7316 = vpop.f32.mrf.mxu0
        %v7317 = vadd.f32 %v7268, %v7316
        %v7318 = vpop.f32.mrf.mxu0
        %v7319 = vadd.f32 %v7270, %v7318
        %7320 = vmatmul.bf16.gmra.mxu0 %v4577
        %v7321 = vpop.f32.mrf.mxu0
        %v7322 = vadd.f32 %v7273, %v7321
        %v7323 = vpop.f32.mrf.mxu0
        %v7324 = vadd.f32 %v7275, %v7323
        %7325 = vdwg.mxu0
        %7326 = vmatpush.bf16.msra.mxu0 %v5778
        %7327 = vmatpush.bf16.msra.mxu0 %v5771
        %7328 = vmatpush.bf16.msra.mxu0 %v5764
        %7329 = vmatpush.bf16.msra.mxu0 %v5757
        %7330 = vmatpush.bf16.msra.mxu0 %v5750
        %7331 = vmatpush.bf16.msra.mxu0 %v5743
        %7332 = vmatpush.bf16.msra.mxu0 %v5736
        %7333 = vmatpush.bf16.msra.mxu0 %v5729
        %7334 = vmatmul.bf16.gmra.mxu0 %v4550
        %v7335 = vpop.f32.mrf.mxu0
        %v7336 = vadd.f32 %v7287, %v7335
        %v7337 = vpop.f32.mrf.mxu0
        %v7338 = vadd.f32 %v7289, %v7337
        %7339 = vmatmul.bf16.gmra.mxu0 %v4554
        %v7340 = vpop.f32.mrf.mxu0
        %v7341 = vadd.f32 %v7292, %v7340
        %v7342 = vpop.f32.mrf.mxu0
        %v7343 = vadd.f32 %v7294, %v7342
        %7344 = vmatmul.bf16.gmra.mxu0 %v4558
        %v7345 = vpop.f32.mrf.mxu0
        %v7346 = vadd.f32 %v7297, %v7345
        %v7347 = vpop.f32.mrf.mxu0
        %v7348 = vadd.f32 %v7299, %v7347
        %7349 = vmatmul.bf16.gmra.mxu0 %v4562
        %v7350 = vpop.f32.mrf.mxu0
        %v7351 = vadd.f32 %v7302, %v7350
        %v7352 = vpop.f32.mrf.mxu0
        %v7353 = vadd.f32 %v7304, %v7352
        %7354 = vmatmul.bf16.gmra.mxu0 %v4566
        %v7355 = vpop.f32.mrf.mxu0
        %v7356 = vadd.f32 %v7307, %v7355
        %v7357 = vpop.f32.mrf.mxu0
        %v7358 = vadd.f32 %v7309, %v7357
        %7359 = vmatmul.bf16.gmra.mxu0 %v4570
        %v7360 = vpop.f32.mrf.mxu0
        %v7361 = vadd.f32 %v7312, %v7360
        %v7362 = vpop.f32.mrf.mxu0
        %v7363 = vadd.f32 %v7314, %v7362
        %7364 = vmatmul.bf16.gmra.mxu0 %v4574
        %v7365 = vpop.f32.mrf.mxu0
        %v7366 = vadd.f32 %v7317, %v7365
        %v7367 = vpop.f32.mrf.mxu0
        %v7368 = vadd.f32 %v7319, %v7367
        %7369 = vmatmul.bf16.gmra.mxu0 %v4578
        %v7370 = vpop.f32.mrf.mxu0
        %v7371 = vadd.f32 %v7322, %v7370
        %v7372 = vpop.f32.mrf.mxu0
        %v7373 = vadd.f32 %v7324, %v7372
        %7374 = vdwg.mxu0
        %v7375 = vxor.u32 %v6160, 2147483648
        %v7376 = vxor.u32 %v6356, 2147483648
        %v7377 = vxor.u32 %v6552, 2147483648
        %v7378 = vxor.u32 %v6748, 2147483648
        %v7379 = vxor.u32 %v6944, 2147483648
        %v7380 = vxor.u32 %v7140, 2147483648
        %v7381 = vxor.u32 %v7336, 2147483648
        %v7382 = vxor.u32 %v6162, 2147483648
        %v7383 = vxor.u32 %v6358, 2147483648
        %v7384 = vxor.u32 %v6554, 2147483648
        %v7385 = vxor.u32 %v6750, 2147483648
        %v7386 = vxor.u32 %v6946, 2147483648
        %v7387 = vxor.u32 %v7142, 2147483648
        %v7388 = vxor.u32 %v7338, 2147483648
        %v7389 = vxor.u32 %v6165, 2147483648
        %v7390 = vxor.u32 %v6361, 2147483648
        %v7391 = vxor.u32 %v6557, 2147483648
        %v7392 = vxor.u32 %v6753, 2147483648
        %v7393 = vxor.u32 %v6949, 2147483648
        %v7394 = vxor.u32 %v7145, 2147483648
        %v7395 = vxor.u32 %v7341, 2147483648
        %v7396 = vxor.u32 %v6167, 2147483648
        %v7397 = vxor.u32 %v6363, 2147483648
        %v7398 = vxor.u32 %v6559, 2147483648
        %v7399 = vxor.u32 %v6755, 2147483648
        %v7400 = vxor.u32 %v6951, 2147483648
        %v7401 = vxor.u32 %v7147, 2147483648
        %v7402 = vxor.u32 %v7343, 2147483648
        %v7403 = vxor.u32 %v6170, 2147483648
        %v7404 = vxor.u32 %v6366, 2147483648
        %v7405 = vxor.u32 %v6562, 2147483648
        %v7406 = vxor.u32 %v6758, 2147483648
        %v7407 = vxor.u32 %v6954, 2147483648
        %v7408 = vxor.u32 %v7150, 2147483648
        %v7409 = vxor.u32 %v7346, 2147483648
        %v7410 = vxor.u32 %v6172, 2147483648
        %v7411 = vxor.u32 %v6368, 2147483648
        %v7412 = vxor.u32 %v6564, 2147483648
        %v7413 = vxor.u32 %v6760, 2147483648
        %v7414 = vxor.u32 %v6956, 2147483648
        %v7415 = vxor.u32 %v7152, 2147483648
        %v7416 = vxor.u32 %v7348, 2147483648
        %v7417 = vxor.u32 %v6175, 2147483648
        %v7418 = vxor.u32 %v6371, 2147483648
        %v7419 = vxor.u32 %v6567, 2147483648
        %v7420 = vxor.u32 %v6763, 2147483648
        %v7421 = vxor.u32 %v6959, 2147483648
        %v7422 = vxor.u32 %v7155, 2147483648
        %v7423 = vxor.u32 %v7351, 2147483648
        %v7424 = vxor.u32 %v6177, 2147483648
        %v7425 = vxor.u32 %v6373, 2147483648
        %v7426 = vxor.u32 %v6569, 2147483648
        %v7427 = vxor.u32 %v6765, 2147483648
        %v7428 = vxor.u32 %v6961, 2147483648
        %v7429 = vxor.u32 %v7157, 2147483648
        %v7430 = vxor.u32 %v7353, 2147483648
        %v7431 = vxor.u32 %v6180, 2147483648
        %v7432 = vxor.u32 %v6376, 2147483648
        %v7433 = vxor.u32 %v6572, 2147483648
        %v7434 = vxor.u32 %v6768, 2147483648
        %v7435 = vxor.u32 %v6964, 2147483648
        %v7436 = vxor.u32 %v7160, 2147483648
        %v7437 = vxor.u32 %v7356, 2147483648
        %v7438 = vxor.u32 %v6182, 2147483648
        %v7439 = vxor.u32 %v6378, 2147483648
        %v7440 = vxor.u32 %v6574, 2147483648
        %v7441 = vxor.u32 %v6770, 2147483648
        %v7442 = vxor.u32 %v6966, 2147483648
        %v7443 = vxor.u32 %v7162, 2147483648
        %v7444 = vxor.u32 %v7358, 2147483648
        %v7445 = vxor.u32 %v6185, 2147483648
        %v7446 = vxor.u32 %v6381, 2147483648
        %v7447 = vxor.u32 %v6577, 2147483648
        %v7448 = vxor.u32 %v6773, 2147483648
        %v7449 = vxor.u32 %v6969, 2147483648
        %v7450 = vxor.u32 %v7165, 2147483648
        %v7451 = vxor.u32 %v7361, 2147483648
        %v7452 = vxor.u32 %v6187, 2147483648
        %v7453 = vxor.u32 %v6383, 2147483648
        %v7454 = vxor.u32 %v6579, 2147483648
        %v7455 = vxor.u32 %v6775, 2147483648
        %v7456 = vxor.u32 %v6971, 2147483648
        %v7457 = vxor.u32 %v7167, 2147483648
        %v7458 = vxor.u32 %v7363, 2147483648
        %v7459 = vxor.u32 %v6190, 2147483648
        %v7460 = vxor.u32 %v6386, 2147483648
        %v7461 = vxor.u32 %v6582, 2147483648
        %v7462 = vxor.u32 %v6778, 2147483648
        %v7463 = vxor.u32 %v6974, 2147483648
        %v7464 = vxor.u32 %v7170, 2147483648
        %v7465 = vxor.u32 %v7366, 2147483648
        %v7466 = vxor.u32 %v6192, 2147483648
        %v7467 = vxor.u32 %v6388, 2147483648
        %v7468 = vxor.u32 %v6584, 2147483648
        %v7469 = vxor.u32 %v6780, 2147483648
        %v7470 = vxor.u32 %v6976, 2147483648
        %v7471 = vxor.u32 %v7172, 2147483648
        %v7472 = vxor.u32 %v7368, 2147483648
        %v7473 = vxor.u32 %v6195, 2147483648
        %v7474 = vxor.u32 %v6391, 2147483648
        %v7475 = vxor.u32 %v6587, 2147483648
        %v7476 = vxor.u32 %v6783, 2147483648
        %v7477 = vxor.u32 %v6979, 2147483648
        %v7478 = vxor.u32 %v7175, 2147483648
        %v7479 = vxor.u32 %v7371, 2147483648
        %v7480 = vxor.u32 %v6197, 2147483648
        %v7481 = vxor.u32 %v6393, 2147483648
        %v7482 = vxor.u32 %v6589, 2147483648
        %v7483 = vxor.u32 %v6785, 2147483648
        %v7484 = vxor.u32 %v6981, 2147483648
        %v7485 = vxor.u32 %v7177, 2147483648
        %v7486 = vxor.u32 %v7373, 2147483648
        %v7487 = vmul.f32 %v7375, 1.442695
        %v7488 = vpow.pop %v7487
        %v7489 = vmul.f32 %v7376, 1.442695
        %v7490 = vpow.pop %v7489
        %v7491 = vmul.f32 %v7377, 1.442695
        %v7492 = vpow.pop %v7491
        %v7493 = vmul.f32 %v7378, 1.442695
        %v7494 = vpow.pop %v7493
        %v7495 = vmul.f32 %v7379, 1.442695
        %v7496 = vpow.pop %v7495
        %v7497 = vmul.f32 %v7380, 1.442695
        %v7498 = vpow.pop %v7497
        %v7499 = vmul.f32 %v7381, 1.442695
        %v7500 = vpow.pop %v7499
        %v7501 = vmul.f32 %v7382, 1.442695
        %v7502 = vpow.pop %v7501
        %v7503 = vmul.f32 %v7383, 1.442695
        %v7504 = vpow.pop %v7503
        %v7505 = vmul.f32 %v7384, 1.442695
        %v7506 = vpow.pop %v7505
        %v7507 = vmul.f32 %v7385, 1.442695
        %v7508 = vpow.pop %v7507
        %v7509 = vmul.f32 %v7386, 1.442695
        %v7510 = vpow.pop %v7509
        %v7511 = vmul.f32 %v7387, 1.442695
        %v7512 = vpow.pop %v7511
        %v7513 = vmul.f32 %v7388, 1.442695
        %v7514 = vpow.pop %v7513
        %v7515 = vmul.f32 %v7389, 1.442695
        %v7516 = vpow.pop %v7515
        %v7517 = vmul.f32 %v7390, 1.442695
        %v7518 = vpow.pop %v7517
        %v7519 = vmul.f32 %v7391, 1.442695
        %v7520 = vpow.pop %v7519
        %v7521 = vmul.f32 %v7392, 1.442695
        %v7522 = vpow.pop %v7521
        %v7523 = vmul.f32 %v7393, 1.442695
        %v7524 = vpow.pop %v7523
        %v7525 = vmul.f32 %v7394, 1.442695
        %v7526 = vpow.pop %v7525
        %v7527 = vmul.f32 %v7395, 1.442695
        %v7528 = vpow.pop %v7527
        %v7529 = vmul.f32 %v7396, 1.442695
        %v7530 = vpow.pop %v7529
        %v7531 = vmul.f32 %v7397, 1.442695
        %v7532 = vpow.pop %v7531
        %v7533 = vmul.f32 %v7398, 1.442695
        %v7534 = vpow.pop %v7533
        %v7535 = vmul.f32 %v7399, 1.442695
        %v7536 = vpow.pop %v7535
        %v7537 = vmul.f32 %v7400, 1.442695
        %v7538 = vpow.pop %v7537
        %v7539 = vmul.f32 %v7401, 1.442695
        %v7540 = vpow.pop %v7539
        %v7541 = vmul.f32 %v7402, 1.442695
        %v7542 = vpow.pop %v7541
        %v7543 = vmul.f32 %v7403, 1.442695
        %v7544 = vpow.pop %v7543
        %v7545 = vmul.f32 %v7404, 1.442695
        %v7546 = vpow.pop %v7545
        %v7547 = vmul.f32 %v7405, 1.442695
        %v7548 = vpow.pop %v7547
        %v7549 = vmul.f32 %v7406, 1.442695
        %v7550 = vpow.pop %v7549
        %v7551 = vmul.f32 %v7407, 1.442695
        %v7552 = vpow.pop %v7551
        %v7553 = vmul.f32 %v7408, 1.442695
        %v7554 = vpow.pop %v7553
        %v7555 = vmul.f32 %v7409, 1.442695
        %v7556 = vpow.pop %v7555
        %v7557 = vmul.f32 %v7410, 1.442695
        %v7558 = vpow.pop %v7557
        %v7559 = vmul.f32 %v7411, 1.442695
        %v7560 = vpow.pop %v7559
        %v7561 = vmul.f32 %v7412, 1.442695
        %v7562 = vpow.pop %v7561
        %v7563 = vmul.f32 %v7413, 1.442695
        %v7564 = vpow.pop %v7563
        %v7565 = vmul.f32 %v7414, 1.442695
        %v7566 = vpow.pop %v7565
        %v7567 = vmul.f32 %v7415, 1.442695
        %v7568 = vpow.pop %v7567
        %v7569 = vmul.f32 %v7416, 1.442695
        %v7570 = vpow.pop %v7569
        %v7571 = vmul.f32 %v7417, 1.442695
        %v7572 = vpow.pop %v7571
        %v7573 = vmul.f32 %v7418, 1.442695
        %v7574 = vpow.pop %v7573
        %v7575 = vmul.f32 %v7419, 1.442695
        %v7576 = vpow.pop %v7575
        %v7577 = vmul.f32 %v7420, 1.442695
        %v7578 = vpow.pop %v7577
        %v7579 = vmul.f32 %v7421, 1.442695
        %v7580 = vpow.pop %v7579
        %v7581 = vmul.f32 %v7422, 1.442695
        %v7582 = vpow.pop %v7581
        %v7583 = vmul.f32 %v7423, 1.442695
        %v7584 = vpow.pop %v7583
        %v7585 = vmul.f32 %v7424, 1.442695
        %v7586 = vpow.pop %v7585
        %v7587 = vmul.f32 %v7425, 1.442695
        %v7588 = vpow.pop %v7587
        %v7589 = vmul.f32 %v7426, 1.442695
        %v7590 = vpow.pop %v7589
        %v7591 = vmul.f32 %v7427, 1.442695
        %v7592 = vpow.pop %v7591
        %v7593 = vmul.f32 %v7428, 1.442695
        %v7594 = vpow.pop %v7593
        %v7595 = vmul.f32 %v7429, 1.442695
        %v7596 = vpow.pop %v7595
        %v7597 = vmul.f32 %v7430, 1.442695
        %v7598 = vpow.pop %v7597
        %v7599 = vmul.f32 %v7431, 1.442695
        %v7600 = vpow.pop %v7599
        %v7601 = vmul.f32 %v7432, 1.442695
        %v7602 = vpow.pop %v7601
        %v7603 = vmul.f32 %v7433, 1.442695
        %v7604 = vpow.pop %v7603
        %v7605 = vmul.f32 %v7434, 1.442695
        %v7606 = vpow.pop %v7605
        %v7607 = vmul.f32 %v7435, 1.442695
        %v7608 = vpow.pop %v7607
        %v7609 = vmul.f32 %v7436, 1.442695
        %v7610 = vpow.pop %v7609
        %v7611 = vmul.f32 %v7437, 1.442695
        %v7612 = vpow.pop %v7611
        %v7613 = vmul.f32 %v7438, 1.442695
        %v7614 = vpow.pop %v7613
        %v7615 = vmul.f32 %v7439, 1.442695
        %v7616 = vpow.pop %v7615
        %v7617 = vmul.f32 %v7440, 1.442695
        %v7618 = vpow.pop %v7617
        %v7619 = vmul.f32 %v7441, 1.442695
        %v7620 = vpow.pop %v7619
        %v7621 = vmul.f32 %v7442, 1.442695
        %v7622 = vpow.pop %v7621
        %v7623 = vmul.f32 %v7443, 1.442695
        %v7624 = vpow.pop %v7623
        %v7625 = vmul.f32 %v7444, 1.442695
        %v7626 = vpow.pop %v7625
        %v7627 = vmul.f32 %v7445, 1.442695
        %v7628 = vpow.pop %v7627
        %v7629 = vmul.f32 %v7446, 1.442695
        %v7630 = vpow.pop %v7629
        %v7631 = vmul.f32 %v7447, 1.442695
        %v7632 = vpow.pop %v7631
        %v7633 = vmul.f32 %v7448, 1.442695
        %v7634 = vpow.pop %v7633
        %v7635 = vmul.f32 %v7449, 1.442695
        %v7636 = vpow.pop %v7635
        %v7637 = vmul.f32 %v7450, 1.442695
        %v7638 = vpow.pop %v7637
        %v7639 = vmul.f32 %v7451, 1.442695
        %v7640 = vpow.pop %v7639
        %v7641 = vmul.f32 %v7452, 1.442695
        %v7642 = vpow.pop %v7641
        %v7643 = vmul.f32 %v7453, 1.442695
        %v7644 = vpow.pop %v7643
        %v7645 = vmul.f32 %v7454, 1.442695
        %v7646 = vpow.pop %v7645
        %v7647 = vmul.f32 %v7455, 1.442695
        %v7648 = vpow.pop %v7647
        %v7649 = vmul.f32 %v7456, 1.442695
        %v7650 = vpow.pop %v7649
        %v7651 = vmul.f32 %v7457, 1.442695
        %v7652 = vpow.pop %v7651
        %v7653 = vmul.f32 %v7458, 1.442695
        %v7654 = vpow.pop %v7653
        %v7655 = vmul.f32 %v7459, 1.442695
        %v7656 = vpow.pop %v7655
        %v7657 = vmul.f32 %v7460, 1.442695
        %v7658 = vpow.pop %v7657
        %v7659 = vmul.f32 %v7461, 1.442695
        %v7660 = vpow.pop %v7659
        %v7661 = vmul.f32 %v7462, 1.442695
        %v7662 = vpow.pop %v7661
        %v7663 = vmul.f32 %v7463, 1.442695
        %v7664 = vpow.pop %v7663
        %v7665 = vmul.f32 %v7464, 1.442695
        %v7666 = vpow.pop %v7665
        %v7667 = vmul.f32 %v7465, 1.442695
        %v7668 = vpow.pop %v7667
        %v7669 = vmul.f32 %v7466, 1.442695
        %v7670 = vpow.pop %v7669
        %v7671 = vmul.f32 %v7467, 1.442695
        %v7672 = vpow.pop %v7671
        %v7673 = vmul.f32 %v7468, 1.442695
        %v7674 = vpow.pop %v7673
        %v7675 = vmul.f32 %v7469, 1.442695
        %v7676 = vpow.pop %v7675
        %v7677 = vmul.f32 %v7470, 1.442695
        %v7678 = vpow.pop %v7677
        %v7679 = vmul.f32 %v7471, 1.442695
        %v7680 = vpow.pop %v7679
        %v7681 = vmul.f32 %v7472, 1.442695
        %v7682 = vpow.pop %v7681
        %v7683 = vmul.f32 %v7473, 1.442695
        %v7684 = vpow.pop %v7683
        %v7685 = vmul.f32 %v7474, 1.442695
        %v7686 = vpow.pop %v7685
        %v7687 = vmul.f32 %v7475, 1.442695
        %v7688 = vpow.pop %v7687
        %v7689 = vmul.f32 %v7476, 1.442695
        %v7690 = vpow.pop %v7689
        %v7691 = vmul.f32 %v7477, 1.442695
        %v7692 = vpow.pop %v7691
        %v7693 = vmul.f32 %v7478, 1.442695
        %v7694 = vpow.pop %v7693
        %v7695 = vmul.f32 %v7479, 1.442695
        %v7696 = vpow.pop %v7695
        %v7697 = vmul.f32 %v7480, 1.442695
        %v7698 = vpow.pop %v7697
        %v7699 = vmul.f32 %v7481, 1.442695
        %v7700 = vpow.pop %v7699
        %v7701 = vmul.f32 %v7482, 1.442695
        %v7702 = vpow.pop %v7701
        %v7703 = vmul.f32 %v7483, 1.442695
        %v7704 = vpow.pop %v7703
        %v7705 = vmul.f32 %v7484, 1.442695
        %v7706 = vpow.pop %v7705
        %v7707 = vmul.f32 %v7485, 1.442695
        %v7708 = vpow.pop %v7707
        %v7709 = vmul.f32 %v7486, 1.442695
        %v7710 = vpow.pop %v7709
        %v7711 = vadd.f32 %v7488, 1.0
        %v7712 = vadd.f32 %v7490, 1.0
        %v7713 = vadd.f32 %v7492, 1.0
        %v7714 = vadd.f32 %v7494, 1.0
        %v7715 = vadd.f32 %v7496, 1.0
        %v7716 = vadd.f32 %v7498, 1.0
        %v7717 = vadd.f32 %v7500, 1.0
        %v7718 = vadd.f32 %v7502, 1.0
        %v7719 = vadd.f32 %v7504, 1.0
        %v7720 = vadd.f32 %v7506, 1.0
        %v7721 = vadd.f32 %v7508, 1.0
        %v7722 = vadd.f32 %v7510, 1.0
        %v7723 = vadd.f32 %v7512, 1.0
        %v7724 = vadd.f32 %v7514, 1.0
        %v7725 = vadd.f32 %v7516, 1.0
        %v7726 = vadd.f32 %v7518, 1.0
        %v7727 = vadd.f32 %v7520, 1.0
        %v7728 = vadd.f32 %v7522, 1.0
        %v7729 = vadd.f32 %v7524, 1.0
        %v7730 = vadd.f32 %v7526, 1.0
        %v7731 = vadd.f32 %v7528, 1.0
        %v7732 = vadd.f32 %v7530, 1.0
        %v7733 = vadd.f32 %v7532, 1.0
        %v7734 = vadd.f32 %v7534, 1.0
        %v7735 = vadd.f32 %v7536, 1.0
        %v7736 = vadd.f32 %v7538, 1.0
        %v7737 = vadd.f32 %v7540, 1.0
        %v7738 = vadd.f32 %v7542, 1.0
        %v7739 = vadd.f32 %v7544, 1.0
        %v7740 = vadd.f32 %v7546, 1.0
        %v7741 = vadd.f32 %v7548, 1.0
        %v7742 = vadd.f32 %v7550, 1.0
        %v7743 = vadd.f32 %v7552, 1.0
        %v7744 = vadd.f32 %v7554, 1.0
        %v7745 = vadd.f32 %v7556, 1.0
        %v7746 = vadd.f32 %v7558, 1.0
        %v7747 = vadd.f32 %v7560, 1.0
        %v7748 = vadd.f32 %v7562, 1.0
        %v7749 = vadd.f32 %v7564, 1.0
        %v7750 = vadd.f32 %v7566, 1.0
        %v7751 = vadd.f32 %v7568, 1.0
        %v7752 = vadd.f32 %v7570, 1.0
        %v7753 = vadd.f32 %v7572, 1.0
        %v7754 = vadd.f32 %v7574, 1.0
        %v7755 = vadd.f32 %v7576, 1.0
        %v7756 = vadd.f32 %v7578, 1.0
        %v7757 = vadd.f32 %v7580, 1.0
        %v7758 = vadd.f32 %v7582, 1.0
        %v7759 = vadd.f32 %v7584, 1.0
        %v7760 = vadd.f32 %v7586, 1.0
        %v7761 = vadd.f32 %v7588, 1.0
        %v7762 = vadd.f32 %v7590, 1.0
        %v7763 = vadd.f32 %v7592, 1.0
        %v7764 = vadd.f32 %v7594, 1.0
        %v7765 = vadd.f32 %v7596, 1.0
        %v7766 = vadd.f32 %v7598, 1.0
        %v7767 = vadd.f32 %v7600, 1.0
        %v7768 = vadd.f32 %v7602, 1.0
        %v7769 = vadd.f32 %v7604, 1.0
        %v7770 = vadd.f32 %v7606, 1.0
        %v7771 = vadd.f32 %v7608, 1.0
        %v7772 = vadd.f32 %v7610, 1.0
        %v7773 = vadd.f32 %v7612, 1.0
        %v7774 = vadd.f32 %v7614, 1.0
        %v7775 = vadd.f32 %v7616, 1.0
        %v7776 = vadd.f32 %v7618, 1.0
        %v7777 = vadd.f32 %v7620, 1.0
        %v7778 = vadd.f32 %v7622, 1.0
        %v7779 = vadd.f32 %v7624, 1.0
        %v7780 = vadd.f32 %v7626, 1.0
        %v7781 = vadd.f32 %v7628, 1.0
        %v7782 = vadd.f32 %v7630, 1.0
        %v7783 = vadd.f32 %v7632, 1.0
        %v7784 = vadd.f32 %v7634, 1.0
        %v7785 = vadd.f32 %v7636, 1.0
        %v7786 = vadd.f32 %v7638, 1.0
        %v7787 = vadd.f32 %v7640, 1.0
        %v7788 = vadd.f32 %v7642, 1.0
        %v7789 = vadd.f32 %v7644, 1.0
        %v7790 = vadd.f32 %v7646, 1.0
        %v7791 = vadd.f32 %v7648, 1.0
        %v7792 = vadd.f32 %v7650, 1.0
        %v7793 = vadd.f32 %v7652, 1.0
        %v7794 = vadd.f32 %v7654, 1.0
        %v7795 = vadd.f32 %v7656, 1.0
        %v7796 = vadd.f32 %v7658, 1.0
        %v7797 = vadd.f32 %v7660, 1.0
        %v7798 = vadd.f32 %v7662, 1.0
        %v7799 = vadd.f32 %v7664, 1.0
        %v7800 = vadd.f32 %v7666, 1.0
        %v7801 = vadd.f32 %v7668, 1.0
        %v7802 = vadd.f32 %v7670, 1.0
        %v7803 = vadd.f32 %v7672, 1.0
        %v7804 = vadd.f32 %v7674, 1.0
        %v7805 = vadd.f32 %v7676, 1.0
        %v7806 = vadd.f32 %v7678, 1.0
        %v7807 = vadd.f32 %v7680, 1.0
        %v7808 = vadd.f32 %v7682, 1.0
        %v7809 = vadd.f32 %v7684, 1.0
        %v7810 = vadd.f32 %v7686, 1.0
        %v7811 = vadd.f32 %v7688, 1.0
        %v7812 = vadd.f32 %v7690, 1.0
        %v7813 = vadd.f32 %v7692, 1.0
        %v7814 = vadd.f32 %v7694, 1.0
        %v7815 = vadd.f32 %v7696, 1.0
        %v7816 = vadd.f32 %v7698, 1.0
        %v7817 = vadd.f32 %v7700, 1.0
        %v7818 = vadd.f32 %v7702, 1.0
        %v7819 = vadd.f32 %v7704, 1.0
        %v7820 = vadd.f32 %v7706, 1.0
        %v7821 = vadd.f32 %v7708, 1.0
        %v7822 = vadd.f32 %v7710, 1.0
        %v7823 = vrcp.pop %v7711
        %v7824 = vmul.f32 %v7711, %v7823
        %v7825 = vsub.f32 1.0, %v7824
        %v7826 = vmul.f32 %v7823, %v7825
        %v7827 = vadd.f32 %v7823, %v7826
        %vm7828 = vweird.f32 %v7711
        %vm7829 = vweird.f32 %v7823
        %vm7830 = vmor %vm7828, %vm7829
        %v7831 = vsel %vm7830, %v7823, %v7827
        %v7832 = vand.u32 2147483647, %v7711
        %vm7833 = vcmp.eq.f32.partialorder %v7832, 8.507059e+37
        %v7834 = vand.u32 %v7711, 2147483648
        %v7835 = vor.u32 1.1754944e-38, %v7834
        %v7836 = vsel %vm7833, %v7835, %v7831
        %v7837 = vmul.f32 1.0, %v7836
        %v7838 = vrcp.pop %v7712
        %v7839 = vmul.f32 %v7712, %v7838
        %v7840 = vsub.f32 1.0, %v7839
        %v7841 = vmul.f32 %v7838, %v7840
        %v7842 = vadd.f32 %v7838, %v7841
        %vm7843 = vweird.f32 %v7712
        %vm7844 = vweird.f32 %v7838
        %vm7845 = vmor %vm7843, %vm7844
        %v7846 = vsel %vm7845, %v7838, %v7842
        %v7847 = vand.u32 2147483647, %v7712
        %vm7848 = vcmp.eq.f32.partialorder %v7847, 8.507059e+37
        %v7849 = vand.u32 %v7712, 2147483648
        %v7850 = vor.u32 1.1754944e-38, %v7849
        %v7851 = vsel %vm7848, %v7850, %v7846
        %v7852 = vmul.f32 1.0, %v7851
        %v7853 = vrcp.pop %v7713
        %v7854 = vmul.f32 %v7713, %v7853
        %v7855 = vsub.f32 1.0, %v7854
        %v7856 = vmul.f32 %v7853, %v7855
        %v7857 = vadd.f32 %v7853, %v7856
        %vm7858 = vweird.f32 %v7713
        %vm7859 = vweird.f32 %v7853
        %vm7860 = vmor %vm7858, %vm7859
        %v7861 = vsel %vm7860, %v7853, %v7857
        %v7862 = vand.u32 2147483647, %v7713
        %vm7863 = vcmp.eq.f32.partialorder %v7862, 8.507059e+37
        %v7864 = vand.u32 %v7713, 2147483648
        %v7865 = vor.u32 1.1754944e-38, %v7864
        %v7866 = vsel %vm7863, %v7865, %v7861
        %v7867 = vmul.f32 1.0, %v7866
        %v7868 = vrcp.pop %v7714
        %v7869 = vmul.f32 %v7714, %v7868
        %v7870 = vsub.f32 1.0, %v7869
        %v7871 = vmul.f32 %v7868, %v7870
        %v7872 = vadd.f32 %v7868, %v7871
        %vm7873 = vweird.f32 %v7714
        %vm7874 = vweird.f32 %v7868
        %vm7875 = vmor %vm7873, %vm7874
        %v7876 = vsel %vm7875, %v7868, %v7872
        %v7877 = vand.u32 2147483647, %v7714
        %vm7878 = vcmp.eq.f32.partialorder %v7877, 8.507059e+37
        %v7879 = vand.u32 %v7714, 2147483648
        %v7880 = vor.u32 1.1754944e-38, %v7879
        %v7881 = vsel %vm7878, %v7880, %v7876
        %v7882 = vmul.f32 1.0, %v7881
        %v7883 = vrcp.pop %v7715
        %v7884 = vmul.f32 %v7715, %v7883
        %v7885 = vsub.f32 1.0, %v7884
        %v7886 = vmul.f32 %v7883, %v7885
        %v7887 = vadd.f32 %v7883, %v7886
        %vm7888 = vweird.f32 %v7715
        %vm7889 = vweird.f32 %v7883
        %vm7890 = vmor %vm7888, %vm7889
        %v7891 = vsel %vm7890, %v7883, %v7887
        %v7892 = vand.u32 2147483647, %v7715
        %vm7893 = vcmp.eq.f32.partialorder %v7892, 8.507059e+37
        %v7894 = vand.u32 %v7715, 2147483648
        %v7895 = vor.u32 1.1754944e-38, %v7894
        %v7896 = vsel %vm7893, %v7895, %v7891
        %v7897 = vmul.f32 1.0, %v7896
        %v7898 = vrcp.pop %v7716
        %v7899 = vmul.f32 %v7716, %v7898
        %v7900 = vsub.f32 1.0, %v7899
        %v7901 = vmul.f32 %v7898, %v7900
        %v7902 = vadd.f32 %v7898, %v7901
        %vm7903 = vweird.f32 %v7716
        %vm7904 = vweird.f32 %v7898
        %vm7905 = vmor %vm7903, %vm7904
        %v7906 = vsel %vm7905, %v7898, %v7902
        %v7907 = vand.u32 2147483647, %v7716
        %vm7908 = vcmp.eq.f32.partialorder %v7907, 8.507059e+37
        %v7909 = vand.u32 %v7716, 2147483648
        %v7910 = vor.u32 1.1754944e-38, %v7909
        %v7911 = vsel %vm7908, %v7910, %v7906
        %v7912 = vmul.f32 1.0, %v7911
        %v7913 = vrcp.pop %v7717
        %v7914 = vmul.f32 %v7717, %v7913
        %v7915 = vsub.f32 1.0, %v7914
        %v7916 = vmul.f32 %v7913, %v7915
        %v7917 = vadd.f32 %v7913, %v7916
        %vm7918 = vweird.f32 %v7717
        %vm7919 = vweird.f32 %v7913
        %vm7920 = vmor %vm7918, %vm7919
        %v7921 = vsel %vm7920, %v7913, %v7917
        %v7922 = vand.u32 2147483647, %v7717
        %vm7923 = vcmp.eq.f32.partialorder %v7922, 8.507059e+37
        %v7924 = vand.u32 %v7717, 2147483648
        %v7925 = vor.u32 1.1754944e-38, %v7924
        %v7926 = vsel %vm7923, %v7925, %v7921
        %v7927 = vmul.f32 1.0, %v7926
        %v7928 = vrcp.pop %v7718
        %v7929 = vmul.f32 %v7718, %v7928
        %v7930 = vsub.f32 1.0, %v7929
        %v7931 = vmul.f32 %v7928, %v7930
        %v7932 = vadd.f32 %v7928, %v7931
        %vm7933 = vweird.f32 %v7718
        %vm7934 = vweird.f32 %v7928
        %vm7935 = vmor %vm7933, %vm7934
        %v7936 = vsel %vm7935, %v7928, %v7932
        %v7937 = vand.u32 2147483647, %v7718
        %vm7938 = vcmp.eq.f32.partialorder %v7937, 8.507059e+37
        %v7939 = vand.u32 %v7718, 2147483648
        %v7940 = vor.u32 1.1754944e-38, %v7939
        %v7941 = vsel %vm7938, %v7940, %v7936
        %v7942 = vmul.f32 1.0, %v7941
        %v7943 = vrcp.pop %v7719
        %v7944 = vmul.f32 %v7719, %v7943
        %v7945 = vsub.f32 1.0, %v7944
        %v7946 = vmul.f32 %v7943, %v7945
        %v7947 = vadd.f32 %v7943, %v7946
        %vm7948 = vweird.f32 %v7719
        %vm7949 = vweird.f32 %v7943
        %vm7950 = vmor %vm7948, %vm7949
        %v7951 = vsel %vm7950, %v7943, %v7947
        %v7952 = vand.u32 2147483647, %v7719
        %vm7953 = vcmp.eq.f32.partialorder %v7952, 8.507059e+37
        %v7954 = vand.u32 %v7719, 2147483648
        %v7955 = vor.u32 1.1754944e-38, %v7954
        %v7956 = vsel %vm7953, %v7955, %v7951
        %v7957 = vmul.f32 1.0, %v7956
        %v7958 = vrcp.pop %v7720
        %v7959 = vmul.f32 %v7720, %v7958
        %v7960 = vsub.f32 1.0, %v7959
        %v7961 = vmul.f32 %v7958, %v7960
        %v7962 = vadd.f32 %v7958, %v7961
        %vm7963 = vweird.f32 %v7720
        %vm7964 = vweird.f32 %v7958
        %vm7965 = vmor %vm7963, %vm7964
        %v7966 = vsel %vm7965, %v7958, %v7962
        %v7967 = vand.u32 2147483647, %v7720
        %vm7968 = vcmp.eq.f32.partialorder %v7967, 8.507059e+37
        %v7969 = vand.u32 %v7720, 2147483648
        %v7970 = vor.u32 1.1754944e-38, %v7969
        %v7971 = vsel %vm7968, %v7970, %v7966
        %v7972 = vmul.f32 1.0, %v7971
        %v7973 = vrcp.pop %v7721
        %v7974 = vmul.f32 %v7721, %v7973
        %v7975 = vsub.f32 1.0, %v7974
        %v7976 = vmul.f32 %v7973, %v7975
        %v7977 = vadd.f32 %v7973, %v7976
        %vm7978 = vweird.f32 %v7721
        %vm7979 = vweird.f32 %v7973
        %vm7980 = vmor %vm7978, %vm7979
        %v7981 = vsel %vm7980, %v7973, %v7977
        %v7982 = vand.u32 2147483647, %v7721
        %vm7983 = vcmp.eq.f32.partialorder %v7982, 8.507059e+37
        %v7984 = vand.u32 %v7721, 2147483648
        %v7985 = vor.u32 1.1754944e-38, %v7984
        %v7986 = vsel %vm7983, %v7985, %v7981
        %v7987 = vmul.f32 1.0, %v7986
        %v7988 = vrcp.pop %v7722
        %v7989 = vmul.f32 %v7722, %v7988
        %v7990 = vsub.f32 1.0, %v7989
        %v7991 = vmul.f32 %v7988, %v7990
        %v7992 = vadd.f32 %v7988, %v7991
        %vm7993 = vweird.f32 %v7722
        %vm7994 = vweird.f32 %v7988
        %vm7995 = vmor %vm7993, %vm7994
        %v7996 = vsel %vm7995, %v7988, %v7992
        %v7997 = vand.u32 2147483647, %v7722
        %vm7998 = vcmp.eq.f32.partialorder %v7997, 8.507059e+37
        %v7999 = vand.u32 %v7722, 2147483648
        %v8000 = vor.u32 1.1754944e-38, %v7999
        %v8001 = vsel %vm7998, %v8000, %v7996
        %v8002 = vmul.f32 1.0, %v8001
        %v8003 = vrcp.pop %v7723
        %v8004 = vmul.f32 %v7723, %v8003
        %v8005 = vsub.f32 1.0, %v8004
        %v8006 = vmul.f32 %v8003, %v8005
        %v8007 = vadd.f32 %v8003, %v8006
        %vm8008 = vweird.f32 %v7723
        %vm8009 = vweird.f32 %v8003
        %vm8010 = vmor %vm8008, %vm8009
        %v8011 = vsel %vm8010, %v8003, %v8007
        %v8012 = vand.u32 2147483647, %v7723
        %vm8013 = vcmp.eq.f32.partialorder %v8012, 8.507059e+37
        %v8014 = vand.u32 %v7723, 2147483648
        %v8015 = vor.u32 1.1754944e-38, %v8014
        %v8016 = vsel %vm8013, %v8015, %v8011
        %v8017 = vmul.f32 1.0, %v8016
        %v8018 = vrcp.pop %v7724
        %v8019 = vmul.f32 %v7724, %v8018
        %v8020 = vsub.f32 1.0, %v8019
        %v8021 = vmul.f32 %v8018, %v8020
        %v8022 = vadd.f32 %v8018, %v8021
        %vm8023 = vweird.f32 %v7724
        %vm8024 = vweird.f32 %v8018
        %vm8025 = vmor %vm8023, %vm8024
        %v8026 = vsel %vm8025, %v8018, %v8022
        %v8027 = vand.u32 2147483647, %v7724
        %vm8028 = vcmp.eq.f32.partialorder %v8027, 8.507059e+37
        %v8029 = vand.u32 %v7724, 2147483648
        %v8030 = vor.u32 1.1754944e-38, %v8029
        %v8031 = vsel %vm8028, %v8030, %v8026
        %v8032 = vmul.f32 1.0, %v8031
        %v8033 = vrcp.pop %v7725
        %v8034 = vmul.f32 %v7725, %v8033
        %v8035 = vsub.f32 1.0, %v8034
        %v8036 = vmul.f32 %v8033, %v8035
        %v8037 = vadd.f32 %v8033, %v8036
        %vm8038 = vweird.f32 %v7725
        %vm8039 = vweird.f32 %v8033
        %vm8040 = vmor %vm8038, %vm8039
        %v8041 = vsel %vm8040, %v8033, %v8037
        %v8042 = vand.u32 2147483647, %v7725
        %vm8043 = vcmp.eq.f32.partialorder %v8042, 8.507059e+37
        %v8044 = vand.u32 %v7725, 2147483648
        %v8045 = vor.u32 1.1754944e-38, %v8044
        %v8046 = vsel %vm8043, %v8045, %v8041
        %v8047 = vmul.f32 1.0, %v8046
        %v8048 = vrcp.pop %v7726
        %v8049 = vmul.f32 %v7726, %v8048
        %v8050 = vsub.f32 1.0, %v8049
        %v8051 = vmul.f32 %v8048, %v8050
        %v8052 = vadd.f32 %v8048, %v8051
        %vm8053 = vweird.f32 %v7726
        %vm8054 = vweird.f32 %v8048
        %vm8055 = vmor %vm8053, %vm8054
        %v8056 = vsel %vm8055, %v8048, %v8052
        %v8057 = vand.u32 2147483647, %v7726
        %vm8058 = vcmp.eq.f32.partialorder %v8057, 8.507059e+37
        %v8059 = vand.u32 %v7726, 2147483648
        %v8060 = vor.u32 1.1754944e-38, %v8059
        %v8061 = vsel %vm8058, %v8060, %v8056
        %v8062 = vmul.f32 1.0, %v8061
        %v8063 = vrcp.pop %v7727
        %v8064 = vmul.f32 %v7727, %v8063
        %v8065 = vsub.f32 1.0, %v8064
        %v8066 = vmul.f32 %v8063, %v8065
        %v8067 = vadd.f32 %v8063, %v8066
        %vm8068 = vweird.f32 %v7727
        %vm8069 = vweird.f32 %v8063
        %vm8070 = vmor %vm8068, %vm8069
        %v8071 = vsel %vm8070, %v8063, %v8067
        %v8072 = vand.u32 2147483647, %v7727
        %vm8073 = vcmp.eq.f32.partialorder %v8072, 8.507059e+37
        %v8074 = vand.u32 %v7727, 2147483648
        %v8075 = vor.u32 1.1754944e-38, %v8074
        %v8076 = vsel %vm8073, %v8075, %v8071
        %v8077 = vmul.f32 1.0, %v8076
        %v8078 = vrcp.pop %v7728
        %v8079 = vmul.f32 %v7728, %v8078
        %v8080 = vsub.f32 1.0, %v8079
        %v8081 = vmul.f32 %v8078, %v8080
        %v8082 = vadd.f32 %v8078, %v8081
        %vm8083 = vweird.f32 %v7728
        %vm8084 = vweird.f32 %v8078
        %vm8085 = vmor %vm8083, %vm8084
        %v8086 = vsel %vm8085, %v8078, %v8082
        %v8087 = vand.u32 2147483647, %v7728
        %vm8088 = vcmp.eq.f32.partialorder %v8087, 8.507059e+37
        %v8089 = vand.u32 %v7728, 2147483648
        %v8090 = vor.u32 1.1754944e-38, %v8089
        %v8091 = vsel %vm8088, %v8090, %v8086
        %v8092 = vmul.f32 1.0, %v8091
        %v8093 = vrcp.pop %v7729
        %v8094 = vmul.f32 %v7729, %v8093
        %v8095 = vsub.f32 1.0, %v8094
        %v8096 = vmul.f32 %v8093, %v8095
        %v8097 = vadd.f32 %v8093, %v8096
        %vm8098 = vweird.f32 %v7729
        %vm8099 = vweird.f32 %v8093
        %vm8100 = vmor %vm8098, %vm8099
        %v8101 = vsel %vm8100, %v8093, %v8097
        %v8102 = vand.u32 2147483647, %v7729
        %vm8103 = vcmp.eq.f32.partialorder %v8102, 8.507059e+37
        %v8104 = vand.u32 %v7729, 2147483648
        %v8105 = vor.u32 1.1754944e-38, %v8104
        %v8106 = vsel %vm8103, %v8105, %v8101
        %v8107 = vmul.f32 1.0, %v8106
        %v8108 = vrcp.pop %v7730
        %v8109 = vmul.f32 %v7730, %v8108
        %v8110 = vsub.f32 1.0, %v8109
        %v8111 = vmul.f32 %v8108, %v8110
        %v8112 = vadd.f32 %v8108, %v8111
        %vm8113 = vweird.f32 %v7730
        %vm8114 = vweird.f32 %v8108
        %vm8115 = vmor %vm8113, %vm8114
        %v8116 = vsel %vm8115, %v8108, %v8112
        %v8117 = vand.u32 2147483647, %v7730
        %vm8118 = vcmp.eq.f32.partialorder %v8117, 8.507059e+37
        %v8119 = vand.u32 %v7730, 2147483648
        %v8120 = vor.u32 1.1754944e-38, %v8119
        %v8121 = vsel %vm8118, %v8120, %v8116
        %v8122 = vmul.f32 1.0, %v8121
        %v8123 = vrcp.pop %v7731
        %v8124 = vmul.f32 %v7731, %v8123
        %v8125 = vsub.f32 1.0, %v8124
        %v8126 = vmul.f32 %v8123, %v8125
        %v8127 = vadd.f32 %v8123, %v8126
        %vm8128 = vweird.f32 %v7731
        %vm8129 = vweird.f32 %v8123
        %vm8130 = vmor %vm8128, %vm8129
        %v8131 = vsel %vm8130, %v8123, %v8127
        %v8132 = vand.u32 2147483647, %v7731
        %vm8133 = vcmp.eq.f32.partialorder %v8132, 8.507059e+37
        %v8134 = vand.u32 %v7731, 2147483648
        %v8135 = vor.u32 1.1754944e-38, %v8134
        %v8136 = vsel %vm8133, %v8135, %v8131
        %v8137 = vmul.f32 1.0, %v8136
        %v8138 = vrcp.pop %v7732
        %v8139 = vmul.f32 %v7732, %v8138
        %v8140 = vsub.f32 1.0, %v8139
        %v8141 = vmul.f32 %v8138, %v8140
        %v8142 = vadd.f32 %v8138, %v8141
        %vm8143 = vweird.f32 %v7732
        %vm8144 = vweird.f32 %v8138
        %vm8145 = vmor %vm8143, %vm8144
        %v8146 = vsel %vm8145, %v8138, %v8142
        %v8147 = vand.u32 2147483647, %v7732
        %vm8148 = vcmp.eq.f32.partialorder %v8147, 8.507059e+37
        %v8149 = vand.u32 %v7732, 2147483648
        %v8150 = vor.u32 1.1754944e-38, %v8149
        %v8151 = vsel %vm8148, %v8150, %v8146
        %v8152 = vmul.f32 1.0, %v8151
        %v8153 = vrcp.pop %v7733
        %v8154 = vmul.f32 %v7733, %v8153
        %v8155 = vsub.f32 1.0, %v8154
        %v8156 = vmul.f32 %v8153, %v8155
        %v8157 = vadd.f32 %v8153, %v8156
        %vm8158 = vweird.f32 %v7733
        %vm8159 = vweird.f32 %v8153
        %vm8160 = vmor %vm8158, %vm8159
        %v8161 = vsel %vm8160, %v8153, %v8157
        %v8162 = vand.u32 2147483647, %v7733
        %vm8163 = vcmp.eq.f32.partialorder %v8162, 8.507059e+37
        %v8164 = vand.u32 %v7733, 2147483648
        %v8165 = vor.u32 1.1754944e-38, %v8164
        %v8166 = vsel %vm8163, %v8165, %v8161
        %v8167 = vmul.f32 1.0, %v8166
        %v8168 = vrcp.pop %v7734
        %v8169 = vmul.f32 %v7734, %v8168
        %v8170 = vsub.f32 1.0, %v8169
        %v8171 = vmul.f32 %v8168, %v8170
        %v8172 = vadd.f32 %v8168, %v8171
        %vm8173 = vweird.f32 %v7734
        %vm8174 = vweird.f32 %v8168
        %vm8175 = vmor %vm8173, %vm8174
        %v8176 = vsel %vm8175, %v8168, %v8172
        %v8177 = vand.u32 2147483647, %v7734
        %vm8178 = vcmp.eq.f32.partialorder %v8177, 8.507059e+37
        %v8179 = vand.u32 %v7734, 2147483648
        %v8180 = vor.u32 1.1754944e-38, %v8179
        %v8181 = vsel %vm8178, %v8180, %v8176
        %v8182 = vmul.f32 1.0, %v8181
        %v8183 = vrcp.pop %v7735
        %v8184 = vmul.f32 %v7735, %v8183
        %v8185 = vsub.f32 1.0, %v8184
        %v8186 = vmul.f32 %v8183, %v8185
        %v8187 = vadd.f32 %v8183, %v8186
        %vm8188 = vweird.f32 %v7735
        %vm8189 = vweird.f32 %v8183
        %vm8190 = vmor %vm8188, %vm8189
        %v8191 = vsel %vm8190, %v8183, %v8187
        %v8192 = vand.u32 2147483647, %v7735
        %vm8193 = vcmp.eq.f32.partialorder %v8192, 8.507059e+37
        %v8194 = vand.u32 %v7735, 2147483648
        %v8195 = vor.u32 1.1754944e-38, %v8194
        %v8196 = vsel %vm8193, %v8195, %v8191
        %v8197 = vmul.f32 1.0, %v8196
        %v8198 = vrcp.pop %v7736
        %v8199 = vmul.f32 %v7736, %v8198
        %v8200 = vsub.f32 1.0, %v8199
        %v8201 = vmul.f32 %v8198, %v8200
        %v8202 = vadd.f32 %v8198, %v8201
        %vm8203 = vweird.f32 %v7736
        %vm8204 = vweird.f32 %v8198
        %vm8205 = vmor %vm8203, %vm8204
        %v8206 = vsel %vm8205, %v8198, %v8202
        %v8207 = vand.u32 2147483647, %v7736
        %vm8208 = vcmp.eq.f32.partialorder %v8207, 8.507059e+37
        %v8209 = vand.u32 %v7736, 2147483648
        %v8210 = vor.u32 1.1754944e-38, %v8209
        %v8211 = vsel %vm8208, %v8210, %v8206
        %v8212 = vmul.f32 1.0, %v8211
        %v8213 = vrcp.pop %v7737
        %v8214 = vmul.f32 %v7737, %v8213
        %v8215 = vsub.f32 1.0, %v8214
        %v8216 = vmul.f32 %v8213, %v8215
        %v8217 = vadd.f32 %v8213, %v8216
        %vm8218 = vweird.f32 %v7737
        %vm8219 = vweird.f32 %v8213
        %vm8220 = vmor %vm8218, %vm8219
        %v8221 = vsel %vm8220, %v8213, %v8217
        %v8222 = vand.u32 2147483647, %v7737
        %vm8223 = vcmp.eq.f32.partialorder %v8222, 8.507059e+37
        %v8224 = vand.u32 %v7737, 2147483648
        %v8225 = vor.u32 1.1754944e-38, %v8224
        %v8226 = vsel %vm8223, %v8225, %v8221
        %v8227 = vmul.f32 1.0, %v8226
        %v8228 = vrcp.pop %v7738
        %v8229 = vmul.f32 %v7738, %v8228
        %v8230 = vsub.f32 1.0, %v8229
        %v8231 = vmul.f32 %v8228, %v8230
        %v8232 = vadd.f32 %v8228, %v8231
        %vm8233 = vweird.f32 %v7738
        %vm8234 = vweird.f32 %v8228
        %vm8235 = vmor %vm8233, %vm8234
        %v8236 = vsel %vm8235, %v8228, %v8232
        %v8237 = vand.u32 2147483647, %v7738
        %vm8238 = vcmp.eq.f32.partialorder %v8237, 8.507059e+37
        %v8239 = vand.u32 %v7738, 2147483648
        %v8240 = vor.u32 1.1754944e-38, %v8239
        %v8241 = vsel %vm8238, %v8240, %v8236
        %v8242 = vmul.f32 1.0, %v8241
        %v8243 = vrcp.pop %v7739
        %v8244 = vmul.f32 %v7739, %v8243
        %v8245 = vsub.f32 1.0, %v8244
        %v8246 = vmul.f32 %v8243, %v8245
        %v8247 = vadd.f32 %v8243, %v8246
        %vm8248 = vweird.f32 %v7739
        %vm8249 = vweird.f32 %v8243
        %vm8250 = vmor %vm8248, %vm8249
        %v8251 = vsel %vm8250, %v8243, %v8247
        %v8252 = vand.u32 2147483647, %v7739
        %vm8253 = vcmp.eq.f32.partialorder %v8252, 8.507059e+37
        %v8254 = vand.u32 %v7739, 2147483648
        %v8255 = vor.u32 1.1754944e-38, %v8254
        %v8256 = vsel %vm8253, %v8255, %v8251
        %v8257 = vmul.f32 1.0, %v8256
        %v8258 = vrcp.pop %v7740
        %v8259 = vmul.f32 %v7740, %v8258
        %v8260 = vsub.f32 1.0, %v8259
        %v8261 = vmul.f32 %v8258, %v8260
        %v8262 = vadd.f32 %v8258, %v8261
        %vm8263 = vweird.f32 %v7740
        %vm8264 = vweird.f32 %v8258
        %vm8265 = vmor %vm8263, %vm8264
        %v8266 = vsel %vm8265, %v8258, %v8262
        %v8267 = vand.u32 2147483647, %v7740
        %vm8268 = vcmp.eq.f32.partialorder %v8267, 8.507059e+37
        %v8269 = vand.u32 %v7740, 2147483648
        %v8270 = vor.u32 1.1754944e-38, %v8269
        %v8271 = vsel %vm8268, %v8270, %v8266
        %v8272 = vmul.f32 1.0, %v8271
        %v8273 = vrcp.pop %v7741
        %v8274 = vmul.f32 %v7741, %v8273
        %v8275 = vsub.f32 1.0, %v8274
        %v8276 = vmul.f32 %v8273, %v8275
        %v8277 = vadd.f32 %v8273, %v8276
        %vm8278 = vweird.f32 %v7741
        %vm8279 = vweird.f32 %v8273
        %vm8280 = vmor %vm8278, %vm8279
        %v8281 = vsel %vm8280, %v8273, %v8277
        %v8282 = vand.u32 2147483647, %v7741
        %vm8283 = vcmp.eq.f32.partialorder %v8282, 8.507059e+37
        %v8284 = vand.u32 %v7741, 2147483648
        %v8285 = vor.u32 1.1754944e-38, %v8284
        %v8286 = vsel %vm8283, %v8285, %v8281
        %v8287 = vmul.f32 1.0, %v8286
        %v8288 = vrcp.pop %v7742
        %v8289 = vmul.f32 %v7742, %v8288
        %v8290 = vsub.f32 1.0, %v8289
        %v8291 = vmul.f32 %v8288, %v8290
        %v8292 = vadd.f32 %v8288, %v8291
        %vm8293 = vweird.f32 %v7742
        %vm8294 = vweird.f32 %v8288
        %vm8295 = vmor %vm8293, %vm8294
        %v8296 = vsel %vm8295, %v8288, %v8292
        %v8297 = vand.u32 2147483647, %v7742
        %vm8298 = vcmp.eq.f32.partialorder %v8297, 8.507059e+37
        %v8299 = vand.u32 %v7742, 2147483648
        %v8300 = vor.u32 1.1754944e-38, %v8299
        %v8301 = vsel %vm8298, %v8300, %v8296
        %v8302 = vmul.f32 1.0, %v8301
        %v8303 = vrcp.pop %v7743
        %v8304 = vmul.f32 %v7743, %v8303
        %v8305 = vsub.f32 1.0, %v8304
        %v8306 = vmul.f32 %v8303, %v8305
        %v8307 = vadd.f32 %v8303, %v8306
        %vm8308 = vweird.f32 %v7743
        %vm8309 = vweird.f32 %v8303
        %vm8310 = vmor %vm8308, %vm8309
        %v8311 = vsel %vm8310, %v8303, %v8307
        %v8312 = vand.u32 2147483647, %v7743
        %vm8313 = vcmp.eq.f32.partialorder %v8312, 8.507059e+37
        %v8314 = vand.u32 %v7743, 2147483648
        %v8315 = vor.u32 1.1754944e-38, %v8314
        %v8316 = vsel %vm8313, %v8315, %v8311
        %v8317 = vmul.f32 1.0, %v8316
        %v8318 = vrcp.pop %v7744
        %v8319 = vmul.f32 %v7744, %v8318
        %v8320 = vsub.f32 1.0, %v8319
        %v8321 = vmul.f32 %v8318, %v8320
        %v8322 = vadd.f32 %v8318, %v8321
        %vm8323 = vweird.f32 %v7744
        %vm8324 = vweird.f32 %v8318
        %vm8325 = vmor %vm8323, %vm8324
        %v8326 = vsel %vm8325, %v8318, %v8322
        %v8327 = vand.u32 2147483647, %v7744
        %vm8328 = vcmp.eq.f32.partialorder %v8327, 8.507059e+37
        %v8329 = vand.u32 %v7744, 2147483648
        %v8330 = vor.u32 1.1754944e-38, %v8329
        %v8331 = vsel %vm8328, %v8330, %v8326
        %v8332 = vmul.f32 1.0, %v8331
        %v8333 = vrcp.pop %v7745
        %v8334 = vmul.f32 %v7745, %v8333
        %v8335 = vsub.f32 1.0, %v8334
        %v8336 = vmul.f32 %v8333, %v8335
        %v8337 = vadd.f32 %v8333, %v8336
        %vm8338 = vweird.f32 %v7745
        %vm8339 = vweird.f32 %v8333
        %vm8340 = vmor %vm8338, %vm8339
        %v8341 = vsel %vm8340, %v8333, %v8337
        %v8342 = vand.u32 2147483647, %v7745
        %vm8343 = vcmp.eq.f32.partialorder %v8342, 8.507059e+37
        %v8344 = vand.u32 %v7745, 2147483648
        %v8345 = vor.u32 1.1754944e-38, %v8344
        %v8346 = vsel %vm8343, %v8345, %v8341
        %v8347 = vmul.f32 1.0, %v8346
        %v8348 = vrcp.pop %v7746
        %v8349 = vmul.f32 %v7746, %v8348
        %v8350 = vsub.f32 1.0, %v8349
        %v8351 = vmul.f32 %v8348, %v8350
        %v8352 = vadd.f32 %v8348, %v8351
        %vm8353 = vweird.f32 %v7746
        %vm8354 = vweird.f32 %v8348
        %vm8355 = vmor %vm8353, %vm8354
        %v8356 = vsel %vm8355, %v8348, %v8352
        %v8357 = vand.u32 2147483647, %v7746
        %vm8358 = vcmp.eq.f32.partialorder %v8357, 8.507059e+37
        %v8359 = vand.u32 %v7746, 2147483648
        %v8360 = vor.u32 1.1754944e-38, %v8359
        %v8361 = vsel %vm8358, %v8360, %v8356
        %v8362 = vmul.f32 1.0, %v8361
        %v8363 = vrcp.pop %v7747
        %v8364 = vmul.f32 %v7747, %v8363
        %v8365 = vsub.f32 1.0, %v8364
        %v8366 = vmul.f32 %v8363, %v8365
        %v8367 = vadd.f32 %v8363, %v8366
        %vm8368 = vweird.f32 %v7747
        %vm8369 = vweird.f32 %v8363
        %vm8370 = vmor %vm8368, %vm8369
        %v8371 = vsel %vm8370, %v8363, %v8367
        %v8372 = vand.u32 2147483647, %v7747
        %vm8373 = vcmp.eq.f32.partialorder %v8372, 8.507059e+37
        %v8374 = vand.u32 %v7747, 2147483648
        %v8375 = vor.u32 1.1754944e-38, %v8374
        %v8376 = vsel %vm8373, %v8375, %v8371
        %v8377 = vmul.f32 1.0, %v8376
        %v8378 = vrcp.pop %v7748
        %v8379 = vmul.f32 %v7748, %v8378
        %v8380 = vsub.f32 1.0, %v8379
        %v8381 = vmul.f32 %v8378, %v8380
        %v8382 = vadd.f32 %v8378, %v8381
        %vm8383 = vweird.f32 %v7748
        %vm8384 = vweird.f32 %v8378
        %vm8385 = vmor %vm8383, %vm8384
        %v8386 = vsel %vm8385, %v8378, %v8382
        %v8387 = vand.u32 2147483647, %v7748
        %vm8388 = vcmp.eq.f32.partialorder %v8387, 8.507059e+37
        %v8389 = vand.u32 %v7748, 2147483648
        %v8390 = vor.u32 1.1754944e-38, %v8389
        %v8391 = vsel %vm8388, %v8390, %v8386
        %v8392 = vmul.f32 1.0, %v8391
        %v8393 = vrcp.pop %v7749
        %v8394 = vmul.f32 %v7749, %v8393
        %v8395 = vsub.f32 1.0, %v8394
        %v8396 = vmul.f32 %v8393, %v8395
        %v8397 = vadd.f32 %v8393, %v8396
        %vm8398 = vweird.f32 %v7749
        %vm8399 = vweird.f32 %v8393
        %vm8400 = vmor %vm8398, %vm8399
        %v8401 = vsel %vm8400, %v8393, %v8397
        %v8402 = vand.u32 2147483647, %v7749
        %vm8403 = vcmp.eq.f32.partialorder %v8402, 8.507059e+37
        %v8404 = vand.u32 %v7749, 2147483648
        %v8405 = vor.u32 1.1754944e-38, %v8404
        %v8406 = vsel %vm8403, %v8405, %v8401
        %v8407 = vmul.f32 1.0, %v8406
        %v8408 = vrcp.pop %v7750
        %v8409 = vmul.f32 %v7750, %v8408
        %v8410 = vsub.f32 1.0, %v8409
        %v8411 = vmul.f32 %v8408, %v8410
        %v8412 = vadd.f32 %v8408, %v8411
        %vm8413 = vweird.f32 %v7750
        %vm8414 = vweird.f32 %v8408
        %vm8415 = vmor %vm8413, %vm8414
        %v8416 = vsel %vm8415, %v8408, %v8412
        %v8417 = vand.u32 2147483647, %v7750
        %vm8418 = vcmp.eq.f32.partialorder %v8417, 8.507059e+37
        %v8419 = vand.u32 %v7750, 2147483648
        %v8420 = vor.u32 1.1754944e-38, %v8419
        %v8421 = vsel %vm8418, %v8420, %v8416
        %v8422 = vmul.f32 1.0, %v8421
        %v8423 = vrcp.pop %v7751
        %v8424 = vmul.f32 %v7751, %v8423
        %v8425 = vsub.f32 1.0, %v8424
        %v8426 = vmul.f32 %v8423, %v8425
        %v8427 = vadd.f32 %v8423, %v8426
        %vm8428 = vweird.f32 %v7751
        %vm8429 = vweird.f32 %v8423
        %vm8430 = vmor %vm8428, %vm8429
        %v8431 = vsel %vm8430, %v8423, %v8427
        %v8432 = vand.u32 2147483647, %v7751
        %vm8433 = vcmp.eq.f32.partialorder %v8432, 8.507059e+37
        %v8434 = vand.u32 %v7751, 2147483648
        %v8435 = vor.u32 1.1754944e-38, %v8434
        %v8436 = vsel %vm8433, %v8435, %v8431
        %v8437 = vmul.f32 1.0, %v8436
        %v8438 = vrcp.pop %v7752
        %v8439 = vmul.f32 %v7752, %v8438
        %v8440 = vsub.f32 1.0, %v8439
        %v8441 = vmul.f32 %v8438, %v8440
        %v8442 = vadd.f32 %v8438, %v8441
        %vm8443 = vweird.f32 %v7752
        %vm8444 = vweird.f32 %v8438
        %vm8445 = vmor %vm8443, %vm8444
        %v8446 = vsel %vm8445, %v8438, %v8442
        %v8447 = vand.u32 2147483647, %v7752
        %vm8448 = vcmp.eq.f32.partialorder %v8447, 8.507059e+37
        %v8449 = vand.u32 %v7752, 2147483648
        %v8450 = vor.u32 1.1754944e-38, %v8449
        %v8451 = vsel %vm8448, %v8450, %v8446
        %v8452 = vmul.f32 1.0, %v8451
        %v8453 = vrcp.pop %v7753
        %v8454 = vmul.f32 %v7753, %v8453
        %v8455 = vsub.f32 1.0, %v8454
        %v8456 = vmul.f32 %v8453, %v8455
        %v8457 = vadd.f32 %v8453, %v8456
        %vm8458 = vweird.f32 %v7753
        %vm8459 = vweird.f32 %v8453
        %vm8460 = vmor %vm8458, %vm8459
        %v8461 = vsel %vm8460, %v8453, %v8457
        %v8462 = vand.u32 2147483647, %v7753
        %vm8463 = vcmp.eq.f32.partialorder %v8462, 8.507059e+37
        %v8464 = vand.u32 %v7753, 2147483648
        %v8465 = vor.u32 1.1754944e-38, %v8464
        %v8466 = vsel %vm8463, %v8465, %v8461
        %v8467 = vmul.f32 1.0, %v8466
        %v8468 = vrcp.pop %v7754
        %v8469 = vmul.f32 %v7754, %v8468
        %v8470 = vsub.f32 1.0, %v8469
        %v8471 = vmul.f32 %v8468, %v8470
        %v8472 = vadd.f32 %v8468, %v8471
        %vm8473 = vweird.f32 %v7754
        %vm8474 = vweird.f32 %v8468
        %vm8475 = vmor %vm8473, %vm8474
        %v8476 = vsel %vm8475, %v8468, %v8472
        %v8477 = vand.u32 2147483647, %v7754
        %vm8478 = vcmp.eq.f32.partialorder %v8477, 8.507059e+37
        %v8479 = vand.u32 %v7754, 2147483648
        %v8480 = vor.u32 1.1754944e-38, %v8479
        %v8481 = vsel %vm8478, %v8480, %v8476
        %v8482 = vmul.f32 1.0, %v8481
        %v8483 = vrcp.pop %v7755
        %v8484 = vmul.f32 %v7755, %v8483
        %v8485 = vsub.f32 1.0, %v8484
        %v8486 = vmul.f32 %v8483, %v8485
        %v8487 = vadd.f32 %v8483, %v8486
        %vm8488 = vweird.f32 %v7755
        %vm8489 = vweird.f32 %v8483
        %vm8490 = vmor %vm8488, %vm8489
        %v8491 = vsel %vm8490, %v8483, %v8487
        %v8492 = vand.u32 2147483647, %v7755
        %vm8493 = vcmp.eq.f32.partialorder %v8492, 8.507059e+37
        %v8494 = vand.u32 %v7755, 2147483648
        %v8495 = vor.u32 1.1754944e-38, %v8494
        %v8496 = vsel %vm8493, %v8495, %v8491
        %v8497 = vmul.f32 1.0, %v8496
        %v8498 = vrcp.pop %v7756
        %v8499 = vmul.f32 %v7756, %v8498
        %v8500 = vsub.f32 1.0, %v8499
        %v8501 = vmul.f32 %v8498, %v8500
        %v8502 = vadd.f32 %v8498, %v8501
        %vm8503 = vweird.f32 %v7756
        %vm8504 = vweird.f32 %v8498
        %vm8505 = vmor %vm8503, %vm8504
        %v8506 = vsel %vm8505, %v8498, %v8502
        %v8507 = vand.u32 2147483647, %v7756
        %vm8508 = vcmp.eq.f32.partialorder %v8507, 8.507059e+37
        %v8509 = vand.u32 %v7756, 2147483648
        %v8510 = vor.u32 1.1754944e-38, %v8509
        %v8511 = vsel %vm8508, %v8510, %v8506
        %v8512 = vmul.f32 1.0, %v8511
        %v8513 = vrcp.pop %v7757
        %v8514 = vmul.f32 %v7757, %v8513
        %v8515 = vsub.f32 1.0, %v8514
        %v8516 = vmul.f32 %v8513, %v8515
        %v8517 = vadd.f32 %v8513, %v8516
        %vm8518 = vweird.f32 %v7757
        %vm8519 = vweird.f32 %v8513
        %vm8520 = vmor %vm8518, %vm8519
        %v8521 = vsel %vm8520, %v8513, %v8517
        %v8522 = vand.u32 2147483647, %v7757
        %vm8523 = vcmp.eq.f32.partialorder %v8522, 8.507059e+37
        %v8524 = vand.u32 %v7757, 2147483648
        %v8525 = vor.u32 1.1754944e-38, %v8524
        %v8526 = vsel %vm8523, %v8525, %v8521
        %v8527 = vmul.f32 1.0, %v8526
        %v8528 = vrcp.pop %v7758
        %v8529 = vmul.f32 %v7758, %v8528
        %v8530 = vsub.f32 1.0, %v8529
        %v8531 = vmul.f32 %v8528, %v8530
        %v8532 = vadd.f32 %v8528, %v8531
        %vm8533 = vweird.f32 %v7758
        %vm8534 = vweird.f32 %v8528
        %vm8535 = vmor %vm8533, %vm8534
        %v8536 = vsel %vm8535, %v8528, %v8532
        %v8537 = vand.u32 2147483647, %v7758
        %vm8538 = vcmp.eq.f32.partialorder %v8537, 8.507059e+37
        %v8539 = vand.u32 %v7758, 2147483648
        %v8540 = vor.u32 1.1754944e-38, %v8539
        %v8541 = vsel %vm8538, %v8540, %v8536
        %v8542 = vmul.f32 1.0, %v8541
        %v8543 = vrcp.pop %v7759
        %v8544 = vmul.f32 %v7759, %v8543
        %v8545 = vsub.f32 1.0, %v8544
        %v8546 = vmul.f32 %v8543, %v8545
        %v8547 = vadd.f32 %v8543, %v8546
        %vm8548 = vweird.f32 %v7759
        %vm8549 = vweird.f32 %v8543
        %vm8550 = vmor %vm8548, %vm8549
        %v8551 = vsel %vm8550, %v8543, %v8547
        %v8552 = vand.u32 2147483647, %v7759
        %vm8553 = vcmp.eq.f32.partialorder %v8552, 8.507059e+37
        %v8554 = vand.u32 %v7759, 2147483648
        %v8555 = vor.u32 1.1754944e-38, %v8554
        %v8556 = vsel %vm8553, %v8555, %v8551
        %v8557 = vmul.f32 1.0, %v8556
        %v8558 = vrcp.pop %v7760
        %v8559 = vmul.f32 %v7760, %v8558
        %v8560 = vsub.f32 1.0, %v8559
        %v8561 = vmul.f32 %v8558, %v8560
        %v8562 = vadd.f32 %v8558, %v8561
        %vm8563 = vweird.f32 %v7760
        %vm8564 = vweird.f32 %v8558
        %vm8565 = vmor %vm8563, %vm8564
        %v8566 = vsel %vm8565, %v8558, %v8562
        %v8567 = vand.u32 2147483647, %v7760
        %vm8568 = vcmp.eq.f32.partialorder %v8567, 8.507059e+37
        %v8569 = vand.u32 %v7760, 2147483648
        %v8570 = vor.u32 1.1754944e-38, %v8569
        %v8571 = vsel %vm8568, %v8570, %v8566
        %v8572 = vmul.f32 1.0, %v8571
        %v8573 = vrcp.pop %v7761
        %v8574 = vmul.f32 %v7761, %v8573
        %v8575 = vsub.f32 1.0, %v8574
        %v8576 = vmul.f32 %v8573, %v8575
        %v8577 = vadd.f32 %v8573, %v8576
        %vm8578 = vweird.f32 %v7761
        %vm8579 = vweird.f32 %v8573
        %vm8580 = vmor %vm8578, %vm8579
        %v8581 = vsel %vm8580, %v8573, %v8577
        %v8582 = vand.u32 2147483647, %v7761
        %vm8583 = vcmp.eq.f32.partialorder %v8582, 8.507059e+37
        %v8584 = vand.u32 %v7761, 2147483648
        %v8585 = vor.u32 1.1754944e-38, %v8584
        %v8586 = vsel %vm8583, %v8585, %v8581
        %v8587 = vmul.f32 1.0, %v8586
        %v8588 = vrcp.pop %v7762
        %v8589 = vmul.f32 %v7762, %v8588
        %v8590 = vsub.f32 1.0, %v8589
        %v8591 = vmul.f32 %v8588, %v8590
        %v8592 = vadd.f32 %v8588, %v8591
        %vm8593 = vweird.f32 %v7762
        %vm8594 = vweird.f32 %v8588
        %vm8595 = vmor %vm8593, %vm8594
        %v8596 = vsel %vm8595, %v8588, %v8592
        %v8597 = vand.u32 2147483647, %v7762
        %vm8598 = vcmp.eq.f32.partialorder %v8597, 8.507059e+37
        %v8599 = vand.u32 %v7762, 2147483648
        %v8600 = vor.u32 1.1754944e-38, %v8599
        %v8601 = vsel %vm8598, %v8600, %v8596
        %v8602 = vmul.f32 1.0, %v8601
        %v8603 = vrcp.pop %v7763
        %v8604 = vmul.f32 %v7763, %v8603
        %v8605 = vsub.f32 1.0, %v8604
        %v8606 = vmul.f32 %v8603, %v8605
        %v8607 = vadd.f32 %v8603, %v8606
        %vm8608 = vweird.f32 %v7763
        %vm8609 = vweird.f32 %v8603
        %vm8610 = vmor %vm8608, %vm8609
        %v8611 = vsel %vm8610, %v8603, %v8607
        %v8612 = vand.u32 2147483647, %v7763
        %vm8613 = vcmp.eq.f32.partialorder %v8612, 8.507059e+37
        %v8614 = vand.u32 %v7763, 2147483648
        %v8615 = vor.u32 1.1754944e-38, %v8614
        %v8616 = vsel %vm8613, %v8615, %v8611
        %v8617 = vmul.f32 1.0, %v8616
        %v8618 = vrcp.pop %v7764
        %v8619 = vmul.f32 %v7764, %v8618
        %v8620 = vsub.f32 1.0, %v8619
        %v8621 = vmul.f32 %v8618, %v8620
        %v8622 = vadd.f32 %v8618, %v8621
        %vm8623 = vweird.f32 %v7764
        %vm8624 = vweird.f32 %v8618
        %vm8625 = vmor %vm8623, %vm8624
        %v8626 = vsel %vm8625, %v8618, %v8622
        %v8627 = vand.u32 2147483647, %v7764
        %vm8628 = vcmp.eq.f32.partialorder %v8627, 8.507059e+37
        %v8629 = vand.u32 %v7764, 2147483648
        %v8630 = vor.u32 1.1754944e-38, %v8629
        %v8631 = vsel %vm8628, %v8630, %v8626
        %v8632 = vmul.f32 1.0, %v8631
        %v8633 = vrcp.pop %v7765
        %v8634 = vmul.f32 %v7765, %v8633
        %v8635 = vsub.f32 1.0, %v8634
        %v8636 = vmul.f32 %v8633, %v8635
        %v8637 = vadd.f32 %v8633, %v8636
        %vm8638 = vweird.f32 %v7765
        %vm8639 = vweird.f32 %v8633
        %vm8640 = vmor %vm8638, %vm8639
        %v8641 = vsel %vm8640, %v8633, %v8637
        %v8642 = vand.u32 2147483647, %v7765
        %vm8643 = vcmp.eq.f32.partialorder %v8642, 8.507059e+37
        %v8644 = vand.u32 %v7765, 2147483648
        %v8645 = vor.u32 1.1754944e-38, %v8644
        %v8646 = vsel %vm8643, %v8645, %v8641
        %v8647 = vmul.f32 1.0, %v8646
        %v8648 = vrcp.pop %v7766
        %v8649 = vmul.f32 %v7766, %v8648
        %v8650 = vsub.f32 1.0, %v8649
        %v8651 = vmul.f32 %v8648, %v8650
        %v8652 = vadd.f32 %v8648, %v8651
        %vm8653 = vweird.f32 %v7766
        %vm8654 = vweird.f32 %v8648
        %vm8655 = vmor %vm8653, %vm8654
        %v8656 = vsel %vm8655, %v8648, %v8652
        %v8657 = vand.u32 2147483647, %v7766
        %vm8658 = vcmp.eq.f32.partialorder %v8657, 8.507059e+37
        %v8659 = vand.u32 %v7766, 2147483648
        %v8660 = vor.u32 1.1754944e-38, %v8659
        %v8661 = vsel %vm8658, %v8660, %v8656
        %v8662 = vmul.f32 1.0, %v8661
        %v8663 = vrcp.pop %v7767
        %v8664 = vmul.f32 %v7767, %v8663
        %v8665 = vsub.f32 1.0, %v8664
        %v8666 = vmul.f32 %v8663, %v8665
        %v8667 = vadd.f32 %v8663, %v8666
        %vm8668 = vweird.f32 %v7767
        %vm8669 = vweird.f32 %v8663
        %vm8670 = vmor %vm8668, %vm8669
        %v8671 = vsel %vm8670, %v8663, %v8667
        %v8672 = vand.u32 2147483647, %v7767
        %vm8673 = vcmp.eq.f32.partialorder %v8672, 8.507059e+37
        %v8674 = vand.u32 %v7767, 2147483648
        %v8675 = vor.u32 1.1754944e-38, %v8674
        %v8676 = vsel %vm8673, %v8675, %v8671
        %v8677 = vmul.f32 1.0, %v8676
        %v8678 = vrcp.pop %v7768
        %v8679 = vmul.f32 %v7768, %v8678
        %v8680 = vsub.f32 1.0, %v8679
        %v8681 = vmul.f32 %v8678, %v8680
        %v8682 = vadd.f32 %v8678, %v8681
        %vm8683 = vweird.f32 %v7768
        %vm8684 = vweird.f32 %v8678
        %vm8685 = vmor %vm8683, %vm8684
        %v8686 = vsel %vm8685, %v8678, %v8682
        %v8687 = vand.u32 2147483647, %v7768
        %vm8688 = vcmp.eq.f32.partialorder %v8687, 8.507059e+37
        %v8689 = vand.u32 %v7768, 2147483648
        %v8690 = vor.u32 1.1754944e-38, %v8689
        %v8691 = vsel %vm8688, %v8690, %v8686
        %v8692 = vmul.f32 1.0, %v8691
        %v8693 = vrcp.pop %v7769
        %v8694 = vmul.f32 %v7769, %v8693
        %v8695 = vsub.f32 1.0, %v8694
        %v8696 = vmul.f32 %v8693, %v8695
        %v8697 = vadd.f32 %v8693, %v8696
        %vm8698 = vweird.f32 %v7769
        %vm8699 = vweird.f32 %v8693
        %vm8700 = vmor %vm8698, %vm8699
        %v8701 = vsel %vm8700, %v8693, %v8697
        %v8702 = vand.u32 2147483647, %v7769
        %vm8703 = vcmp.eq.f32.partialorder %v8702, 8.507059e+37
        %v8704 = vand.u32 %v7769, 2147483648
        %v8705 = vor.u32 1.1754944e-38, %v8704
        %v8706 = vsel %vm8703, %v8705, %v8701
        %v8707 = vmul.f32 1.0, %v8706
        %v8708 = vrcp.pop %v7770
        %v8709 = vmul.f32 %v7770, %v8708
        %v8710 = vsub.f32 1.0, %v8709
        %v8711 = vmul.f32 %v8708, %v8710
        %v8712 = vadd.f32 %v8708, %v8711
        %vm8713 = vweird.f32 %v7770
        %vm8714 = vweird.f32 %v8708
        %vm8715 = vmor %vm8713, %vm8714
        %v8716 = vsel %vm8715, %v8708, %v8712
        %v8717 = vand.u32 2147483647, %v7770
        %vm8718 = vcmp.eq.f32.partialorder %v8717, 8.507059e+37
        %v8719 = vand.u32 %v7770, 2147483648
        %v8720 = vor.u32 1.1754944e-38, %v8719
        %v8721 = vsel %vm8718, %v8720, %v8716
        %v8722 = vmul.f32 1.0, %v8721
        %v8723 = vrcp.pop %v7771
        %v8724 = vmul.f32 %v7771, %v8723
        %v8725 = vsub.f32 1.0, %v8724
        %v8726 = vmul.f32 %v8723, %v8725
        %v8727 = vadd.f32 %v8723, %v8726
        %vm8728 = vweird.f32 %v7771
        %vm8729 = vweird.f32 %v8723
        %vm8730 = vmor %vm8728, %vm8729
        %v8731 = vsel %vm8730, %v8723, %v8727
        %v8732 = vand.u32 2147483647, %v7771
        %vm8733 = vcmp.eq.f32.partialorder %v8732, 8.507059e+37
        %v8734 = vand.u32 %v7771, 2147483648
        %v8735 = vor.u32 1.1754944e-38, %v8734
        %v8736 = vsel %vm8733, %v8735, %v8731
        %v8737 = vmul.f32 1.0, %v8736
        %v8738 = vrcp.pop %v7772
        %v8739 = vmul.f32 %v7772, %v8738
        %v8740 = vsub.f32 1.0, %v8739
        %v8741 = vmul.f32 %v8738, %v8740
        %v8742 = vadd.f32 %v8738, %v8741
        %vm8743 = vweird.f32 %v7772
        %vm8744 = vweird.f32 %v8738
        %vm8745 = vmor %vm8743, %vm8744
        %v8746 = vsel %vm8745, %v8738, %v8742
        %v8747 = vand.u32 2147483647, %v7772
        %vm8748 = vcmp.eq.f32.partialorder %v8747, 8.507059e+37
        %v8749 = vand.u32 %v7772, 2147483648
        %v8750 = vor.u32 1.1754944e-38, %v8749
        %v8751 = vsel %vm8748, %v8750, %v8746
        %v8752 = vmul.f32 1.0, %v8751
        %v8753 = vrcp.pop %v7773
        %v8754 = vmul.f32 %v7773, %v8753
        %v8755 = vsub.f32 1.0, %v8754
        %v8756 = vmul.f32 %v8753, %v8755
        %v8757 = vadd.f32 %v8753, %v8756
        %vm8758 = vweird.f32 %v7773
        %vm8759 = vweird.f32 %v8753
        %vm8760 = vmor %vm8758, %vm8759
        %v8761 = vsel %vm8760, %v8753, %v8757
        %v8762 = vand.u32 2147483647, %v7773
        %vm8763 = vcmp.eq.f32.partialorder %v8762, 8.507059e+37
        %v8764 = vand.u32 %v7773, 2147483648
        %v8765 = vor.u32 1.1754944e-38, %v8764
        %v8766 = vsel %vm8763, %v8765, %v8761
        %v8767 = vmul.f32 1.0, %v8766
        %v8768 = vrcp.pop %v7774
        %v8769 = vmul.f32 %v7774, %v8768
        %v8770 = vsub.f32 1.0, %v8769
        %v8771 = vmul.f32 %v8768, %v8770
        %v8772 = vadd.f32 %v8768, %v8771
        %vm8773 = vweird.f32 %v7774
        %vm8774 = vweird.f32 %v8768
        %vm8775 = vmor %vm8773, %vm8774
        %v8776 = vsel %vm8775, %v8768, %v8772
        %v8777 = vand.u32 2147483647, %v7774
        %vm8778 = vcmp.eq.f32.partialorder %v8777, 8.507059e+37
        %v8779 = vand.u32 %v7774, 2147483648
        %v8780 = vor.u32 1.1754944e-38, %v8779
        %v8781 = vsel %vm8778, %v8780, %v8776
        %v8782 = vmul.f32 1.0, %v8781
        %v8783 = vrcp.pop %v7775
        %v8784 = vmul.f32 %v7775, %v8783
        %v8785 = vsub.f32 1.0, %v8784
        %v8786 = vmul.f32 %v8783, %v8785
        %v8787 = vadd.f32 %v8783, %v8786
        %vm8788 = vweird.f32 %v7775
        %vm8789 = vweird.f32 %v8783
        %vm8790 = vmor %vm8788, %vm8789
        %v8791 = vsel %vm8790, %v8783, %v8787
        %v8792 = vand.u32 2147483647, %v7775
        %vm8793 = vcmp.eq.f32.partialorder %v8792, 8.507059e+37
        %v8794 = vand.u32 %v7775, 2147483648
        %v8795 = vor.u32 1.1754944e-38, %v8794
        %v8796 = vsel %vm8793, %v8795, %v8791
        %v8797 = vmul.f32 1.0, %v8796
        %v8798 = vrcp.pop %v7776
        %v8799 = vmul.f32 %v7776, %v8798
        %v8800 = vsub.f32 1.0, %v8799
        %v8801 = vmul.f32 %v8798, %v8800
        %v8802 = vadd.f32 %v8798, %v8801
        %vm8803 = vweird.f32 %v7776
        %vm8804 = vweird.f32 %v8798
        %vm8805 = vmor %vm8803, %vm8804
        %v8806 = vsel %vm8805, %v8798, %v8802
        %v8807 = vand.u32 2147483647, %v7776
        %vm8808 = vcmp.eq.f32.partialorder %v8807, 8.507059e+37
        %v8809 = vand.u32 %v7776, 2147483648
        %v8810 = vor.u32 1.1754944e-38, %v8809
        %v8811 = vsel %vm8808, %v8810, %v8806
        %v8812 = vmul.f32 1.0, %v8811
        %v8813 = vrcp.pop %v7777
        %v8814 = vmul.f32 %v7777, %v8813
        %v8815 = vsub.f32 1.0, %v8814
        %v8816 = vmul.f32 %v8813, %v8815
        %v8817 = vadd.f32 %v8813, %v8816
        %vm8818 = vweird.f32 %v7777
        %vm8819 = vweird.f32 %v8813
        %vm8820 = vmor %vm8818, %vm8819
        %v8821 = vsel %vm8820, %v8813, %v8817
        %v8822 = vand.u32 2147483647, %v7777
        %vm8823 = vcmp.eq.f32.partialorder %v8822, 8.507059e+37
        %v8824 = vand.u32 %v7777, 2147483648
        %v8825 = vor.u32 1.1754944e-38, %v8824
        %v8826 = vsel %vm8823, %v8825, %v8821
        %v8827 = vmul.f32 1.0, %v8826
        %v8828 = vrcp.pop %v7778
        %v8829 = vmul.f32 %v7778, %v8828
        %v8830 = vsub.f32 1.0, %v8829
        %v8831 = vmul.f32 %v8828, %v8830
        %v8832 = vadd.f32 %v8828, %v8831
        %vm8833 = vweird.f32 %v7778
        %vm8834 = vweird.f32 %v8828
        %vm8835 = vmor %vm8833, %vm8834
        %v8836 = vsel %vm8835, %v8828, %v8832
        %v8837 = vand.u32 2147483647, %v7778
        %vm8838 = vcmp.eq.f32.partialorder %v8837, 8.507059e+37
        %v8839 = vand.u32 %v7778, 2147483648
        %v8840 = vor.u32 1.1754944e-38, %v8839
        %v8841 = vsel %vm8838, %v8840, %v8836
        %v8842 = vmul.f32 1.0, %v8841
        %v8843 = vrcp.pop %v7779
        %v8844 = vmul.f32 %v7779, %v8843
        %v8845 = vsub.f32 1.0, %v8844
        %v8846 = vmul.f32 %v8843, %v8845
        %v8847 = vadd.f32 %v8843, %v8846
        %vm8848 = vweird.f32 %v7779
        %vm8849 = vweird.f32 %v8843
        %vm8850 = vmor %vm8848, %vm8849
        %v8851 = vsel %vm8850, %v8843, %v8847
        %v8852 = vand.u32 2147483647, %v7779
        %vm8853 = vcmp.eq.f32.partialorder %v8852, 8.507059e+37
        %v8854 = vand.u32 %v7779, 2147483648
        %v8855 = vor.u32 1.1754944e-38, %v8854
        %v8856 = vsel %vm8853, %v8855, %v8851
        %v8857 = vmul.f32 1.0, %v8856
        %v8858 = vrcp.pop %v7780
        %v8859 = vmul.f32 %v7780, %v8858
        %v8860 = vsub.f32 1.0, %v8859
        %v8861 = vmul.f32 %v8858, %v8860
        %v8862 = vadd.f32 %v8858, %v8861
        %vm8863 = vweird.f32 %v7780
        %vm8864 = vweird.f32 %v8858
        %vm8865 = vmor %vm8863, %vm8864
        %v8866 = vsel %vm8865, %v8858, %v8862
        %v8867 = vand.u32 2147483647, %v7780
        %vm8868 = vcmp.eq.f32.partialorder %v8867, 8.507059e+37
        %v8869 = vand.u32 %v7780, 2147483648
        %v8870 = vor.u32 1.1754944e-38, %v8869
        %v8871 = vsel %vm8868, %v8870, %v8866
        %v8872 = vmul.f32 1.0, %v8871
        %v8873 = vrcp.pop %v7781
        %v8874 = vmul.f32 %v7781, %v8873
        %v8875 = vsub.f32 1.0, %v8874
        %v8876 = vmul.f32 %v8873, %v8875
        %v8877 = vadd.f32 %v8873, %v8876
        %vm8878 = vweird.f32 %v7781
        %vm8879 = vweird.f32 %v8873
        %vm8880 = vmor %vm8878, %vm8879
        %v8881 = vsel %vm8880, %v8873, %v8877
        %v8882 = vand.u32 2147483647, %v7781
        %vm8883 = vcmp.eq.f32.partialorder %v8882, 8.507059e+37
        %v8884 = vand.u32 %v7781, 2147483648
        %v8885 = vor.u32 1.1754944e-38, %v8884
        %v8886 = vsel %vm8883, %v8885, %v8881
        %v8887 = vmul.f32 1.0, %v8886
        %v8888 = vrcp.pop %v7782
        %v8889 = vmul.f32 %v7782, %v8888
        %v8890 = vsub.f32 1.0, %v8889
        %v8891 = vmul.f32 %v8888, %v8890
        %v8892 = vadd.f32 %v8888, %v8891
        %vm8893 = vweird.f32 %v7782
        %vm8894 = vweird.f32 %v8888
        %vm8895 = vmor %vm8893, %vm8894
        %v8896 = vsel %vm8895, %v8888, %v8892
        %v8897 = vand.u32 2147483647, %v7782
        %vm8898 = vcmp.eq.f32.partialorder %v8897, 8.507059e+37
        %v8899 = vand.u32 %v7782, 2147483648
        %v8900 = vor.u32 1.1754944e-38, %v8899
        %v8901 = vsel %vm8898, %v8900, %v8896
        %v8902 = vmul.f32 1.0, %v8901
        %v8903 = vrcp.pop %v7783
        %v8904 = vmul.f32 %v7783, %v8903
        %v8905 = vsub.f32 1.0, %v8904
        %v8906 = vmul.f32 %v8903, %v8905
        %v8907 = vadd.f32 %v8903, %v8906
        %vm8908 = vweird.f32 %v7783
        %vm8909 = vweird.f32 %v8903
        %vm8910 = vmor %vm8908, %vm8909
        %v8911 = vsel %vm8910, %v8903, %v8907
        %v8912 = vand.u32 2147483647, %v7783
        %vm8913 = vcmp.eq.f32.partialorder %v8912, 8.507059e+37
        %v8914 = vand.u32 %v7783, 2147483648
        %v8915 = vor.u32 1.1754944e-38, %v8914
        %v8916 = vsel %vm8913, %v8915, %v8911
        %v8917 = vmul.f32 1.0, %v8916
        %v8918 = vrcp.pop %v7784
        %v8919 = vmul.f32 %v7784, %v8918
        %v8920 = vsub.f32 1.0, %v8919
        %v8921 = vmul.f32 %v8918, %v8920
        %v8922 = vadd.f32 %v8918, %v8921
        %vm8923 = vweird.f32 %v7784
        %vm8924 = vweird.f32 %v8918
        %vm8925 = vmor %vm8923, %vm8924
        %v8926 = vsel %vm8925, %v8918, %v8922
        %v8927 = vand.u32 2147483647, %v7784
        %vm8928 = vcmp.eq.f32.partialorder %v8927, 8.507059e+37
        %v8929 = vand.u32 %v7784, 2147483648
        %v8930 = vor.u32 1.1754944e-38, %v8929
        %v8931 = vsel %vm8928, %v8930, %v8926
        %v8932 = vmul.f32 1.0, %v8931
        %v8933 = vrcp.pop %v7785
        %v8934 = vmul.f32 %v7785, %v8933
        %v8935 = vsub.f32 1.0, %v8934
        %v8936 = vmul.f32 %v8933, %v8935
        %v8937 = vadd.f32 %v8933, %v8936
        %vm8938 = vweird.f32 %v7785
        %vm8939 = vweird.f32 %v8933
        %vm8940 = vmor %vm8938, %vm8939
        %v8941 = vsel %vm8940, %v8933, %v8937
        %v8942 = vand.u32 2147483647, %v7785
        %vm8943 = vcmp.eq.f32.partialorder %v8942, 8.507059e+37
        %v8944 = vand.u32 %v7785, 2147483648
        %v8945 = vor.u32 1.1754944e-38, %v8944
        %v8946 = vsel %vm8943, %v8945, %v8941
        %v8947 = vmul.f32 1.0, %v8946
        %v8948 = vrcp.pop %v7786
        %v8949 = vmul.f32 %v7786, %v8948
        %v8950 = vsub.f32 1.0, %v8949
        %v8951 = vmul.f32 %v8948, %v8950
        %v8952 = vadd.f32 %v8948, %v8951
        %vm8953 = vweird.f32 %v7786
        %vm8954 = vweird.f32 %v8948
        %vm8955 = vmor %vm8953, %vm8954
        %v8956 = vsel %vm8955, %v8948, %v8952
        %v8957 = vand.u32 2147483647, %v7786
        %vm8958 = vcmp.eq.f32.partialorder %v8957, 8.507059e+37
        %v8959 = vand.u32 %v7786, 2147483648
        %v8960 = vor.u32 1.1754944e-38, %v8959
        %v8961 = vsel %vm8958, %v8960, %v8956
        %v8962 = vmul.f32 1.0, %v8961
        %v8963 = vrcp.pop %v7787
        %v8964 = vmul.f32 %v7787, %v8963
        %v8965 = vsub.f32 1.0, %v8964
        %v8966 = vmul.f32 %v8963, %v8965
        %v8967 = vadd.f32 %v8963, %v8966
        %vm8968 = vweird.f32 %v7787
        %vm8969 = vweird.f32 %v8963
        %vm8970 = vmor %vm8968, %vm8969
        %v8971 = vsel %vm8970, %v8963, %v8967
        %v8972 = vand.u32 2147483647, %v7787
        %vm8973 = vcmp.eq.f32.partialorder %v8972, 8.507059e+37
        %v8974 = vand.u32 %v7787, 2147483648
        %v8975 = vor.u32 1.1754944e-38, %v8974
        %v8976 = vsel %vm8973, %v8975, %v8971
        %v8977 = vmul.f32 1.0, %v8976
        %v8978 = vrcp.pop %v7788
        %v8979 = vmul.f32 %v7788, %v8978
        %v8980 = vsub.f32 1.0, %v8979
        %v8981 = vmul.f32 %v8978, %v8980
        %v8982 = vadd.f32 %v8978, %v8981
        %vm8983 = vweird.f32 %v7788
        %vm8984 = vweird.f32 %v8978
        %vm8985 = vmor %vm8983, %vm8984
        %v8986 = vsel %vm8985, %v8978, %v8982
        %v8987 = vand.u32 2147483647, %v7788
        %vm8988 = vcmp.eq.f32.partialorder %v8987, 8.507059e+37
        %v8989 = vand.u32 %v7788, 2147483648
        %v8990 = vor.u32 1.1754944e-38, %v8989
        %v8991 = vsel %vm8988, %v8990, %v8986
        %v8992 = vmul.f32 1.0, %v8991
        %v8993 = vrcp.pop %v7789
        %v8994 = vmul.f32 %v7789, %v8993
        %v8995 = vsub.f32 1.0, %v8994
        %v8996 = vmul.f32 %v8993, %v8995
        %v8997 = vadd.f32 %v8993, %v8996
        %vm8998 = vweird.f32 %v7789
        %vm8999 = vweird.f32 %v8993
        %vm9000 = vmor %vm8998, %vm8999
        %v9001 = vsel %vm9000, %v8993, %v8997
        %v9002 = vand.u32 2147483647, %v7789
        %vm9003 = vcmp.eq.f32.partialorder %v9002, 8.507059e+37
        %v9004 = vand.u32 %v7789, 2147483648
        %v9005 = vor.u32 1.1754944e-38, %v9004
        %v9006 = vsel %vm9003, %v9005, %v9001
        %v9007 = vmul.f32 1.0, %v9006
        %v9008 = vrcp.pop %v7790
        %v9009 = vmul.f32 %v7790, %v9008
        %v9010 = vsub.f32 1.0, %v9009
        %v9011 = vmul.f32 %v9008, %v9010
        %v9012 = vadd.f32 %v9008, %v9011
        %vm9013 = vweird.f32 %v7790
        %vm9014 = vweird.f32 %v9008
        %vm9015 = vmor %vm9013, %vm9014
        %v9016 = vsel %vm9015, %v9008, %v9012
        %v9017 = vand.u32 2147483647, %v7790
        %vm9018 = vcmp.eq.f32.partialorder %v9017, 8.507059e+37
        %v9019 = vand.u32 %v7790, 2147483648
        %v9020 = vor.u32 1.1754944e-38, %v9019
        %v9021 = vsel %vm9018, %v9020, %v9016
        %v9022 = vmul.f32 1.0, %v9021
        %v9023 = vrcp.pop %v7791
        %v9024 = vmul.f32 %v7791, %v9023
        %v9025 = vsub.f32 1.0, %v9024
        %v9026 = vmul.f32 %v9023, %v9025
        %v9027 = vadd.f32 %v9023, %v9026
        %vm9028 = vweird.f32 %v7791
        %vm9029 = vweird.f32 %v9023
        %vm9030 = vmor %vm9028, %vm9029
        %v9031 = vsel %vm9030, %v9023, %v9027
        %v9032 = vand.u32 2147483647, %v7791
        %vm9033 = vcmp.eq.f32.partialorder %v9032, 8.507059e+37
        %v9034 = vand.u32 %v7791, 2147483648
        %v9035 = vor.u32 1.1754944e-38, %v9034
        %v9036 = vsel %vm9033, %v9035, %v9031
        %v9037 = vmul.f32 1.0, %v9036
        %v9038 = vrcp.pop %v7792
        %v9039 = vmul.f32 %v7792, %v9038
        %v9040 = vsub.f32 1.0, %v9039
        %v9041 = vmul.f32 %v9038, %v9040
        %v9042 = vadd.f32 %v9038, %v9041
        %vm9043 = vweird.f32 %v7792
        %vm9044 = vweird.f32 %v9038
        %vm9045 = vmor %vm9043, %vm9044
        %v9046 = vsel %vm9045, %v9038, %v9042
        %v9047 = vand.u32 2147483647, %v7792
        %vm9048 = vcmp.eq.f32.partialorder %v9047, 8.507059e+37
        %v9049 = vand.u32 %v7792, 2147483648
        %v9050 = vor.u32 1.1754944e-38, %v9049
        %v9051 = vsel %vm9048, %v9050, %v9046
        %v9052 = vmul.f32 1.0, %v9051
        %v9053 = vrcp.pop %v7793
        %v9054 = vmul.f32 %v7793, %v9053
        %v9055 = vsub.f32 1.0, %v9054
        %v9056 = vmul.f32 %v9053, %v9055
        %v9057 = vadd.f32 %v9053, %v9056
        %vm9058 = vweird.f32 %v7793
        %vm9059 = vweird.f32 %v9053
        %vm9060 = vmor %vm9058, %vm9059
        %v9061 = vsel %vm9060, %v9053, %v9057
        %v9062 = vand.u32 2147483647, %v7793
        %vm9063 = vcmp.eq.f32.partialorder %v9062, 8.507059e+37
        %v9064 = vand.u32 %v7793, 2147483648
        %v9065 = vor.u32 1.1754944e-38, %v9064
        %v9066 = vsel %vm9063, %v9065, %v9061
        %v9067 = vmul.f32 1.0, %v9066
        %v9068 = vrcp.pop %v7794
        %v9069 = vmul.f32 %v7794, %v9068
        %v9070 = vsub.f32 1.0, %v9069
        %v9071 = vmul.f32 %v9068, %v9070
        %v9072 = vadd.f32 %v9068, %v9071
        %vm9073 = vweird.f32 %v7794
        %vm9074 = vweird.f32 %v9068
        %vm9075 = vmor %vm9073, %vm9074
        %v9076 = vsel %vm9075, %v9068, %v9072
        %v9077 = vand.u32 2147483647, %v7794
        %vm9078 = vcmp.eq.f32.partialorder %v9077, 8.507059e+37
        %v9079 = vand.u32 %v7794, 2147483648
        %v9080 = vor.u32 1.1754944e-38, %v9079
        %v9081 = vsel %vm9078, %v9080, %v9076
        %v9082 = vmul.f32 1.0, %v9081
        %v9083 = vrcp.pop %v7795
        %v9084 = vmul.f32 %v7795, %v9083
        %v9085 = vsub.f32 1.0, %v9084
        %v9086 = vmul.f32 %v9083, %v9085
        %v9087 = vadd.f32 %v9083, %v9086
        %vm9088 = vweird.f32 %v7795
        %vm9089 = vweird.f32 %v9083
        %vm9090 = vmor %vm9088, %vm9089
        %v9091 = vsel %vm9090, %v9083, %v9087
        %v9092 = vand.u32 2147483647, %v7795
        %vm9093 = vcmp.eq.f32.partialorder %v9092, 8.507059e+37
        %v9094 = vand.u32 %v7795, 2147483648
        %v9095 = vor.u32 1.1754944e-38, %v9094
        %v9096 = vsel %vm9093, %v9095, %v9091
        %v9097 = vmul.f32 1.0, %v9096
        %v9098 = vrcp.pop %v7796
        %v9099 = vmul.f32 %v7796, %v9098
        %v9100 = vsub.f32 1.0, %v9099
        %v9101 = vmul.f32 %v9098, %v9100
        %v9102 = vadd.f32 %v9098, %v9101
        %vm9103 = vweird.f32 %v7796
        %vm9104 = vweird.f32 %v9098
        %vm9105 = vmor %vm9103, %vm9104
        %v9106 = vsel %vm9105, %v9098, %v9102
        %v9107 = vand.u32 2147483647, %v7796
        %vm9108 = vcmp.eq.f32.partialorder %v9107, 8.507059e+37
        %v9109 = vand.u32 %v7796, 2147483648
        %v9110 = vor.u32 1.1754944e-38, %v9109
        %v9111 = vsel %vm9108, %v9110, %v9106
        %v9112 = vmul.f32 1.0, %v9111
        %v9113 = vrcp.pop %v7797
        %v9114 = vmul.f32 %v7797, %v9113
        %v9115 = vsub.f32 1.0, %v9114
        %v9116 = vmul.f32 %v9113, %v9115
        %v9117 = vadd.f32 %v9113, %v9116
        %vm9118 = vweird.f32 %v7797
        %vm9119 = vweird.f32 %v9113
        %vm9120 = vmor %vm9118, %vm9119
        %v9121 = vsel %vm9120, %v9113, %v9117
        %v9122 = vand.u32 2147483647, %v7797
        %vm9123 = vcmp.eq.f32.partialorder %v9122, 8.507059e+37
        %v9124 = vand.u32 %v7797, 2147483648
        %v9125 = vor.u32 1.1754944e-38, %v9124
        %v9126 = vsel %vm9123, %v9125, %v9121
        %v9127 = vmul.f32 1.0, %v9126
        %v9128 = vrcp.pop %v7798
        %v9129 = vmul.f32 %v7798, %v9128
        %v9130 = vsub.f32 1.0, %v9129
        %v9131 = vmul.f32 %v9128, %v9130
        %v9132 = vadd.f32 %v9128, %v9131
        %vm9133 = vweird.f32 %v7798
        %vm9134 = vweird.f32 %v9128
        %vm9135 = vmor %vm9133, %vm9134
        %v9136 = vsel %vm9135, %v9128, %v9132
        %v9137 = vand.u32 2147483647, %v7798
        %vm9138 = vcmp.eq.f32.partialorder %v9137, 8.507059e+37
        %v9139 = vand.u32 %v7798, 2147483648
        %v9140 = vor.u32 1.1754944e-38, %v9139
        %v9141 = vsel %vm9138, %v9140, %v9136
        %v9142 = vmul.f32 1.0, %v9141
        %v9143 = vrcp.pop %v7799
        %v9144 = vmul.f32 %v7799, %v9143
        %v9145 = vsub.f32 1.0, %v9144
        %v9146 = vmul.f32 %v9143, %v9145
        %v9147 = vadd.f32 %v9143, %v9146
        %vm9148 = vweird.f32 %v7799
        %vm9149 = vweird.f32 %v9143
        %vm9150 = vmor %vm9148, %vm9149
        %v9151 = vsel %vm9150, %v9143, %v9147
        %v9152 = vand.u32 2147483647, %v7799
        %vm9153 = vcmp.eq.f32.partialorder %v9152, 8.507059e+37
        %v9154 = vand.u32 %v7799, 2147483648
        %v9155 = vor.u32 1.1754944e-38, %v9154
        %v9156 = vsel %vm9153, %v9155, %v9151
        %v9157 = vmul.f32 1.0, %v9156
        %v9158 = vrcp.pop %v7800
        %v9159 = vmul.f32 %v7800, %v9158
        %v9160 = vsub.f32 1.0, %v9159
        %v9161 = vmul.f32 %v9158, %v9160
        %v9162 = vadd.f32 %v9158, %v9161
        %vm9163 = vweird.f32 %v7800
        %vm9164 = vweird.f32 %v9158
        %vm9165 = vmor %vm9163, %vm9164
        %v9166 = vsel %vm9165, %v9158, %v9162
        %v9167 = vand.u32 2147483647, %v7800
        %vm9168 = vcmp.eq.f32.partialorder %v9167, 8.507059e+37
        %v9169 = vand.u32 %v7800, 2147483648
        %v9170 = vor.u32 1.1754944e-38, %v9169
        %v9171 = vsel %vm9168, %v9170, %v9166
        %v9172 = vmul.f32 1.0, %v9171
        %v9173 = vrcp.pop %v7801
        %v9174 = vmul.f32 %v7801, %v9173
        %v9175 = vsub.f32 1.0, %v9174
        %v9176 = vmul.f32 %v9173, %v9175
        %v9177 = vadd.f32 %v9173, %v9176
        %vm9178 = vweird.f32 %v7801
        %vm9179 = vweird.f32 %v9173
        %vm9180 = vmor %vm9178, %vm9179
        %v9181 = vsel %vm9180, %v9173, %v9177
        %v9182 = vand.u32 2147483647, %v7801
        %vm9183 = vcmp.eq.f32.partialorder %v9182, 8.507059e+37
        %v9184 = vand.u32 %v7801, 2147483648
        %v9185 = vor.u32 1.1754944e-38, %v9184
        %v9186 = vsel %vm9183, %v9185, %v9181
        %v9187 = vmul.f32 1.0, %v9186
        %v9188 = vrcp.pop %v7802
        %v9189 = vmul.f32 %v7802, %v9188
        %v9190 = vsub.f32 1.0, %v9189
        %v9191 = vmul.f32 %v9188, %v9190
        %v9192 = vadd.f32 %v9188, %v9191
        %vm9193 = vweird.f32 %v7802
        %vm9194 = vweird.f32 %v9188
        %vm9195 = vmor %vm9193, %vm9194
        %v9196 = vsel %vm9195, %v9188, %v9192
        %v9197 = vand.u32 2147483647, %v7802
        %vm9198 = vcmp.eq.f32.partialorder %v9197, 8.507059e+37
        %v9199 = vand.u32 %v7802, 2147483648
        %v9200 = vor.u32 1.1754944e-38, %v9199
        %v9201 = vsel %vm9198, %v9200, %v9196
        %v9202 = vmul.f32 1.0, %v9201
        %v9203 = vrcp.pop %v7803
        %v9204 = vmul.f32 %v7803, %v9203
        %v9205 = vsub.f32 1.0, %v9204
        %v9206 = vmul.f32 %v9203, %v9205
        %v9207 = vadd.f32 %v9203, %v9206
        %vm9208 = vweird.f32 %v7803
        %vm9209 = vweird.f32 %v9203
        %vm9210 = vmor %vm9208, %vm9209
        %v9211 = vsel %vm9210, %v9203, %v9207
        %v9212 = vand.u32 2147483647, %v7803
        %vm9213 = vcmp.eq.f32.partialorder %v9212, 8.507059e+37
        %v9214 = vand.u32 %v7803, 2147483648
        %v9215 = vor.u32 1.1754944e-38, %v9214
        %v9216 = vsel %vm9213, %v9215, %v9211
        %v9217 = vmul.f32 1.0, %v9216
        %v9218 = vrcp.pop %v7804
        %v9219 = vmul.f32 %v7804, %v9218
        %v9220 = vsub.f32 1.0, %v9219
        %v9221 = vmul.f32 %v9218, %v9220
        %v9222 = vadd.f32 %v9218, %v9221
        %vm9223 = vweird.f32 %v7804
        %vm9224 = vweird.f32 %v9218
        %vm9225 = vmor %vm9223, %vm9224
        %v9226 = vsel %vm9225, %v9218, %v9222
        %v9227 = vand.u32 2147483647, %v7804
        %vm9228 = vcmp.eq.f32.partialorder %v9227, 8.507059e+37
        %v9229 = vand.u32 %v7804, 2147483648
        %v9230 = vor.u32 1.1754944e-38, %v9229
        %v9231 = vsel %vm9228, %v9230, %v9226
        %v9232 = vmul.f32 1.0, %v9231
        %v9233 = vrcp.pop %v7805
        %v9234 = vmul.f32 %v7805, %v9233
        %v9235 = vsub.f32 1.0, %v9234
        %v9236 = vmul.f32 %v9233, %v9235
        %v9237 = vadd.f32 %v9233, %v9236
        %vm9238 = vweird.f32 %v7805
        %vm9239 = vweird.f32 %v9233
        %vm9240 = vmor %vm9238, %vm9239
        %v9241 = vsel %vm9240, %v9233, %v9237
        %v9242 = vand.u32 2147483647, %v7805
        %vm9243 = vcmp.eq.f32.partialorder %v9242, 8.507059e+37
        %v9244 = vand.u32 %v7805, 2147483648
        %v9245 = vor.u32 1.1754944e-38, %v9244
        %v9246 = vsel %vm9243, %v9245, %v9241
        %v9247 = vmul.f32 1.0, %v9246
        %v9248 = vrcp.pop %v7806
        %v9249 = vmul.f32 %v7806, %v9248
        %v9250 = vsub.f32 1.0, %v9249
        %v9251 = vmul.f32 %v9248, %v9250
        %v9252 = vadd.f32 %v9248, %v9251
        %vm9253 = vweird.f32 %v7806
        %vm9254 = vweird.f32 %v9248
        %vm9255 = vmor %vm9253, %vm9254
        %v9256 = vsel %vm9255, %v9248, %v9252
        %v9257 = vand.u32 2147483647, %v7806
        %vm9258 = vcmp.eq.f32.partialorder %v9257, 8.507059e+37
        %v9259 = vand.u32 %v7806, 2147483648
        %v9260 = vor.u32 1.1754944e-38, %v9259
        %v9261 = vsel %vm9258, %v9260, %v9256
        %v9262 = vmul.f32 1.0, %v9261
        %v9263 = vrcp.pop %v7807
        %v9264 = vmul.f32 %v7807, %v9263
        %v9265 = vsub.f32 1.0, %v9264
        %v9266 = vmul.f32 %v9263, %v9265
        %v9267 = vadd.f32 %v9263, %v9266
        %vm9268 = vweird.f32 %v7807
        %vm9269 = vweird.f32 %v9263
        %vm9270 = vmor %vm9268, %vm9269
        %v9271 = vsel %vm9270, %v9263, %v9267
        %v9272 = vand.u32 2147483647, %v7807
        %vm9273 = vcmp.eq.f32.partialorder %v9272, 8.507059e+37
        %v9274 = vand.u32 %v7807, 2147483648
        %v9275 = vor.u32 1.1754944e-38, %v9274
        %v9276 = vsel %vm9273, %v9275, %v9271
        %v9277 = vmul.f32 1.0, %v9276
        %v9278 = vrcp.pop %v7808
        %v9279 = vmul.f32 %v7808, %v9278
        %v9280 = vsub.f32 1.0, %v9279
        %v9281 = vmul.f32 %v9278, %v9280
        %v9282 = vadd.f32 %v9278, %v9281
        %vm9283 = vweird.f32 %v7808
        %vm9284 = vweird.f32 %v9278
        %vm9285 = vmor %vm9283, %vm9284
        %v9286 = vsel %vm9285, %v9278, %v9282
        %v9287 = vand.u32 2147483647, %v7808
        %vm9288 = vcmp.eq.f32.partialorder %v9287, 8.507059e+37
        %v9289 = vand.u32 %v7808, 2147483648
        %v9290 = vor.u32 1.1754944e-38, %v9289
        %v9291 = vsel %vm9288, %v9290, %v9286
        %v9292 = vmul.f32 1.0, %v9291
        %v9293 = vrcp.pop %v7809
        %v9294 = vmul.f32 %v7809, %v9293
        %v9295 = vsub.f32 1.0, %v9294
        %v9296 = vmul.f32 %v9293, %v9295
        %v9297 = vadd.f32 %v9293, %v9296
        %vm9298 = vweird.f32 %v7809
        %vm9299 = vweird.f32 %v9293
        %vm9300 = vmor %vm9298, %vm9299
        %v9301 = vsel %vm9300, %v9293, %v9297
        %v9302 = vand.u32 2147483647, %v7809
        %vm9303 = vcmp.eq.f32.partialorder %v9302, 8.507059e+37
        %v9304 = vand.u32 %v7809, 2147483648
        %v9305 = vor.u32 1.1754944e-38, %v9304
        %v9306 = vsel %vm9303, %v9305, %v9301
        %v9307 = vmul.f32 1.0, %v9306
        %v9308 = vrcp.pop %v7810
        %v9309 = vmul.f32 %v7810, %v9308
        %v9310 = vsub.f32 1.0, %v9309
        %v9311 = vmul.f32 %v9308, %v9310
        %v9312 = vadd.f32 %v9308, %v9311
        %vm9313 = vweird.f32 %v7810
        %vm9314 = vweird.f32 %v9308
        %vm9315 = vmor %vm9313, %vm9314
        %v9316 = vsel %vm9315, %v9308, %v9312
        %v9317 = vand.u32 2147483647, %v7810
        %vm9318 = vcmp.eq.f32.partialorder %v9317, 8.507059e+37
        %v9319 = vand.u32 %v7810, 2147483648
        %v9320 = vor.u32 1.1754944e-38, %v9319
        %v9321 = vsel %vm9318, %v9320, %v9316
        %v9322 = vmul.f32 1.0, %v9321
        %v9323 = vrcp.pop %v7811
        %v9324 = vmul.f32 %v7811, %v9323
        %v9325 = vsub.f32 1.0, %v9324
        %v9326 = vmul.f32 %v9323, %v9325
        %v9327 = vadd.f32 %v9323, %v9326
        %vm9328 = vweird.f32 %v7811
        %vm9329 = vweird.f32 %v9323
        %vm9330 = vmor %vm9328, %vm9329
        %v9331 = vsel %vm9330, %v9323, %v9327
        %v9332 = vand.u32 2147483647, %v7811
        %vm9333 = vcmp.eq.f32.partialorder %v9332, 8.507059e+37
        %v9334 = vand.u32 %v7811, 2147483648
        %v9335 = vor.u32 1.1754944e-38, %v9334
        %v9336 = vsel %vm9333, %v9335, %v9331
        %v9337 = vmul.f32 1.0, %v9336
        %v9338 = vrcp.pop %v7812
        %v9339 = vmul.f32 %v7812, %v9338
        %v9340 = vsub.f32 1.0, %v9339
        %v9341 = vmul.f32 %v9338, %v9340
        %v9342 = vadd.f32 %v9338, %v9341
        %vm9343 = vweird.f32 %v7812
        %vm9344 = vweird.f32 %v9338
        %vm9345 = vmor %vm9343, %vm9344
        %v9346 = vsel %vm9345, %v9338, %v9342
        %v9347 = vand.u32 2147483647, %v7812
        %vm9348 = vcmp.eq.f32.partialorder %v9347, 8.507059e+37
        %v9349 = vand.u32 %v7812, 2147483648
        %v9350 = vor.u32 1.1754944e-38, %v9349
        %v9351 = vsel %vm9348, %v9350, %v9346
        %v9352 = vmul.f32 1.0, %v9351
        %v9353 = vrcp.pop %v7813
        %v9354 = vmul.f32 %v7813, %v9353
        %v9355 = vsub.f32 1.0, %v9354
        %v9356 = vmul.f32 %v9353, %v9355
        %v9357 = vadd.f32 %v9353, %v9356
        %vm9358 = vweird.f32 %v7813
        %vm9359 = vweird.f32 %v9353
        %vm9360 = vmor %vm9358, %vm9359
        %v9361 = vsel %vm9360, %v9353, %v9357
        %v9362 = vand.u32 2147483647, %v7813
        %vm9363 = vcmp.eq.f32.partialorder %v9362, 8.507059e+37
        %v9364 = vand.u32 %v7813, 2147483648
        %v9365 = vor.u32 1.1754944e-38, %v9364
        %v9366 = vsel %vm9363, %v9365, %v9361
        %v9367 = vmul.f32 1.0, %v9366
        %v9368 = vrcp.pop %v7814
        %v9369 = vmul.f32 %v7814, %v9368
        %v9370 = vsub.f32 1.0, %v9369
        %v9371 = vmul.f32 %v9368, %v9370
        %v9372 = vadd.f32 %v9368, %v9371
        %vm9373 = vweird.f32 %v7814
        %vm9374 = vweird.f32 %v9368
        %vm9375 = vmor %vm9373, %vm9374
        %v9376 = vsel %vm9375, %v9368, %v9372
        %v9377 = vand.u32 2147483647, %v7814
        %vm9378 = vcmp.eq.f32.partialorder %v9377, 8.507059e+37
        %v9379 = vand.u32 %v7814, 2147483648
        %v9380 = vor.u32 1.1754944e-38, %v9379
        %v9381 = vsel %vm9378, %v9380, %v9376
        %v9382 = vmul.f32 1.0, %v9381
        %v9383 = vrcp.pop %v7815
        %v9384 = vmul.f32 %v7815, %v9383
        %v9385 = vsub.f32 1.0, %v9384
        %v9386 = vmul.f32 %v9383, %v9385
        %v9387 = vadd.f32 %v9383, %v9386
        %vm9388 = vweird.f32 %v7815
        %vm9389 = vweird.f32 %v9383
        %vm9390 = vmor %vm9388, %vm9389
        %v9391 = vsel %vm9390, %v9383, %v9387
        %v9392 = vand.u32 2147483647, %v7815
        %vm9393 = vcmp.eq.f32.partialorder %v9392, 8.507059e+37
        %v9394 = vand.u32 %v7815, 2147483648
        %v9395 = vor.u32 1.1754944e-38, %v9394
        %v9396 = vsel %vm9393, %v9395, %v9391
        %v9397 = vmul.f32 1.0, %v9396
        %v9398 = vrcp.pop %v7816
        %v9399 = vmul.f32 %v7816, %v9398
        %v9400 = vsub.f32 1.0, %v9399
        %v9401 = vmul.f32 %v9398, %v9400
        %v9402 = vadd.f32 %v9398, %v9401
        %vm9403 = vweird.f32 %v7816
        %vm9404 = vweird.f32 %v9398
        %vm9405 = vmor %vm9403, %vm9404
        %v9406 = vsel %vm9405, %v9398, %v9402
        %v9407 = vand.u32 2147483647, %v7816
        %vm9408 = vcmp.eq.f32.partialorder %v9407, 8.507059e+37
        %v9409 = vand.u32 %v7816, 2147483648
        %v9410 = vor.u32 1.1754944e-38, %v9409
        %v9411 = vsel %vm9408, %v9410, %v9406
        %v9412 = vmul.f32 1.0, %v9411
        %v9413 = vrcp.pop %v7817
        %v9414 = vmul.f32 %v7817, %v9413
        %v9415 = vsub.f32 1.0, %v9414
        %v9416 = vmul.f32 %v9413, %v9415
        %v9417 = vadd.f32 %v9413, %v9416
        %vm9418 = vweird.f32 %v7817
        %vm9419 = vweird.f32 %v9413
        %vm9420 = vmor %vm9418, %vm9419
        %v9421 = vsel %vm9420, %v9413, %v9417
        %v9422 = vand.u32 2147483647, %v7817
        %vm9423 = vcmp.eq.f32.partialorder %v9422, 8.507059e+37
        %v9424 = vand.u32 %v7817, 2147483648
        %v9425 = vor.u32 1.1754944e-38, %v9424
        %v9426 = vsel %vm9423, %v9425, %v9421
        %v9427 = vmul.f32 1.0, %v9426
        %v9428 = vrcp.pop %v7818
        %v9429 = vmul.f32 %v7818, %v9428
        %v9430 = vsub.f32 1.0, %v9429
        %v9431 = vmul.f32 %v9428, %v9430
        %v9432 = vadd.f32 %v9428, %v9431
        %vm9433 = vweird.f32 %v7818
        %vm9434 = vweird.f32 %v9428
        %vm9435 = vmor %vm9433, %vm9434
        %v9436 = vsel %vm9435, %v9428, %v9432
        %v9437 = vand.u32 2147483647, %v7818
        %vm9438 = vcmp.eq.f32.partialorder %v9437, 8.507059e+37
        %v9439 = vand.u32 %v7818, 2147483648
        %v9440 = vor.u32 1.1754944e-38, %v9439
        %v9441 = vsel %vm9438, %v9440, %v9436
        %v9442 = vmul.f32 1.0, %v9441
        %v9443 = vrcp.pop %v7819
        %v9444 = vmul.f32 %v7819, %v9443
        %v9445 = vsub.f32 1.0, %v9444
        %v9446 = vmul.f32 %v9443, %v9445
        %v9447 = vadd.f32 %v9443, %v9446
        %vm9448 = vweird.f32 %v7819
        %vm9449 = vweird.f32 %v9443
        %vm9450 = vmor %vm9448, %vm9449
        %v9451 = vsel %vm9450, %v9443, %v9447
        %v9452 = vand.u32 2147483647, %v7819
        %vm9453 = vcmp.eq.f32.partialorder %v9452, 8.507059e+37
        %v9454 = vand.u32 %v7819, 2147483648
        %v9455 = vor.u32 1.1754944e-38, %v9454
        %v9456 = vsel %vm9453, %v9455, %v9451
        %v9457 = vmul.f32 1.0, %v9456
        %v9458 = vrcp.pop %v7820
        %v9459 = vmul.f32 %v7820, %v9458
        %v9460 = vsub.f32 1.0, %v9459
        %v9461 = vmul.f32 %v9458, %v9460
        %v9462 = vadd.f32 %v9458, %v9461
        %vm9463 = vweird.f32 %v7820
        %vm9464 = vweird.f32 %v9458
        %vm9465 = vmor %vm9463, %vm9464
        %v9466 = vsel %vm9465, %v9458, %v9462
        %v9467 = vand.u32 2147483647, %v7820
        %vm9468 = vcmp.eq.f32.partialorder %v9467, 8.507059e+37
        %v9469 = vand.u32 %v7820, 2147483648
        %v9470 = vor.u32 1.1754944e-38, %v9469
        %v9471 = vsel %vm9468, %v9470, %v9466
        %v9472 = vmul.f32 1.0, %v9471
        %v9473 = vrcp.pop %v7821
        %v9474 = vmul.f32 %v7821, %v9473
        %v9475 = vsub.f32 1.0, %v9474
        %v9476 = vmul.f32 %v9473, %v9475
        %v9477 = vadd.f32 %v9473, %v9476
        %vm9478 = vweird.f32 %v7821
        %vm9479 = vweird.f32 %v9473
        %vm9480 = vmor %vm9478, %vm9479
        %v9481 = vsel %vm9480, %v9473, %v9477
        %v9482 = vand.u32 2147483647, %v7821
        %vm9483 = vcmp.eq.f32.partialorder %v9482, 8.507059e+37
        %v9484 = vand.u32 %v7821, 2147483648
        %v9485 = vor.u32 1.1754944e-38, %v9484
        %v9486 = vsel %vm9483, %v9485, %v9481
        %v9487 = vmul.f32 1.0, %v9486
        %v9488 = vrcp.pop %v7822
        %v9489 = vmul.f32 %v7822, %v9488
        %v9490 = vsub.f32 1.0, %v9489
        %v9491 = vmul.f32 %v9488, %v9490
        %v9492 = vadd.f32 %v9488, %v9491
        %vm9493 = vweird.f32 %v7822
        %vm9494 = vweird.f32 %v9488
        %vm9495 = vmor %vm9493, %vm9494
        %v9496 = vsel %vm9495, %v9488, %v9492
        %v9497 = vand.u32 2147483647, %v7822
        %vm9498 = vcmp.eq.f32.partialorder %v9497, 8.507059e+37
        %v9499 = vand.u32 %v7822, 2147483648
        %v9500 = vor.u32 1.1754944e-38, %v9499
        %v9501 = vsel %vm9498, %v9500, %v9496
        %v9502 = vmul.f32 1.0, %v9501
        %9503 = vst [vmem:[%s324] sm:$0xff] %v7837
        %9504 = vst [vmem:[%s324 + $0x8] sm:$0xff] %v7852
        %9505 = vst [vmem:[%s324 + $0x10] sm:$0xff] %v7867
        %9506 = vst [vmem:[%s324 + $0x18] sm:$0xff] %v7882
        %9507 = vst [vmem:[%s324 + $0x20] sm:$0xff] %v7897
        %9508 = vst [vmem:[%s324 + $0x28] sm:$0xff] %v7912
        %9509 = vst [vmem:[%s324 + $0x30] sm:$0xff] %v7927
        %9510 = vst [vmem:[%s324 + $0x38] sm:$0xff] %v7942
        %9511 = vst [vmem:[%s324 + $0x40] sm:$0xff] %v7957
        %9512 = vst [vmem:[%s324 + $0x48] sm:$0xff] %v7972
        %9513 = vst [vmem:[%s324 + $0x50] sm:$0xff] %v7987
        %9514 = vst [vmem:[%s324 + $0x58] sm:$0xff] %v8002
        %9515 = vst [vmem:[%s324 + $0x60] sm:$0xff] %v8017
        %9516 = vst [vmem:[%s324 + $0x68] sm:$0xff] %v8032
        %9517 = vst [vmem:[%s324 + $0x70] sm:$0xff] %v8047
        %9518 = vst [vmem:[%s324 + $0x78] sm:$0xff] %v8062
        %9519 = vst [vmem:[%s324 + $0x80] sm:$0xff] %v8077
        %9520 = vst [vmem:[%s324 + $0x88] sm:$0xff] %v8092
        %9521 = vst [vmem:[%s324 + $0x90] sm:$0xff] %v8107
        %9522 = vst [vmem:[%s324 + $0x98] sm:$0xff] %v8122
        %9523 = vst [vmem:[%s324 + $0xa0] sm:$0xff] %v8137
        %9524 = vst [vmem:[%s324 + $0xa8] sm:$0xff] %v8152
        %9525 = vst [vmem:[%s324 + $0xb0] sm:$0xff] %v8167
        %9526 = vst [vmem:[%s324 + $0xb8] sm:$0xff] %v8182
        %9527 = vst [vmem:[%s324 + $0xc0] sm:$0xff] %v8197
        %9528 = vst [vmem:[%s324 + $0xc8] sm:$0xff] %v8212
        %9529 = vst [vmem:[%s324 + $0xd0] sm:$0xff] %v8227
        %9530 = vst [vmem:[%s324 + $0xd8] sm:$0xff] %v8242
        %9531 = vst [vmem:[%s324 + $0xe0] sm:$0xff] %v8257
        %9532 = vst [vmem:[%s324 + $0xe8] sm:$0xff] %v8272
        %9533 = vst [vmem:[%s324 + $0xf0] sm:$0xff] %v8287
        %9534 = vst [vmem:[%s324 + $0xf8] sm:$0xff] %v8302
        %9535 = vst [vmem:[%s324 + $0x100] sm:$0xff] %v8317
        %9536 = vst [vmem:[%s324 + $0x108] sm:$0xff] %v8332
        %9537 = vst [vmem:[%s324 + $0x110] sm:$0xff] %v8347
        %9538 = vst [vmem:[%s324 + $0x118] sm:$0xff] %v8362
        %9539 = vst [vmem:[%s324 + $0x120] sm:$0xff] %v8377
        %9540 = vst [vmem:[%s324 + $0x128] sm:$0xff] %v8392
        %9541 = vst [vmem:[%s324 + $0x130] sm:$0xff] %v8407
        %9542 = vst [vmem:[%s324 + $0x138] sm:$0xff] %v8422
        %9543 = vst [vmem:[%s324 + $0x140] sm:$0xff] %v8437
        %9544 = vst [vmem:[%s324 + $0x148] sm:$0xff] %v8452
        %9545 = vst [vmem:[%s324 + $0x150] sm:$0xff] %v8467
        %9546 = vst [vmem:[%s324 + $0x158] sm:$0xff] %v8482
        %9547 = vst [vmem:[%s324 + $0x160] sm:$0xff] %v8497
        %9548 = vst [vmem:[%s324 + $0x168] sm:$0xff] %v8512
        %9549 = vst [vmem:[%s324 + $0x170] sm:$0xff] %v8527
        %9550 = vst [vmem:[%s324 + $0x178] sm:$0xff] %v8542
        %9551 = vst [vmem:[%s324 + $0x180] sm:$0xff] %v8557
        %9552 = vst [vmem:[%s324 + $0x188] sm:$0xff] %v8572
        %9553 = vst [vmem:[%s324 + $0x190] sm:$0xff] %v8587
        %9554 = vst [vmem:[%s324 + $0x198] sm:$0xff] %v8602
        %9555 = vst [vmem:[%s324 + $0x1a0] sm:$0xff] %v8617
        %9556 = vst [vmem:[%s324 + $0x1a8] sm:$0xff] %v8632
        %9557 = vst [vmem:[%s324 + $0x1b0] sm:$0xff] %v8647
        %9558 = vst [vmem:[%s324 + $0x1b8] sm:$0xff] %v8662
        %9559 = vst [vmem:[%s324 + $0x1c0] sm:$0xff] %v8677
        %9560 = vst [vmem:[%s324 + $0x1c8] sm:$0xff] %v8692
        %9561 = vst [vmem:[%s324 + $0x1d0] sm:$0xff] %v8707
        %9562 = vst [vmem:[%s324 + $0x1d8] sm:$0xff] %v8722
        %9563 = vst [vmem:[%s324 + $0x1e0] sm:$0xff] %v8737
        %9564 = vst [vmem:[%s324 + $0x1e8] sm:$0xff] %v8752
        %9565 = vst [vmem:[%s324 + $0x1f0] sm:$0xff] %v8767
        %9566 = vst [vmem:[%s324 + $0x1f8] sm:$0xff] %v8782
        %9567 = vst [vmem:[%s324 + $0x200] sm:$0xff] %v8797
        %9568 = vst [vmem:[%s324 + $0x208] sm:$0xff] %v8812
        %9569 = vst [vmem:[%s324 + $0x210] sm:$0xff] %v8827
        %9570 = vst [vmem:[%s324 + $0x218] sm:$0xff] %v8842
        %9571 = vst [vmem:[%s324 + $0x220] sm:$0xff] %v8857
        %9572 = vst [vmem:[%s324 + $0x228] sm:$0xff] %v8872
        %9573 = vst [vmem:[%s324 + $0x230] sm:$0xff] %v8887
        %9574 = vst [vmem:[%s324 + $0x238] sm:$0xff] %v8902
        %9575 = vst [vmem:[%s324 + $0x240] sm:$0xff] %v8917
        %9576 = vst [vmem:[%s324 + $0x248] sm:$0xff] %v8932
        %9577 = vst [vmem:[%s324 + $0x250] sm:$0xff] %v8947
        %9578 = vst [vmem:[%s324 + $0x258] sm:$0xff] %v8962
        %9579 = vst [vmem:[%s324 + $0x260] sm:$0xff] %v8977
        %9580 = vst [vmem:[%s324 + $0x268] sm:$0xff] %v8992
        %9581 = vst [vmem:[%s324 + $0x270] sm:$0xff] %v9007
        %9582 = vst [vmem:[%s324 + $0x278] sm:$0xff] %v9022
        %9583 = vst [vmem:[%s324 + $0x280] sm:$0xff] %v9037
        %9584 = vst [vmem:[%s324 + $0x288] sm:$0xff] %v9052
        %9585 = vst [vmem:[%s324 + $0x290] sm:$0xff] %v9067
        %9586 = vst [vmem:[%s324 + $0x298] sm:$0xff] %v9082
        %9587 = vst [vmem:[%s324 + $0x2a0] sm:$0xff] %v9097
        %9588 = vst [vmem:[%s324 + $0x2a8] sm:$0xff] %v9112
        %9589 = vst [vmem:[%s324 + $0x2b0] sm:$0xff] %v9127
        %9590 = vst [vmem:[%s324 + $0x2b8] sm:$0xff] %v9142
        %9591 = vst [vmem:[%s324 + $0x2c0] sm:$0xff] %v9157
        %9592 = vst [vmem:[%s324 + $0x2c8] sm:$0xff] %v9172
        %9593 = vst [vmem:[%s324 + $0x2d0] sm:$0xff] %v9187
        %9594 = vst [vmem:[%s324 + $0x2d8] sm:$0xff] %v9202
        %9595 = vst [vmem:[%s324 + $0x2e0] sm:$0xff] %v9217
        %9596 = vst [vmem:[%s324 + $0x2e8] sm:$0xff] %v9232
        %9597 = vst [vmem:[%s324 + $0x2f0] sm:$0xff] %v9247
        %9598 = vst [vmem:[%s324 + $0x2f8] sm:$0xff] %v9262
        %9599 = vst [vmem:[%s324 + $0x300] sm:$0xff] %v9277
        %9600 = vst [vmem:[%s324 + $0x308] sm:$0xff] %v9292
        %9601 = vst [vmem:[%s324 + $0x310] sm:$0xff] %v9307
        %9602 = vst [vmem:[%s324 + $0x318] sm:$0xff] %v9322
        %9603 = vst [vmem:[%s324 + $0x320] sm:$0xff] %v9337
        %9604 = vst [vmem:[%s324 + $0x328] sm:$0xff] %v9352
        %9605 = vst [vmem:[%s324 + $0x330] sm:$0xff] %v9367
        %9606 = vst [vmem:[%s324 + $0x338] sm:$0xff] %v9382
        %9607 = vst [vmem:[%s324 + $0x340] sm:$0xff] %v9397
        %9608 = vst [vmem:[%s324 + $0x348] sm:$0xff] %v9412
        %9609 = vst [vmem:[%s324 + $0x350] sm:$0xff] %v9427
        %9610 = vst [vmem:[%s324 + $0x358] sm:$0xff] %v9442
        %9611 = vst [vmem:[%s324 + $0x360] sm:$0xff] %v9457
        %9612 = vst [vmem:[%s324 + $0x368] sm:$0xff] %v9472
        %9613 = vst [vmem:[%s324 + $0x370] sm:$0xff] %v9487
        %9614 = vst [vmem:[%s324 + $0x378] sm:$0xff] %v9502
        %s9615 = smul.u32 16, %s19
        %p9616 = scmp.lt.s32.totalorder %s9615, 31
        %s9617 = scalar_select %p9616, %s9615, 31
        %s9618 = smul.addr %s9617, 7
        %s9619 = smul.addr %s9618, 8
        %s9620 = scalar_lea.vmem %s7, %s9619
        // Predicated region
        $region53: #{vae_forward.1} parent=47 // pred_check
          %p9621 = pneg %p194
        $region54: #{vae_forward.1} parent=47 // pred_check_branch
          %9623 = sbr.rel (%p9621) target = $region56
        $region55: #{vae_forward.1} parent=47 // pred_region
          %s9624 = smul.u32 16, %s19
        $region56: #{vae_forward.1} parent=47 // pred_fallthru
          _
      $region48: #{vae_forward.1} parent=5 // pred_fallthru
        _
      %p9625 = scmp.le.s32.totalorder 2, %s14
      // Predicated region
      $region57: #{vae_forward.1} parent=5 // pred_check
        %p9626 = pneg %p9625
      $region58: #{vae_forward.1} parent=5 // pred_check_branch
        %9628 = sbr.rel (%p9626) target = $region60
      $region59: #{vae_forward.1} parent=5 // pred_region
        %s9629 = ssub.s32 %s14, 2
        // Predicated region
        $region61: #{vae_forward.1} parent=59 // pred_check
          %p9630 = pneg %p200
        $region62: #{vae_forward.1} parent=59 // pred_check_branch
          %9632 = sbr.rel (%p9630) target = $region64
        $region63: #{vae_forward.1} parent=59 // pred_region
          %s9633 = smul.u32 16, %s20
          %p9634 = scmp.lt.s32.totalorder %s9633, 31
          %s9635 = scalar_select %p9634, %s9633, 31
          %s9636 = smul.addr %s9635, 7
          %s9637 = smul.addr %s9636, 8
          %s9638 = scalar_lea.vmem %s7, %s9637
        $region64: #{vae_forward.1} parent=59 // pred_fallthru
          _
      $region60: #{vae_forward.1} parent=5 // pred_fallthru
        _
    $region6: #{vae_forward.1} parent=1 // loop_footer
      %s18 = sadd.s32 1, %s14
    $region7: #{vae_forward.1} parent=1 // loop_footer_branch
      %13 = sbr.rel target = $region3
    $region8: #{vae_forward.1} parent=1 // loop_exit
      _
    %9639 = vsyncpa [#allocation3], 1
    %s9640 = scalar_lea.sflag [#allocation3], 1
    %9641 = vsyncpa %s9640, 1

</llo_original>
